<compile_context>
chip_gen: v6e
topology: v6e:2x2x1
jax: 0.10.0
libtpu: 0.0.40
codegen_flags: <defaults>
</compile_context>

<pallas_src>
import math
from functools import partial

import jax
import jax.numpy as jnp
from jax import lax
from jax.experimental import pallas as pl
from jax.experimental.pallas import tpu as pltpu

_RT = 64     # output-tile rows (sublane axis)
_TF = 128    # output-tile filters (lane axis)  -> lane-dense stores
_CK = 128    # K-chunk processed per fori_loop iteration


def _round_up(v, m):
    return ((v + m - 1) // m) * m


# ---------------------------------------------------------------------------
# Pallas kernel: out = epilogue( -sum_k |x[p,k] - w[k,f]| )
#   x_ref: (NC, RT, CK)   rows on sublanes, k-chunk on lanes
#   w_ref: (NC, CK, TF)   k-chunk on sublanes, filters on lanes
#   o_ref: (RT, TF)
# Grid: (F_tiles, row_tiles) -- both parallel, no reduction grid axis.
# ---------------------------------------------------------------------------
def _make_adder_kernel(apply_relu, scale, has_residual):
    def kernel(x_ref, w_ref, *rest):
        if has_residual:
            r_ref, o_ref = rest
        else:
            (o_ref,) = rest
        nc, rt, ck = x_ref.shape
        tf = w_ref.shape[2]

        def chunk_body(c, acc):
            xc = x_ref[c]                                  # (RT, CK) value
            for g in range(ck // 8):                       # static, 16 groups
                wg = w_ref[c, pl.ds(g * 8, 8), :]          # (8, TF)
                for j in range(8):                         # static unroll
                    kk = g * 8 + j
                    col = xc[:, kk:kk + 1]                 # (RT, 1)
                    acc = acc + jnp.abs(col - wg[j:j + 1, :])
            return acc

        acc = lax.fori_loop(0, nc, chunk_body,
                            jnp.zeros((rt, tf), jnp.float32))
        out = -acc
        if apply_relu:
            out = jnp.maximum(out, 0.0)
        if scale != 1.0:
            out = out * scale
        if has_residual:
            out = out + r_ref[...]
        o_ref[...] = out.astype(o_ref.dtype)

    return kernel


def _adder_l1_matmul(x3, w3, residual, *, relu, scale):
    """x3: (NC, NP, CK), w3: (NC, CK, Fp), residual: (NP, Fp) or None."""
    nc, npp, ck = x3.shape
    _, _, fp = w3.shape
    grid = (fp // _TF, npp // _RT)          # row axis minor -> w block reused
    kernel = _make_adder_kernel(relu, float(scale), residual is not None)

    in_specs = [
        pl.BlockSpec((nc, _RT, ck), lambda fi, r: (0, r, 0)),
        pl.BlockSpec((nc, ck, _TF), lambda fi, r: (0, 0, fi)),
    ]
    args = [x3, w3]
    if residual is not None:
        in_specs.append(pl.BlockSpec((_RT, _TF), lambda fi, r: (r, fi)))
        args.append(residual)

    return pl.pallas_call(
        kernel,
        out_shape=jax.ShapeDtypeStruct((npp, fp), jnp.float32),
        grid_spec=pltpu.PrefetchScalarGridSpec(
            num_scalar_prefetch=0,
            grid=grid,
            in_specs=in_specs,
            out_specs=pl.BlockSpec((_RT, _TF), lambda fi, r: (r, fi)),
        ),
        compiler_params=pltpu.CompilerParams(
            dimension_semantics=("parallel", "parallel")),
    )(*args)


# ---------------------------------------------------------------------------
# Weight packing (done once): (F, C, 3, 3) -> (NC, CK, Fp) with zero padding.
# ---------------------------------------------------------------------------
def pack_weight(w):
    f, c = int(w.shape[0]), int(w.shape[1])
    k = 9 * c
    w_col = jnp.transpose(w, (0, 2, 3, 1)).reshape(f, k)   # (kh, kw, c) order
    kp = _round_up(k, _CK)
    fp = _round_up(f, _TF)
    w_col = jnp.pad(w_col, ((0, fp - f), (0, kp - k)))
    return jnp.transpose(w_col, (1, 0)).reshape(kp // _CK, _CK, fp)


# ---------------------------------------------------------------------------
# adder2d(kernel=3, stride=1, padding=1, bias=False), NHWC in / NHWC out,
# with fused epilogue: out = scale * relu(adder(x, w)) + residual
# ---------------------------------------------------------------------------
def _adder_conv_packed(x_nhwc, w3, f_out, residual=None, *, relu=False,
                       scale=1.0):
    n, h, wd, c = x_nhwc.shape
    k = 9 * c
    nc = w3.shape[0]
    kp = nc * _CK
    fp = w3.shape[2]
    assert kp == _round_up(k, _CK), "packed weight K does not match input"

    # im2col with the same (kh, kw, c) K ordering as the packed weights
    xp = jnp.pad(x_nhwc, ((0, 0), (1, 1), (1, 1), (0, 0)))
    cols = [xp[:, i:i + h, j:j + wd, :] for i in range(3) for j in range(3)]
    x_col = jnp.concatenate(cols, axis=-1).reshape(n * h * wd, k)

    # zero-pad K (both operands zero -> |0-0| = 0) and rows to tile multiples
    npr = n * h * wd
    npp = _round_up(npr, _RT)
    x_col = jnp.pad(x_col, ((0, npp - npr), (0, kp - k)))
    x3 = jnp.transpose(x_col.reshape(npp, nc, _CK), (1, 0, 2))   # (NC, NP, CK)

    res_flat = None
    if residual is not None:
        res_flat = residual.reshape(npr, f_out)
        res_flat = jnp.pad(res_flat, ((0, npp - npr), (0, fp - f_out)))

    out = _adder_l1_matmul(x3, w3, res_flat, relu=relu, scale=scale)
    return out[:npr, :f_out].reshape(n, h, wd, f_out)


@partial(jax.jit, static_argnames=("relu", "scale"))
def adder_conv3x3(x_nhwc, w, residual=None, *, relu=False, scale=1.0):
    """Convenience wrapper taking raw (F, C, 3, 3) weights (used by tests)."""
    return _adder_conv_packed(x_nhwc, pack_weight(w), int(w.shape[0]),
                              residual, relu=relu, scale=scale)


def adder_conv3x3_ref(x_nhwc, w):
    """Pure-JAX reference of adder2d (NHWC) for correctness checking."""
    n, h, wd, c = x_nhwc.shape
    f = w.shape[0]
    xp = jnp.pad(x_nhwc, ((0, 0), (1, 1), (1, 1), (0, 0)))
    cols = [xp[:, i:i + h, j:j + wd, :] for i in range(3) for j in range(3)]
    x_col = jnp.concatenate(cols, axis=-1).reshape(n * h * wd, 9 * c)
    w_col = jnp.transpose(w, (0, 2, 3, 1)).reshape(f, 9 * c)
    out = -jnp.sum(jnp.abs(x_col[:, None, :] - w_col[None, :, :]), axis=-1)
    return out.reshape(n, h, wd, f)


# ---------------------------------------------------------------------------
# Network glue (plain JAX, channels-last)
# ---------------------------------------------------------------------------
def pixel_shuffle_nhwc(x, r):
    n, h, w, c4 = x.shape
    c = c4 // (r * r)
    x = x.reshape(n, h, w, c, r, r)
    x = jnp.transpose(x, (0, 1, 4, 2, 5, 3))
    return x.reshape(n, h * r, w * r, c)


def init_params(key, num_channels=3, base_filter=256, n_resblocks=32,
                scale_factor=2):
    def w_init(kk, shape):
        return jax.random.normal(kk, shape, jnp.float32) * 0.05

    n_up = int(math.log2(scale_factor))
    k_head, k_b1, k_b2, k_tail, k_up, k_out = jax.random.split(key, 6)
    params = {
        "head": w_init(k_head, (base_filter, num_channels, 3, 3)),
        "body_w1": w_init(k_b1, (n_resblocks, base_filter, base_filter, 3, 3)),
        "body_w2": w_init(k_b2, (n_resblocks, base_filter, base_filter, 3, 3)),
        "body_tail": w_init(k_tail, (base_filter, base_filter, 3, 3)),
        # TODO(synk): Upsampler class is not in the provided source; assumed
        # the standard EDSR-style upsampler (adder-conv F->4F + PixelShuffle(2)
        # per log2(scale) stage, activation=None).
        "up": [w_init(kk, (4 * base_filter, base_filter, 3, 3))
               for kk in jax.random.split(k_up, n_up)],
        "out": w_init(k_out, (num_channels, base_filter, 3, 3)),
    }
    return params


def pack_params(raw):
    """One-time weight re-layout so the forward pass does zero weight prep."""
    return {
        "head": pack_weight(raw["head"]),
        "body_w1": jax.vmap(pack_weight)(raw["body_w1"]),
        "body_w2": jax.vmap(pack_weight)(raw["body_w2"]),
        "body_tail": pack_weight(raw["body_tail"]),
        "up": [pack_weight(wu) for wu in raw["up"]],
        "out": pack_weight(raw["out"]),
    }


def make_net_forward(num_channels=3, base_filter=256, res_scale=0.1):
    """Single-jit forward; 32 residual blocks run under one lax.scan."""
    def forward(packed, x_nchw):
        x = jnp.transpose(x_nchw, (0, 2, 3, 1))            # NCHW -> NHWC once
        x = _adder_conv_packed(x, packed["head"], base_filter, relu=True)
        res = x

        # 32 x add_ResnetBlock: h = 0.1 * relu(conv2(relu(conv1(h)))) + h
        def block(h, ws):
            w1, w2 = ws
            o = _adder_conv_packed(h, w1, base_filter, relu=True)
            h = _adder_conv_packed(o, w2, base_filter, residual=h,
                                   relu=True, scale=res_scale)
            return h, None

        h, _ = lax.scan(block, x, (packed["body_w1"], packed["body_w2"]))

        # body tail conv, Net's relu and the outer skip, all fused:
        x = _adder_conv_packed(h, packed["body_tail"], base_filter,
                               residual=res, relu=True)
        # upsampler: conv F->4F + PixelShuffle(2) per stage
        for wu in packed["up"]:
            x = _adder_conv_packed(x, wu, 4 * base_filter)
            x = pixel_shuffle_nhwc(x, 2)
        # output conv (F=3, padded to a lane-dense F tile inside the wrapper)
        x = _adder_conv_packed(x, packed["out"], num_channels)
        return jnp.transpose(x, (0, 3, 1, 2))              # NHWC -> NCHW

    return jax.jit(forward)


if __name__ == "__main__":
    key = jax.random.PRNGKey(0)
    k_params, k_x, k1, k2, k3, k4, k5 = jax.random.split(key, 7)

    # --- sanity: plain adder conv (K=27, single padded chunk) ---------------
    xs = jax.random.normal(k1, (2, 8, 8, 3), jnp.float32)
    ws = jax.random.normal(k2, (16, 3, 3, 3), jnp.float32) * 0.1
    got = adder_conv3x3(xs, ws)
    want = adder_conv3x3_ref(xs, ws)
    assert bool(jnp.allclose(got, want, rtol=1e-3, atol=1e-3)), \
        "plain adder conv mismatch"

    # --- sanity: multi-chunk K + fused relu / scale / residual --------------
    xs2 = jax.random.normal(k3, (1, 8, 8, 64), jnp.float32)
    ws2 = jax.random.normal(k4, (128, 64, 3, 3), jnp.float32) * 0.05
    rs2 = jax.random.normal(k5, (1, 8, 8, 128), jnp.float32)
    got2 = adder_conv3x3(xs2, ws2, rs2, relu=True, scale=0.1)
    want2 = 0.1 * jnp.maximum(adder_conv3x3_ref(xs2, ws2), 0.0) + rs2
    assert bool(jnp.allclose(got2, want2, rtol=1e-3, atol=1e-2)), \
        "fused adder conv mismatch"

    # --- full Net forward: num_channels=3, base_filter=256, 32 blocks, x2 ---
    raw = init_params(k_params, num_channels=3, base_filter=256,
                      n_resblocks=32, scale_factor=2)
    packed = pack_params(raw)
    net_apply = make_net_forward(num_channels=3, base_filter=256,
                                 res_scale=0.1)
    x = jax.random.normal(k_x, (2, 3, 8, 8), jnp.float32)   # NCHW input
    out = net_apply(packed, x)
    out = jax.block_until_ready(out)
    assert out.shape == (2, 3, 16, 16), out.shape
    print("KERNEL_OK")
</pallas_src>

<mosaic_0001>
module attributes {stable_mosaic.version = 11 : i64} {
  func.func @kernel(%arg0: i32, %arg1: i32, %arg2: memref<1x64x128xf32, #tpu.memory_space<vmem>>, %arg3: memref<1x128x128xf32, #tpu.memory_space<vmem>>, %arg4: memref<64x128xf32, #tpu.memory_space<vmem>>) attributes {dimension_semantics = [#tpu.dimension_semantics<parallel>, #tpu.dimension_semantics<parallel>], iteration_bounds = array<i64: 1, 2>, scalar_prefetch = 0 : i64, scratch_operands = 0 : i64, tpu.core_type = #tpu.core_type<tc>, window_params = [{transform_indices = @transform_0, window_bounds = array<i64: 1, 64, 128>}, {transform_indices = @transform_1, window_bounds = array<i64: 1, 128, 128>}, {transform_indices = @transform_2, window_bounds = array<i64: 64, 128>}]} {
    %cst = arith.constant 0.000000e+00 : f32
    %0 = vector.broadcast %cst : f32 to vector<64x128xf32>
    %c0_i32 = arith.constant 0 : i32
    %1 = arith.index_cast %c0_i32 : i32 to index
    %c0 = arith.constant 0 : index
    %c0_0 = arith.constant 0 : index
    %2 = vector.load %arg2[%1, %c0, %c0_0] : memref<1x64x128xf32, #tpu.memory_space<vmem>>, vector<1x64x128xf32>
    %3 = vector.shape_cast %2 : vector<1x64x128xf32> to vector<64x128xf32>
    %4 = arith.index_cast %c0_i32 : i32 to index
    %c0_1 = arith.constant 0 : index
    %c0_2 = arith.constant 0 : index
    %5 = vector.load %arg3[%4, %c0_1, %c0_2] : memref<1x128x128xf32, #tpu.memory_space<vmem>>, vector<1x8x128xf32>
    %6 = vector.shape_cast %5 : vector<1x8x128xf32> to vector<8x128xf32>
    %7 = vector.extract_strided_slice %3 {offsets = [0, 0], sizes = [64, 1], strides = [1, 1]} : vector<64x128xf32> to vector<64x1xf32>
    %8 = vector.extract_strided_slice %6 {offsets = [0, 0], sizes = [1, 128], strides = [1, 1]} : vector<8x128xf32> to vector<1x128xf32>
    %9 = vector.broadcast %7 : vector<64x1xf32> to vector<64x128xf32>
    %10 = vector.broadcast %8 : vector<1x128xf32> to vector<64x128xf32>
    %11 = arith.subf %9, %10 : vector<64x128xf32>
    %12 = math.absf %11 : vector<64x128xf32>
    %13 = arith.addf %0, %12 : vector<64x128xf32>
    %14 = vector.extract_strided_slice %3 {offsets = [0, 1], sizes = [64, 1], strides = [1, 1]} : vector<64x128xf32> to vector<64x1xf32>
    %15 = vector.extract_strided_slice %6 {offsets = [1, 0], sizes = [1, 128], strides = [1, 1]} : vector<8x128xf32> to vector<1x128xf32>
    %16 = vector.broadcast %14 : vector<64x1xf32> to vector<64x128xf32>
    %17 = vector.broadcast %15 : vector<1x128xf32> to vector<64x128xf32>
    %18 = arith.subf %16, %17 : vector<64x128xf32>
    %19 = math.absf %18 : vector<64x128xf32>
    %20 = arith.addf %13, %19 : vector<64x128xf32>
    %21 = vector.extract_strided_slice %3 {offsets = [0, 2], sizes = [64, 1], strides = [1, 1]} : vector<64x128xf32> to vector<64x1xf32>
    %22 = vector.extract_strided_slice %6 {offsets = [2, 0], sizes = [1, 128], strides = [1, 1]} : vector<8x128xf32> to vector<1x128xf32>
    %23 = vector.broadcast %21 : vector<64x1xf32> to vector<64x128xf32>
    %24 = vector.broadcast %22 : vector<1x128xf32> to vector<64x128xf32>
    %25 = arith.subf %23, %24 : vector<64x128xf32>
    %26 = math.absf %25 : vector<64x128xf32>
    %27 = arith.addf %20, %26 : vector<64x128xf32>
    %28 = vector.extract_strided_slice %3 {offsets = [0, 3], sizes = [64, 1], strides = [1, 1]} : vector<64x128xf32> to vector<64x1xf32>
    %29 = vector.extract_strided_slice %6 {offsets = [3, 0], sizes = [1, 128], strides = [1, 1]} : vector<8x128xf32> to vector<1x128xf32>
    %30 = vector.broadcast %28 : vector<64x1xf32> to vector<64x128xf32>
    %31 = vector.broadcast %29 : vector<1x128xf32> to vector<64x128xf32>
    %32 = arith.subf %30, %31 : vector<64x128xf32>
    %33 = math.absf %32 : vector<64x128xf32>
    %34 = arith.addf %27, %33 : vector<64x128xf32>
    %35 = vector.extract_strided_slice %3 {offsets = [0, 4], sizes = [64, 1], strides = [1, 1]} : vector<64x128xf32> to vector<64x1xf32>
    %36 = vector.extract_strided_slice %6 {offsets = [4, 0], sizes = [1, 128], strides = [1, 1]} : vector<8x128xf32> to vector<1x128xf32>
    %37 = vector.broadcast %35 : vector<64x1xf32> to vector<64x128xf32>
    %38 = vector.broadcast %36 : vector<1x128xf32> to vector<64x128xf32>
    %39 = arith.subf %37, %38 : vector<64x128xf32>
    %40 = math.absf %39 : vector<64x128xf32>
    %41 = arith.addf %34, %40 : vector<64x128xf32>
    %42 = vector.extract_strided_slice %3 {offsets = [0, 5], sizes = [64, 1], strides = [1, 1]} : vector<64x128xf32> to vector<64x1xf32>
    %43 = vector.extract_strided_slice %6 {offsets = [5, 0], sizes = [1, 128], strides = [1, 1]} : vector<8x128xf32> to vector<1x128xf32>
    %44 = vector.broadcast %42 : vector<64x1xf32> to vector<64x128xf32>
    %45 = vector.broadcast %43 : vector<1x128xf32> to vector<64x128xf32>
    %46 = arith.subf %44, %45 : vector<64x128xf32>
    %47 = math.absf %46 : vector<64x128xf32>
    %48 = arith.addf %41, %47 : vector<64x128xf32>
    %49 = vector.extract_strided_slice %3 {offsets = [0, 6], sizes = [64, 1], strides = [1, 1]} : vector<64x128xf32> to vector<64x1xf32>
    %50 = vector.extract_strided_slice %6 {offsets = [6, 0], sizes = [1, 128], strides = [1, 1]} : vector<8x128xf32> to vector<1x128xf32>
    %51 = vector.broadcast %49 : vector<64x1xf32> to vector<64x128xf32>
    %52 = vector.broadcast %50 : vector<1x128xf32> to vector<64x128xf32>
    %53 = arith.subf %51, %52 : vector<64x128xf32>
    %54 = math.absf %53 : vector<64x128xf32>
    %55 = arith.addf %48, %54 : vector<64x128xf32>
    %56 = vector.extract_strided_slice %3 {offsets = [0, 7], sizes = [64, 1], strides = [1, 1]} : vector<64x128xf32> to vector<64x1xf32>
    %57 = vector.extract_strided_slice %6 {offsets = [7, 0], sizes = [1, 128], strides = [1, 1]} : vector<8x128xf32> to vector<1x128xf32>
    %58 = vector.broadcast %56 : vector<64x1xf32> to vector<64x128xf32>
    %59 = vector.broadcast %57 : vector<1x128xf32> to vector<64x128xf32>
    %60 = arith.subf %58, %59 : vector<64x128xf32>
    %61 = math.absf %60 : vector<64x128xf32>
    %62 = arith.addf %55, %61 : vector<64x128xf32>
    %63 = arith.index_cast %c0_i32 : i32 to index
    %c8 = arith.constant 8 : index
    %c0_3 = arith.constant 0 : index
    %64 = vector.load %arg3[%63, %c8, %c0_3] : memref<1x128x128xf32, #tpu.memory_space<vmem>>, vector<1x8x128xf32>
    %65 = vector.shape_cast %64 : vector<1x8x128xf32> to vector<8x128xf32>
    %66 = vector.extract_strided_slice %3 {offsets = [0, 8], sizes = [64, 1], strides = [1, 1]} : vector<64x128xf32> to vector<64x1xf32>
    %67 = vector.extract_strided_slice %65 {offsets = [0, 0], sizes = [1, 128], strides = [1, 1]} : vector<8x128xf32> to vector<1x128xf32>
    %68 = vector.broadcast %66 : vector<64x1xf32> to vector<64x128xf32>
    %69 = vector.broadcast %67 : vector<1x128xf32> to vector<64x128xf32>
    %70 = arith.subf %68, %69 : vector<64x128xf32>
    %71 = math.absf %70 : vector<64x128xf32>
    %72 = arith.addf %62, %71 : vector<64x128xf32>
    %73 = vector.extract_strided_slice %3 {offsets = [0, 9], sizes = [64, 1], strides = [1, 1]} : vector<64x128xf32> to vector<64x1xf32>
    %74 = vector.extract_strided_slice %65 {offsets = [1, 0], sizes = [1, 128], strides = [1, 1]} : vector<8x128xf32> to vector<1x128xf32>
    %75 = vector.broadcast %73 : vector<64x1xf32> to vector<64x128xf32>
    %76 = vector.broadcast %74 : vector<1x128xf32> to vector<64x128xf32>
    %77 = arith.subf %75, %76 : vector<64x128xf32>
    %78 = math.absf %77 : vector<64x128xf32>
    %79 = arith.addf %72, %78 : vector<64x128xf32>
    %80 = vector.extract_strided_slice %3 {offsets = [0, 10], sizes = [64, 1], strides = [1, 1]} : vector<64x128xf32> to vector<64x1xf32>
    %81 = vector.extract_strided_slice %65 {offsets = [2, 0], sizes = [1, 128], strides = [1, 1]} : vector<8x128xf32> to vector<1x128xf32>
    %82 = vector.broadcast %80 : vector<64x1xf32> to vector<64x128xf32>
    %83 = vector.broadcast %81 : vector<1x128xf32> to vector<64x128xf32>
    %84 = arith.subf %82, %83 : vector<64x128xf32>
    %85 = math.absf %84 : vector<64x128xf32>
    %86 = arith.addf %79, %85 : vector<64x128xf32>
    %87 = vector.extract_strided_slice %3 {offsets = [0, 11], sizes = [64, 1], strides = [1, 1]} : vector<64x128xf32> to vector<64x1xf32>
    %88 = vector.extract_strided_slice %65 {offsets = [3, 0], sizes = [1, 128], strides = [1, 1]} : vector<8x128xf32> to vector<1x128xf32>
    %89 = vector.broadcast %87 : vector<64x1xf32> to vector<64x128xf32>
    %90 = vector.broadcast %88 : vector<1x128xf32> to vector<64x128xf32>
    %91 = arith.subf %89, %90 : vector<64x128xf32>
    %92 = math.absf %91 : vector<64x128xf32>
    %93 = arith.addf %86, %92 : vector<64x128xf32>
    %94 = vector.extract_strided_slice %3 {offsets = [0, 12], sizes = [64, 1], strides = [1, 1]} : vector<64x128xf32> to vector<64x1xf32>
    %95 = vector.extract_strided_slice %65 {offsets = [4, 0], sizes = [1, 128], strides = [1, 1]} : vector<8x128xf32> to vector<1x128xf32>
    %96 = vector.broadcast %94 : vector<64x1xf32> to vector<64x128xf32>
    %97 = vector.broadcast %95 : vector<1x128xf32> to vector<64x128xf32>
    %98 = arith.subf %96, %97 : vector<64x128xf32>
    %99 = math.absf %98 : vector<64x128xf32>
    %100 = arith.addf %93, %99 : vector<64x128xf32>
    %101 = vector.extract_strided_slice %3 {offsets = [0, 13], sizes = [64, 1], strides = [1, 1]} : vector<64x128xf32> to vector<64x1xf32>
    %102 = vector.extract_strided_slice %65 {offsets = [5, 0], sizes = [1, 128], strides = [1, 1]} : vector<8x128xf32> to vector<1x128xf32>
    %103 = vector.broadcast %101 : vector<64x1xf32> to vector<64x128xf32>
    %104 = vector.broadcast %102 : vector<1x128xf32> to vector<64x128xf32>
    %105 = arith.subf %103, %104 : vector<64x128xf32>
    %106 = math.absf %105 : vector<64x128xf32>
    %107 = arith.addf %100, %106 : vector<64x128xf32>
    %108 = vector.extract_strided_slice %3 {offsets = [0, 14], sizes = [64, 1], strides = [1, 1]} : vector<64x128xf32> to vector<64x1xf32>
    %109 = vector.extract_strided_slice %65 {offsets = [6, 0], sizes = [1, 128], strides = [1, 1]} : vector<8x128xf32> to vector<1x128xf32>
    %110 = vector.broadcast %108 : vector<64x1xf32> to vector<64x128xf32>
    %111 = vector.broadcast %109 : vector<1x128xf32> to vector<64x128xf32>
    %112 = arith.subf %110, %111 : vector<64x128xf32>
    %113 = math.absf %112 : vector<64x128xf32>
    %114 = arith.addf %107, %113 : vector<64x128xf32>
    %115 = vector.extract_strided_slice %3 {offsets = [0, 15], sizes = [64, 1], strides = [1, 1]} : vector<64x128xf32> to vector<64x1xf32>
    %116 = vector.extract_strided_slice %65 {offsets = [7, 0], sizes = [1, 128], strides = [1, 1]} : vector<8x128xf32> to vector<1x128xf32>
    %117 = vector.broadcast %115 : vector<64x1xf32> to vector<64x128xf32>
    %118 = vector.broadcast %116 : vector<1x128xf32> to vector<64x128xf32>
    %119 = arith.subf %117, %118 : vector<64x128xf32>
    %120 = math.absf %119 : vector<64x128xf32>
    %121 = arith.addf %114, %120 : vector<64x128xf32>
    %122 = arith.index_cast %c0_i32 : i32 to index
    %c16 = arith.constant 16 : index
    %c0_4 = arith.constant 0 : index
    %123 = vector.load %arg3[%122, %c16, %c0_4] : memref<1x128x128xf32, #tpu.memory_space<vmem>>, vector<1x8x128xf32>
    %124 = vector.shape_cast %123 : vector<1x8x128xf32> to vector<8x128xf32>
    %125 = vector.extract_strided_slice %3 {offsets = [0, 16], sizes = [64, 1], strides = [1, 1]} : vector<64x128xf32> to vector<64x1xf32>
    %126 = vector.extract_strided_slice %124 {offsets = [0, 0], sizes = [1, 128], strides = [1, 1]} : vector<8x128xf32> to vector<1x128xf32>
    %127 = vector.broadcast %125 : vector<64x1xf32> to vector<64x128xf32>
    %128 = vector.broadcast %126 : vector<1x128xf32> to vector<64x128xf32>
    %129 = arith.subf %127, %128 : vector<64x128xf32>
    %130 = math.absf %129 : vector<64x128xf32>
    %131 = arith.addf %121, %130 : vector<64x128xf32>
    %132 = vector.extract_strided_slice %3 {offsets = [0, 17], sizes = [64, 1], strides = [1, 1]} : vector<64x128xf32> to vector<64x1xf32>
    %133 = vector.extract_strided_slice %124 {offsets = [1, 0], sizes = [1, 128], strides = [1, 1]} : vector<8x128xf32> to vector<1x128xf32>
    %134 = vector.broadcast %132 : vector<64x1xf32> to vector<64x128xf32>
    %135 = vector.broadcast %133 : vector<1x128xf32> to vector<64x128xf32>
    %136 = arith.subf %134, %135 : vector<64x128xf32>
    %137 = math.absf %136 : vector<64x128xf32>
    %138 = arith.addf %131, %137 : vector<64x128xf32>
    %139 = vector.extract_strided_slice %3 {offsets = [0, 18], sizes = [64, 1], strides = [1, 1]} : vector<64x128xf32> to vector<64x1xf32>
    %140 = vector.extract_strided_slice %124 {offsets = [2, 0], sizes = [1, 128], strides = [1, 1]} : vector<8x128xf32> to vector<1x128xf32>
    %141 = vector.broadcast %139 : vector<64x1xf32> to vector<64x128xf32>
    %142 = vector.broadcast %140 : vector<1x128xf32> to vector<64x128xf32>
    %143 = arith.subf %141, %142 : vector<64x128xf32>
    %144 = math.absf %143 : vector<64x128xf32>
    %145 = arith.addf %138, %144 : vector<64x128xf32>
    %146 = vector.extract_strided_slice %3 {offsets = [0, 19], sizes = [64, 1], strides = [1, 1]} : vector<64x128xf32> to vector<64x1xf32>
    %147 = vector.extract_strided_slice %124 {offsets = [3, 0], sizes = [1, 128], strides = [1, 1]} : vector<8x128xf32> to vector<1x128xf32>
    %148 = vector.broadcast %146 : vector<64x1xf32> to vector<64x128xf32>
    %149 = vector.broadcast %147 : vector<1x128xf32> to vector<64x128xf32>
    %150 = arith.subf %148, %149 : vector<64x128xf32>
    %151 = math.absf %150 : vector<64x128xf32>
    %152 = arith.addf %145, %151 : vector<64x128xf32>
    %153 = vector.extract_strided_slice %3 {offsets = [0, 20], sizes = [64, 1], strides = [1, 1]} : vector<64x128xf32> to vector<64x1xf32>
    %154 = vector.extract_strided_slice %124 {offsets = [4, 0], sizes = [1, 128], strides = [1, 1]} : vector<8x128xf32> to vector<1x128xf32>
    %155 = vector.broadcast %153 : vector<64x1xf32> to vector<64x128xf32>
    %156 = vector.broadcast %154 : vector<1x128xf32> to vector<64x128xf32>
    %157 = arith.subf %155, %156 : vector<64x128xf32>
    %158 = math.absf %157 : vector<64x128xf32>
    %159 = arith.addf %152, %158 : vector<64x128xf32>
    %160 = vector.extract_strided_slice %3 {offsets = [0, 21], sizes = [64, 1], strides = [1, 1]} : vector<64x128xf32> to vector<64x1xf32>
    %161 = vector.extract_strided_slice %124 {offsets = [5, 0], sizes = [1, 128], strides = [1, 1]} : vector<8x128xf32> to vector<1x128xf32>
    %162 = vector.broadcast %160 : vector<64x1xf32> to vector<64x128xf32>
    %163 = vector.broadcast %161 : vector<1x128xf32> to vector<64x128xf32>
    %164 = arith.subf %162, %163 : vector<64x128xf32>
    %165 = math.absf %164 : vector<64x128xf32>
    %166 = arith.addf %159, %165 : vector<64x128xf32>
    %167 = vector.extract_strided_slice %3 {offsets = [0, 22], sizes = [64, 1], strides = [1, 1]} : vector<64x128xf32> to vector<64x1xf32>
    %168 = vector.extract_strided_slice %124 {offsets = [6, 0], sizes = [1, 128], strides = [1, 1]} : vector<8x128xf32> to vector<1x128xf32>
    %169 = vector.broadcast %167 : vector<64x1xf32> to vector<64x128xf32>
    %170 = vector.broadcast %168 : vector<1x128xf32> to vector<64x128xf32>
    %171 = arith.subf %169, %170 : vector<64x128xf32>
    %172 = math.absf %171 : vector<64x128xf32>
    %173 = arith.addf %166, %172 : vector<64x128xf32>
    %174 = vector.extract_strided_slice %3 {offsets = [0, 23], sizes = [64, 1], strides = [1, 1]} : vector<64x128xf32> to vector<64x1xf32>
    %175 = vector.extract_strided_slice %124 {offsets = [7, 0], sizes = [1, 128], strides = [1, 1]} : vector<8x128xf32> to vector<1x128xf32>
    %176 = vector.broadcast %174 : vector<64x1xf32> to vector<64x128xf32>
    %177 = vector.broadcast %175 : vector<1x128xf32> to vector<64x128xf32>
    %178 = arith.subf %176, %177 : vector<64x128xf32>
    %179 = math.absf %178 : vector<64x128xf32>
    %180 = arith.addf %173, %179 : vector<64x128xf32>
    %181 = arith.index_cast %c0_i32 : i32 to index
    %c24 = arith.constant 24 : index
    %c0_5 = arith.constant 0 : index
    %182 = vector.load %arg3[%181, %c24, %c0_5] : memref<1x128x128xf32, #tpu.memory_space<vmem>>, vector<1x8x128xf32>
    %183 = vector.shape_cast %182 : vector<1x8x128xf32> to vector<8x128xf32>
    %184 = vector.extract_strided_slice %3 {offsets = [0, 24], sizes = [64, 1], strides = [1, 1]} : vector<64x128xf32> to vector<64x1xf32>
    %185 = vector.extract_strided_slice %183 {offsets = [0, 0], sizes = [1, 128], strides = [1, 1]} : vector<8x128xf32> to vector<1x128xf32>
    %186 = vector.broadcast %184 : vector<64x1xf32> to vector<64x128xf32>
    %187 = vector.broadcast %185 : vector<1x128xf32> to vector<64x128xf32>
    %188 = arith.subf %186, %187 : vector<64x128xf32>
    %189 = math.absf %188 : vector<64x128xf32>
    %190 = arith.addf %180, %189 : vector<64x128xf32>
    %191 = vector.extract_strided_slice %3 {offsets = [0, 25], sizes = [64, 1], strides = [1, 1]} : vector<64x128xf32> to vector<64x1xf32>
    %192 = vector.extract_strided_slice %183 {offsets = [1, 0], sizes = [1, 128], strides = [1, 1]} : vector<8x128xf32> to vector<1x128xf32>
    %193 = vector.broadcast %191 : vector<64x1xf32> to vector<64x128xf32>
    %194 = vector.broadcast %192 : vector<1x128xf32> to vector<64x128xf32>
    %195 = arith.subf %193, %194 : vector<64x128xf32>
    %196 = math.absf %195 : vector<64x128xf32>
    %197 = arith.addf %190, %196 : vector<64x128xf32>
    %198 = vector.extract_strided_slice %3 {offsets = [0, 26], sizes = [64, 1], strides = [1, 1]} : vector<64x128xf32> to vector<64x1xf32>
    %199 = vector.extract_strided_slice %183 {offsets = [2, 0], sizes = [1, 128], strides = [1, 1]} : vector<8x128xf32> to vector<1x128xf32>
    %200 = vector.broadcast %198 : vector<64x1xf32> to vector<64x128xf32>
    %201 = vector.broadcast %199 : vector<1x128xf32> to vector<64x128xf32>
    %202 = arith.subf %200, %201 : vector<64x128xf32>
    %203 = math.absf %202 : vector<64x128xf32>
    %204 = arith.addf %197, %203 : vector<64x128xf32>
    %205 = vector.extract_strided_slice %3 {offsets = [0, 27], sizes = [64, 1], strides = [1, 1]} : vector<64x128xf32> to vector<64x1xf32>
    %206 = vector.extract_strided_slice %183 {offsets = [3, 0], sizes = [1, 128], strides = [1, 1]} : vector<8x128xf32> to vector<1x128xf32>
    %207 = vector.broadcast %205 : vector<64x1xf32> to vector<64x128xf32>
    %208 = vector.broadcast %206 : vector<1x128xf32> to vector<64x128xf32>
    %209 = arith.subf %207, %208 : vector<64x128xf32>
    %210 = math.absf %209 : vector<64x128xf32>
    %211 = arith.addf %204, %210 : vector<64x128xf32>
    %212 = vector.extract_strided_slice %3 {offsets = [0, 28], sizes = [64, 1], strides = [1, 1]} : vector<64x128xf32> to vector<64x1xf32>
    %213 = vector.extract_strided_slice %183 {offsets = [4, 0], sizes = [1, 128], strides = [1, 1]} : vector<8x128xf32> to vector<1x128xf32>
    %214 = vector.broadcast %212 : vector<64x1xf32> to vector<64x128xf32>
    %215 = vector.broadcast %213 : vector<1x128xf32> to vector<64x128xf32>
    %216 = arith.subf %214, %215 : vector<64x128xf32>
    %217 = math.absf %216 : vector<64x128xf32>
    %218 = arith.addf %211, %217 : vector<64x128xf32>
    %219 = vector.extract_strided_slice %3 {offsets = [0, 29], sizes = [64, 1], strides = [1, 1]} : vector<64x128xf32> to vector<64x1xf32>
    %220 = vector.extract_strided_slice %183 {offsets = [5, 0], sizes = [1, 128], strides = [1, 1]} : vector<8x128xf32> to vector<1x128xf32>
    %221 = vector.broadcast %219 : vector<64x1xf32> to vector<64x128xf32>
    %222 = vector.broadcast %220 : vector<1x128xf32> to vector<64x128xf32>
    %223 = arith.subf %221, %222 : vector<64x128xf32>
    %224 = math.absf %223 : vector<64x128xf32>
    %225 = arith.addf %218, %224 : vector<64x128xf32>
    %226 = vector.extract_strided_slice %3 {offsets = [0, 30], sizes = [64, 1], strides = [1, 1]} : vector<64x128xf32> to vector<64x1xf32>
    %227 = vector.extract_strided_slice %183 {offsets = [6, 0], sizes = [1, 128], strides = [1, 1]} : vector<8x128xf32> to vector<1x128xf32>
    %228 = vector.broadcast %226 : vector<64x1xf32> to vector<64x128xf32>
    %229 = vector.broadcast %227 : vector<1x128xf32> to vector<64x128xf32>
    %230 = arith.subf %228, %229 : vector<64x128xf32>
    %231 = math.absf %230 : vector<64x128xf32>
    %232 = arith.addf %225, %231 : vector<64x128xf32>
    %233 = vector.extract_strided_slice %3 {offsets = [0, 31], sizes = [64, 1], strides = [1, 1]} : vector<64x128xf32> to vector<64x1xf32>
    %234 = vector.extract_strided_slice %183 {offsets = [7, 0], sizes = [1, 128], strides = [1, 1]} : vector<8x128xf32> to vector<1x128xf32>
    %235 = vector.broadcast %233 : vector<64x1xf32> to vector<64x128xf32>
    %236 = vector.broadcast %234 : vector<1x128xf32> to vector<64x128xf32>
    %237 = arith.subf %235, %236 : vector<64x128xf32>
    %238 = math.absf %237 : vector<64x128xf32>
    %239 = arith.addf %232, %238 : vector<64x128xf32>
    %240 = arith.index_cast %c0_i32 : i32 to index
    %c32 = arith.constant 32 : index
    %c0_6 = arith.constant 0 : index
    %241 = vector.load %arg3[%240, %c32, %c0_6] : memref<1x128x128xf32, #tpu.memory_space<vmem>>, vector<1x8x128xf32>
    %242 = vector.shape_cast %241 : vector<1x8x128xf32> to vector<8x128xf32>
    %243 = vector.extract_strided_slice %3 {offsets = [0, 32], sizes = [64, 1], strides = [1, 1]} : vector<64x128xf32> to vector<64x1xf32>
    %244 = vector.extract_strided_slice %242 {offsets = [0, 0], sizes = [1, 128], strides = [1, 1]} : vector<8x128xf32> to vector<1x128xf32>
    %245 = vector.broadcast %243 : vector<64x1xf32> to vector<64x128xf32>
    %246 = vector.broadcast %244 : vector<1x128xf32> to vector<64x128xf32>
    %247 = arith.subf %245, %246 : vector<64x128xf32>
    %248 = math.absf %247 : vector<64x128xf32>
    %249 = arith.addf %239, %248 : vector<64x128xf32>
    %250 = vector.extract_strided_slice %3 {offsets = [0, 33], sizes = [64, 1], strides = [1, 1]} : vector<64x128xf32> to vector<64x1xf32>
    %251 = vector.extract_strided_slice %242 {offsets = [1, 0], sizes = [1, 128], strides = [1, 1]} : vector<8x128xf32> to vector<1x128xf32>
    %252 = vector.broadcast %250 : vector<64x1xf32> to vector<64x128xf32>
    %253 = vector.broadcast %251 : vector<1x128xf32> to vector<64x128xf32>
    %254 = arith.subf %252, %253 : vector<64x128xf32>
    %255 = math.absf %254 : vector<64x128xf32>
    %256 = arith.addf %249, %255 : vector<64x128xf32>
    %257 = vector.extract_strided_slice %3 {offsets = [0, 34], sizes = [64, 1], strides = [1, 1]} : vector<64x128xf32> to vector<64x1xf32>
    %258 = vector.extract_strided_slice %242 {offsets = [2, 0], sizes = [1, 128], strides = [1, 1]} : vector<8x128xf32> to vector<1x128xf32>
    %259 = vector.broadcast %257 : vector<64x1xf32> to vector<64x128xf32>
    %260 = vector.broadcast %258 : vector<1x128xf32> to vector<64x128xf32>
    %261 = arith.subf %259, %260 : vector<64x128xf32>
    %262 = math.absf %261 : vector<64x128xf32>
    %263 = arith.addf %256, %262 : vector<64x128xf32>
    %264 = vector.extract_strided_slice %3 {offsets = [0, 35], sizes = [64, 1], strides = [1, 1]} : vector<64x128xf32> to vector<64x1xf32>
    %265 = vector.extract_strided_slice %242 {offsets = [3, 0], sizes = [1, 128], strides = [1, 1]} : vector<8x128xf32> to vector<1x128xf32>
    %266 = vector.broadcast %264 : vector<64x1xf32> to vector<64x128xf32>
    %267 = vector.broadcast %265 : vector<1x128xf32> to vector<64x128xf32>
    %268 = arith.subf %266, %267 : vector<64x128xf32>
    %269 = math.absf %268 : vector<64x128xf32>
    %270 = arith.addf %263, %269 : vector<64x128xf32>
    %271 = vector.extract_strided_slice %3 {offsets = [0, 36], sizes = [64, 1], strides = [1, 1]} : vector<64x128xf32> to vector<64x1xf32>
    %272 = vector.extract_strided_slice %242 {offsets = [4, 0], sizes = [1, 128], strides = [1, 1]} : vector<8x128xf32> to vector<1x128xf32>
    %273 = vector.broadcast %271 : vector<64x1xf32> to vector<64x128xf32>
    %274 = vector.broadcast %272 : vector<1x128xf32> to vector<64x128xf32>
    %275 = arith.subf %273, %274 : vector<64x128xf32>
    %276 = math.absf %275 : vector<64x128xf32>
    %277 = arith.addf %270, %276 : vector<64x128xf32>
    %278 = vector.extract_strided_slice %3 {offsets = [0, 37], sizes = [64, 1], strides = [1, 1]} : vector<64x128xf32> to vector<64x1xf32>
    %279 = vector.extract_strided_slice %242 {offsets = [5, 0], sizes = [1, 128], strides = [1, 1]} : vector<8x128xf32> to vector<1x128xf32>
    %280 = vector.broadcast %278 : vector<64x1xf32> to vector<64x128xf32>
    %281 = vector.broadcast %279 : vector<1x128xf32> to vector<64x128xf32>
    %282 = arith.subf %280, %281 : vector<64x128xf32>
    %283 = math.absf %282 : vector<64x128xf32>
    %284 = arith.addf %277, %283 : vector<64x128xf32>
    %285 = vector.extract_strided_slice %3 {offsets = [0, 38], sizes = [64, 1], strides = [1, 1]} : vector<64x128xf32> to vector<64x1xf32>
    %286 = vector.extract_strided_slice %242 {offsets = [6, 0], sizes = [1, 128], strides = [1, 1]} : vector<8x128xf32> to vector<1x128xf32>
    %287 = vector.broadcast %285 : vector<64x1xf32> to vector<64x128xf32>
    %288 = vector.broadcast %286 : vector<1x128xf32> to vector<64x128xf32>
    %289 = arith.subf %287, %288 : vector<64x128xf32>
    %290 = math.absf %289 : vector<64x128xf32>
    %291 = arith.addf %284, %290 : vector<64x128xf32>
    %292 = vector.extract_strided_slice %3 {offsets = [0, 39], sizes = [64, 1], strides = [1, 1]} : vector<64x128xf32> to vector<64x1xf32>
    %293 = vector.extract_strided_slice %242 {offsets = [7, 0], sizes = [1, 128], strides = [1, 1]} : vector<8x128xf32> to vector<1x128xf32>
    %294 = vector.broadcast %292 : vector<64x1xf32> to vector<64x128xf32>
    %295 = vector.broadcast %293 : vector<1x128xf32> to vector<64x128xf32>
    %296 = arith.subf %294, %295 : vector<64x128xf32>
    %297 = math.absf %296 : vector<64x128xf32>
    %298 = arith.addf %291, %297 : vector<64x128xf32>
    %299 = arith.index_cast %c0_i32 : i32 to index
    %c40 = arith.constant 40 : index
    %c0_7 = arith.constant 0 : index
    %300 = vector.load %arg3[%299, %c40, %c0_7] : memref<1x128x128xf32, #tpu.memory_space<vmem>>, vector<1x8x128xf32>
    %301 = vector.shape_cast %300 : vector<1x8x128xf32> to vector<8x128xf32>
    %302 = vector.extract_strided_slice %3 {offsets = [0, 40], sizes = [64, 1], strides = [1, 1]} : vector<64x128xf32> to vector<64x1xf32>
    %303 = vector.extract_strided_slice %301 {offsets = [0, 0], sizes = [1, 128], strides = [1, 1]} : vector<8x128xf32> to vector<1x128xf32>
    %304 = vector.broadcast %302 : vector<64x1xf32> to vector<64x128xf32>
    %305 = vector.broadcast %303 : vector<1x128xf32> to vector<64x128xf32>
    %306 = arith.subf %304, %305 : vector<64x128xf32>
    %307 = math.absf %306 : vector<64x128xf32>
    %308 = arith.addf %298, %307 : vector<64x128xf32>
    %309 = vector.extract_strided_slice %3 {offsets = [0, 41], sizes = [64, 1], strides = [1, 1]} : vector<64x128xf32> to vector<64x1xf32>
    %310 = vector.extract_strided_slice %301 {offsets = [1, 0], sizes = [1, 128], strides = [1, 1]} : vector<8x128xf32> to vector<1x128xf32>
    %311 = vector.broadcast %309 : vector<64x1xf32> to vector<64x128xf32>
    %312 = vector.broadcast %310 : vector<1x128xf32> to vector<64x128xf32>
    %313 = arith.subf %311, %312 : vector<64x128xf32>
    %314 = math.absf %313 : vector<64x128xf32>
    %315 = arith.addf %308, %314 : vector<64x128xf32>
    %316 = vector.extract_strided_slice %3 {offsets = [0, 42], sizes = [64, 1], strides = [1, 1]} : vector<64x128xf32> to vector<64x1xf32>
    %317 = vector.extract_strided_slice %301 {offsets = [2, 0], sizes = [1, 128], strides = [1, 1]} : vector<8x128xf32> to vector<1x128xf32>
    %318 = vector.broadcast %316 : vector<64x1xf32> to vector<64x128xf32>
    %319 = vector.broadcast %317 : vector<1x128xf32> to vector<64x128xf32>
    %320 = arith.subf %318, %319 : vector<64x128xf32>
    %321 = math.absf %320 : vector<64x128xf32>
    %322 = arith.addf %315, %321 : vector<64x128xf32>
    %323 = vector.extract_strided_slice %3 {offsets = [0, 43], sizes = [64, 1], strides = [1, 1]} : vector<64x128xf32> to vector<64x1xf32>
    %324 = vector.extract_strided_slice %301 {offsets = [3, 0], sizes = [1, 128], strides = [1, 1]} : vector<8x128xf32> to vector<1x128xf32>
    %325 = vector.broadcast %323 : vector<64x1xf32> to vector<64x128xf32>
    %326 = vector.broadcast %324 : vector<1x128xf32> to vector<64x128xf32>
    %327 = arith.subf %325, %326 : vector<64x128xf32>
    %328 = math.absf %327 : vector<64x128xf32>
    %329 = arith.addf %322, %328 : vector<64x128xf32>
    %330 = vector.extract_strided_slice %3 {offsets = [0, 44], sizes = [64, 1], strides = [1, 1]} : vector<64x128xf32> to vector<64x1xf32>
    %331 = vector.extract_strided_slice %301 {offsets = [4, 0], sizes = [1, 128], strides = [1, 1]} : vector<8x128xf32> to vector<1x128xf32>
    %332 = vector.broadcast %330 : vector<64x1xf32> to vector<64x128xf32>
    %333 = vector.broadcast %331 : vector<1x128xf32> to vector<64x128xf32>
    %334 = arith.subf %332, %333 : vector<64x128xf32>
    %335 = math.absf %334 : vector<64x128xf32>
    %336 = arith.addf %329, %335 : vector<64x128xf32>
    %337 = vector.extract_strided_slice %3 {offsets = [0, 45], sizes = [64, 1], strides = [1, 1]} : vector<64x128xf32> to vector<64x1xf32>
    %338 = vector.extract_strided_slice %301 {offsets = [5, 0], sizes = [1, 128], strides = [1, 1]} : vector<8x128xf32> to vector<1x128xf32>
    %339 = vector.broadcast %337 : vector<64x1xf32> to vector<64x128xf32>
    %340 = vector.broadcast %338 : vector<1x128xf32> to vector<64x128xf32>
    %341 = arith.subf %339, %340 : vector<64x128xf32>
    %342 = math.absf %341 : vector<64x128xf32>
    %343 = arith.addf %336, %342 : vector<64x128xf32>
    %344 = vector.extract_strided_slice %3 {offsets = [0, 46], sizes = [64, 1], strides = [1, 1]} : vector<64x128xf32> to vector<64x1xf32>
    %345 = vector.extract_strided_slice %301 {offsets = [6, 0], sizes = [1, 128], strides = [1, 1]} : vector<8x128xf32> to vector<1x128xf32>
    %346 = vector.broadcast %344 : vector<64x1xf32> to vector<64x128xf32>
    %347 = vector.broadcast %345 : vector<1x128xf32> to vector<64x128xf32>
    %348 = arith.subf %346, %347 : vector<64x128xf32>
    %349 = math.absf %348 : vector<64x128xf32>
    %350 = arith.addf %343, %349 : vector<64x128xf32>
    %351 = vector.extract_strided_slice %3 {offsets = [0, 47], sizes = [64, 1], strides = [1, 1]} : vector<64x128xf32> to vector<64x1xf32>
    %352 = vector.extract_strided_slice %301 {offsets = [7, 0], sizes = [1, 128], strides = [1, 1]} : vector<8x128xf32> to vector<1x128xf32>
    %353 = vector.broadcast %351 : vector<64x1xf32> to vector<64x128xf32>
    %354 = vector.broadcast %352 : vector<1x128xf32> to vector<64x128xf32>
    %355 = arith.subf %353, %354 : vector<64x128xf32>
    %356 = math.absf %355 : vector<64x128xf32>
    %357 = arith.addf %350, %356 : vector<64x128xf32>
    %358 = arith.index_cast %c0_i32 : i32 to index
    %c48 = arith.constant 48 : index
    %c0_8 = arith.constant 0 : index
    %359 = vector.load %arg3[%358, %c48, %c0_8] : memref<1x128x128xf32, #tpu.memory_space<vmem>>, vector<1x8x128xf32>
    %360 = vector.shape_cast %359 : vector<1x8x128xf32> to vector<8x128xf32>
    %361 = vector.extract_strided_slice %3 {offsets = [0, 48], sizes = [64, 1], strides = [1, 1]} : vector<64x128xf32> to vector<64x1xf32>
    %362 = vector.extract_strided_slice %360 {offsets = [0, 0], sizes = [1, 128], strides = [1, 1]} : vector<8x128xf32> to vector<1x128xf32>
    %363 = vector.broadcast %361 : vector<64x1xf32> to vector<64x128xf32>
    %364 = vector.broadcast %362 : vector<1x128xf32> to vector<64x128xf32>
    %365 = arith.subf %363, %364 : vector<64x128xf32>
    %366 = math.absf %365 : vector<64x128xf32>
    %367 = arith.addf %357, %366 : vector<64x128xf32>
    %368 = vector.extract_strided_slice %3 {offsets = [0, 49], sizes = [64, 1], strides = [1, 1]} : vector<64x128xf32> to vector<64x1xf32>
    %369 = vector.extract_strided_slice %360 {offsets = [1, 0], sizes = [1, 128], strides = [1, 1]} : vector<8x128xf32> to vector<1x128xf32>
    %370 = vector.broadcast %368 : vector<64x1xf32> to vector<64x128xf32>
    %371 = vector.broadcast %369 : vector<1x128xf32> to vector<64x128xf32>
    %372 = arith.subf %370, %371 : vector<64x128xf32>
    %373 = math.absf %372 : vector<64x128xf32>
    %374 = arith.addf %367, %373 : vector<64x128xf32>
    %375 = vector.extract_strided_slice %3 {offsets = [0, 50], sizes = [64, 1], strides = [1, 1]} : vector<64x128xf32> to vector<64x1xf32>
    %376 = vector.extract_strided_slice %360 {offsets = [2, 0], sizes = [1, 128], strides = [1, 1]} : vector<8x128xf32> to vector<1x128xf32>
    %377 = vector.broadcast %375 : vector<64x1xf32> to vector<64x128xf32>
    %378 = vector.broadcast %376 : vector<1x128xf32> to vector<64x128xf32>
    %379 = arith.subf %377, %378 : vector<64x128xf32>
    %380 = math.absf %379 : vector<64x128xf32>
    %381 = arith.addf %374, %380 : vector<64x128xf32>
    %382 = vector.extract_strided_slice %3 {offsets = [0, 51], sizes = [64, 1], strides = [1, 1]} : vector<64x128xf32> to vector<64x1xf32>
    %383 = vector.extract_strided_slice %360 {offsets = [3, 0], sizes = [1, 128], strides = [1, 1]} : vector<8x128xf32> to vector<1x128xf32>
    %384 = vector.broadcast %382 : vector<64x1xf32> to vector<64x128xf32>
    %385 = vector.broadcast %383 : vector<1x128xf32> to vector<64x128xf32>
    %386 = arith.subf %384, %385 : vector<64x128xf32>
    %387 = math.absf %386 : vector<64x128xf32>
    %388 = arith.addf %381, %387 : vector<64x128xf32>
    %389 = vector.extract_strided_slice %3 {offsets = [0, 52], sizes = [64, 1], strides = [1, 1]} : vector<64x128xf32> to vector<64x1xf32>
    %390 = vector.extract_strided_slice %360 {offsets = [4, 0], sizes = [1, 128], strides = [1, 1]} : vector<8x128xf32> to vector<1x128xf32>
    %391 = vector.broadcast %389 : vector<64x1xf32> to vector<64x128xf32>
    %392 = vector.broadcast %390 : vector<1x128xf32> to vector<64x128xf32>
    %393 = arith.subf %391, %392 : vector<64x128xf32>
    %394 = math.absf %393 : vector<64x128xf32>
    %395 = arith.addf %388, %394 : vector<64x128xf32>
    %396 = vector.extract_strided_slice %3 {offsets = [0, 53], sizes = [64, 1], strides = [1, 1]} : vector<64x128xf32> to vector<64x1xf32>
    %397 = vector.extract_strided_slice %360 {offsets = [5, 0], sizes = [1, 128], strides = [1, 1]} : vector<8x128xf32> to vector<1x128xf32>
    %398 = vector.broadcast %396 : vector<64x1xf32> to vector<64x128xf32>
    %399 = vector.broadcast %397 : vector<1x128xf32> to vector<64x128xf32>
    %400 = arith.subf %398, %399 : vector<64x128xf32>
    %401 = math.absf %400 : vector<64x128xf32>
    %402 = arith.addf %395, %401 : vector<64x128xf32>
    %403 = vector.extract_strided_slice %3 {offsets = [0, 54], sizes = [64, 1], strides = [1, 1]} : vector<64x128xf32> to vector<64x1xf32>
    %404 = vector.extract_strided_slice %360 {offsets = [6, 0], sizes = [1, 128], strides = [1, 1]} : vector<8x128xf32> to vector<1x128xf32>
    %405 = vector.broadcast %403 : vector<64x1xf32> to vector<64x128xf32>
    %406 = vector.broadcast %404 : vector<1x128xf32> to vector<64x128xf32>
    %407 = arith.subf %405, %406 : vector<64x128xf32>
    %408 = math.absf %407 : vector<64x128xf32>
    %409 = arith.addf %402, %408 : vector<64x128xf32>
    %410 = vector.extract_strided_slice %3 {offsets = [0, 55], sizes = [64, 1], strides = [1, 1]} : vector<64x128xf32> to vector<64x1xf32>
    %411 = vector.extract_strided_slice %360 {offsets = [7, 0], sizes = [1, 128], strides = [1, 1]} : vector<8x128xf32> to vector<1x128xf32>
    %412 = vector.broadcast %410 : vector<64x1xf32> to vector<64x128xf32>
    %413 = vector.broadcast %411 : vector<1x128xf32> to vector<64x128xf32>
    %414 = arith.subf %412, %413 : vector<64x128xf32>
    %415 = math.absf %414 : vector<64x128xf32>
    %416 = arith.addf %409, %415 : vector<64x128xf32>
    %417 = arith.index_cast %c0_i32 : i32 to index
    %c56 = arith.constant 56 : index
    %c0_9 = arith.constant 0 : index
    %418 = vector.load %arg3[%417, %c56, %c0_9] : memref<1x128x128xf32, #tpu.memory_space<vmem>>, vector<1x8x128xf32>
    %419 = vector.shape_cast %418 : vector<1x8x128xf32> to vector<8x128xf32>
    %420 = vector.extract_strided_slice %3 {offsets = [0, 56], sizes = [64, 1], strides = [1, 1]} : vector<64x128xf32> to vector<64x1xf32>
    %421 = vector.extract_strided_slice %419 {offsets = [0, 0], sizes = [1, 128], strides = [1, 1]} : vector<8x128xf32> to vector<1x128xf32>
    %422 = vector.broadcast %420 : vector<64x1xf32> to vector<64x128xf32>
    %423 = vector.broadcast %421 : vector<1x128xf32> to vector<64x128xf32>
    %424 = arith.subf %422, %423 : vector<64x128xf32>
    %425 = math.absf %424 : vector<64x128xf32>
    %426 = arith.addf %416, %425 : vector<64x128xf32>
    %427 = vector.extract_strided_slice %3 {offsets = [0, 57], sizes = [64, 1], strides = [1, 1]} : vector<64x128xf32> to vector<64x1xf32>
    %428 = vector.extract_strided_slice %419 {offsets = [1, 0], sizes = [1, 128], strides = [1, 1]} : vector<8x128xf32> to vector<1x128xf32>
    %429 = vector.broadcast %427 : vector<64x1xf32> to vector<64x128xf32>
    %430 = vector.broadcast %428 : vector<1x128xf32> to vector<64x128xf32>
    %431 = arith.subf %429, %430 : vector<64x128xf32>
    %432 = math.absf %431 : vector<64x128xf32>
    %433 = arith.addf %426, %432 : vector<64x128xf32>
    %434 = vector.extract_strided_slice %3 {offsets = [0, 58], sizes = [64, 1], strides = [1, 1]} : vector<64x128xf32> to vector<64x1xf32>
    %435 = vector.extract_strided_slice %419 {offsets = [2, 0], sizes = [1, 128], strides = [1, 1]} : vector<8x128xf32> to vector<1x128xf32>
    %436 = vector.broadcast %434 : vector<64x1xf32> to vector<64x128xf32>
    %437 = vector.broadcast %435 : vector<1x128xf32> to vector<64x128xf32>
    %438 = arith.subf %436, %437 : vector<64x128xf32>
    %439 = math.absf %438 : vector<64x128xf32>
    %440 = arith.addf %433, %439 : vector<64x128xf32>
    %441 = vector.extract_strided_slice %3 {offsets = [0, 59], sizes = [64, 1], strides = [1, 1]} : vector<64x128xf32> to vector<64x1xf32>
    %442 = vector.extract_strided_slice %419 {offsets = [3, 0], sizes = [1, 128], strides = [1, 1]} : vector<8x128xf32> to vector<1x128xf32>
    %443 = vector.broadcast %441 : vector<64x1xf32> to vector<64x128xf32>
    %444 = vector.broadcast %442 : vector<1x128xf32> to vector<64x128xf32>
    %445 = arith.subf %443, %444 : vector<64x128xf32>
    %446 = math.absf %445 : vector<64x128xf32>
    %447 = arith.addf %440, %446 : vector<64x128xf32>
    %448 = vector.extract_strided_slice %3 {offsets = [0, 60], sizes = [64, 1], strides = [1, 1]} : vector<64x128xf32> to vector<64x1xf32>
    %449 = vector.extract_strided_slice %419 {offsets = [4, 0], sizes = [1, 128], strides = [1, 1]} : vector<8x128xf32> to vector<1x128xf32>
    %450 = vector.broadcast %448 : vector<64x1xf32> to vector<64x128xf32>
    %451 = vector.broadcast %449 : vector<1x128xf32> to vector<64x128xf32>
    %452 = arith.subf %450, %451 : vector<64x128xf32>
    %453 = math.absf %452 : vector<64x128xf32>
    %454 = arith.addf %447, %453 : vector<64x128xf32>
    %455 = vector.extract_strided_slice %3 {offsets = [0, 61], sizes = [64, 1], strides = [1, 1]} : vector<64x128xf32> to vector<64x1xf32>
    %456 = vector.extract_strided_slice %419 {offsets = [5, 0], sizes = [1, 128], strides = [1, 1]} : vector<8x128xf32> to vector<1x128xf32>
    %457 = vector.broadcast %455 : vector<64x1xf32> to vector<64x128xf32>
    %458 = vector.broadcast %456 : vector<1x128xf32> to vector<64x128xf32>
    %459 = arith.subf %457, %458 : vector<64x128xf32>
    %460 = math.absf %459 : vector<64x128xf32>
    %461 = arith.addf %454, %460 : vector<64x128xf32>
    %462 = vector.extract_strided_slice %3 {offsets = [0, 62], sizes = [64, 1], strides = [1, 1]} : vector<64x128xf32> to vector<64x1xf32>
    %463 = vector.extract_strided_slice %419 {offsets = [6, 0], sizes = [1, 128], strides = [1, 1]} : vector<8x128xf32> to vector<1x128xf32>
    %464 = vector.broadcast %462 : vector<64x1xf32> to vector<64x128xf32>
    %465 = vector.broadcast %463 : vector<1x128xf32> to vector<64x128xf32>
    %466 = arith.subf %464, %465 : vector<64x128xf32>
    %467 = math.absf %466 : vector<64x128xf32>
    %468 = arith.addf %461, %467 : vector<64x128xf32>
    %469 = vector.extract_strided_slice %3 {offsets = [0, 63], sizes = [64, 1], strides = [1, 1]} : vector<64x128xf32> to vector<64x1xf32>
    %470 = vector.extract_strided_slice %419 {offsets = [7, 0], sizes = [1, 128], strides = [1, 1]} : vector<8x128xf32> to vector<1x128xf32>
    %471 = vector.broadcast %469 : vector<64x1xf32> to vector<64x128xf32>
    %472 = vector.broadcast %470 : vector<1x128xf32> to vector<64x128xf32>
    %473 = arith.subf %471, %472 : vector<64x128xf32>
    %474 = math.absf %473 : vector<64x128xf32>
    %475 = arith.addf %468, %474 : vector<64x128xf32>
    %476 = arith.index_cast %c0_i32 : i32 to index
    %c64 = arith.constant 64 : index
    %c0_10 = arith.constant 0 : index
    %477 = vector.load %arg3[%476, %c64, %c0_10] : memref<1x128x128xf32, #tpu.memory_space<vmem>>, vector<1x8x128xf32>
    %478 = vector.shape_cast %477 : vector<1x8x128xf32> to vector<8x128xf32>
    %479 = vector.extract_strided_slice %3 {offsets = [0, 64], sizes = [64, 1], strides = [1, 1]} : vector<64x128xf32> to vector<64x1xf32>
    %480 = vector.extract_strided_slice %478 {offsets = [0, 0], sizes = [1, 128], strides = [1, 1]} : vector<8x128xf32> to vector<1x128xf32>
    %481 = vector.broadcast %479 : vector<64x1xf32> to vector<64x128xf32>
    %482 = vector.broadcast %480 : vector<1x128xf32> to vector<64x128xf32>
    %483 = arith.subf %481, %482 : vector<64x128xf32>
    %484 = math.absf %483 : vector<64x128xf32>
    %485 = arith.addf %475, %484 : vector<64x128xf32>
    %486 = vector.extract_strided_slice %3 {offsets = [0, 65], sizes = [64, 1], strides = [1, 1]} : vector<64x128xf32> to vector<64x1xf32>
    %487 = vector.extract_strided_slice %478 {offsets = [1, 0], sizes = [1, 128], strides = [1, 1]} : vector<8x128xf32> to vector<1x128xf32>
    %488 = vector.broadcast %486 : vector<64x1xf32> to vector<64x128xf32>
    %489 = vector.broadcast %487 : vector<1x128xf32> to vector<64x128xf32>
    %490 = arith.subf %488, %489 : vector<64x128xf32>
    %491 = math.absf %490 : vector<64x128xf32>
    %492 = arith.addf %485, %491 : vector<64x128xf32>
    %493 = vector.extract_strided_slice %3 {offsets = [0, 66], sizes = [64, 1], strides = [1, 1]} : vector<64x128xf32> to vector<64x1xf32>
    %494 = vector.extract_strided_slice %478 {offsets = [2, 0], sizes = [1, 128], strides = [1, 1]} : vector<8x128xf32> to vector<1x128xf32>
    %495 = vector.broadcast %493 : vector<64x1xf32> to vector<64x128xf32>
    %496 = vector.broadcast %494 : vector<1x128xf32> to vector<64x128xf32>
    %497 = arith.subf %495, %496 : vector<64x128xf32>
    %498 = math.absf %497 : vector<64x128xf32>
    %499 = arith.addf %492, %498 : vector<64x128xf32>
    %500 = vector.extract_strided_slice %3 {offsets = [0, 67], sizes = [64, 1], strides = [1, 1]} : vector<64x128xf32> to vector<64x1xf32>
    %501 = vector.extract_strided_slice %478 {offsets = [3, 0], sizes = [1, 128], strides = [1, 1]} : vector<8x128xf32> to vector<1x128xf32>
    %502 = vector.broadcast %500 : vector<64x1xf32> to vector<64x128xf32>
    %503 = vector.broadcast %501 : vector<1x128xf32> to vector<64x128xf32>
    %504 = arith.subf %502, %503 : vector<64x128xf32>
    %505 = math.absf %504 : vector<64x128xf32>
    %506 = arith.addf %499, %505 : vector<64x128xf32>
    %507 = vector.extract_strided_slice %3 {offsets = [0, 68], sizes = [64, 1], strides = [1, 1]} : vector<64x128xf32> to vector<64x1xf32>
    %508 = vector.extract_strided_slice %478 {offsets = [4, 0], sizes = [1, 128], strides = [1, 1]} : vector<8x128xf32> to vector<1x128xf32>
    %509 = vector.broadcast %507 : vector<64x1xf32> to vector<64x128xf32>
    %510 = vector.broadcast %508 : vector<1x128xf32> to vector<64x128xf32>
    %511 = arith.subf %509, %510 : vector<64x128xf32>
    %512 = math.absf %511 : vector<64x128xf32>
    %513 = arith.addf %506, %512 : vector<64x128xf32>
    %514 = vector.extract_strided_slice %3 {offsets = [0, 69], sizes = [64, 1], strides = [1, 1]} : vector<64x128xf32> to vector<64x1xf32>
    %515 = vector.extract_strided_slice %478 {offsets = [5, 0], sizes = [1, 128], strides = [1, 1]} : vector<8x128xf32> to vector<1x128xf32>
    %516 = vector.broadcast %514 : vector<64x1xf32> to vector<64x128xf32>
    %517 = vector.broadcast %515 : vector<1x128xf32> to vector<64x128xf32>
    %518 = arith.subf %516, %517 : vector<64x128xf32>
    %519 = math.absf %518 : vector<64x128xf32>
    %520 = arith.addf %513, %519 : vector<64x128xf32>
    %521 = vector.extract_strided_slice %3 {offsets = [0, 70], sizes = [64, 1], strides = [1, 1]} : vector<64x128xf32> to vector<64x1xf32>
    %522 = vector.extract_strided_slice %478 {offsets = [6, 0], sizes = [1, 128], strides = [1, 1]} : vector<8x128xf32> to vector<1x128xf32>
    %523 = vector.broadcast %521 : vector<64x1xf32> to vector<64x128xf32>
    %524 = vector.broadcast %522 : vector<1x128xf32> to vector<64x128xf32>
    %525 = arith.subf %523, %524 : vector<64x128xf32>
    %526 = math.absf %525 : vector<64x128xf32>
    %527 = arith.addf %520, %526 : vector<64x128xf32>
    %528 = vector.extract_strided_slice %3 {offsets = [0, 71], sizes = [64, 1], strides = [1, 1]} : vector<64x128xf32> to vector<64x1xf32>
    %529 = vector.extract_strided_slice %478 {offsets = [7, 0], sizes = [1, 128], strides = [1, 1]} : vector<8x128xf32> to vector<1x128xf32>
    %530 = vector.broadcast %528 : vector<64x1xf32> to vector<64x128xf32>
    %531 = vector.broadcast %529 : vector<1x128xf32> to vector<64x128xf32>
    %532 = arith.subf %530, %531 : vector<64x128xf32>
    %533 = math.absf %532 : vector<64x128xf32>
    %534 = arith.addf %527, %533 : vector<64x128xf32>
    %535 = arith.index_cast %c0_i32 : i32 to index
    %c72 = arith.constant 72 : index
    %c0_11 = arith.constant 0 : index
    %536 = vector.load %arg3[%535, %c72, %c0_11] : memref<1x128x128xf32, #tpu.memory_space<vmem>>, vector<1x8x128xf32>
    %537 = vector.shape_cast %536 : vector<1x8x128xf32> to vector<8x128xf32>
    %538 = vector.extract_strided_slice %3 {offsets = [0, 72], sizes = [64, 1], strides = [1, 1]} : vector<64x128xf32> to vector<64x1xf32>
    %539 = vector.extract_strided_slice %537 {offsets = [0, 0], sizes = [1, 128], strides = [1, 1]} : vector<8x128xf32> to vector<1x128xf32>
    %540 = vector.broadcast %538 : vector<64x1xf32> to vector<64x128xf32>
    %541 = vector.broadcast %539 : vector<1x128xf32> to vector<64x128xf32>
    %542 = arith.subf %540, %541 : vector<64x128xf32>
    %543 = math.absf %542 : vector<64x128xf32>
    %544 = arith.addf %534, %543 : vector<64x128xf32>
    %545 = vector.extract_strided_slice %3 {offsets = [0, 73], sizes = [64, 1], strides = [1, 1]} : vector<64x128xf32> to vector<64x1xf32>
    %546 = vector.extract_strided_slice %537 {offsets = [1, 0], sizes = [1, 128], strides = [1, 1]} : vector<8x128xf32> to vector<1x128xf32>
    %547 = vector.broadcast %545 : vector<64x1xf32> to vector<64x128xf32>
    %548 = vector.broadcast %546 : vector<1x128xf32> to vector<64x128xf32>
    %549 = arith.subf %547, %548 : vector<64x128xf32>
    %550 = math.absf %549 : vector<64x128xf32>
    %551 = arith.addf %544, %550 : vector<64x128xf32>
    %552 = vector.extract_strided_slice %3 {offsets = [0, 74], sizes = [64, 1], strides = [1, 1]} : vector<64x128xf32> to vector<64x1xf32>
    %553 = vector.extract_strided_slice %537 {offsets = [2, 0], sizes = [1, 128], strides = [1, 1]} : vector<8x128xf32> to vector<1x128xf32>
    %554 = vector.broadcast %552 : vector<64x1xf32> to vector<64x128xf32>
    %555 = vector.broadcast %553 : vector<1x128xf32> to vector<64x128xf32>
    %556 = arith.subf %554, %555 : vector<64x128xf32>
    %557 = math.absf %556 : vector<64x128xf32>
    %558 = arith.addf %551, %557 : vector<64x128xf32>
    %559 = vector.extract_strided_slice %3 {offsets = [0, 75], sizes = [64, 1], strides = [1, 1]} : vector<64x128xf32> to vector<64x1xf32>
    %560 = vector.extract_strided_slice %537 {offsets = [3, 0], sizes = [1, 128], strides = [1, 1]} : vector<8x128xf32> to vector<1x128xf32>
    %561 = vector.broadcast %559 : vector<64x1xf32> to vector<64x128xf32>
    %562 = vector.broadcast %560 : vector<1x128xf32> to vector<64x128xf32>
    %563 = arith.subf %561, %562 : vector<64x128xf32>
    %564 = math.absf %563 : vector<64x128xf32>
    %565 = arith.addf %558, %564 : vector<64x128xf32>
    %566 = vector.extract_strided_slice %3 {offsets = [0, 76], sizes = [64, 1], strides = [1, 1]} : vector<64x128xf32> to vector<64x1xf32>
    %567 = vector.extract_strided_slice %537 {offsets = [4, 0], sizes = [1, 128], strides = [1, 1]} : vector<8x128xf32> to vector<1x128xf32>
    %568 = vector.broadcast %566 : vector<64x1xf32> to vector<64x128xf32>
    %569 = vector.broadcast %567 : vector<1x128xf32> to vector<64x128xf32>
    %570 = arith.subf %568, %569 : vector<64x128xf32>
    %571 = math.absf %570 : vector<64x128xf32>
    %572 = arith.addf %565, %571 : vector<64x128xf32>
    %573 = vector.extract_strided_slice %3 {offsets = [0, 77], sizes = [64, 1], strides = [1, 1]} : vector<64x128xf32> to vector<64x1xf32>
    %574 = vector.extract_strided_slice %537 {offsets = [5, 0], sizes = [1, 128], strides = [1, 1]} : vector<8x128xf32> to vector<1x128xf32>
    %575 = vector.broadcast %573 : vector<64x1xf32> to vector<64x128xf32>
    %576 = vector.broadcast %574 : vector<1x128xf32> to vector<64x128xf32>
    %577 = arith.subf %575, %576 : vector<64x128xf32>
    %578 = math.absf %577 : vector<64x128xf32>
    %579 = arith.addf %572, %578 : vector<64x128xf32>
    %580 = vector.extract_strided_slice %3 {offsets = [0, 78], sizes = [64, 1], strides = [1, 1]} : vector<64x128xf32> to vector<64x1xf32>
    %581 = vector.extract_strided_slice %537 {offsets = [6, 0], sizes = [1, 128], strides = [1, 1]} : vector<8x128xf32> to vector<1x128xf32>
    %582 = vector.broadcast %580 : vector<64x1xf32> to vector<64x128xf32>
    %583 = vector.broadcast %581 : vector<1x128xf32> to vector<64x128xf32>
    %584 = arith.subf %582, %583 : vector<64x128xf32>
    %585 = math.absf %584 : vector<64x128xf32>
    %586 = arith.addf %579, %585 : vector<64x128xf32>
    %587 = vector.extract_strided_slice %3 {offsets = [0, 79], sizes = [64, 1], strides = [1, 1]} : vector<64x128xf32> to vector<64x1xf32>
    %588 = vector.extract_strided_slice %537 {offsets = [7, 0], sizes = [1, 128], strides = [1, 1]} : vector<8x128xf32> to vector<1x128xf32>
    %589 = vector.broadcast %587 : vector<64x1xf32> to vector<64x128xf32>
    %590 = vector.broadcast %588 : vector<1x128xf32> to vector<64x128xf32>
    %591 = arith.subf %589, %590 : vector<64x128xf32>
    %592 = math.absf %591 : vector<64x128xf32>
    %593 = arith.addf %586, %592 : vector<64x128xf32>
    %594 = arith.index_cast %c0_i32 : i32 to index
    %c80 = arith.constant 80 : index
    %c0_12 = arith.constant 0 : index
    %595 = vector.load %arg3[%594, %c80, %c0_12] : memref<1x128x128xf32, #tpu.memory_space<vmem>>, vector<1x8x128xf32>
    %596 = vector.shape_cast %595 : vector<1x8x128xf32> to vector<8x128xf32>
    %597 = vector.extract_strided_slice %3 {offsets = [0, 80], sizes = [64, 1], strides = [1, 1]} : vector<64x128xf32> to vector<64x1xf32>
    %598 = vector.extract_strided_slice %596 {offsets = [0, 0], sizes = [1, 128], strides = [1, 1]} : vector<8x128xf32> to vector<1x128xf32>
    %599 = vector.broadcast %597 : vector<64x1xf32> to vector<64x128xf32>
    %600 = vector.broadcast %598 : vector<1x128xf32> to vector<64x128xf32>
    %601 = arith.subf %599, %600 : vector<64x128xf32>
    %602 = math.absf %601 : vector<64x128xf32>
    %603 = arith.addf %593, %602 : vector<64x128xf32>
    %604 = vector.extract_strided_slice %3 {offsets = [0, 81], sizes = [64, 1], strides = [1, 1]} : vector<64x128xf32> to vector<64x1xf32>
    %605 = vector.extract_strided_slice %596 {offsets = [1, 0], sizes = [1, 128], strides = [1, 1]} : vector<8x128xf32> to vector<1x128xf32>
    %606 = vector.broadcast %604 : vector<64x1xf32> to vector<64x128xf32>
    %607 = vector.broadcast %605 : vector<1x128xf32> to vector<64x128xf32>
    %608 = arith.subf %606, %607 : vector<64x128xf32>
    %609 = math.absf %608 : vector<64x128xf32>
    %610 = arith.addf %603, %609 : vector<64x128xf32>
    %611 = vector.extract_strided_slice %3 {offsets = [0, 82], sizes = [64, 1], strides = [1, 1]} : vector<64x128xf32> to vector<64x1xf32>
    %612 = vector.extract_strided_slice %596 {offsets = [2, 0], sizes = [1, 128], strides = [1, 1]} : vector<8x128xf32> to vector<1x128xf32>
    %613 = vector.broadcast %611 : vector<64x1xf32> to vector<64x128xf32>
    %614 = vector.broadcast %612 : vector<1x128xf32> to vector<64x128xf32>
    %615 = arith.subf %613, %614 : vector<64x128xf32>
    %616 = math.absf %615 : vector<64x128xf32>
    %617 = arith.addf %610, %616 : vector<64x128xf32>
    %618 = vector.extract_strided_slice %3 {offsets = [0, 83], sizes = [64, 1], strides = [1, 1]} : vector<64x128xf32> to vector<64x1xf32>
    %619 = vector.extract_strided_slice %596 {offsets = [3, 0], sizes = [1, 128], strides = [1, 1]} : vector<8x128xf32> to vector<1x128xf32>
    %620 = vector.broadcast %618 : vector<64x1xf32> to vector<64x128xf32>
    %621 = vector.broadcast %619 : vector<1x128xf32> to vector<64x128xf32>
    %622 = arith.subf %620, %621 : vector<64x128xf32>
    %623 = math.absf %622 : vector<64x128xf32>
    %624 = arith.addf %617, %623 : vector<64x128xf32>
    %625 = vector.extract_strided_slice %3 {offsets = [0, 84], sizes = [64, 1], strides = [1, 1]} : vector<64x128xf32> to vector<64x1xf32>
    %626 = vector.extract_strided_slice %596 {offsets = [4, 0], sizes = [1, 128], strides = [1, 1]} : vector<8x128xf32> to vector<1x128xf32>
    %627 = vector.broadcast %625 : vector<64x1xf32> to vector<64x128xf32>
    %628 = vector.broadcast %626 : vector<1x128xf32> to vector<64x128xf32>
    %629 = arith.subf %627, %628 : vector<64x128xf32>
    %630 = math.absf %629 : vector<64x128xf32>
    %631 = arith.addf %624, %630 : vector<64x128xf32>
    %632 = vector.extract_strided_slice %3 {offsets = [0, 85], sizes = [64, 1], strides = [1, 1]} : vector<64x128xf32> to vector<64x1xf32>
    %633 = vector.extract_strided_slice %596 {offsets = [5, 0], sizes = [1, 128], strides = [1, 1]} : vector<8x128xf32> to vector<1x128xf32>
    %634 = vector.broadcast %632 : vector<64x1xf32> to vector<64x128xf32>
    %635 = vector.broadcast %633 : vector<1x128xf32> to vector<64x128xf32>
    %636 = arith.subf %634, %635 : vector<64x128xf32>
    %637 = math.absf %636 : vector<64x128xf32>
    %638 = arith.addf %631, %637 : vector<64x128xf32>
    %639 = vector.extract_strided_slice %3 {offsets = [0, 86], sizes = [64, 1], strides = [1, 1]} : vector<64x128xf32> to vector<64x1xf32>
    %640 = vector.extract_strided_slice %596 {offsets = [6, 0], sizes = [1, 128], strides = [1, 1]} : vector<8x128xf32> to vector<1x128xf32>
    %641 = vector.broadcast %639 : vector<64x1xf32> to vector<64x128xf32>
    %642 = vector.broadcast %640 : vector<1x128xf32> to vector<64x128xf32>
    %643 = arith.subf %641, %642 : vector<64x128xf32>
    %644 = math.absf %643 : vector<64x128xf32>
    %645 = arith.addf %638, %644 : vector<64x128xf32>
    %646 = vector.extract_strided_slice %3 {offsets = [0, 87], sizes = [64, 1], strides = [1, 1]} : vector<64x128xf32> to vector<64x1xf32>
    %647 = vector.extract_strided_slice %596 {offsets = [7, 0], sizes = [1, 128], strides = [1, 1]} : vector<8x128xf32> to vector<1x128xf32>
    %648 = vector.broadcast %646 : vector<64x1xf32> to vector<64x128xf32>
    %649 = vector.broadcast %647 : vector<1x128xf32> to vector<64x128xf32>
    %650 = arith.subf %648, %649 : vector<64x128xf32>
    %651 = math.absf %650 : vector<64x128xf32>
    %652 = arith.addf %645, %651 : vector<64x128xf32>
    %653 = arith.index_cast %c0_i32 : i32 to index
    %c88 = arith.constant 88 : index
    %c0_13 = arith.constant 0 : index
    %654 = vector.load %arg3[%653, %c88, %c0_13] : memref<1x128x128xf32, #tpu.memory_space<vmem>>, vector<1x8x128xf32>
    %655 = vector.shape_cast %654 : vector<1x8x128xf32> to vector<8x128xf32>
    %656 = vector.extract_strided_slice %3 {offsets = [0, 88], sizes = [64, 1], strides = [1, 1]} : vector<64x128xf32> to vector<64x1xf32>
    %657 = vector.extract_strided_slice %655 {offsets = [0, 0], sizes = [1, 128], strides = [1, 1]} : vector<8x128xf32> to vector<1x128xf32>
    %658 = vector.broadcast %656 : vector<64x1xf32> to vector<64x128xf32>
    %659 = vector.broadcast %657 : vector<1x128xf32> to vector<64x128xf32>
    %660 = arith.subf %658, %659 : vector<64x128xf32>
    %661 = math.absf %660 : vector<64x128xf32>
    %662 = arith.addf %652, %661 : vector<64x128xf32>
    %663 = vector.extract_strided_slice %3 {offsets = [0, 89], sizes = [64, 1], strides = [1, 1]} : vector<64x128xf32> to vector<64x1xf32>
    %664 = vector.extract_strided_slice %655 {offsets = [1, 0], sizes = [1, 128], strides = [1, 1]} : vector<8x128xf32> to vector<1x128xf32>
    %665 = vector.broadcast %663 : vector<64x1xf32> to vector<64x128xf32>
    %666 = vector.broadcast %664 : vector<1x128xf32> to vector<64x128xf32>
    %667 = arith.subf %665, %666 : vector<64x128xf32>
    %668 = math.absf %667 : vector<64x128xf32>
    %669 = arith.addf %662, %668 : vector<64x128xf32>
    %670 = vector.extract_strided_slice %3 {offsets = [0, 90], sizes = [64, 1], strides = [1, 1]} : vector<64x128xf32> to vector<64x1xf32>
    %671 = vector.extract_strided_slice %655 {offsets = [2, 0], sizes = [1, 128], strides = [1, 1]} : vector<8x128xf32> to vector<1x128xf32>
    %672 = vector.broadcast %670 : vector<64x1xf32> to vector<64x128xf32>
    %673 = vector.broadcast %671 : vector<1x128xf32> to vector<64x128xf32>
    %674 = arith.subf %672, %673 : vector<64x128xf32>
    %675 = math.absf %674 : vector<64x128xf32>
    %676 = arith.addf %669, %675 : vector<64x128xf32>
    %677 = vector.extract_strided_slice %3 {offsets = [0, 91], sizes = [64, 1], strides = [1, 1]} : vector<64x128xf32> to vector<64x1xf32>
    %678 = vector.extract_strided_slice %655 {offsets = [3, 0], sizes = [1, 128], strides = [1, 1]} : vector<8x128xf32> to vector<1x128xf32>
    %679 = vector.broadcast %677 : vector<64x1xf32> to vector<64x128xf32>
    %680 = vector.broadcast %678 : vector<1x128xf32> to vector<64x128xf32>
    %681 = arith.subf %679, %680 : vector<64x128xf32>
    %682 = math.absf %681 : vector<64x128xf32>
    %683 = arith.addf %676, %682 : vector<64x128xf32>
    %684 = vector.extract_strided_slice %3 {offsets = [0, 92], sizes = [64, 1], strides = [1, 1]} : vector<64x128xf32> to vector<64x1xf32>
    %685 = vector.extract_strided_slice %655 {offsets = [4, 0], sizes = [1, 128], strides = [1, 1]} : vector<8x128xf32> to vector<1x128xf32>
    %686 = vector.broadcast %684 : vector<64x1xf32> to vector<64x128xf32>
    %687 = vector.broadcast %685 : vector<1x128xf32> to vector<64x128xf32>
    %688 = arith.subf %686, %687 : vector<64x128xf32>
    %689 = math.absf %688 : vector<64x128xf32>
    %690 = arith.addf %683, %689 : vector<64x128xf32>
    %691 = vector.extract_strided_slice %3 {offsets = [0, 93], sizes = [64, 1], strides = [1, 1]} : vector<64x128xf32> to vector<64x1xf32>
    %692 = vector.extract_strided_slice %655 {offsets = [5, 0], sizes = [1, 128], strides = [1, 1]} : vector<8x128xf32> to vector<1x128xf32>
    %693 = vector.broadcast %691 : vector<64x1xf32> to vector<64x128xf32>
    %694 = vector.broadcast %692 : vector<1x128xf32> to vector<64x128xf32>
    %695 = arith.subf %693, %694 : vector<64x128xf32>
    %696 = math.absf %695 : vector<64x128xf32>
    %697 = arith.addf %690, %696 : vector<64x128xf32>
    %698 = vector.extract_strided_slice %3 {offsets = [0, 94], sizes = [64, 1], strides = [1, 1]} : vector<64x128xf32> to vector<64x1xf32>
    %699 = vector.extract_strided_slice %655 {offsets = [6, 0], sizes = [1, 128], strides = [1, 1]} : vector<8x128xf32> to vector<1x128xf32>
    %700 = vector.broadcast %698 : vector<64x1xf32> to vector<64x128xf32>
    %701 = vector.broadcast %699 : vector<1x128xf32> to vector<64x128xf32>
    %702 = arith.subf %700, %701 : vector<64x128xf32>
    %703 = math.absf %702 : vector<64x128xf32>
    %704 = arith.addf %697, %703 : vector<64x128xf32>
    %705 = vector.extract_strided_slice %3 {offsets = [0, 95], sizes = [64, 1], strides = [1, 1]} : vector<64x128xf32> to vector<64x1xf32>
    %706 = vector.extract_strided_slice %655 {offsets = [7, 0], sizes = [1, 128], strides = [1, 1]} : vector<8x128xf32> to vector<1x128xf32>
    %707 = vector.broadcast %705 : vector<64x1xf32> to vector<64x128xf32>
    %708 = vector.broadcast %706 : vector<1x128xf32> to vector<64x128xf32>
    %709 = arith.subf %707, %708 : vector<64x128xf32>
    %710 = math.absf %709 : vector<64x128xf32>
    %711 = arith.addf %704, %710 : vector<64x128xf32>
    %712 = arith.index_cast %c0_i32 : i32 to index
    %c96 = arith.constant 96 : index
    %c0_14 = arith.constant 0 : index
    %713 = vector.load %arg3[%712, %c96, %c0_14] : memref<1x128x128xf32, #tpu.memory_space<vmem>>, vector<1x8x128xf32>
    %714 = vector.shape_cast %713 : vector<1x8x128xf32> to vector<8x128xf32>
    %715 = vector.extract_strided_slice %3 {offsets = [0, 96], sizes = [64, 1], strides = [1, 1]} : vector<64x128xf32> to vector<64x1xf32>
    %716 = vector.extract_strided_slice %714 {offsets = [0, 0], sizes = [1, 128], strides = [1, 1]} : vector<8x128xf32> to vector<1x128xf32>
    %717 = vector.broadcast %715 : vector<64x1xf32> to vector<64x128xf32>
    %718 = vector.broadcast %716 : vector<1x128xf32> to vector<64x128xf32>
    %719 = arith.subf %717, %718 : vector<64x128xf32>
    %720 = math.absf %719 : vector<64x128xf32>
    %721 = arith.addf %711, %720 : vector<64x128xf32>
    %722 = vector.extract_strided_slice %3 {offsets = [0, 97], sizes = [64, 1], strides = [1, 1]} : vector<64x128xf32> to vector<64x1xf32>
    %723 = vector.extract_strided_slice %714 {offsets = [1, 0], sizes = [1, 128], strides = [1, 1]} : vector<8x128xf32> to vector<1x128xf32>
    %724 = vector.broadcast %722 : vector<64x1xf32> to vector<64x128xf32>
    %725 = vector.broadcast %723 : vector<1x128xf32> to vector<64x128xf32>
    %726 = arith.subf %724, %725 : vector<64x128xf32>
    %727 = math.absf %726 : vector<64x128xf32>
    %728 = arith.addf %721, %727 : vector<64x128xf32>
    %729 = vector.extract_strided_slice %3 {offsets = [0, 98], sizes = [64, 1], strides = [1, 1]} : vector<64x128xf32> to vector<64x1xf32>
    %730 = vector.extract_strided_slice %714 {offsets = [2, 0], sizes = [1, 128], strides = [1, 1]} : vector<8x128xf32> to vector<1x128xf32>
    %731 = vector.broadcast %729 : vector<64x1xf32> to vector<64x128xf32>
    %732 = vector.broadcast %730 : vector<1x128xf32> to vector<64x128xf32>
    %733 = arith.subf %731, %732 : vector<64x128xf32>
    %734 = math.absf %733 : vector<64x128xf32>
    %735 = arith.addf %728, %734 : vector<64x128xf32>
    %736 = vector.extract_strided_slice %3 {offsets = [0, 99], sizes = [64, 1], strides = [1, 1]} : vector<64x128xf32> to vector<64x1xf32>
    %737 = vector.extract_strided_slice %714 {offsets = [3, 0], sizes = [1, 128], strides = [1, 1]} : vector<8x128xf32> to vector<1x128xf32>
    %738 = vector.broadcast %736 : vector<64x1xf32> to vector<64x128xf32>
    %739 = vector.broadcast %737 : vector<1x128xf32> to vector<64x128xf32>
    %740 = arith.subf %738, %739 : vector<64x128xf32>
    %741 = math.absf %740 : vector<64x128xf32>
    %742 = arith.addf %735, %741 : vector<64x128xf32>
    %743 = vector.extract_strided_slice %3 {offsets = [0, 100], sizes = [64, 1], strides = [1, 1]} : vector<64x128xf32> to vector<64x1xf32>
    %744 = vector.extract_strided_slice %714 {offsets = [4, 0], sizes = [1, 128], strides = [1, 1]} : vector<8x128xf32> to vector<1x128xf32>
    %745 = vector.broadcast %743 : vector<64x1xf32> to vector<64x128xf32>
    %746 = vector.broadcast %744 : vector<1x128xf32> to vector<64x128xf32>
    %747 = arith.subf %745, %746 : vector<64x128xf32>
    %748 = math.absf %747 : vector<64x128xf32>
    %749 = arith.addf %742, %748 : vector<64x128xf32>
    %750 = vector.extract_strided_slice %3 {offsets = [0, 101], sizes = [64, 1], strides = [1, 1]} : vector<64x128xf32> to vector<64x1xf32>
    %751 = vector.extract_strided_slice %714 {offsets = [5, 0], sizes = [1, 128], strides = [1, 1]} : vector<8x128xf32> to vector<1x128xf32>
    %752 = vector.broadcast %750 : vector<64x1xf32> to vector<64x128xf32>
    %753 = vector.broadcast %751 : vector<1x128xf32> to vector<64x128xf32>
    %754 = arith.subf %752, %753 : vector<64x128xf32>
    %755 = math.absf %754 : vector<64x128xf32>
    %756 = arith.addf %749, %755 : vector<64x128xf32>
    %757 = vector.extract_strided_slice %3 {offsets = [0, 102], sizes = [64, 1], strides = [1, 1]} : vector<64x128xf32> to vector<64x1xf32>
    %758 = vector.extract_strided_slice %714 {offsets = [6, 0], sizes = [1, 128], strides = [1, 1]} : vector<8x128xf32> to vector<1x128xf32>
    %759 = vector.broadcast %757 : vector<64x1xf32> to vector<64x128xf32>
    %760 = vector.broadcast %758 : vector<1x128xf32> to vector<64x128xf32>
    %761 = arith.subf %759, %760 : vector<64x128xf32>
    %762 = math.absf %761 : vector<64x128xf32>
    %763 = arith.addf %756, %762 : vector<64x128xf32>
    %764 = vector.extract_strided_slice %3 {offsets = [0, 103], sizes = [64, 1], strides = [1, 1]} : vector<64x128xf32> to vector<64x1xf32>
    %765 = vector.extract_strided_slice %714 {offsets = [7, 0], sizes = [1, 128], strides = [1, 1]} : vector<8x128xf32> to vector<1x128xf32>
    %766 = vector.broadcast %764 : vector<64x1xf32> to vector<64x128xf32>
    %767 = vector.broadcast %765 : vector<1x128xf32> to vector<64x128xf32>
    %768 = arith.subf %766, %767 : vector<64x128xf32>
    %769 = math.absf %768 : vector<64x128xf32>
    %770 = arith.addf %763, %769 : vector<64x128xf32>
    %771 = arith.index_cast %c0_i32 : i32 to index
    %c104 = arith.constant 104 : index
    %c0_15 = arith.constant 0 : index
    %772 = vector.load %arg3[%771, %c104, %c0_15] : memref<1x128x128xf32, #tpu.memory_space<vmem>>, vector<1x8x128xf32>
    %773 = vector.shape_cast %772 : vector<1x8x128xf32> to vector<8x128xf32>
    %774 = vector.extract_strided_slice %3 {offsets = [0, 104], sizes = [64, 1], strides = [1, 1]} : vector<64x128xf32> to vector<64x1xf32>
    %775 = vector.extract_strided_slice %773 {offsets = [0, 0], sizes = [1, 128], strides = [1, 1]} : vector<8x128xf32> to vector<1x128xf32>
    %776 = vector.broadcast %774 : vector<64x1xf32> to vector<64x128xf32>
    %777 = vector.broadcast %775 : vector<1x128xf32> to vector<64x128xf32>
    %778 = arith.subf %776, %777 : vector<64x128xf32>
    %779 = math.absf %778 : vector<64x128xf32>
    %780 = arith.addf %770, %779 : vector<64x128xf32>
    %781 = vector.extract_strided_slice %3 {offsets = [0, 105], sizes = [64, 1], strides = [1, 1]} : vector<64x128xf32> to vector<64x1xf32>
    %782 = vector.extract_strided_slice %773 {offsets = [1, 0], sizes = [1, 128], strides = [1, 1]} : vector<8x128xf32> to vector<1x128xf32>
    %783 = vector.broadcast %781 : vector<64x1xf32> to vector<64x128xf32>
    %784 = vector.broadcast %782 : vector<1x128xf32> to vector<64x128xf32>
    %785 = arith.subf %783, %784 : vector<64x128xf32>
    %786 = math.absf %785 : vector<64x128xf32>
    %787 = arith.addf %780, %786 : vector<64x128xf32>
    %788 = vector.extract_strided_slice %3 {offsets = [0, 106], sizes = [64, 1], strides = [1, 1]} : vector<64x128xf32> to vector<64x1xf32>
    %789 = vector.extract_strided_slice %773 {offsets = [2, 0], sizes = [1, 128], strides = [1, 1]} : vector<8x128xf32> to vector<1x128xf32>
    %790 = vector.broadcast %788 : vector<64x1xf32> to vector<64x128xf32>
    %791 = vector.broadcast %789 : vector<1x128xf32> to vector<64x128xf32>
    %792 = arith.subf %790, %791 : vector<64x128xf32>
    %793 = math.absf %792 : vector<64x128xf32>
    %794 = arith.addf %787, %793 : vector<64x128xf32>
    %795 = vector.extract_strided_slice %3 {offsets = [0, 107], sizes = [64, 1], strides = [1, 1]} : vector<64x128xf32> to vector<64x1xf32>
    %796 = vector.extract_strided_slice %773 {offsets = [3, 0], sizes = [1, 128], strides = [1, 1]} : vector<8x128xf32> to vector<1x128xf32>
    %797 = vector.broadcast %795 : vector<64x1xf32> to vector<64x128xf32>
    %798 = vector.broadcast %796 : vector<1x128xf32> to vector<64x128xf32>
    %799 = arith.subf %797, %798 : vector<64x128xf32>
    %800 = math.absf %799 : vector<64x128xf32>
    %801 = arith.addf %794, %800 : vector<64x128xf32>
    %802 = vector.extract_strided_slice %3 {offsets = [0, 108], sizes = [64, 1], strides = [1, 1]} : vector<64x128xf32> to vector<64x1xf32>
    %803 = vector.extract_strided_slice %773 {offsets = [4, 0], sizes = [1, 128], strides = [1, 1]} : vector<8x128xf32> to vector<1x128xf32>
    %804 = vector.broadcast %802 : vector<64x1xf32> to vector<64x128xf32>
    %805 = vector.broadcast %803 : vector<1x128xf32> to vector<64x128xf32>
    %806 = arith.subf %804, %805 : vector<64x128xf32>
    %807 = math.absf %806 : vector<64x128xf32>
    %808 = arith.addf %801, %807 : vector<64x128xf32>
    %809 = vector.extract_strided_slice %3 {offsets = [0, 109], sizes = [64, 1], strides = [1, 1]} : vector<64x128xf32> to vector<64x1xf32>
    %810 = vector.extract_strided_slice %773 {offsets = [5, 0], sizes = [1, 128], strides = [1, 1]} : vector<8x128xf32> to vector<1x128xf32>
    %811 = vector.broadcast %809 : vector<64x1xf32> to vector<64x128xf32>
    %812 = vector.broadcast %810 : vector<1x128xf32> to vector<64x128xf32>
    %813 = arith.subf %811, %812 : vector<64x128xf32>
    %814 = math.absf %813 : vector<64x128xf32>
    %815 = arith.addf %808, %814 : vector<64x128xf32>
    %816 = vector.extract_strided_slice %3 {offsets = [0, 110], sizes = [64, 1], strides = [1, 1]} : vector<64x128xf32> to vector<64x1xf32>
    %817 = vector.extract_strided_slice %773 {offsets = [6, 0], sizes = [1, 128], strides = [1, 1]} : vector<8x128xf32> to vector<1x128xf32>
    %818 = vector.broadcast %816 : vector<64x1xf32> to vector<64x128xf32>
    %819 = vector.broadcast %817 : vector<1x128xf32> to vector<64x128xf32>
    %820 = arith.subf %818, %819 : vector<64x128xf32>
    %821 = math.absf %820 : vector<64x128xf32>
    %822 = arith.addf %815, %821 : vector<64x128xf32>
    %823 = vector.extract_strided_slice %3 {offsets = [0, 111], sizes = [64, 1], strides = [1, 1]} : vector<64x128xf32> to vector<64x1xf32>
    %824 = vector.extract_strided_slice %773 {offsets = [7, 0], sizes = [1, 128], strides = [1, 1]} : vector<8x128xf32> to vector<1x128xf32>
    %825 = vector.broadcast %823 : vector<64x1xf32> to vector<64x128xf32>
    %826 = vector.broadcast %824 : vector<1x128xf32> to vector<64x128xf32>
    %827 = arith.subf %825, %826 : vector<64x128xf32>
    %828 = math.absf %827 : vector<64x128xf32>
    %829 = arith.addf %822, %828 : vector<64x128xf32>
    %830 = arith.index_cast %c0_i32 : i32 to index
    %c112 = arith.constant 112 : index
    %c0_16 = arith.constant 0 : index
    %831 = vector.load %arg3[%830, %c112, %c0_16] : memref<1x128x128xf32, #tpu.memory_space<vmem>>, vector<1x8x128xf32>
    %832 = vector.shape_cast %831 : vector<1x8x128xf32> to vector<8x128xf32>
    %833 = vector.extract_strided_slice %3 {offsets = [0, 112], sizes = [64, 1], strides = [1, 1]} : vector<64x128xf32> to vector<64x1xf32>
    %834 = vector.extract_strided_slice %832 {offsets = [0, 0], sizes = [1, 128], strides = [1, 1]} : vector<8x128xf32> to vector<1x128xf32>
    %835 = vector.broadcast %833 : vector<64x1xf32> to vector<64x128xf32>
    %836 = vector.broadcast %834 : vector<1x128xf32> to vector<64x128xf32>
    %837 = arith.subf %835, %836 : vector<64x128xf32>
    %838 = math.absf %837 : vector<64x128xf32>
    %839 = arith.addf %829, %838 : vector<64x128xf32>
    %840 = vector.extract_strided_slice %3 {offsets = [0, 113], sizes = [64, 1], strides = [1, 1]} : vector<64x128xf32> to vector<64x1xf32>
    %841 = vector.extract_strided_slice %832 {offsets = [1, 0], sizes = [1, 128], strides = [1, 1]} : vector<8x128xf32> to vector<1x128xf32>
    %842 = vector.broadcast %840 : vector<64x1xf32> to vector<64x128xf32>
    %843 = vector.broadcast %841 : vector<1x128xf32> to vector<64x128xf32>
    %844 = arith.subf %842, %843 : vector<64x128xf32>
    %845 = math.absf %844 : vector<64x128xf32>
    %846 = arith.addf %839, %845 : vector<64x128xf32>
    %847 = vector.extract_strided_slice %3 {offsets = [0, 114], sizes = [64, 1], strides = [1, 1]} : vector<64x128xf32> to vector<64x1xf32>
    %848 = vector.extract_strided_slice %832 {offsets = [2, 0], sizes = [1, 128], strides = [1, 1]} : vector<8x128xf32> to vector<1x128xf32>
    %849 = vector.broadcast %847 : vector<64x1xf32> to vector<64x128xf32>
    %850 = vector.broadcast %848 : vector<1x128xf32> to vector<64x128xf32>
    %851 = arith.subf %849, %850 : vector<64x128xf32>
    %852 = math.absf %851 : vector<64x128xf32>
    %853 = arith.addf %846, %852 : vector<64x128xf32>
    %854 = vector.extract_strided_slice %3 {offsets = [0, 115], sizes = [64, 1], strides = [1, 1]} : vector<64x128xf32> to vector<64x1xf32>
    %855 = vector.extract_strided_slice %832 {offsets = [3, 0], sizes = [1, 128], strides = [1, 1]} : vector<8x128xf32> to vector<1x128xf32>
    %856 = vector.broadcast %854 : vector<64x1xf32> to vector<64x128xf32>
    %857 = vector.broadcast %855 : vector<1x128xf32> to vector<64x128xf32>
    %858 = arith.subf %856, %857 : vector<64x128xf32>
    %859 = math.absf %858 : vector<64x128xf32>
    %860 = arith.addf %853, %859 : vector<64x128xf32>
    %861 = vector.extract_strided_slice %3 {offsets = [0, 116], sizes = [64, 1], strides = [1, 1]} : vector<64x128xf32> to vector<64x1xf32>
    %862 = vector.extract_strided_slice %832 {offsets = [4, 0], sizes = [1, 128], strides = [1, 1]} : vector<8x128xf32> to vector<1x128xf32>
    %863 = vector.broadcast %861 : vector<64x1xf32> to vector<64x128xf32>
    %864 = vector.broadcast %862 : vector<1x128xf32> to vector<64x128xf32>
    %865 = arith.subf %863, %864 : vector<64x128xf32>
    %866 = math.absf %865 : vector<64x128xf32>
    %867 = arith.addf %860, %866 : vector<64x128xf32>
    %868 = vector.extract_strided_slice %3 {offsets = [0, 117], sizes = [64, 1], strides = [1, 1]} : vector<64x128xf32> to vector<64x1xf32>
    %869 = vector.extract_strided_slice %832 {offsets = [5, 0], sizes = [1, 128], strides = [1, 1]} : vector<8x128xf32> to vector<1x128xf32>
    %870 = vector.broadcast %868 : vector<64x1xf32> to vector<64x128xf32>
    %871 = vector.broadcast %869 : vector<1x128xf32> to vector<64x128xf32>
    %872 = arith.subf %870, %871 : vector<64x128xf32>
    %873 = math.absf %872 : vector<64x128xf32>
    %874 = arith.addf %867, %873 : vector<64x128xf32>
    %875 = vector.extract_strided_slice %3 {offsets = [0, 118], sizes = [64, 1], strides = [1, 1]} : vector<64x128xf32> to vector<64x1xf32>
    %876 = vector.extract_strided_slice %832 {offsets = [6, 0], sizes = [1, 128], strides = [1, 1]} : vector<8x128xf32> to vector<1x128xf32>
    %877 = vector.broadcast %875 : vector<64x1xf32> to vector<64x128xf32>
    %878 = vector.broadcast %876 : vector<1x128xf32> to vector<64x128xf32>
    %879 = arith.subf %877, %878 : vector<64x128xf32>
    %880 = math.absf %879 : vector<64x128xf32>
    %881 = arith.addf %874, %880 : vector<64x128xf32>
    %882 = vector.extract_strided_slice %3 {offsets = [0, 119], sizes = [64, 1], strides = [1, 1]} : vector<64x128xf32> to vector<64x1xf32>
    %883 = vector.extract_strided_slice %832 {offsets = [7, 0], sizes = [1, 128], strides = [1, 1]} : vector<8x128xf32> to vector<1x128xf32>
    %884 = vector.broadcast %882 : vector<64x1xf32> to vector<64x128xf32>
    %885 = vector.broadcast %883 : vector<1x128xf32> to vector<64x128xf32>
    %886 = arith.subf %884, %885 : vector<64x128xf32>
    %887 = math.absf %886 : vector<64x128xf32>
    %888 = arith.addf %881, %887 : vector<64x128xf32>
    %889 = arith.index_cast %c0_i32 : i32 to index
    %c120 = arith.constant 120 : index
    %c0_17 = arith.constant 0 : index
    %890 = vector.load %arg3[%889, %c120, %c0_17] : memref<1x128x128xf32, #tpu.memory_space<vmem>>, vector<1x8x128xf32>
    %891 = vector.shape_cast %890 : vector<1x8x128xf32> to vector<8x128xf32>
    %892 = vector.extract_strided_slice %3 {offsets = [0, 120], sizes = [64, 1], strides = [1, 1]} : vector<64x128xf32> to vector<64x1xf32>
    %893 = vector.extract_strided_slice %891 {offsets = [0, 0], sizes = [1, 128], strides = [1, 1]} : vector<8x128xf32> to vector<1x128xf32>
    %894 = vector.broadcast %892 : vector<64x1xf32> to vector<64x128xf32>
    %895 = vector.broadcast %893 : vector<1x128xf32> to vector<64x128xf32>
    %896 = arith.subf %894, %895 : vector<64x128xf32>
    %897 = math.absf %896 : vector<64x128xf32>
    %898 = arith.addf %888, %897 : vector<64x128xf32>
    %899 = vector.extract_strided_slice %3 {offsets = [0, 121], sizes = [64, 1], strides = [1, 1]} : vector<64x128xf32> to vector<64x1xf32>
    %900 = vector.extract_strided_slice %891 {offsets = [1, 0], sizes = [1, 128], strides = [1, 1]} : vector<8x128xf32> to vector<1x128xf32>
    %901 = vector.broadcast %899 : vector<64x1xf32> to vector<64x128xf32>
    %902 = vector.broadcast %900 : vector<1x128xf32> to vector<64x128xf32>
    %903 = arith.subf %901, %902 : vector<64x128xf32>
    %904 = math.absf %903 : vector<64x128xf32>
    %905 = arith.addf %898, %904 : vector<64x128xf32>
    %906 = vector.extract_strided_slice %3 {offsets = [0, 122], sizes = [64, 1], strides = [1, 1]} : vector<64x128xf32> to vector<64x1xf32>
    %907 = vector.extract_strided_slice %891 {offsets = [2, 0], sizes = [1, 128], strides = [1, 1]} : vector<8x128xf32> to vector<1x128xf32>
    %908 = vector.broadcast %906 : vector<64x1xf32> to vector<64x128xf32>
    %909 = vector.broadcast %907 : vector<1x128xf32> to vector<64x128xf32>
    %910 = arith.subf %908, %909 : vector<64x128xf32>
    %911 = math.absf %910 : vector<64x128xf32>
    %912 = arith.addf %905, %911 : vector<64x128xf32>
    %913 = vector.extract_strided_slice %3 {offsets = [0, 123], sizes = [64, 1], strides = [1, 1]} : vector<64x128xf32> to vector<64x1xf32>
    %914 = vector.extract_strided_slice %891 {offsets = [3, 0], sizes = [1, 128], strides = [1, 1]} : vector<8x128xf32> to vector<1x128xf32>
    %915 = vector.broadcast %913 : vector<64x1xf32> to vector<64x128xf32>
    %916 = vector.broadcast %914 : vector<1x128xf32> to vector<64x128xf32>
    %917 = arith.subf %915, %916 : vector<64x128xf32>
    %918 = math.absf %917 : vector<64x128xf32>
    %919 = arith.addf %912, %918 : vector<64x128xf32>
    %920 = vector.extract_strided_slice %3 {offsets = [0, 124], sizes = [64, 1], strides = [1, 1]} : vector<64x128xf32> to vector<64x1xf32>
    %921 = vector.extract_strided_slice %891 {offsets = [4, 0], sizes = [1, 128], strides = [1, 1]} : vector<8x128xf32> to vector<1x128xf32>
    %922 = vector.broadcast %920 : vector<64x1xf32> to vector<64x128xf32>
    %923 = vector.broadcast %921 : vector<1x128xf32> to vector<64x128xf32>
    %924 = arith.subf %922, %923 : vector<64x128xf32>
    %925 = math.absf %924 : vector<64x128xf32>
    %926 = arith.addf %919, %925 : vector<64x128xf32>
    %927 = vector.extract_strided_slice %3 {offsets = [0, 125], sizes = [64, 1], strides = [1, 1]} : vector<64x128xf32> to vector<64x1xf32>
    %928 = vector.extract_strided_slice %891 {offsets = [5, 0], sizes = [1, 128], strides = [1, 1]} : vector<8x128xf32> to vector<1x128xf32>
    %929 = vector.broadcast %927 : vector<64x1xf32> to vector<64x128xf32>
    %930 = vector.broadcast %928 : vector<1x128xf32> to vector<64x128xf32>
    %931 = arith.subf %929, %930 : vector<64x128xf32>
    %932 = math.absf %931 : vector<64x128xf32>
    %933 = arith.addf %926, %932 : vector<64x128xf32>
    %934 = vector.extract_strided_slice %3 {offsets = [0, 126], sizes = [64, 1], strides = [1, 1]} : vector<64x128xf32> to vector<64x1xf32>
    %935 = vector.extract_strided_slice %891 {offsets = [6, 0], sizes = [1, 128], strides = [1, 1]} : vector<8x128xf32> to vector<1x128xf32>
    %936 = vector.broadcast %934 : vector<64x1xf32> to vector<64x128xf32>
    %937 = vector.broadcast %935 : vector<1x128xf32> to vector<64x128xf32>
    %938 = arith.subf %936, %937 : vector<64x128xf32>
    %939 = math.absf %938 : vector<64x128xf32>
    %940 = arith.addf %933, %939 : vector<64x128xf32>
    %941 = vector.extract_strided_slice %3 {offsets = [0, 127], sizes = [64, 1], strides = [1, 1]} : vector<64x128xf32> to vector<64x1xf32>
    %942 = vector.extract_strided_slice %891 {offsets = [7, 0], sizes = [1, 128], strides = [1, 1]} : vector<8x128xf32> to vector<1x128xf32>
    %943 = vector.broadcast %941 : vector<64x1xf32> to vector<64x128xf32>
    %944 = vector.broadcast %942 : vector<1x128xf32> to vector<64x128xf32>
    %945 = arith.subf %943, %944 : vector<64x128xf32>
    %946 = math.absf %945 : vector<64x128xf32>
    %947 = arith.addf %940, %946 : vector<64x128xf32>
    %c1_i32 = arith.constant 1 : i32
    %cst_18 = arith.constant 0.000000e+00 : f32
    %948 = vector.broadcast %cst_18 : f32 to vector<64x128xf32>
    %949 = arith.subf %948, %947 : vector<64x128xf32>
    %c0_19 = arith.constant 0 : index
    %c0_20 = arith.constant 0 : index
    %950 = vector.load %arg4[%c0_19, %c0_20] : memref<64x128xf32, #tpu.memory_space<vmem>>, vector<64x128xf32>
    tpu.vector_store %arg4[%c0_19, %c0_20], %949 {strides = array<i32>} : memref<64x128xf32, #tpu.memory_space<vmem>>, vector<64x128xf32>,
    return
  }
  func.func @transform_0(%arg0: i32, %arg1: i32) -> (i32, i32, i32) {
    %c0_i32 = arith.constant 0 : i32
    %c0_i32_0 = arith.constant 0 : i32
    %c0_i32_1 = arith.constant 0 : i32
    return %c0_i32, %arg1, %c0_i32_0 : i32, i32, i32
  }
  func.func @transform_1(%arg0: i32, %arg1: i32) -> (i32, i32, i32) {
    %c0_i32 = arith.constant 0 : i32
    %c0_i32_0 = arith.constant 0 : i32
    %c0_i32_1 = arith.constant 0 : i32
    return %c0_i32, %c0_i32_0, %arg0 : i32, i32, i32
  }
  func.func @transform_2(%arg0: i32, %arg1: i32) -> (i32, i32) {
    %c0_i32 = arith.constant 0 : i32
    return %arg1, %arg0 : i32, i32
  }
}

</mosaic_0001>

<llo_original>
// kernel: adder_conv3x3.1
$region0: #{adder_conv3x3.1}
  #allocation0 [shape = 'u32[]', space=smem, size = 0x4, offset = 0x4, fixed_abs, tag = 'smem constant byte address 0x4 - core index']
  #allocation1 [shape = 'u32[144,128]{1,0:T(1,128)}', space=vmem, size = 0x12000, scoped, tag = 'internal scratch']
  %s0 = inlined_call_operand.vmem [shape: f32[1,128,128], index: 0, kind: input, shape index: {}]
  %s1 = inlined_call_operand.vmem [shape: f32[1,128,128], index: 1, kind: input, shape index: {}]
  %s2 = inlined_call_operand.hbm [shape: f32[128,128], index: 2, kind: output, shape index: {}]
  %s3 = sld [smem:[#allocation0]]
  $region41: #{adder_conv3x3.1} parent=0
    _
  %s5 = ssub.s32 1, %s3
  %s6 = scalar_select 0, %s5, %s3
  $region1: #{adder_conv3x3.1} parent=0
    #allocation2 [shape = 'u8[65536]{0}', space=vmem, size = 0x10000, scoped, tag = 'output window, operand 0']
    #allocation3 [shape = 's32[2]{0}', space=sflag, size = 0x8, scoped, tag = 'scoped memory for adder_conv3x3.1']
    %7 = vsyncpa [#allocation3], 0
    %s8 = scalar_lea.sflag [#allocation3], 1
    %9 = vsyncpa %s8, 0
    loop: start=0, step=1, limit=4
    $region2: #{adder_conv3x3.1} parent=1 // loop_pre_header
      _
    $region3: #{adder_conv3x3.1} parent=1 // loop_header
      %s11 = sphi 0, %s15
      %p12 = scmp.ge.s32.totalorder %s11, 4
      %s18 = sphi 0, %s30
      %s19 = sphi 0, %s26
      %s20 = sphi 0, %s18
      %s21 = sphi 0, %s19
      %s22 = sphi 0, %s20
      %s23 = sphi 0, %s21
      %s33 = sphi 0, %s35
      %s36 = sphi 0, %s33
      %s37 = sphi 0, %s36
      %s53 = sphi 0, %s37
      %s59 = sphi 0, %s61
      %s62 = sphi 0, %s59
      %s63 = sphi 0, %s62
      %s79 = sphi 0, %s63
      %s87 = sphi 0, %s89
      %s90 = sphi 0, %s87
      %s91 = sphi 0, %s90
      %s107 = sphi 0, %s91
    $region4: #{adder_conv3x3.1} parent=1 // loop_header_branch
      %14 = sbr.rel (%p12) target = $region8
    $region5: #{adder_conv3x3.1} parent=1 // loop_body
      %s16 = ssub.s32 %s11, 1
      %s17 = ssub.s32 %s11, 2
      %s24 = sadd.s32 1, %s19
      %p25 = scmp.ge.s32.totalorder %s24, 2
      %s26 = scalar_select %p25, 0, %s24
      %s27 = sadd.s32 1, %s18
      %s28 = scalar_select %p25, %s27, %s18
      %p29 = scmp.ge.s32.totalorder %s28, 1
      %s30 = scalar_select %p29, 0, %s28
      %s31 = ssub.s32 %s19, %s26
      %p32 = scmp.eq.s32.totalorder %s31, 0
      %s34 = sadd.s32 %s33, 1
      %s35 = scalar_select %p32, %s33, %s34
      %p38 = pneg %p32
      %p39 = scmp.eq.s32.totalorder %s11, 1
      %p40 = por %p38, %p39
      %p41 = scmp.ne.s32.totalorder %s33, %s36
      %p42 = scmp.eq.s32.totalorder %s11, 0
      %p43 = por %p41, %p42
      %p44 = scmp.ne.s32.totalorder %s33, %s36
      %p45 = scmp.eq.s32.totalorder %s16, 1
      %p46 = por %p44, %p45
      %p47 = scmp.ne.s32.totalorder %s36, %s37
      %p48 = scmp.eq.s32.totalorder %s16, 0
      %p49 = por %p47, %p48
      %p50 = scmp.ne.s32.totalorder %s36, %s37
      %p51 = scmp.eq.s32.totalorder %s17, 1
      %p52 = por %p50, %p51
      %p54 = scmp.ne.s32.totalorder %s37, %s53
      %p55 = scmp.eq.s32.totalorder %s17, 0
      %p56 = por %p54, %p55
      %s57 = ssub.s32 %s18, %s30
      %p58 = scmp.eq.s32.totalorder %s57, 0
      %s60 = sadd.s32 %s59, 1
      %s61 = scalar_select %p58, %s59, %s60
      %p64 = pneg %p58
      %p65 = scmp.eq.s32.totalorder %s11, 1
      %p66 = por %p64, %p65
      %p67 = scmp.ne.s32.totalorder %s59, %s62
      %p68 = scmp.eq.s32.totalorder %s11, 0
      %p69 = por %p67, %p68
      %p70 = scmp.ne.s32.totalorder %s59, %s62
      %p71 = scmp.eq.s32.totalorder %s16, 1
      %p72 = por %p70, %p71
      %p73 = scmp.ne.s32.totalorder %s62, %s63
      %p74 = scmp.eq.s32.totalorder %s16, 0
      %p75 = por %p73, %p74
      %p76 = scmp.ne.s32.totalorder %s62, %s63
      %p77 = scmp.eq.s32.totalorder %s17, 1
      %p78 = por %p76, %p77
      %p80 = scmp.ne.s32.totalorder %s63, %s79
      %p81 = scmp.eq.s32.totalorder %s17, 0
      %p82 = por %p80, %p81
      %s83 = ssub.s32 %s19, %s26
      %s84 = ssub.s32 %s18, %s30
      %s85 = sor.u32 %s83, %s84
      %p86 = scmp.eq.s32.totalorder %s85, 0
      %s88 = sadd.s32 %s87, 1
      %s89 = scalar_select %p86, %s87, %s88
      %p92 = pneg %p86
      %p93 = scmp.eq.s32.totalorder %s11, 1
      %p94 = por %p92, %p93
      %p95 = scmp.ne.s32.totalorder %s87, %s90
      %p96 = scmp.eq.s32.totalorder %s11, 0
      %p97 = por %p95, %p96
      %p98 = scmp.ne.s32.totalorder %s87, %s90
      %p99 = scmp.eq.s32.totalorder %s16, 1
      %p100 = por %p98, %p99
      %p101 = scmp.ne.s32.totalorder %s90, %s91
      %p102 = scmp.eq.s32.totalorder %s16, 0
      %p103 = por %p101, %p102
      %p104 = scmp.ne.s32.totalorder %s90, %s91
      %p105 = scmp.eq.s32.totalorder %s17, 1
      %p106 = por %p104, %p105
      %p108 = scmp.ne.s32.totalorder %s91, %s107
      %p109 = scmp.eq.s32.totalorder %s17, 0
      %p110 = por %p108, %p109
      %p111 = scmp.le.s32.totalorder 1, %s11
      %p112 = scmp.lt.s32.totalorder %s11, 3
      %p113 = pnand %p111, %p112
      %p114 = pneg %p113
      // Predicated region
      $region9: #{adder_conv3x3.1} parent=5 // pred_check
        _
      $region10: #{adder_conv3x3.1} parent=5 // pred_check_branch
        %116 = sbr.rel (%p113) target = $region12
      $region11: #{adder_conv3x3.1} parent=5 // pred_region
        %s117 = ssub.s32 %s11, 1
        // Predicated region
        $region13: #{adder_conv3x3.1} parent=11 // pred_check
          %p118 = pneg %p75
        $region14: #{adder_conv3x3.1} parent=11 // pred_check_branch
          %120 = sbr.rel (%p118) target = $region16
        $region15: #{adder_conv3x3.1} parent=11 // pred_region
          %p121 = scmp.lt.s32.totalorder %s20, 0
          %s122 = scalar_select %p121, %s20, 0
          %s123 = smul.addr %s122, 8
          %s124 = scalar_lea.vmem %s1, %s123
        $region16: #{adder_conv3x3.1} parent=11 // pred_fallthru
          _
      $region12: #{adder_conv3x3.1} parent=5 // pred_fallthru
        _
      %p125 = scmp.lt.s32.totalorder %s11, 2
      // Predicated region
      $region17: #{adder_conv3x3.1} parent=5 // pred_check
        %p126 = pneg %p125
      $region18: #{adder_conv3x3.1} parent=5 // pred_check_branch
        %128 = sbr.rel (%p126) target = $region20
      $region19: #{adder_conv3x3.1} parent=5 // pred_region
        // Predicated region
        $region21: #{adder_conv3x3.1} parent=19 // pred_check
          %p129 = pneg %p43
        $region22: #{adder_conv3x3.1} parent=19 // pred_check_branch
          %131 = sbr.rel (%p129) target = $region24
        $region23: #{adder_conv3x3.1} parent=19 // pred_region
          %s132 = smul.u32 8, %s19
          %p133 = scmp.lt.s32.totalorder %s132, 15
          %s134 = scalar_select %p133, %s132, 15
          %s135 = smul.addr %s134, 8
          %s136 = scalar_lea.vmem %s0, %s135
          %s137 = smul.u32 8, %s19
        $region24: #{adder_conv3x3.1} parent=19 // pred_fallthru
          _
      $region20: #{adder_conv3x3.1} parent=5 // pred_fallthru
        _
      %p138 = scmp.le.s32.totalorder 1, %s11
      %p139 = scmp.lt.s32.totalorder %s11, 3
      %p140 = pnand %p138, %p139
      %p141 = pneg %p140
      // Predicated region
      $region25: #{adder_conv3x3.1} parent=5 // pred_check
        _
      $region26: #{adder_conv3x3.1} parent=5 // pred_check_branch
        %143 = sbr.rel (%p140) target = $region28
      $region27: #{adder_conv3x3.1} parent=5 // pred_region
        %s144 = ssub.s32 %s11, 1
        %s145 = smul.u32 8, %s21
        %p146 = scmp.lt.s32.totalorder %s145, 15
        %s147 = scalar_select %p146, %s145, 15
        %s148 = smul.addr %s147, 8
        %s149 = scalar_lea.vmem %s0, %s148
        %p150 = pneg %p49
        %p151 = pneg %p46
        %p152 = scmp.lt.s32.totalorder %s20, 0
        %s153 = scalar_select %p152, %s20, 0
        %s154 = smul.addr %s153, 8
        %s155 = scalar_lea.vmem %s1, %s154
        %p156 = pneg %p75
        %p157 = pneg %p72
        %p158 = pneg %p103
        %p159 = pneg %p100
        %s160 = sand.u32 %s90, 1
        %s161 = scalar_lea.sflag [#allocation3], %s160
        %s162 = sand.u32 %s90, 1
        %s163 = smul.addr %s162, 64
        %s164 = scalar_lea.vmem [#allocation2], %s163
        %s165 = smul.u32 8, %s21
        %p166 = scmp.lt.s32.totalorder %s165, 15
        %s167 = scalar_select %p166, %s165, 15
        %s168 = smul.addr %s167, 8
        %s169 = scalar_lea.vmem %s0, %s168
        %s170 = smul.u32 8, %s21
        %p171 = scmp.lt.s32.totalorder %s20, 0
        %s172 = scalar_select %p171, %s20, 0
        %s173 = smul.addr %s172, 8
        %s174 = scalar_lea.vmem %s1, %s173
        %s175 = smul.u32 8, %s21
        %v176 = vld [vmem:[%s169] sm:$0xff]
        %v177 = vld [vmem:[%s169 + $0x8] sm:$0xff]
        %v178 = vld [vmem:[%s169 + $0x10] sm:$0xff]
        %v179 = vld [vmem:[%s169 + $0x18] sm:$0xff]
        %v180 = vld [vmem:[%s169 + $0x20] sm:$0xff]
        %v181 = vld [vmem:[%s169 + $0x28] sm:$0xff]
        %v182 = vld [vmem:[%s169 + $0x30] sm:$0xff]
        %v183 = vld [vmem:[%s169 + $0x38] sm:$0xff]
        %v184 = vld [vmem:[%s174] sm:$0xff]
        %186 = vset.pattern.permute.xlu0 0
        %187 = vperm.xlu0 %186, %v176
        %v188 = vpop.permute.xlu0 %187
        %191 = vset.pattern.permute.xlu0 0
        %192 = vperm.xlu0 %191, %v177
        %v193 = vpop.permute.xlu0 %192
        %196 = vset.pattern.permute.xlu0 0
        %197 = vperm.xlu0 %196, %v178
        %v198 = vpop.permute.xlu0 %197
        %201 = vset.pattern.permute.xlu0 0
        %202 = vperm.xlu0 %201, %v179
        %v203 = vpop.permute.xlu0 %202
        %206 = vset.pattern.permute.xlu0 0
        %207 = vperm.xlu0 %206, %v180
        %v208 = vpop.permute.xlu0 %207
        %211 = vset.pattern.permute.xlu0 0
        %212 = vperm.xlu0 %211, %v181
        %v213 = vpop.permute.xlu0 %212
        %216 = vset.pattern.permute.xlu0 0
        %217 = vperm.xlu0 %216, %v182
        %v218 = vpop.permute.xlu0 %217
        %221 = vset.pattern.permute.xlu0 0
        %222 = vperm.xlu0 %221, %v183
        %v223 = vpop.permute.xlu0 %222
        %v225 = vlaneseq
        %v226 = vshrl.u32 %v225, 7
        %v227 = vsub.s32 0, %v226
        %v228 = vrot.slane %v184, %v227
        %v229 = vsub.f32 %v188, %v228
        %v230 = vsub.f32 %v193, %v228
        %v231 = vsub.f32 %v198, %v228
        %v232 = vsub.f32 %v203, %v228
        %v233 = vsub.f32 %v208, %v228
        %v234 = vsub.f32 %v213, %v228
        %v235 = vsub.f32 %v218, %v228
        %v236 = vsub.f32 %v223, %v228
        %v237 = vand.u32 2147483647, %v229
        %v238 = vand.u32 2147483647, %v230
        %v239 = vand.u32 2147483647, %v231
        %v240 = vand.u32 2147483647, %v232
        %v241 = vand.u32 2147483647, %v233
        %v242 = vand.u32 2147483647, %v234
        %v243 = vand.u32 2147483647, %v235
        %v244 = vand.u32 2147483647, %v236
        %v245 = vadd.f32 %v237, 0.0
        %v246 = vadd.f32 %v238, 0.0
        %v247 = vadd.f32 %v239, 0.0
        %v248 = vadd.f32 %v240, 0.0
        %v249 = vadd.f32 %v241, 0.0
        %v250 = vadd.f32 %v242, 0.0
        %v251 = vadd.f32 %v243, 0.0
        %v252 = vadd.f32 %v244, 0.0
        %253 = vset.pattern.permute.xlu0 1
        %254 = vperm.xlu0 %253, %v176
        %v255 = vpop.permute.xlu0 %254
        %257 = vset.pattern.permute.xlu0 1
        %258 = vperm.xlu0 %257, %v177
        %v259 = vpop.permute.xlu0 %258
        %261 = vset.pattern.permute.xlu0 1
        %262 = vperm.xlu0 %261, %v178
        %v263 = vpop.permute.xlu0 %262
        %265 = vset.pattern.permute.xlu0 1
        %266 = vperm.xlu0 %265, %v179
        %v267 = vpop.permute.xlu0 %266
        %269 = vset.pattern.permute.xlu0 1
        %270 = vperm.xlu0 %269, %v180
        %v271 = vpop.permute.xlu0 %270
        %273 = vset.pattern.permute.xlu0 1
        %274 = vperm.xlu0 %273, %v181
        %v275 = vpop.permute.xlu0 %274
        %277 = vset.pattern.permute.xlu0 1
        %278 = vperm.xlu0 %277, %v182
        %v279 = vpop.permute.xlu0 %278
        %281 = vset.pattern.permute.xlu0 1
        %282 = vperm.xlu0 %281, %v183
        %v283 = vpop.permute.xlu0 %282
        %v285 = vlaneseq
        %v286 = vshrl.u32 %v285, 7
        %v287 = vsub.s32 1, %v286
        %v288 = vrot.slane %v184, %v287
        %v289 = vsub.f32 %v255, %v288
        %v290 = vsub.f32 %v259, %v288
        %v291 = vsub.f32 %v263, %v288
        %v292 = vsub.f32 %v267, %v288
        %v293 = vsub.f32 %v271, %v288
        %v294 = vsub.f32 %v275, %v288
        %v295 = vsub.f32 %v279, %v288
        %v296 = vsub.f32 %v283, %v288
        %v297 = vand.u32 2147483647, %v289
        %v298 = vand.u32 2147483647, %v290
        %v299 = vand.u32 2147483647, %v291
        %v300 = vand.u32 2147483647, %v292
        %v301 = vand.u32 2147483647, %v293
        %v302 = vand.u32 2147483647, %v294
        %v303 = vand.u32 2147483647, %v295
        %v304 = vand.u32 2147483647, %v296
        %v305 = vadd.f32 %v245, %v297
        %v306 = vadd.f32 %v246, %v298
        %v307 = vadd.f32 %v247, %v299
        %v308 = vadd.f32 %v248, %v300
        %v309 = vadd.f32 %v249, %v301
        %v310 = vadd.f32 %v250, %v302
        %v311 = vadd.f32 %v251, %v303
        %v312 = vadd.f32 %v252, %v304
        %313 = vset.pattern.permute.xlu0 2
        %314 = vperm.xlu0 %313, %v176
        %v315 = vpop.permute.xlu0 %314
        %317 = vset.pattern.permute.xlu0 2
        %318 = vperm.xlu0 %317, %v177
        %v319 = vpop.permute.xlu0 %318
        %321 = vset.pattern.permute.xlu0 2
        %322 = vperm.xlu0 %321, %v178
        %v323 = vpop.permute.xlu0 %322
        %325 = vset.pattern.permute.xlu0 2
        %326 = vperm.xlu0 %325, %v179
        %v327 = vpop.permute.xlu0 %326
        %329 = vset.pattern.permute.xlu0 2
        %330 = vperm.xlu0 %329, %v180
        %v331 = vpop.permute.xlu0 %330
        %333 = vset.pattern.permute.xlu0 2
        %334 = vperm.xlu0 %333, %v181
        %v335 = vpop.permute.xlu0 %334
        %337 = vset.pattern.permute.xlu0 2
        %338 = vperm.xlu0 %337, %v182
        %v339 = vpop.permute.xlu0 %338
        %341 = vset.pattern.permute.xlu0 2
        %342 = vperm.xlu0 %341, %v183
        %v343 = vpop.permute.xlu0 %342
        %v345 = vlaneseq
        %v346 = vshrl.u32 %v345, 7
        %v347 = vsub.s32 2, %v346
        %v348 = vrot.slane %v184, %v347
        %v349 = vsub.f32 %v315, %v348
        %v350 = vsub.f32 %v319, %v348
        %v351 = vsub.f32 %v323, %v348
        %v352 = vsub.f32 %v327, %v348
        %v353 = vsub.f32 %v331, %v348
        %v354 = vsub.f32 %v335, %v348
        %v355 = vsub.f32 %v339, %v348
        %v356 = vsub.f32 %v343, %v348
        %v357 = vand.u32 2147483647, %v349
        %v358 = vand.u32 2147483647, %v350
        %v359 = vand.u32 2147483647, %v351
        %v360 = vand.u32 2147483647, %v352
        %v361 = vand.u32 2147483647, %v353
        %v362 = vand.u32 2147483647, %v354
        %v363 = vand.u32 2147483647, %v355
        %v364 = vand.u32 2147483647, %v356
        %v365 = vadd.f32 %v305, %v357
        %v366 = vadd.f32 %v306, %v358
        %v367 = vadd.f32 %v307, %v359
        %v368 = vadd.f32 %v308, %v360
        %v369 = vadd.f32 %v309, %v361
        %v370 = vadd.f32 %v310, %v362
        %v371 = vadd.f32 %v311, %v363
        %v372 = vadd.f32 %v312, %v364
        %373 = vset.pattern.permute.xlu0 3
        %374 = vperm.xlu0 %373, %v176
        %v375 = vpop.permute.xlu0 %374
        %377 = vset.pattern.permute.xlu0 3
        %378 = vperm.xlu0 %377, %v177
        %v379 = vpop.permute.xlu0 %378
        %381 = vset.pattern.permute.xlu0 3
        %382 = vperm.xlu0 %381, %v178
        %v383 = vpop.permute.xlu0 %382
        %385 = vset.pattern.permute.xlu0 3
        %386 = vperm.xlu0 %385, %v179
        %v387 = vpop.permute.xlu0 %386
        %389 = vset.pattern.permute.xlu0 3
        %390 = vperm.xlu0 %389, %v180
        %v391 = vpop.permute.xlu0 %390
        %393 = vset.pattern.permute.xlu0 3
        %394 = vperm.xlu0 %393, %v181
        %v395 = vpop.permute.xlu0 %394
        %397 = vset.pattern.permute.xlu0 3
        %398 = vperm.xlu0 %397, %v182
        %v399 = vpop.permute.xlu0 %398
        %401 = vset.pattern.permute.xlu0 3
        %402 = vperm.xlu0 %401, %v183
        %v403 = vpop.permute.xlu0 %402
        %v405 = vlaneseq
        %v406 = vshrl.u32 %v405, 7
        %v407 = vsub.s32 3, %v406
        %v408 = vrot.slane %v184, %v407
        %v409 = vsub.f32 %v375, %v408
        %v410 = vsub.f32 %v379, %v408
        %v411 = vsub.f32 %v383, %v408
        %v412 = vsub.f32 %v387, %v408
        %v413 = vsub.f32 %v391, %v408
        %v414 = vsub.f32 %v395, %v408
        %v415 = vsub.f32 %v399, %v408
        %v416 = vsub.f32 %v403, %v408
        %v417 = vand.u32 2147483647, %v409
        %v418 = vand.u32 2147483647, %v410
        %v419 = vand.u32 2147483647, %v411
        %v420 = vand.u32 2147483647, %v412
        %v421 = vand.u32 2147483647, %v413
        %v422 = vand.u32 2147483647, %v414
        %v423 = vand.u32 2147483647, %v415
        %v424 = vand.u32 2147483647, %v416
        %v425 = vadd.f32 %v365, %v417
        %v426 = vadd.f32 %v366, %v418
        %v427 = vadd.f32 %v367, %v419
        %v428 = vadd.f32 %v368, %v420
        %v429 = vadd.f32 %v369, %v421
        %v430 = vadd.f32 %v370, %v422
        %v431 = vadd.f32 %v371, %v423
        %v432 = vadd.f32 %v372, %v424
        %433 = vset.pattern.permute.xlu0 4
        %434 = vperm.xlu0 %433, %v176
        %v435 = vpop.permute.xlu0 %434
        %437 = vset.pattern.permute.xlu0 4
        %438 = vperm.xlu0 %437, %v177
        %v439 = vpop.permute.xlu0 %438
        %441 = vset.pattern.permute.xlu0 4
        %442 = vperm.xlu0 %441, %v178
        %v443 = vpop.permute.xlu0 %442
        %445 = vset.pattern.permute.xlu0 4
        %446 = vperm.xlu0 %445, %v179
        %v447 = vpop.permute.xlu0 %446
        %449 = vset.pattern.permute.xlu0 4
        %450 = vperm.xlu0 %449, %v180
        %v451 = vpop.permute.xlu0 %450
        %453 = vset.pattern.permute.xlu0 4
        %454 = vperm.xlu0 %453, %v181
        %v455 = vpop.permute.xlu0 %454
        %457 = vset.pattern.permute.xlu0 4
        %458 = vperm.xlu0 %457, %v182
        %v459 = vpop.permute.xlu0 %458
        %461 = vset.pattern.permute.xlu0 4
        %462 = vperm.xlu0 %461, %v183
        %v463 = vpop.permute.xlu0 %462
        %v465 = vlaneseq
        %v466 = vshrl.u32 %v465, 7
        %v467 = vsub.s32 4, %v466
        %v468 = vrot.slane %v184, %v467
        %v469 = vsub.f32 %v435, %v468
        %v470 = vsub.f32 %v439, %v468
        %v471 = vsub.f32 %v443, %v468
        %v472 = vsub.f32 %v447, %v468
        %v473 = vsub.f32 %v451, %v468
        %v474 = vsub.f32 %v455, %v468
        %v475 = vsub.f32 %v459, %v468
        %v476 = vsub.f32 %v463, %v468
        %v477 = vand.u32 2147483647, %v469
        %v478 = vand.u32 2147483647, %v470
        %v479 = vand.u32 2147483647, %v471
        %v480 = vand.u32 2147483647, %v472
        %v481 = vand.u32 2147483647, %v473
        %v482 = vand.u32 2147483647, %v474
        %v483 = vand.u32 2147483647, %v475
        %v484 = vand.u32 2147483647, %v476
        %v485 = vadd.f32 %v425, %v477
        %v486 = vadd.f32 %v426, %v478
        %v487 = vadd.f32 %v427, %v479
        %v488 = vadd.f32 %v428, %v480
        %v489 = vadd.f32 %v429, %v481
        %v490 = vadd.f32 %v430, %v482
        %v491 = vadd.f32 %v431, %v483
        %v492 = vadd.f32 %v432, %v484
        %493 = vset.pattern.permute.xlu0 5
        %494 = vperm.xlu0 %493, %v176
        %v495 = vpop.permute.xlu0 %494
        %497 = vset.pattern.permute.xlu0 5
        %498 = vperm.xlu0 %497, %v177
        %v499 = vpop.permute.xlu0 %498
        %501 = vset.pattern.permute.xlu0 5
        %502 = vperm.xlu0 %501, %v178
        %v503 = vpop.permute.xlu0 %502
        %505 = vset.pattern.permute.xlu0 5
        %506 = vperm.xlu0 %505, %v179
        %v507 = vpop.permute.xlu0 %506
        %509 = vset.pattern.permute.xlu0 5
        %510 = vperm.xlu0 %509, %v180
        %v511 = vpop.permute.xlu0 %510
        %513 = vset.pattern.permute.xlu0 5
        %514 = vperm.xlu0 %513, %v181
        %v515 = vpop.permute.xlu0 %514
        %517 = vset.pattern.permute.xlu0 5
        %518 = vperm.xlu0 %517, %v182
        %v519 = vpop.permute.xlu0 %518
        %521 = vset.pattern.permute.xlu0 5
        %522 = vperm.xlu0 %521, %v183
        %v523 = vpop.permute.xlu0 %522
        %v525 = vlaneseq
        %v526 = vshrl.u32 %v525, 7
        %v527 = vsub.s32 5, %v526
        %v528 = vrot.slane %v184, %v527
        %v529 = vsub.f32 %v495, %v528
        %v530 = vsub.f32 %v499, %v528
        %v531 = vsub.f32 %v503, %v528
        %v532 = vsub.f32 %v507, %v528
        %v533 = vsub.f32 %v511, %v528
        %v534 = vsub.f32 %v515, %v528
        %v535 = vsub.f32 %v519, %v528
        %v536 = vsub.f32 %v523, %v528
        %v537 = vand.u32 2147483647, %v529
        %v538 = vand.u32 2147483647, %v530
        %v539 = vand.u32 2147483647, %v531
        %v540 = vand.u32 2147483647, %v532
        %v541 = vand.u32 2147483647, %v533
        %v542 = vand.u32 2147483647, %v534
        %v543 = vand.u32 2147483647, %v535
        %v544 = vand.u32 2147483647, %v536
        %v545 = vadd.f32 %v485, %v537
        %v546 = vadd.f32 %v486, %v538
        %v547 = vadd.f32 %v487, %v539
        %v548 = vadd.f32 %v488, %v540
        %v549 = vadd.f32 %v489, %v541
        %v550 = vadd.f32 %v490, %v542
        %v551 = vadd.f32 %v491, %v543
        %v552 = vadd.f32 %v492, %v544
        %553 = vset.pattern.permute.xlu0 6
        %554 = vperm.xlu0 %553, %v176
        %v555 = vpop.permute.xlu0 %554
        %557 = vset.pattern.permute.xlu0 6
        %558 = vperm.xlu0 %557, %v177
        %v559 = vpop.permute.xlu0 %558
        %561 = vset.pattern.permute.xlu0 6
        %562 = vperm.xlu0 %561, %v178
        %v563 = vpop.permute.xlu0 %562
        %565 = vset.pattern.permute.xlu0 6
        %566 = vperm.xlu0 %565, %v179
        %v567 = vpop.permute.xlu0 %566
        %569 = vset.pattern.permute.xlu0 6
        %570 = vperm.xlu0 %569, %v180
        %v571 = vpop.permute.xlu0 %570
        %573 = vset.pattern.permute.xlu0 6
        %574 = vperm.xlu0 %573, %v181
        %v575 = vpop.permute.xlu0 %574
        %577 = vset.pattern.permute.xlu0 6
        %578 = vperm.xlu0 %577, %v182
        %v579 = vpop.permute.xlu0 %578
        %581 = vset.pattern.permute.xlu0 6
        %582 = vperm.xlu0 %581, %v183
        %v583 = vpop.permute.xlu0 %582
        %v585 = vlaneseq
        %v586 = vshrl.u32 %v585, 7
        %v587 = vsub.s32 6, %v586
        %v588 = vrot.slane %v184, %v587
        %v589 = vsub.f32 %v555, %v588
        %v590 = vsub.f32 %v559, %v588
        %v591 = vsub.f32 %v563, %v588
        %v592 = vsub.f32 %v567, %v588
        %v593 = vsub.f32 %v571, %v588
        %v594 = vsub.f32 %v575, %v588
        %v595 = vsub.f32 %v579, %v588
        %v596 = vsub.f32 %v583, %v588
        %v597 = vand.u32 2147483647, %v589
        %v598 = vand.u32 2147483647, %v590
        %v599 = vand.u32 2147483647, %v591
        %v600 = vand.u32 2147483647, %v592
        %v601 = vand.u32 2147483647, %v593
        %v602 = vand.u32 2147483647, %v594
        %v603 = vand.u32 2147483647, %v595
        %v604 = vand.u32 2147483647, %v596
        %v605 = vadd.f32 %v545, %v597
        %v606 = vadd.f32 %v546, %v598
        %v607 = vadd.f32 %v547, %v599
        %v608 = vadd.f32 %v548, %v600
        %v609 = vadd.f32 %v549, %v601
        %v610 = vadd.f32 %v550, %v602
        %v611 = vadd.f32 %v551, %v603
        %v612 = vadd.f32 %v552, %v604
        %613 = vset.pattern.permute.xlu0 7
        %614 = vperm.xlu0 %613, %v176
        %v615 = vpop.permute.xlu0 %614
        %617 = vset.pattern.permute.xlu0 7
        %618 = vperm.xlu0 %617, %v177
        %v619 = vpop.permute.xlu0 %618
        %621 = vset.pattern.permute.xlu0 7
        %622 = vperm.xlu0 %621, %v178
        %v623 = vpop.permute.xlu0 %622
        %625 = vset.pattern.permute.xlu0 7
        %626 = vperm.xlu0 %625, %v179
        %v627 = vpop.permute.xlu0 %626
        %629 = vset.pattern.permute.xlu0 7
        %630 = vperm.xlu0 %629, %v180
        %v631 = vpop.permute.xlu0 %630
        %633 = vset.pattern.permute.xlu0 7
        %634 = vperm.xlu0 %633, %v181
        %v635 = vpop.permute.xlu0 %634
        %637 = vset.pattern.permute.xlu0 7
        %638 = vperm.xlu0 %637, %v182
        %v639 = vpop.permute.xlu0 %638
        %641 = vset.pattern.permute.xlu0 7
        %642 = vperm.xlu0 %641, %v183
        %v643 = vpop.permute.xlu0 %642
        %v645 = vlaneseq
        %v646 = vshrl.u32 %v645, 7
        %v647 = vsub.s32 7, %v646
        %v648 = vrot.slane %v184, %v647
        %v649 = vsub.f32 %v615, %v648
        %v650 = vsub.f32 %v619, %v648
        %v651 = vsub.f32 %v623, %v648
        %v652 = vsub.f32 %v627, %v648
        %v653 = vsub.f32 %v631, %v648
        %v654 = vsub.f32 %v635, %v648
        %v655 = vsub.f32 %v639, %v648
        %v656 = vsub.f32 %v643, %v648
        %v657 = vand.u32 2147483647, %v649
        %v658 = vand.u32 2147483647, %v650
        %v659 = vand.u32 2147483647, %v651
        %v660 = vand.u32 2147483647, %v652
        %v661 = vand.u32 2147483647, %v653
        %v662 = vand.u32 2147483647, %v654
        %v663 = vand.u32 2147483647, %v655
        %v664 = vand.u32 2147483647, %v656
        %v665 = vadd.f32 %v605, %v657
        %v666 = vadd.f32 %v606, %v658
        %v667 = vadd.f32 %v607, %v659
        %v668 = vadd.f32 %v608, %v660
        %v669 = vadd.f32 %v609, %v661
        %v670 = vadd.f32 %v610, %v662
        %v671 = vadd.f32 %v611, %v663
        %v672 = vadd.f32 %v612, %v664
        %v673 = vld [vmem:[%s174 + $0x8] sm:$0xff]
        %674 = vset.pattern.permute.xlu0 8
        %675 = vperm.xlu0 %674, %v176
        %v676 = vpop.permute.xlu0 %675
        %678 = vset.pattern.permute.xlu0 8
        %679 = vperm.xlu0 %678, %v177
        %v680 = vpop.permute.xlu0 %679
        %682 = vset.pattern.permute.xlu0 8
        %683 = vperm.xlu0 %682, %v178
        %v684 = vpop.permute.xlu0 %683
        %686 = vset.pattern.permute.xlu0 8
        %687 = vperm.xlu0 %686, %v179
        %v688 = vpop.permute.xlu0 %687
        %690 = vset.pattern.permute.xlu0 8
        %691 = vperm.xlu0 %690, %v180
        %v692 = vpop.permute.xlu0 %691
        %694 = vset.pattern.permute.xlu0 8
        %695 = vperm.xlu0 %694, %v181
        %v696 = vpop.permute.xlu0 %695
        %698 = vset.pattern.permute.xlu0 8
        %699 = vperm.xlu0 %698, %v182
        %v700 = vpop.permute.xlu0 %699
        %702 = vset.pattern.permute.xlu0 8
        %703 = vperm.xlu0 %702, %v183
        %v704 = vpop.permute.xlu0 %703
        %v706 = vlaneseq
        %v707 = vshrl.u32 %v706, 7
        %v708 = vsub.s32 0, %v707
        %v709 = vrot.slane %v673, %v708
        %v710 = vsub.f32 %v676, %v709
        %v711 = vsub.f32 %v680, %v709
        %v712 = vsub.f32 %v684, %v709
        %v713 = vsub.f32 %v688, %v709
        %v714 = vsub.f32 %v692, %v709
        %v715 = vsub.f32 %v696, %v709
        %v716 = vsub.f32 %v700, %v709
        %v717 = vsub.f32 %v704, %v709
        %v718 = vand.u32 2147483647, %v710
        %v719 = vand.u32 2147483647, %v711
        %v720 = vand.u32 2147483647, %v712
        %v721 = vand.u32 2147483647, %v713
        %v722 = vand.u32 2147483647, %v714
        %v723 = vand.u32 2147483647, %v715
        %v724 = vand.u32 2147483647, %v716
        %v725 = vand.u32 2147483647, %v717
        %v726 = vadd.f32 %v665, %v718
        %v727 = vadd.f32 %v666, %v719
        %v728 = vadd.f32 %v667, %v720
        %v729 = vadd.f32 %v668, %v721
        %v730 = vadd.f32 %v669, %v722
        %v731 = vadd.f32 %v670, %v723
        %v732 = vadd.f32 %v671, %v724
        %v733 = vadd.f32 %v672, %v725
        %734 = vset.pattern.permute.xlu0 9
        %735 = vperm.xlu0 %734, %v176
        %v736 = vpop.permute.xlu0 %735
        %738 = vset.pattern.permute.xlu0 9
        %739 = vperm.xlu0 %738, %v177
        %v740 = vpop.permute.xlu0 %739
        %742 = vset.pattern.permute.xlu0 9
        %743 = vperm.xlu0 %742, %v178
        %v744 = vpop.permute.xlu0 %743
        %746 = vset.pattern.permute.xlu0 9
        %747 = vperm.xlu0 %746, %v179
        %v748 = vpop.permute.xlu0 %747
        %750 = vset.pattern.permute.xlu0 9
        %751 = vperm.xlu0 %750, %v180
        %v752 = vpop.permute.xlu0 %751
        %754 = vset.pattern.permute.xlu0 9
        %755 = vperm.xlu0 %754, %v181
        %v756 = vpop.permute.xlu0 %755
        %758 = vset.pattern.permute.xlu0 9
        %759 = vperm.xlu0 %758, %v182
        %v760 = vpop.permute.xlu0 %759
        %762 = vset.pattern.permute.xlu0 9
        %763 = vperm.xlu0 %762, %v183
        %v764 = vpop.permute.xlu0 %763
        %v766 = vlaneseq
        %v767 = vshrl.u32 %v766, 7
        %v768 = vsub.s32 1, %v767
        %v769 = vrot.slane %v673, %v768
        %v770 = vsub.f32 %v736, %v769
        %v771 = vsub.f32 %v740, %v769
        %v772 = vsub.f32 %v744, %v769
        %v773 = vsub.f32 %v748, %v769
        %v774 = vsub.f32 %v752, %v769
        %v775 = vsub.f32 %v756, %v769
        %v776 = vsub.f32 %v760, %v769
        %v777 = vsub.f32 %v764, %v769
        %v778 = vand.u32 2147483647, %v770
        %v779 = vand.u32 2147483647, %v771
        %v780 = vand.u32 2147483647, %v772
        %v781 = vand.u32 2147483647, %v773
        %v782 = vand.u32 2147483647, %v774
        %v783 = vand.u32 2147483647, %v775
        %v784 = vand.u32 2147483647, %v776
        %v785 = vand.u32 2147483647, %v777
        %v786 = vadd.f32 %v726, %v778
        %v787 = vadd.f32 %v727, %v779
        %v788 = vadd.f32 %v728, %v780
        %v789 = vadd.f32 %v729, %v781
        %v790 = vadd.f32 %v730, %v782
        %v791 = vadd.f32 %v731, %v783
        %v792 = vadd.f32 %v732, %v784
        %v793 = vadd.f32 %v733, %v785
        %794 = vset.pattern.permute.xlu0 10
        %795 = vperm.xlu0 %794, %v176
        %v796 = vpop.permute.xlu0 %795
        %798 = vset.pattern.permute.xlu0 10
        %799 = vperm.xlu0 %798, %v177
        %v800 = vpop.permute.xlu0 %799
        %802 = vset.pattern.permute.xlu0 10
        %803 = vperm.xlu0 %802, %v178
        %v804 = vpop.permute.xlu0 %803
        %806 = vset.pattern.permute.xlu0 10
        %807 = vperm.xlu0 %806, %v179
        %v808 = vpop.permute.xlu0 %807
        %810 = vset.pattern.permute.xlu0 10
        %811 = vperm.xlu0 %810, %v180
        %v812 = vpop.permute.xlu0 %811
        %814 = vset.pattern.permute.xlu0 10
        %815 = vperm.xlu0 %814, %v181
        %v816 = vpop.permute.xlu0 %815
        %818 = vset.pattern.permute.xlu0 10
        %819 = vperm.xlu0 %818, %v182
        %v820 = vpop.permute.xlu0 %819
        %822 = vset.pattern.permute.xlu0 10
        %823 = vperm.xlu0 %822, %v183
        %v824 = vpop.permute.xlu0 %823
        %v826 = vlaneseq
        %v827 = vshrl.u32 %v826, 7
        %v828 = vsub.s32 2, %v827
        %v829 = vrot.slane %v673, %v828
        %v830 = vsub.f32 %v796, %v829
        %v831 = vsub.f32 %v800, %v829
        %v832 = vsub.f32 %v804, %v829
        %v833 = vsub.f32 %v808, %v829
        %v834 = vsub.f32 %v812, %v829
        %v835 = vsub.f32 %v816, %v829
        %v836 = vsub.f32 %v820, %v829
        %v837 = vsub.f32 %v824, %v829
        %v838 = vand.u32 2147483647, %v830
        %v839 = vand.u32 2147483647, %v831
        %v840 = vand.u32 2147483647, %v832
        %v841 = vand.u32 2147483647, %v833
        %v842 = vand.u32 2147483647, %v834
        %v843 = vand.u32 2147483647, %v835
        %v844 = vand.u32 2147483647, %v836
        %v845 = vand.u32 2147483647, %v837
        %v846 = vadd.f32 %v786, %v838
        %v847 = vadd.f32 %v787, %v839
        %v848 = vadd.f32 %v788, %v840
        %v849 = vadd.f32 %v789, %v841
        %v850 = vadd.f32 %v790, %v842
        %v851 = vadd.f32 %v791, %v843
        %v852 = vadd.f32 %v792, %v844
        %v853 = vadd.f32 %v793, %v845
        %854 = vset.pattern.permute.xlu0 11
        %855 = vperm.xlu0 %854, %v176
        %v856 = vpop.permute.xlu0 %855
        %858 = vset.pattern.permute.xlu0 11
        %859 = vperm.xlu0 %858, %v177
        %v860 = vpop.permute.xlu0 %859
        %862 = vset.pattern.permute.xlu0 11
        %863 = vperm.xlu0 %862, %v178
        %v864 = vpop.permute.xlu0 %863
        %866 = vset.pattern.permute.xlu0 11
        %867 = vperm.xlu0 %866, %v179
        %v868 = vpop.permute.xlu0 %867
        %870 = vset.pattern.permute.xlu0 11
        %871 = vperm.xlu0 %870, %v180
        %v872 = vpop.permute.xlu0 %871
        %874 = vset.pattern.permute.xlu0 11
        %875 = vperm.xlu0 %874, %v181
        %v876 = vpop.permute.xlu0 %875
        %878 = vset.pattern.permute.xlu0 11
        %879 = vperm.xlu0 %878, %v182
        %v880 = vpop.permute.xlu0 %879
        %882 = vset.pattern.permute.xlu0 11
        %883 = vperm.xlu0 %882, %v183
        %v884 = vpop.permute.xlu0 %883
        %v886 = vlaneseq
        %v887 = vshrl.u32 %v886, 7
        %v888 = vsub.s32 3, %v887
        %v889 = vrot.slane %v673, %v888
        %v890 = vsub.f32 %v856, %v889
        %v891 = vsub.f32 %v860, %v889
        %v892 = vsub.f32 %v864, %v889
        %v893 = vsub.f32 %v868, %v889
        %v894 = vsub.f32 %v872, %v889
        %v895 = vsub.f32 %v876, %v889
        %v896 = vsub.f32 %v880, %v889
        %v897 = vsub.f32 %v884, %v889
        %v898 = vand.u32 2147483647, %v890
        %v899 = vand.u32 2147483647, %v891
        %v900 = vand.u32 2147483647, %v892
        %v901 = vand.u32 2147483647, %v893
        %v902 = vand.u32 2147483647, %v894
        %v903 = vand.u32 2147483647, %v895
        %v904 = vand.u32 2147483647, %v896
        %v905 = vand.u32 2147483647, %v897
        %v906 = vadd.f32 %v846, %v898
        %v907 = vadd.f32 %v847, %v899
        %v908 = vadd.f32 %v848, %v900
        %v909 = vadd.f32 %v849, %v901
        %v910 = vadd.f32 %v850, %v902
        %v911 = vadd.f32 %v851, %v903
        %v912 = vadd.f32 %v852, %v904
        %v913 = vadd.f32 %v853, %v905
        %914 = vset.pattern.permute.xlu0 12
        %915 = vperm.xlu0 %914, %v176
        %v916 = vpop.permute.xlu0 %915
        %918 = vset.pattern.permute.xlu0 12
        %919 = vperm.xlu0 %918, %v177
        %v920 = vpop.permute.xlu0 %919
        %922 = vset.pattern.permute.xlu0 12
        %923 = vperm.xlu0 %922, %v178
        %v924 = vpop.permute.xlu0 %923
        %926 = vset.pattern.permute.xlu0 12
        %927 = vperm.xlu0 %926, %v179
        %v928 = vpop.permute.xlu0 %927
        %930 = vset.pattern.permute.xlu0 12
        %931 = vperm.xlu0 %930, %v180
        %v932 = vpop.permute.xlu0 %931
        %934 = vset.pattern.permute.xlu0 12
        %935 = vperm.xlu0 %934, %v181
        %v936 = vpop.permute.xlu0 %935
        %938 = vset.pattern.permute.xlu0 12
        %939 = vperm.xlu0 %938, %v182
        %v940 = vpop.permute.xlu0 %939
        %942 = vset.pattern.permute.xlu0 12
        %943 = vperm.xlu0 %942, %v183
        %v944 = vpop.permute.xlu0 %943
        %v946 = vlaneseq
        %v947 = vshrl.u32 %v946, 7
        %v948 = vsub.s32 4, %v947
        %v949 = vrot.slane %v673, %v948
        %v950 = vsub.f32 %v916, %v949
        %v951 = vsub.f32 %v920, %v949
        %v952 = vsub.f32 %v924, %v949
        %v953 = vsub.f32 %v928, %v949
        %v954 = vsub.f32 %v932, %v949
        %v955 = vsub.f32 %v936, %v949
        %v956 = vsub.f32 %v940, %v949
        %v957 = vsub.f32 %v944, %v949
        %v958 = vand.u32 2147483647, %v950
        %v959 = vand.u32 2147483647, %v951
        %v960 = vand.u32 2147483647, %v952
        %v961 = vand.u32 2147483647, %v953
        %v962 = vand.u32 2147483647, %v954
        %v963 = vand.u32 2147483647, %v955
        %v964 = vand.u32 2147483647, %v956
        %v965 = vand.u32 2147483647, %v957
        %v966 = vadd.f32 %v906, %v958
        %v967 = vadd.f32 %v907, %v959
        %v968 = vadd.f32 %v908, %v960
        %v969 = vadd.f32 %v909, %v961
        %v970 = vadd.f32 %v910, %v962
        %v971 = vadd.f32 %v911, %v963
        %v972 = vadd.f32 %v912, %v964
        %v973 = vadd.f32 %v913, %v965
        %974 = vset.pattern.permute.xlu0 13
        %975 = vperm.xlu0 %974, %v176
        %v976 = vpop.permute.xlu0 %975
        %978 = vset.pattern.permute.xlu0 13
        %979 = vperm.xlu0 %978, %v177
        %v980 = vpop.permute.xlu0 %979
        %982 = vset.pattern.permute.xlu0 13
        %983 = vperm.xlu0 %982, %v178
        %v984 = vpop.permute.xlu0 %983
        %986 = vset.pattern.permute.xlu0 13
        %987 = vperm.xlu0 %986, %v179
        %v988 = vpop.permute.xlu0 %987
        %990 = vset.pattern.permute.xlu0 13
        %991 = vperm.xlu0 %990, %v180
        %v992 = vpop.permute.xlu0 %991
        %994 = vset.pattern.permute.xlu0 13
        %995 = vperm.xlu0 %994, %v181
        %v996 = vpop.permute.xlu0 %995
        %998 = vset.pattern.permute.xlu0 13
        %999 = vperm.xlu0 %998, %v182
        %v1000 = vpop.permute.xlu0 %999
        %1002 = vset.pattern.permute.xlu0 13
        %1003 = vperm.xlu0 %1002, %v183
        %v1004 = vpop.permute.xlu0 %1003
        %v1006 = vlaneseq
        %v1007 = vshrl.u32 %v1006, 7
        %v1008 = vsub.s32 5, %v1007
        %v1009 = vrot.slane %v673, %v1008
        %v1010 = vsub.f32 %v976, %v1009
        %v1011 = vsub.f32 %v980, %v1009
        %v1012 = vsub.f32 %v984, %v1009
        %v1013 = vsub.f32 %v988, %v1009
        %v1014 = vsub.f32 %v992, %v1009
        %v1015 = vsub.f32 %v996, %v1009
        %v1016 = vsub.f32 %v1000, %v1009
        %v1017 = vsub.f32 %v1004, %v1009
        %v1018 = vand.u32 2147483647, %v1010
        %v1019 = vand.u32 2147483647, %v1011
        %v1020 = vand.u32 2147483647, %v1012
        %v1021 = vand.u32 2147483647, %v1013
        %v1022 = vand.u32 2147483647, %v1014
        %v1023 = vand.u32 2147483647, %v1015
        %v1024 = vand.u32 2147483647, %v1016
        %v1025 = vand.u32 2147483647, %v1017
        %v1026 = vadd.f32 %v966, %v1018
        %v1027 = vadd.f32 %v967, %v1019
        %v1028 = vadd.f32 %v968, %v1020
        %v1029 = vadd.f32 %v969, %v1021
        %v1030 = vadd.f32 %v970, %v1022
        %v1031 = vadd.f32 %v971, %v1023
        %v1032 = vadd.f32 %v972, %v1024
        %v1033 = vadd.f32 %v973, %v1025
        %1034 = vset.pattern.permute.xlu0 14
        %1035 = vperm.xlu0 %1034, %v176
        %v1036 = vpop.permute.xlu0 %1035
        %1038 = vset.pattern.permute.xlu0 14
        %1039 = vperm.xlu0 %1038, %v177
        %v1040 = vpop.permute.xlu0 %1039
        %1042 = vset.pattern.permute.xlu0 14
        %1043 = vperm.xlu0 %1042, %v178
        %v1044 = vpop.permute.xlu0 %1043
        %1046 = vset.pattern.permute.xlu0 14
        %1047 = vperm.xlu0 %1046, %v179
        %v1048 = vpop.permute.xlu0 %1047
        %1050 = vset.pattern.permute.xlu0 14
        %1051 = vperm.xlu0 %1050, %v180
        %v1052 = vpop.permute.xlu0 %1051
        %1054 = vset.pattern.permute.xlu0 14
        %1055 = vperm.xlu0 %1054, %v181
        %v1056 = vpop.permute.xlu0 %1055
        %1058 = vset.pattern.permute.xlu0 14
        %1059 = vperm.xlu0 %1058, %v182
        %v1060 = vpop.permute.xlu0 %1059
        %1062 = vset.pattern.permute.xlu0 14
        %1063 = vperm.xlu0 %1062, %v183
        %v1064 = vpop.permute.xlu0 %1063
        %v1066 = vlaneseq
        %v1067 = vshrl.u32 %v1066, 7
        %v1068 = vsub.s32 6, %v1067
        %v1069 = vrot.slane %v673, %v1068
        %v1070 = vsub.f32 %v1036, %v1069
        %v1071 = vsub.f32 %v1040, %v1069
        %v1072 = vsub.f32 %v1044, %v1069
        %v1073 = vsub.f32 %v1048, %v1069
        %v1074 = vsub.f32 %v1052, %v1069
        %v1075 = vsub.f32 %v1056, %v1069
        %v1076 = vsub.f32 %v1060, %v1069
        %v1077 = vsub.f32 %v1064, %v1069
        %v1078 = vand.u32 2147483647, %v1070
        %v1079 = vand.u32 2147483647, %v1071
        %v1080 = vand.u32 2147483647, %v1072
        %v1081 = vand.u32 2147483647, %v1073
        %v1082 = vand.u32 2147483647, %v1074
        %v1083 = vand.u32 2147483647, %v1075
        %v1084 = vand.u32 2147483647, %v1076
        %v1085 = vand.u32 2147483647, %v1077
        %v1086 = vadd.f32 %v1026, %v1078
        %v1087 = vadd.f32 %v1027, %v1079
        %v1088 = vadd.f32 %v1028, %v1080
        %v1089 = vadd.f32 %v1029, %v1081
        %v1090 = vadd.f32 %v1030, %v1082
        %v1091 = vadd.f32 %v1031, %v1083
        %v1092 = vadd.f32 %v1032, %v1084
        %v1093 = vadd.f32 %v1033, %v1085
        %1094 = vset.pattern.permute.xlu0 15
        %1095 = vperm.xlu0 %1094, %v176
        %v1096 = vpop.permute.xlu0 %1095
        %1098 = vset.pattern.permute.xlu0 15
        %1099 = vperm.xlu0 %1098, %v177
        %v1100 = vpop.permute.xlu0 %1099
        %1102 = vset.pattern.permute.xlu0 15
        %1103 = vperm.xlu0 %1102, %v178
        %v1104 = vpop.permute.xlu0 %1103
        %1106 = vset.pattern.permute.xlu0 15
        %1107 = vperm.xlu0 %1106, %v179
        %v1108 = vpop.permute.xlu0 %1107
        %1110 = vset.pattern.permute.xlu0 15
        %1111 = vperm.xlu0 %1110, %v180
        %v1112 = vpop.permute.xlu0 %1111
        %1114 = vset.pattern.permute.xlu0 15
        %1115 = vperm.xlu0 %1114, %v181
        %v1116 = vpop.permute.xlu0 %1115
        %1118 = vset.pattern.permute.xlu0 15
        %1119 = vperm.xlu0 %1118, %v182
        %v1120 = vpop.permute.xlu0 %1119
        %1122 = vset.pattern.permute.xlu0 15
        %1123 = vperm.xlu0 %1122, %v183
        %v1124 = vpop.permute.xlu0 %1123
        %v1126 = vlaneseq
        %v1127 = vshrl.u32 %v1126, 7
        %v1128 = vsub.s32 7, %v1127
        %v1129 = vrot.slane %v673, %v1128
        %v1130 = vsub.f32 %v1096, %v1129
        %v1131 = vsub.f32 %v1100, %v1129
        %v1132 = vsub.f32 %v1104, %v1129
        %v1133 = vsub.f32 %v1108, %v1129
        %v1134 = vsub.f32 %v1112, %v1129
        %v1135 = vsub.f32 %v1116, %v1129
        %v1136 = vsub.f32 %v1120, %v1129
        %v1137 = vsub.f32 %v1124, %v1129
        %v1138 = vand.u32 2147483647, %v1130
        %v1139 = vand.u32 2147483647, %v1131
        %v1140 = vand.u32 2147483647, %v1132
        %v1141 = vand.u32 2147483647, %v1133
        %v1142 = vand.u32 2147483647, %v1134
        %v1143 = vand.u32 2147483647, %v1135
        %v1144 = vand.u32 2147483647, %v1136
        %v1145 = vand.u32 2147483647, %v1137
        %v1146 = vadd.f32 %v1086, %v1138
        %v1147 = vadd.f32 %v1087, %v1139
        %v1148 = vadd.f32 %v1088, %v1140
        %v1149 = vadd.f32 %v1089, %v1141
        %v1150 = vadd.f32 %v1090, %v1142
        %v1151 = vadd.f32 %v1091, %v1143
        %v1152 = vadd.f32 %v1092, %v1144
        %v1153 = vadd.f32 %v1093, %v1145
        %v1154 = vld [vmem:[%s174 + $0x10] sm:$0xff]
        %1155 = vset.pattern.permute.xlu0 16
        %1156 = vperm.xlu0 %1155, %v176
        %v1157 = vpop.permute.xlu0 %1156
        %1159 = vset.pattern.permute.xlu0 16
        %1160 = vperm.xlu0 %1159, %v177
        %v1161 = vpop.permute.xlu0 %1160
        %1163 = vset.pattern.permute.xlu0 16
        %1164 = vperm.xlu0 %1163, %v178
        %v1165 = vpop.permute.xlu0 %1164
        %1167 = vset.pattern.permute.xlu0 16
        %1168 = vperm.xlu0 %1167, %v179
        %v1169 = vpop.permute.xlu0 %1168
        %1171 = vset.pattern.permute.xlu0 16
        %1172 = vperm.xlu0 %1171, %v180
        %v1173 = vpop.permute.xlu0 %1172
        %1175 = vset.pattern.permute.xlu0 16
        %1176 = vperm.xlu0 %1175, %v181
        %v1177 = vpop.permute.xlu0 %1176
        %1179 = vset.pattern.permute.xlu0 16
        %1180 = vperm.xlu0 %1179, %v182
        %v1181 = vpop.permute.xlu0 %1180
        %1183 = vset.pattern.permute.xlu0 16
        %1184 = vperm.xlu0 %1183, %v183
        %v1185 = vpop.permute.xlu0 %1184
        %v1187 = vlaneseq
        %v1188 = vshrl.u32 %v1187, 7
        %v1189 = vsub.s32 0, %v1188
        %v1190 = vrot.slane %v1154, %v1189
        %v1191 = vsub.f32 %v1157, %v1190
        %v1192 = vsub.f32 %v1161, %v1190
        %v1193 = vsub.f32 %v1165, %v1190
        %v1194 = vsub.f32 %v1169, %v1190
        %v1195 = vsub.f32 %v1173, %v1190
        %v1196 = vsub.f32 %v1177, %v1190
        %v1197 = vsub.f32 %v1181, %v1190
        %v1198 = vsub.f32 %v1185, %v1190
        %v1199 = vand.u32 2147483647, %v1191
        %v1200 = vand.u32 2147483647, %v1192
        %v1201 = vand.u32 2147483647, %v1193
        %v1202 = vand.u32 2147483647, %v1194
        %v1203 = vand.u32 2147483647, %v1195
        %v1204 = vand.u32 2147483647, %v1196
        %v1205 = vand.u32 2147483647, %v1197
        %v1206 = vand.u32 2147483647, %v1198
        %v1207 = vadd.f32 %v1146, %v1199
        %v1208 = vadd.f32 %v1147, %v1200
        %v1209 = vadd.f32 %v1148, %v1201
        %v1210 = vadd.f32 %v1149, %v1202
        %v1211 = vadd.f32 %v1150, %v1203
        %v1212 = vadd.f32 %v1151, %v1204
        %v1213 = vadd.f32 %v1152, %v1205
        %v1214 = vadd.f32 %v1153, %v1206
        %1215 = vset.pattern.permute.xlu0 17
        %1216 = vperm.xlu0 %1215, %v176
        %v1217 = vpop.permute.xlu0 %1216
        %1219 = vset.pattern.permute.xlu0 17
        %1220 = vperm.xlu0 %1219, %v177
        %v1221 = vpop.permute.xlu0 %1220
        %1223 = vset.pattern.permute.xlu0 17
        %1224 = vperm.xlu0 %1223, %v178
        %v1225 = vpop.permute.xlu0 %1224
        %1227 = vset.pattern.permute.xlu0 17
        %1228 = vperm.xlu0 %1227, %v179
        %v1229 = vpop.permute.xlu0 %1228
        %1231 = vset.pattern.permute.xlu0 17
        %1232 = vperm.xlu0 %1231, %v180
        %v1233 = vpop.permute.xlu0 %1232
        %1235 = vset.pattern.permute.xlu0 17
        %1236 = vperm.xlu0 %1235, %v181
        %v1237 = vpop.permute.xlu0 %1236
        %1239 = vset.pattern.permute.xlu0 17
        %1240 = vperm.xlu0 %1239, %v182
        %v1241 = vpop.permute.xlu0 %1240
        %1243 = vset.pattern.permute.xlu0 17
        %1244 = vperm.xlu0 %1243, %v183
        %v1245 = vpop.permute.xlu0 %1244
        %v1247 = vlaneseq
        %v1248 = vshrl.u32 %v1247, 7
        %v1249 = vsub.s32 1, %v1248
        %v1250 = vrot.slane %v1154, %v1249
        %v1251 = vsub.f32 %v1217, %v1250
        %v1252 = vsub.f32 %v1221, %v1250
        %v1253 = vsub.f32 %v1225, %v1250
        %v1254 = vsub.f32 %v1229, %v1250
        %v1255 = vsub.f32 %v1233, %v1250
        %v1256 = vsub.f32 %v1237, %v1250
        %v1257 = vsub.f32 %v1241, %v1250
        %v1258 = vsub.f32 %v1245, %v1250
        %v1259 = vand.u32 2147483647, %v1251
        %v1260 = vand.u32 2147483647, %v1252
        %v1261 = vand.u32 2147483647, %v1253
        %v1262 = vand.u32 2147483647, %v1254
        %v1263 = vand.u32 2147483647, %v1255
        %v1264 = vand.u32 2147483647, %v1256
        %v1265 = vand.u32 2147483647, %v1257
        %v1266 = vand.u32 2147483647, %v1258
        %v1267 = vadd.f32 %v1207, %v1259
        %v1268 = vadd.f32 %v1208, %v1260
        %v1269 = vadd.f32 %v1209, %v1261
        %v1270 = vadd.f32 %v1210, %v1262
        %v1271 = vadd.f32 %v1211, %v1263
        %v1272 = vadd.f32 %v1212, %v1264
        %v1273 = vadd.f32 %v1213, %v1265
        %v1274 = vadd.f32 %v1214, %v1266
        %1275 = vset.pattern.permute.xlu0 18
        %1276 = vperm.xlu0 %1275, %v176
        %v1277 = vpop.permute.xlu0 %1276
        %1279 = vset.pattern.permute.xlu0 18
        %1280 = vperm.xlu0 %1279, %v177
        %v1281 = vpop.permute.xlu0 %1280
        %1283 = vset.pattern.permute.xlu0 18
        %1284 = vperm.xlu0 %1283, %v178
        %v1285 = vpop.permute.xlu0 %1284
        %1287 = vset.pattern.permute.xlu0 18
        %1288 = vperm.xlu0 %1287, %v179
        %v1289 = vpop.permute.xlu0 %1288
        %1291 = vset.pattern.permute.xlu0 18
        %1292 = vperm.xlu0 %1291, %v180
        %v1293 = vpop.permute.xlu0 %1292
        %1295 = vset.pattern.permute.xlu0 18
        %1296 = vperm.xlu0 %1295, %v181
        %v1297 = vpop.permute.xlu0 %1296
        %1299 = vset.pattern.permute.xlu0 18
        %1300 = vperm.xlu0 %1299, %v182
        %v1301 = vpop.permute.xlu0 %1300
        %1303 = vset.pattern.permute.xlu0 18
        %1304 = vperm.xlu0 %1303, %v183
        %v1305 = vpop.permute.xlu0 %1304
        %v1307 = vlaneseq
        %v1308 = vshrl.u32 %v1307, 7
        %v1309 = vsub.s32 2, %v1308
        %v1310 = vrot.slane %v1154, %v1309
        %v1311 = vsub.f32 %v1277, %v1310
        %v1312 = vsub.f32 %v1281, %v1310
        %v1313 = vsub.f32 %v1285, %v1310
        %v1314 = vsub.f32 %v1289, %v1310
        %v1315 = vsub.f32 %v1293, %v1310
        %v1316 = vsub.f32 %v1297, %v1310
        %v1317 = vsub.f32 %v1301, %v1310
        %v1318 = vsub.f32 %v1305, %v1310
        %v1319 = vand.u32 2147483647, %v1311
        %v1320 = vand.u32 2147483647, %v1312
        %v1321 = vand.u32 2147483647, %v1313
        %v1322 = vand.u32 2147483647, %v1314
        %v1323 = vand.u32 2147483647, %v1315
        %v1324 = vand.u32 2147483647, %v1316
        %v1325 = vand.u32 2147483647, %v1317
        %v1326 = vand.u32 2147483647, %v1318
        %v1327 = vadd.f32 %v1267, %v1319
        %v1328 = vadd.f32 %v1268, %v1320
        %v1329 = vadd.f32 %v1269, %v1321
        %v1330 = vadd.f32 %v1270, %v1322
        %v1331 = vadd.f32 %v1271, %v1323
        %v1332 = vadd.f32 %v1272, %v1324
        %v1333 = vadd.f32 %v1273, %v1325
        %v1334 = vadd.f32 %v1274, %v1326
        %1335 = vset.pattern.permute.xlu0 19
        %1336 = vperm.xlu0 %1335, %v176
        %v1337 = vpop.permute.xlu0 %1336
        %1339 = vset.pattern.permute.xlu0 19
        %1340 = vperm.xlu0 %1339, %v177
        %v1341 = vpop.permute.xlu0 %1340
        %1343 = vset.pattern.permute.xlu0 19
        %1344 = vperm.xlu0 %1343, %v178
        %v1345 = vpop.permute.xlu0 %1344
        %1347 = vset.pattern.permute.xlu0 19
        %1348 = vperm.xlu0 %1347, %v179
        %v1349 = vpop.permute.xlu0 %1348
        %1351 = vset.pattern.permute.xlu0 19
        %1352 = vperm.xlu0 %1351, %v180
        %v1353 = vpop.permute.xlu0 %1352
        %1355 = vset.pattern.permute.xlu0 19
        %1356 = vperm.xlu0 %1355, %v181
        %v1357 = vpop.permute.xlu0 %1356
        %1359 = vset.pattern.permute.xlu0 19
        %1360 = vperm.xlu0 %1359, %v182
        %v1361 = vpop.permute.xlu0 %1360
        %1363 = vset.pattern.permute.xlu0 19
        %1364 = vperm.xlu0 %1363, %v183
        %v1365 = vpop.permute.xlu0 %1364
        %v1367 = vlaneseq
        %v1368 = vshrl.u32 %v1367, 7
        %v1369 = vsub.s32 3, %v1368
        %v1370 = vrot.slane %v1154, %v1369
        %v1371 = vsub.f32 %v1337, %v1370
        %v1372 = vsub.f32 %v1341, %v1370
        %v1373 = vsub.f32 %v1345, %v1370
        %v1374 = vsub.f32 %v1349, %v1370
        %v1375 = vsub.f32 %v1353, %v1370
        %v1376 = vsub.f32 %v1357, %v1370
        %v1377 = vsub.f32 %v1361, %v1370
        %v1378 = vsub.f32 %v1365, %v1370
        %v1379 = vand.u32 2147483647, %v1371
        %v1380 = vand.u32 2147483647, %v1372
        %v1381 = vand.u32 2147483647, %v1373
        %v1382 = vand.u32 2147483647, %v1374
        %v1383 = vand.u32 2147483647, %v1375
        %v1384 = vand.u32 2147483647, %v1376
        %v1385 = vand.u32 2147483647, %v1377
        %v1386 = vand.u32 2147483647, %v1378
        %v1387 = vadd.f32 %v1327, %v1379
        %v1388 = vadd.f32 %v1328, %v1380
        %v1389 = vadd.f32 %v1329, %v1381
        %v1390 = vadd.f32 %v1330, %v1382
        %v1391 = vadd.f32 %v1331, %v1383
        %v1392 = vadd.f32 %v1332, %v1384
        %v1393 = vadd.f32 %v1333, %v1385
        %v1394 = vadd.f32 %v1334, %v1386
        %1395 = vset.pattern.permute.xlu0 20
        %1396 = vperm.xlu0 %1395, %v176
        %v1397 = vpop.permute.xlu0 %1396
        %1399 = vset.pattern.permute.xlu0 20
        %1400 = vperm.xlu0 %1399, %v177
        %v1401 = vpop.permute.xlu0 %1400
        %1403 = vset.pattern.permute.xlu0 20
        %1404 = vperm.xlu0 %1403, %v178
        %v1405 = vpop.permute.xlu0 %1404
        %1407 = vset.pattern.permute.xlu0 20
        %1408 = vperm.xlu0 %1407, %v179
        %v1409 = vpop.permute.xlu0 %1408
        %1411 = vset.pattern.permute.xlu0 20
        %1412 = vperm.xlu0 %1411, %v180
        %v1413 = vpop.permute.xlu0 %1412
        %1415 = vset.pattern.permute.xlu0 20
        %1416 = vperm.xlu0 %1415, %v181
        %v1417 = vpop.permute.xlu0 %1416
        %1419 = vset.pattern.permute.xlu0 20
        %1420 = vperm.xlu0 %1419, %v182
        %v1421 = vpop.permute.xlu0 %1420
        %1423 = vset.pattern.permute.xlu0 20
        %1424 = vperm.xlu0 %1423, %v183
        %v1425 = vpop.permute.xlu0 %1424
        %v1427 = vlaneseq
        %v1428 = vshrl.u32 %v1427, 7
        %v1429 = vsub.s32 4, %v1428
        %v1430 = vrot.slane %v1154, %v1429
        %v1431 = vsub.f32 %v1397, %v1430
        %v1432 = vsub.f32 %v1401, %v1430
        %v1433 = vsub.f32 %v1405, %v1430
        %v1434 = vsub.f32 %v1409, %v1430
        %v1435 = vsub.f32 %v1413, %v1430
        %v1436 = vsub.f32 %v1417, %v1430
        %v1437 = vsub.f32 %v1421, %v1430
        %v1438 = vsub.f32 %v1425, %v1430
        %v1439 = vand.u32 2147483647, %v1431
        %v1440 = vand.u32 2147483647, %v1432
        %v1441 = vand.u32 2147483647, %v1433
        %v1442 = vand.u32 2147483647, %v1434
        %v1443 = vand.u32 2147483647, %v1435
        %v1444 = vand.u32 2147483647, %v1436
        %v1445 = vand.u32 2147483647, %v1437
        %v1446 = vand.u32 2147483647, %v1438
        %v1447 = vadd.f32 %v1387, %v1439
        %v1448 = vadd.f32 %v1388, %v1440
        %v1449 = vadd.f32 %v1389, %v1441
        %v1450 = vadd.f32 %v1390, %v1442
        %v1451 = vadd.f32 %v1391, %v1443
        %v1452 = vadd.f32 %v1392, %v1444
        %v1453 = vadd.f32 %v1393, %v1445
        %v1454 = vadd.f32 %v1394, %v1446
        %1455 = vset.pattern.permute.xlu0 21
        %1456 = vperm.xlu0 %1455, %v176
        %v1457 = vpop.permute.xlu0 %1456
        %1459 = vset.pattern.permute.xlu0 21
        %1460 = vperm.xlu0 %1459, %v177
        %v1461 = vpop.permute.xlu0 %1460
        %1463 = vset.pattern.permute.xlu0 21
        %1464 = vperm.xlu0 %1463, %v178
        %v1465 = vpop.permute.xlu0 %1464
        %1467 = vset.pattern.permute.xlu0 21
        %1468 = vperm.xlu0 %1467, %v179
        %v1469 = vpop.permute.xlu0 %1468
        %1471 = vset.pattern.permute.xlu0 21
        %1472 = vperm.xlu0 %1471, %v180
        %v1473 = vpop.permute.xlu0 %1472
        %1475 = vset.pattern.permute.xlu0 21
        %1476 = vperm.xlu0 %1475, %v181
        %v1477 = vpop.permute.xlu0 %1476
        %1479 = vset.pattern.permute.xlu0 21
        %1480 = vperm.xlu0 %1479, %v182
        %v1481 = vpop.permute.xlu0 %1480
        %1483 = vset.pattern.permute.xlu0 21
        %1484 = vperm.xlu0 %1483, %v183
        %v1485 = vpop.permute.xlu0 %1484
        %v1487 = vlaneseq
        %v1488 = vshrl.u32 %v1487, 7
        %v1489 = vsub.s32 5, %v1488
        %v1490 = vrot.slane %v1154, %v1489
        %v1491 = vsub.f32 %v1457, %v1490
        %v1492 = vsub.f32 %v1461, %v1490
        %v1493 = vsub.f32 %v1465, %v1490
        %v1494 = vsub.f32 %v1469, %v1490
        %v1495 = vsub.f32 %v1473, %v1490
        %v1496 = vsub.f32 %v1477, %v1490
        %v1497 = vsub.f32 %v1481, %v1490
        %v1498 = vsub.f32 %v1485, %v1490
        %v1499 = vand.u32 2147483647, %v1491
        %v1500 = vand.u32 2147483647, %v1492
        %v1501 = vand.u32 2147483647, %v1493
        %v1502 = vand.u32 2147483647, %v1494
        %v1503 = vand.u32 2147483647, %v1495
        %v1504 = vand.u32 2147483647, %v1496
        %v1505 = vand.u32 2147483647, %v1497
        %v1506 = vand.u32 2147483647, %v1498
        %v1507 = vadd.f32 %v1447, %v1499
        %v1508 = vadd.f32 %v1448, %v1500
        %v1509 = vadd.f32 %v1449, %v1501
        %v1510 = vadd.f32 %v1450, %v1502
        %v1511 = vadd.f32 %v1451, %v1503
        %v1512 = vadd.f32 %v1452, %v1504
        %v1513 = vadd.f32 %v1453, %v1505
        %v1514 = vadd.f32 %v1454, %v1506
        %1515 = vset.pattern.permute.xlu0 22
        %1516 = vperm.xlu0 %1515, %v176
        %v1517 = vpop.permute.xlu0 %1516
        %1519 = vset.pattern.permute.xlu0 22
        %1520 = vperm.xlu0 %1519, %v177
        %v1521 = vpop.permute.xlu0 %1520
        %1523 = vset.pattern.permute.xlu0 22
        %1524 = vperm.xlu0 %1523, %v178
        %v1525 = vpop.permute.xlu0 %1524
        %1527 = vset.pattern.permute.xlu0 22
        %1528 = vperm.xlu0 %1527, %v179
        %v1529 = vpop.permute.xlu0 %1528
        %1531 = vset.pattern.permute.xlu0 22
        %1532 = vperm.xlu0 %1531, %v180
        %v1533 = vpop.permute.xlu0 %1532
        %1535 = vset.pattern.permute.xlu0 22
        %1536 = vperm.xlu0 %1535, %v181
        %v1537 = vpop.permute.xlu0 %1536
        %1539 = vset.pattern.permute.xlu0 22
        %1540 = vperm.xlu0 %1539, %v182
        %v1541 = vpop.permute.xlu0 %1540
        %1543 = vset.pattern.permute.xlu0 22
        %1544 = vperm.xlu0 %1543, %v183
        %v1545 = vpop.permute.xlu0 %1544
        %v1547 = vlaneseq
        %v1548 = vshrl.u32 %v1547, 7
        %v1549 = vsub.s32 6, %v1548
        %v1550 = vrot.slane %v1154, %v1549
        %v1551 = vsub.f32 %v1517, %v1550
        %v1552 = vsub.f32 %v1521, %v1550
        %v1553 = vsub.f32 %v1525, %v1550
        %v1554 = vsub.f32 %v1529, %v1550
        %v1555 = vsub.f32 %v1533, %v1550
        %v1556 = vsub.f32 %v1537, %v1550
        %v1557 = vsub.f32 %v1541, %v1550
        %v1558 = vsub.f32 %v1545, %v1550
        %v1559 = vand.u32 2147483647, %v1551
        %v1560 = vand.u32 2147483647, %v1552
        %v1561 = vand.u32 2147483647, %v1553
        %v1562 = vand.u32 2147483647, %v1554
        %v1563 = vand.u32 2147483647, %v1555
        %v1564 = vand.u32 2147483647, %v1556
        %v1565 = vand.u32 2147483647, %v1557
        %v1566 = vand.u32 2147483647, %v1558
        %v1567 = vadd.f32 %v1507, %v1559
        %v1568 = vadd.f32 %v1508, %v1560
        %v1569 = vadd.f32 %v1509, %v1561
        %v1570 = vadd.f32 %v1510, %v1562
        %v1571 = vadd.f32 %v1511, %v1563
        %v1572 = vadd.f32 %v1512, %v1564
        %v1573 = vadd.f32 %v1513, %v1565
        %v1574 = vadd.f32 %v1514, %v1566
        %1575 = vset.pattern.permute.xlu0 23
        %1576 = vperm.xlu0 %1575, %v176
        %v1577 = vpop.permute.xlu0 %1576
        %1579 = vset.pattern.permute.xlu0 23
        %1580 = vperm.xlu0 %1579, %v177
        %v1581 = vpop.permute.xlu0 %1580
        %1583 = vset.pattern.permute.xlu0 23
        %1584 = vperm.xlu0 %1583, %v178
        %v1585 = vpop.permute.xlu0 %1584
        %1587 = vset.pattern.permute.xlu0 23
        %1588 = vperm.xlu0 %1587, %v179
        %v1589 = vpop.permute.xlu0 %1588
        %1591 = vset.pattern.permute.xlu0 23
        %1592 = vperm.xlu0 %1591, %v180
        %v1593 = vpop.permute.xlu0 %1592
        %1595 = vset.pattern.permute.xlu0 23
        %1596 = vperm.xlu0 %1595, %v181
        %v1597 = vpop.permute.xlu0 %1596
        %1599 = vset.pattern.permute.xlu0 23
        %1600 = vperm.xlu0 %1599, %v182
        %v1601 = vpop.permute.xlu0 %1600
        %1603 = vset.pattern.permute.xlu0 23
        %1604 = vperm.xlu0 %1603, %v183
        %v1605 = vpop.permute.xlu0 %1604
        %v1607 = vlaneseq
        %v1608 = vshrl.u32 %v1607, 7
        %v1609 = vsub.s32 7, %v1608
        %v1610 = vrot.slane %v1154, %v1609
        %v1611 = vsub.f32 %v1577, %v1610
        %v1612 = vsub.f32 %v1581, %v1610
        %v1613 = vsub.f32 %v1585, %v1610
        %v1614 = vsub.f32 %v1589, %v1610
        %v1615 = vsub.f32 %v1593, %v1610
        %v1616 = vsub.f32 %v1597, %v1610
        %v1617 = vsub.f32 %v1601, %v1610
        %v1618 = vsub.f32 %v1605, %v1610
        %v1619 = vand.u32 2147483647, %v1611
        %v1620 = vand.u32 2147483647, %v1612
        %v1621 = vand.u32 2147483647, %v1613
        %v1622 = vand.u32 2147483647, %v1614
        %v1623 = vand.u32 2147483647, %v1615
        %v1624 = vand.u32 2147483647, %v1616
        %v1625 = vand.u32 2147483647, %v1617
        %v1626 = vand.u32 2147483647, %v1618
        %v1627 = vadd.f32 %v1567, %v1619
        %v1628 = vadd.f32 %v1568, %v1620
        %v1629 = vadd.f32 %v1569, %v1621
        %v1630 = vadd.f32 %v1570, %v1622
        %v1631 = vadd.f32 %v1571, %v1623
        %v1632 = vadd.f32 %v1572, %v1624
        %v1633 = vadd.f32 %v1573, %v1625
        %v1634 = vadd.f32 %v1574, %v1626
        %v1635 = vld [vmem:[%s174 + $0x18] sm:$0xff]
        %1636 = vset.pattern.permute.xlu0 24
        %1637 = vperm.xlu0 %1636, %v176
        %v1638 = vpop.permute.xlu0 %1637
        %1640 = vset.pattern.permute.xlu0 24
        %1641 = vperm.xlu0 %1640, %v177
        %v1642 = vpop.permute.xlu0 %1641
        %1644 = vset.pattern.permute.xlu0 24
        %1645 = vperm.xlu0 %1644, %v178
        %v1646 = vpop.permute.xlu0 %1645
        %1648 = vset.pattern.permute.xlu0 24
        %1649 = vperm.xlu0 %1648, %v179
        %v1650 = vpop.permute.xlu0 %1649
        %1652 = vset.pattern.permute.xlu0 24
        %1653 = vperm.xlu0 %1652, %v180
        %v1654 = vpop.permute.xlu0 %1653
        %1656 = vset.pattern.permute.xlu0 24
        %1657 = vperm.xlu0 %1656, %v181
        %v1658 = vpop.permute.xlu0 %1657
        %1660 = vset.pattern.permute.xlu0 24
        %1661 = vperm.xlu0 %1660, %v182
        %v1662 = vpop.permute.xlu0 %1661
        %1664 = vset.pattern.permute.xlu0 24
        %1665 = vperm.xlu0 %1664, %v183
        %v1666 = vpop.permute.xlu0 %1665
        %v1668 = vlaneseq
        %v1669 = vshrl.u32 %v1668, 7
        %v1670 = vsub.s32 0, %v1669
        %v1671 = vrot.slane %v1635, %v1670
        %v1672 = vsub.f32 %v1638, %v1671
        %v1673 = vsub.f32 %v1642, %v1671
        %v1674 = vsub.f32 %v1646, %v1671
        %v1675 = vsub.f32 %v1650, %v1671
        %v1676 = vsub.f32 %v1654, %v1671
        %v1677 = vsub.f32 %v1658, %v1671
        %v1678 = vsub.f32 %v1662, %v1671
        %v1679 = vsub.f32 %v1666, %v1671
        %v1680 = vand.u32 2147483647, %v1672
        %v1681 = vand.u32 2147483647, %v1673
        %v1682 = vand.u32 2147483647, %v1674
        %v1683 = vand.u32 2147483647, %v1675
        %v1684 = vand.u32 2147483647, %v1676
        %v1685 = vand.u32 2147483647, %v1677
        %v1686 = vand.u32 2147483647, %v1678
        %v1687 = vand.u32 2147483647, %v1679
        %v1688 = vadd.f32 %v1627, %v1680
        %v1689 = vadd.f32 %v1628, %v1681
        %v1690 = vadd.f32 %v1629, %v1682
        %v1691 = vadd.f32 %v1630, %v1683
        %v1692 = vadd.f32 %v1631, %v1684
        %v1693 = vadd.f32 %v1632, %v1685
        %v1694 = vadd.f32 %v1633, %v1686
        %v1695 = vadd.f32 %v1634, %v1687
        %1696 = vset.pattern.permute.xlu0 25
        %1697 = vperm.xlu0 %1696, %v176
        %v1698 = vpop.permute.xlu0 %1697
        %1700 = vset.pattern.permute.xlu0 25
        %1701 = vperm.xlu0 %1700, %v177
        %v1702 = vpop.permute.xlu0 %1701
        %1704 = vset.pattern.permute.xlu0 25
        %1705 = vperm.xlu0 %1704, %v178
        %v1706 = vpop.permute.xlu0 %1705
        %1708 = vset.pattern.permute.xlu0 25
        %1709 = vperm.xlu0 %1708, %v179
        %v1710 = vpop.permute.xlu0 %1709
        %1712 = vset.pattern.permute.xlu0 25
        %1713 = vperm.xlu0 %1712, %v180
        %v1714 = vpop.permute.xlu0 %1713
        %1716 = vset.pattern.permute.xlu0 25
        %1717 = vperm.xlu0 %1716, %v181
        %v1718 = vpop.permute.xlu0 %1717
        %1720 = vset.pattern.permute.xlu0 25
        %1721 = vperm.xlu0 %1720, %v182
        %v1722 = vpop.permute.xlu0 %1721
        %1724 = vset.pattern.permute.xlu0 25
        %1725 = vperm.xlu0 %1724, %v183
        %v1726 = vpop.permute.xlu0 %1725
        %v1728 = vlaneseq
        %v1729 = vshrl.u32 %v1728, 7
        %v1730 = vsub.s32 1, %v1729
        %v1731 = vrot.slane %v1635, %v1730
        %v1732 = vsub.f32 %v1698, %v1731
        %v1733 = vsub.f32 %v1702, %v1731
        %v1734 = vsub.f32 %v1706, %v1731
        %v1735 = vsub.f32 %v1710, %v1731
        %v1736 = vsub.f32 %v1714, %v1731
        %v1737 = vsub.f32 %v1718, %v1731
        %v1738 = vsub.f32 %v1722, %v1731
        %v1739 = vsub.f32 %v1726, %v1731
        %v1740 = vand.u32 2147483647, %v1732
        %v1741 = vand.u32 2147483647, %v1733
        %v1742 = vand.u32 2147483647, %v1734
        %v1743 = vand.u32 2147483647, %v1735
        %v1744 = vand.u32 2147483647, %v1736
        %v1745 = vand.u32 2147483647, %v1737
        %v1746 = vand.u32 2147483647, %v1738
        %v1747 = vand.u32 2147483647, %v1739
        %v1748 = vadd.f32 %v1688, %v1740
        %v1749 = vadd.f32 %v1689, %v1741
        %v1750 = vadd.f32 %v1690, %v1742
        %v1751 = vadd.f32 %v1691, %v1743
        %v1752 = vadd.f32 %v1692, %v1744
        %v1753 = vadd.f32 %v1693, %v1745
        %v1754 = vadd.f32 %v1694, %v1746
        %v1755 = vadd.f32 %v1695, %v1747
        %1756 = vset.pattern.permute.xlu0 26
        %1757 = vperm.xlu0 %1756, %v176
        %v1758 = vpop.permute.xlu0 %1757
        %1760 = vset.pattern.permute.xlu0 26
        %1761 = vperm.xlu0 %1760, %v177
        %v1762 = vpop.permute.xlu0 %1761
        %1764 = vset.pattern.permute.xlu0 26
        %1765 = vperm.xlu0 %1764, %v178
        %v1766 = vpop.permute.xlu0 %1765
        %1768 = vset.pattern.permute.xlu0 26
        %1769 = vperm.xlu0 %1768, %v179
        %v1770 = vpop.permute.xlu0 %1769
        %1772 = vset.pattern.permute.xlu0 26
        %1773 = vperm.xlu0 %1772, %v180
        %v1774 = vpop.permute.xlu0 %1773
        %1776 = vset.pattern.permute.xlu0 26
        %1777 = vperm.xlu0 %1776, %v181
        %v1778 = vpop.permute.xlu0 %1777
        %1780 = vset.pattern.permute.xlu0 26
        %1781 = vperm.xlu0 %1780, %v182
        %v1782 = vpop.permute.xlu0 %1781
        %1784 = vset.pattern.permute.xlu0 26
        %1785 = vperm.xlu0 %1784, %v183
        %v1786 = vpop.permute.xlu0 %1785
        %v1788 = vlaneseq
        %v1789 = vshrl.u32 %v1788, 7
        %v1790 = vsub.s32 2, %v1789
        %v1791 = vrot.slane %v1635, %v1790
        %v1792 = vsub.f32 %v1758, %v1791
        %v1793 = vsub.f32 %v1762, %v1791
        %v1794 = vsub.f32 %v1766, %v1791
        %v1795 = vsub.f32 %v1770, %v1791
        %v1796 = vsub.f32 %v1774, %v1791
        %v1797 = vsub.f32 %v1778, %v1791
        %v1798 = vsub.f32 %v1782, %v1791
        %v1799 = vsub.f32 %v1786, %v1791
        %v1800 = vand.u32 2147483647, %v1792
        %v1801 = vand.u32 2147483647, %v1793
        %v1802 = vand.u32 2147483647, %v1794
        %v1803 = vand.u32 2147483647, %v1795
        %v1804 = vand.u32 2147483647, %v1796
        %v1805 = vand.u32 2147483647, %v1797
        %v1806 = vand.u32 2147483647, %v1798
        %v1807 = vand.u32 2147483647, %v1799
        %v1808 = vadd.f32 %v1748, %v1800
        %v1809 = vadd.f32 %v1749, %v1801
        %v1810 = vadd.f32 %v1750, %v1802
        %v1811 = vadd.f32 %v1751, %v1803
        %v1812 = vadd.f32 %v1752, %v1804
        %v1813 = vadd.f32 %v1753, %v1805
        %v1814 = vadd.f32 %v1754, %v1806
        %v1815 = vadd.f32 %v1755, %v1807
        %1816 = vset.pattern.permute.xlu0 27
        %1817 = vperm.xlu0 %1816, %v176
        %v1818 = vpop.permute.xlu0 %1817
        %1820 = vset.pattern.permute.xlu0 27
        %1821 = vperm.xlu0 %1820, %v177
        %v1822 = vpop.permute.xlu0 %1821
        %1824 = vset.pattern.permute.xlu0 27
        %1825 = vperm.xlu0 %1824, %v178
        %v1826 = vpop.permute.xlu0 %1825
        %1828 = vset.pattern.permute.xlu0 27
        %1829 = vperm.xlu0 %1828, %v179
        %v1830 = vpop.permute.xlu0 %1829
        %1832 = vset.pattern.permute.xlu0 27
        %1833 = vperm.xlu0 %1832, %v180
        %v1834 = vpop.permute.xlu0 %1833
        %1836 = vset.pattern.permute.xlu0 27
        %1837 = vperm.xlu0 %1836, %v181
        %v1838 = vpop.permute.xlu0 %1837
        %1840 = vset.pattern.permute.xlu0 27
        %1841 = vperm.xlu0 %1840, %v182
        %v1842 = vpop.permute.xlu0 %1841
        %1844 = vset.pattern.permute.xlu0 27
        %1845 = vperm.xlu0 %1844, %v183
        %v1846 = vpop.permute.xlu0 %1845
        %v1848 = vlaneseq
        %v1849 = vshrl.u32 %v1848, 7
        %v1850 = vsub.s32 3, %v1849
        %v1851 = vrot.slane %v1635, %v1850
        %v1852 = vsub.f32 %v1818, %v1851
        %v1853 = vsub.f32 %v1822, %v1851
        %v1854 = vsub.f32 %v1826, %v1851
        %v1855 = vsub.f32 %v1830, %v1851
        %v1856 = vsub.f32 %v1834, %v1851
        %v1857 = vsub.f32 %v1838, %v1851
        %v1858 = vsub.f32 %v1842, %v1851
        %v1859 = vsub.f32 %v1846, %v1851
        %v1860 = vand.u32 2147483647, %v1852
        %v1861 = vand.u32 2147483647, %v1853
        %v1862 = vand.u32 2147483647, %v1854
        %v1863 = vand.u32 2147483647, %v1855
        %v1864 = vand.u32 2147483647, %v1856
        %v1865 = vand.u32 2147483647, %v1857
        %v1866 = vand.u32 2147483647, %v1858
        %v1867 = vand.u32 2147483647, %v1859
        %v1868 = vadd.f32 %v1808, %v1860
        %v1869 = vadd.f32 %v1809, %v1861
        %v1870 = vadd.f32 %v1810, %v1862
        %v1871 = vadd.f32 %v1811, %v1863
        %v1872 = vadd.f32 %v1812, %v1864
        %v1873 = vadd.f32 %v1813, %v1865
        %v1874 = vadd.f32 %v1814, %v1866
        %v1875 = vadd.f32 %v1815, %v1867
        %1876 = vset.pattern.permute.xlu0 28
        %1877 = vperm.xlu0 %1876, %v176
        %v1878 = vpop.permute.xlu0 %1877
        %1880 = vset.pattern.permute.xlu0 28
        %1881 = vperm.xlu0 %1880, %v177
        %v1882 = vpop.permute.xlu0 %1881
        %1884 = vset.pattern.permute.xlu0 28
        %1885 = vperm.xlu0 %1884, %v178
        %v1886 = vpop.permute.xlu0 %1885
        %1888 = vset.pattern.permute.xlu0 28
        %1889 = vperm.xlu0 %1888, %v179
        %v1890 = vpop.permute.xlu0 %1889
        %1892 = vset.pattern.permute.xlu0 28
        %1893 = vperm.xlu0 %1892, %v180
        %v1894 = vpop.permute.xlu0 %1893
        %1896 = vset.pattern.permute.xlu0 28
        %1897 = vperm.xlu0 %1896, %v181
        %v1898 = vpop.permute.xlu0 %1897
        %1900 = vset.pattern.permute.xlu0 28
        %1901 = vperm.xlu0 %1900, %v182
        %v1902 = vpop.permute.xlu0 %1901
        %1904 = vset.pattern.permute.xlu0 28
        %1905 = vperm.xlu0 %1904, %v183
        %v1906 = vpop.permute.xlu0 %1905
        %v1908 = vlaneseq
        %v1909 = vshrl.u32 %v1908, 7
        %v1910 = vsub.s32 4, %v1909
        %v1911 = vrot.slane %v1635, %v1910
        %v1912 = vsub.f32 %v1878, %v1911
        %v1913 = vsub.f32 %v1882, %v1911
        %v1914 = vsub.f32 %v1886, %v1911
        %v1915 = vsub.f32 %v1890, %v1911
        %v1916 = vsub.f32 %v1894, %v1911
        %v1917 = vsub.f32 %v1898, %v1911
        %v1918 = vsub.f32 %v1902, %v1911
        %v1919 = vsub.f32 %v1906, %v1911
        %v1920 = vand.u32 2147483647, %v1912
        %v1921 = vand.u32 2147483647, %v1913
        %v1922 = vand.u32 2147483647, %v1914
        %v1923 = vand.u32 2147483647, %v1915
        %v1924 = vand.u32 2147483647, %v1916
        %v1925 = vand.u32 2147483647, %v1917
        %v1926 = vand.u32 2147483647, %v1918
        %v1927 = vand.u32 2147483647, %v1919
        %v1928 = vadd.f32 %v1868, %v1920
        %v1929 = vadd.f32 %v1869, %v1921
        %v1930 = vadd.f32 %v1870, %v1922
        %v1931 = vadd.f32 %v1871, %v1923
        %v1932 = vadd.f32 %v1872, %v1924
        %v1933 = vadd.f32 %v1873, %v1925
        %v1934 = vadd.f32 %v1874, %v1926
        %v1935 = vadd.f32 %v1875, %v1927
        %1936 = vset.pattern.permute.xlu0 29
        %1937 = vperm.xlu0 %1936, %v176
        %v1938 = vpop.permute.xlu0 %1937
        %1940 = vset.pattern.permute.xlu0 29
        %1941 = vperm.xlu0 %1940, %v177
        %v1942 = vpop.permute.xlu0 %1941
        %1944 = vset.pattern.permute.xlu0 29
        %1945 = vperm.xlu0 %1944, %v178
        %v1946 = vpop.permute.xlu0 %1945
        %1948 = vset.pattern.permute.xlu0 29
        %1949 = vperm.xlu0 %1948, %v179
        %v1950 = vpop.permute.xlu0 %1949
        %1952 = vset.pattern.permute.xlu0 29
        %1953 = vperm.xlu0 %1952, %v180
        %v1954 = vpop.permute.xlu0 %1953
        %1956 = vset.pattern.permute.xlu0 29
        %1957 = vperm.xlu0 %1956, %v181
        %v1958 = vpop.permute.xlu0 %1957
        %1960 = vset.pattern.permute.xlu0 29
        %1961 = vperm.xlu0 %1960, %v182
        %v1962 = vpop.permute.xlu0 %1961
        %1964 = vset.pattern.permute.xlu0 29
        %1965 = vperm.xlu0 %1964, %v183
        %v1966 = vpop.permute.xlu0 %1965
        %v1968 = vlaneseq
        %v1969 = vshrl.u32 %v1968, 7
        %v1970 = vsub.s32 5, %v1969
        %v1971 = vrot.slane %v1635, %v1970
        %v1972 = vsub.f32 %v1938, %v1971
        %v1973 = vsub.f32 %v1942, %v1971
        %v1974 = vsub.f32 %v1946, %v1971
        %v1975 = vsub.f32 %v1950, %v1971
        %v1976 = vsub.f32 %v1954, %v1971
        %v1977 = vsub.f32 %v1958, %v1971
        %v1978 = vsub.f32 %v1962, %v1971
        %v1979 = vsub.f32 %v1966, %v1971
        %v1980 = vand.u32 2147483647, %v1972
        %v1981 = vand.u32 2147483647, %v1973
        %v1982 = vand.u32 2147483647, %v1974
        %v1983 = vand.u32 2147483647, %v1975
        %v1984 = vand.u32 2147483647, %v1976
        %v1985 = vand.u32 2147483647, %v1977
        %v1986 = vand.u32 2147483647, %v1978
        %v1987 = vand.u32 2147483647, %v1979
        %v1988 = vadd.f32 %v1928, %v1980
        %v1989 = vadd.f32 %v1929, %v1981
        %v1990 = vadd.f32 %v1930, %v1982
        %v1991 = vadd.f32 %v1931, %v1983
        %v1992 = vadd.f32 %v1932, %v1984
        %v1993 = vadd.f32 %v1933, %v1985
        %v1994 = vadd.f32 %v1934, %v1986
        %v1995 = vadd.f32 %v1935, %v1987
        %1996 = vset.pattern.permute.xlu0 30
        %1997 = vperm.xlu0 %1996, %v176
        %v1998 = vpop.permute.xlu0 %1997
        %2000 = vset.pattern.permute.xlu0 30
        %2001 = vperm.xlu0 %2000, %v177
        %v2002 = vpop.permute.xlu0 %2001
        %2004 = vset.pattern.permute.xlu0 30
        %2005 = vperm.xlu0 %2004, %v178
        %v2006 = vpop.permute.xlu0 %2005
        %2008 = vset.pattern.permute.xlu0 30
        %2009 = vperm.xlu0 %2008, %v179
        %v2010 = vpop.permute.xlu0 %2009
        %2012 = vset.pattern.permute.xlu0 30
        %2013 = vperm.xlu0 %2012, %v180
        %v2014 = vpop.permute.xlu0 %2013
        %2016 = vset.pattern.permute.xlu0 30
        %2017 = vperm.xlu0 %2016, %v181
        %v2018 = vpop.permute.xlu0 %2017
        %2020 = vset.pattern.permute.xlu0 30
        %2021 = vperm.xlu0 %2020, %v182
        %v2022 = vpop.permute.xlu0 %2021
        %2024 = vset.pattern.permute.xlu0 30
        %2025 = vperm.xlu0 %2024, %v183
        %v2026 = vpop.permute.xlu0 %2025
        %v2028 = vlaneseq
        %v2029 = vshrl.u32 %v2028, 7
        %v2030 = vsub.s32 6, %v2029
        %v2031 = vrot.slane %v1635, %v2030
        %v2032 = vsub.f32 %v1998, %v2031
        %v2033 = vsub.f32 %v2002, %v2031
        %v2034 = vsub.f32 %v2006, %v2031
        %v2035 = vsub.f32 %v2010, %v2031
        %v2036 = vsub.f32 %v2014, %v2031
        %v2037 = vsub.f32 %v2018, %v2031
        %v2038 = vsub.f32 %v2022, %v2031
        %v2039 = vsub.f32 %v2026, %v2031
        %v2040 = vand.u32 2147483647, %v2032
        %v2041 = vand.u32 2147483647, %v2033
        %v2042 = vand.u32 2147483647, %v2034
        %v2043 = vand.u32 2147483647, %v2035
        %v2044 = vand.u32 2147483647, %v2036
        %v2045 = vand.u32 2147483647, %v2037
        %v2046 = vand.u32 2147483647, %v2038
        %v2047 = vand.u32 2147483647, %v2039
        %v2048 = vadd.f32 %v1988, %v2040
        %v2049 = vadd.f32 %v1989, %v2041
        %v2050 = vadd.f32 %v1990, %v2042
        %v2051 = vadd.f32 %v1991, %v2043
        %v2052 = vadd.f32 %v1992, %v2044
        %v2053 = vadd.f32 %v1993, %v2045
        %v2054 = vadd.f32 %v1994, %v2046
        %v2055 = vadd.f32 %v1995, %v2047
        %2056 = vset.pattern.permute.xlu0 31
        %2057 = vperm.xlu0 %2056, %v176
        %v2058 = vpop.permute.xlu0 %2057
        %2060 = vset.pattern.permute.xlu0 31
        %2061 = vperm.xlu0 %2060, %v177
        %v2062 = vpop.permute.xlu0 %2061
        %2064 = vset.pattern.permute.xlu0 31
        %2065 = vperm.xlu0 %2064, %v178
        %v2066 = vpop.permute.xlu0 %2065
        %2068 = vset.pattern.permute.xlu0 31
        %2069 = vperm.xlu0 %2068, %v179
        %v2070 = vpop.permute.xlu0 %2069
        %2072 = vset.pattern.permute.xlu0 31
        %2073 = vperm.xlu0 %2072, %v180
        %v2074 = vpop.permute.xlu0 %2073
        %2076 = vset.pattern.permute.xlu0 31
        %2077 = vperm.xlu0 %2076, %v181
        %v2078 = vpop.permute.xlu0 %2077
        %2080 = vset.pattern.permute.xlu0 31
        %2081 = vperm.xlu0 %2080, %v182
        %v2082 = vpop.permute.xlu0 %2081
        %2084 = vset.pattern.permute.xlu0 31
        %2085 = vperm.xlu0 %2084, %v183
        %v2086 = vpop.permute.xlu0 %2085
        %v2088 = vlaneseq
        %v2089 = vshrl.u32 %v2088, 7
        %v2090 = vsub.s32 7, %v2089
        %v2091 = vrot.slane %v1635, %v2090
        %v2092 = vsub.f32 %v2058, %v2091
        %v2093 = vsub.f32 %v2062, %v2091
        %v2094 = vsub.f32 %v2066, %v2091
        %v2095 = vsub.f32 %v2070, %v2091
        %v2096 = vsub.f32 %v2074, %v2091
        %v2097 = vsub.f32 %v2078, %v2091
        %v2098 = vsub.f32 %v2082, %v2091
        %v2099 = vsub.f32 %v2086, %v2091
        %v2100 = vand.u32 2147483647, %v2092
        %v2101 = vand.u32 2147483647, %v2093
        %v2102 = vand.u32 2147483647, %v2094
        %v2103 = vand.u32 2147483647, %v2095
        %v2104 = vand.u32 2147483647, %v2096
        %v2105 = vand.u32 2147483647, %v2097
        %v2106 = vand.u32 2147483647, %v2098
        %v2107 = vand.u32 2147483647, %v2099
        %v2108 = vadd.f32 %v2048, %v2100
        %v2109 = vadd.f32 %v2049, %v2101
        %v2110 = vadd.f32 %v2050, %v2102
        %v2111 = vadd.f32 %v2051, %v2103
        %v2112 = vadd.f32 %v2052, %v2104
        %v2113 = vadd.f32 %v2053, %v2105
        %v2114 = vadd.f32 %v2054, %v2106
        %v2115 = vadd.f32 %v2055, %v2107
        %v2116 = vld [vmem:[%s174 + $0x20] sm:$0xff]
        %2117 = vset.pattern.permute.xlu0 32
        %2118 = vperm.xlu0 %2117, %v176
        %v2119 = vpop.permute.xlu0 %2118
        %2121 = vset.pattern.permute.xlu0 32
        %2122 = vperm.xlu0 %2121, %v177
        %v2123 = vpop.permute.xlu0 %2122
        %2125 = vset.pattern.permute.xlu0 32
        %2126 = vperm.xlu0 %2125, %v178
        %v2127 = vpop.permute.xlu0 %2126
        %2129 = vset.pattern.permute.xlu0 32
        %2130 = vperm.xlu0 %2129, %v179
        %v2131 = vpop.permute.xlu0 %2130
        %2133 = vset.pattern.permute.xlu0 32
        %2134 = vperm.xlu0 %2133, %v180
        %v2135 = vpop.permute.xlu0 %2134
        %2137 = vset.pattern.permute.xlu0 32
        %2138 = vperm.xlu0 %2137, %v181
        %v2139 = vpop.permute.xlu0 %2138
        %2141 = vset.pattern.permute.xlu0 32
        %2142 = vperm.xlu0 %2141, %v182
        %v2143 = vpop.permute.xlu0 %2142
        %2145 = vset.pattern.permute.xlu0 32
        %2146 = vperm.xlu0 %2145, %v183
        %v2147 = vpop.permute.xlu0 %2146
        %v2149 = vlaneseq
        %v2150 = vshrl.u32 %v2149, 7
        %v2151 = vsub.s32 0, %v2150
        %v2152 = vrot.slane %v2116, %v2151
        %v2153 = vsub.f32 %v2119, %v2152
        %v2154 = vsub.f32 %v2123, %v2152
        %v2155 = vsub.f32 %v2127, %v2152
        %v2156 = vsub.f32 %v2131, %v2152
        %v2157 = vsub.f32 %v2135, %v2152
        %v2158 = vsub.f32 %v2139, %v2152
        %v2159 = vsub.f32 %v2143, %v2152
        %v2160 = vsub.f32 %v2147, %v2152
        %v2161 = vand.u32 2147483647, %v2153
        %v2162 = vand.u32 2147483647, %v2154
        %v2163 = vand.u32 2147483647, %v2155
        %v2164 = vand.u32 2147483647, %v2156
        %v2165 = vand.u32 2147483647, %v2157
        %v2166 = vand.u32 2147483647, %v2158
        %v2167 = vand.u32 2147483647, %v2159
        %v2168 = vand.u32 2147483647, %v2160
        %v2169 = vadd.f32 %v2108, %v2161
        %v2170 = vadd.f32 %v2109, %v2162
        %v2171 = vadd.f32 %v2110, %v2163
        %v2172 = vadd.f32 %v2111, %v2164
        %v2173 = vadd.f32 %v2112, %v2165
        %v2174 = vadd.f32 %v2113, %v2166
        %v2175 = vadd.f32 %v2114, %v2167
        %v2176 = vadd.f32 %v2115, %v2168
        %2177 = vset.pattern.permute.xlu0 33
        %2178 = vperm.xlu0 %2177, %v176
        %v2179 = vpop.permute.xlu0 %2178
        %2181 = vset.pattern.permute.xlu0 33
        %2182 = vperm.xlu0 %2181, %v177
        %v2183 = vpop.permute.xlu0 %2182
        %2185 = vset.pattern.permute.xlu0 33
        %2186 = vperm.xlu0 %2185, %v178
        %v2187 = vpop.permute.xlu0 %2186
        %2189 = vset.pattern.permute.xlu0 33
        %2190 = vperm.xlu0 %2189, %v179
        %v2191 = vpop.permute.xlu0 %2190
        %2193 = vset.pattern.permute.xlu0 33
        %2194 = vperm.xlu0 %2193, %v180
        %v2195 = vpop.permute.xlu0 %2194
        %2197 = vset.pattern.permute.xlu0 33
        %2198 = vperm.xlu0 %2197, %v181
        %v2199 = vpop.permute.xlu0 %2198
        %2201 = vset.pattern.permute.xlu0 33
        %2202 = vperm.xlu0 %2201, %v182
        %v2203 = vpop.permute.xlu0 %2202
        %2205 = vset.pattern.permute.xlu0 33
        %2206 = vperm.xlu0 %2205, %v183
        %v2207 = vpop.permute.xlu0 %2206
        %v2209 = vlaneseq
        %v2210 = vshrl.u32 %v2209, 7
        %v2211 = vsub.s32 1, %v2210
        %v2212 = vrot.slane %v2116, %v2211
        %v2213 = vsub.f32 %v2179, %v2212
        %v2214 = vsub.f32 %v2183, %v2212
        %v2215 = vsub.f32 %v2187, %v2212
        %v2216 = vsub.f32 %v2191, %v2212
        %v2217 = vsub.f32 %v2195, %v2212
        %v2218 = vsub.f32 %v2199, %v2212
        %v2219 = vsub.f32 %v2203, %v2212
        %v2220 = vsub.f32 %v2207, %v2212
        %v2221 = vand.u32 2147483647, %v2213
        %v2222 = vand.u32 2147483647, %v2214
        %v2223 = vand.u32 2147483647, %v2215
        %v2224 = vand.u32 2147483647, %v2216
        %v2225 = vand.u32 2147483647, %v2217
        %v2226 = vand.u32 2147483647, %v2218
        %v2227 = vand.u32 2147483647, %v2219
        %v2228 = vand.u32 2147483647, %v2220
        %v2229 = vadd.f32 %v2169, %v2221
        %v2230 = vadd.f32 %v2170, %v2222
        %v2231 = vadd.f32 %v2171, %v2223
        %v2232 = vadd.f32 %v2172, %v2224
        %v2233 = vadd.f32 %v2173, %v2225
        %v2234 = vadd.f32 %v2174, %v2226
        %v2235 = vadd.f32 %v2175, %v2227
        %v2236 = vadd.f32 %v2176, %v2228
        %2237 = vset.pattern.permute.xlu0 34
        %2238 = vperm.xlu0 %2237, %v176
        %v2239 = vpop.permute.xlu0 %2238
        %2241 = vset.pattern.permute.xlu0 34
        %2242 = vperm.xlu0 %2241, %v177
        %v2243 = vpop.permute.xlu0 %2242
        %2245 = vset.pattern.permute.xlu0 34
        %2246 = vperm.xlu0 %2245, %v178
        %v2247 = vpop.permute.xlu0 %2246
        %2249 = vset.pattern.permute.xlu0 34
        %2250 = vperm.xlu0 %2249, %v179
        %v2251 = vpop.permute.xlu0 %2250
        %2253 = vset.pattern.permute.xlu0 34
        %2254 = vperm.xlu0 %2253, %v180
        %v2255 = vpop.permute.xlu0 %2254
        %2257 = vset.pattern.permute.xlu0 34
        %2258 = vperm.xlu0 %2257, %v181
        %v2259 = vpop.permute.xlu0 %2258
        %2261 = vset.pattern.permute.xlu0 34
        %2262 = vperm.xlu0 %2261, %v182
        %v2263 = vpop.permute.xlu0 %2262
        %2265 = vset.pattern.permute.xlu0 34
        %2266 = vperm.xlu0 %2265, %v183
        %v2267 = vpop.permute.xlu0 %2266
        %v2269 = vlaneseq
        %v2270 = vshrl.u32 %v2269, 7
        %v2271 = vsub.s32 2, %v2270
        %v2272 = vrot.slane %v2116, %v2271
        %v2273 = vsub.f32 %v2239, %v2272
        %v2274 = vsub.f32 %v2243, %v2272
        %v2275 = vsub.f32 %v2247, %v2272
        %v2276 = vsub.f32 %v2251, %v2272
        %v2277 = vsub.f32 %v2255, %v2272
        %v2278 = vsub.f32 %v2259, %v2272
        %v2279 = vsub.f32 %v2263, %v2272
        %v2280 = vsub.f32 %v2267, %v2272
        %v2281 = vand.u32 2147483647, %v2273
        %v2282 = vand.u32 2147483647, %v2274
        %v2283 = vand.u32 2147483647, %v2275
        %v2284 = vand.u32 2147483647, %v2276
        %v2285 = vand.u32 2147483647, %v2277
        %v2286 = vand.u32 2147483647, %v2278
        %v2287 = vand.u32 2147483647, %v2279
        %v2288 = vand.u32 2147483647, %v2280
        %v2289 = vadd.f32 %v2229, %v2281
        %v2290 = vadd.f32 %v2230, %v2282
        %v2291 = vadd.f32 %v2231, %v2283
        %v2292 = vadd.f32 %v2232, %v2284
        %v2293 = vadd.f32 %v2233, %v2285
        %v2294 = vadd.f32 %v2234, %v2286
        %v2295 = vadd.f32 %v2235, %v2287
        %v2296 = vadd.f32 %v2236, %v2288
        %2297 = vset.pattern.permute.xlu0 35
        %2298 = vperm.xlu0 %2297, %v176
        %v2299 = vpop.permute.xlu0 %2298
        %2301 = vset.pattern.permute.xlu0 35
        %2302 = vperm.xlu0 %2301, %v177
        %v2303 = vpop.permute.xlu0 %2302
        %2305 = vset.pattern.permute.xlu0 35
        %2306 = vperm.xlu0 %2305, %v178
        %v2307 = vpop.permute.xlu0 %2306
        %2309 = vset.pattern.permute.xlu0 35
        %2310 = vperm.xlu0 %2309, %v179
        %v2311 = vpop.permute.xlu0 %2310
        %2313 = vset.pattern.permute.xlu0 35
        %2314 = vperm.xlu0 %2313, %v180
        %v2315 = vpop.permute.xlu0 %2314
        %2317 = vset.pattern.permute.xlu0 35
        %2318 = vperm.xlu0 %2317, %v181
        %v2319 = vpop.permute.xlu0 %2318
        %2321 = vset.pattern.permute.xlu0 35
        %2322 = vperm.xlu0 %2321, %v182
        %v2323 = vpop.permute.xlu0 %2322
        %2325 = vset.pattern.permute.xlu0 35
        %2326 = vperm.xlu0 %2325, %v183
        %v2327 = vpop.permute.xlu0 %2326
        %v2329 = vlaneseq
        %v2330 = vshrl.u32 %v2329, 7
        %v2331 = vsub.s32 3, %v2330
        %v2332 = vrot.slane %v2116, %v2331
        %v2333 = vsub.f32 %v2299, %v2332
        %v2334 = vsub.f32 %v2303, %v2332
        %v2335 = vsub.f32 %v2307, %v2332
        %v2336 = vsub.f32 %v2311, %v2332
        %v2337 = vsub.f32 %v2315, %v2332
        %v2338 = vsub.f32 %v2319, %v2332
        %v2339 = vsub.f32 %v2323, %v2332
        %v2340 = vsub.f32 %v2327, %v2332
        %v2341 = vand.u32 2147483647, %v2333
        %v2342 = vand.u32 2147483647, %v2334
        %v2343 = vand.u32 2147483647, %v2335
        %v2344 = vand.u32 2147483647, %v2336
        %v2345 = vand.u32 2147483647, %v2337
        %v2346 = vand.u32 2147483647, %v2338
        %v2347 = vand.u32 2147483647, %v2339
        %v2348 = vand.u32 2147483647, %v2340
        %v2349 = vadd.f32 %v2289, %v2341
        %v2350 = vadd.f32 %v2290, %v2342
        %v2351 = vadd.f32 %v2291, %v2343
        %v2352 = vadd.f32 %v2292, %v2344
        %v2353 = vadd.f32 %v2293, %v2345
        %v2354 = vadd.f32 %v2294, %v2346
        %v2355 = vadd.f32 %v2295, %v2347
        %v2356 = vadd.f32 %v2296, %v2348
        %2357 = vset.pattern.permute.xlu0 36
        %2358 = vperm.xlu0 %2357, %v176
        %v2359 = vpop.permute.xlu0 %2358
        %2361 = vset.pattern.permute.xlu0 36
        %2362 = vperm.xlu0 %2361, %v177
        %v2363 = vpop.permute.xlu0 %2362
        %2365 = vset.pattern.permute.xlu0 36
        %2366 = vperm.xlu0 %2365, %v178
        %v2367 = vpop.permute.xlu0 %2366
        %2369 = vset.pattern.permute.xlu0 36
        %2370 = vperm.xlu0 %2369, %v179
        %v2371 = vpop.permute.xlu0 %2370
        %2373 = vset.pattern.permute.xlu0 36
        %2374 = vperm.xlu0 %2373, %v180
        %v2375 = vpop.permute.xlu0 %2374
        %2377 = vset.pattern.permute.xlu0 36
        %2378 = vperm.xlu0 %2377, %v181
        %v2379 = vpop.permute.xlu0 %2378
        %2381 = vset.pattern.permute.xlu0 36
        %2382 = vperm.xlu0 %2381, %v182
        %v2383 = vpop.permute.xlu0 %2382
        %2385 = vset.pattern.permute.xlu0 36
        %2386 = vperm.xlu0 %2385, %v183
        %v2387 = vpop.permute.xlu0 %2386
        %v2389 = vlaneseq
        %v2390 = vshrl.u32 %v2389, 7
        %v2391 = vsub.s32 4, %v2390
        %v2392 = vrot.slane %v2116, %v2391
        %v2393 = vsub.f32 %v2359, %v2392
        %v2394 = vsub.f32 %v2363, %v2392
        %v2395 = vsub.f32 %v2367, %v2392
        %v2396 = vsub.f32 %v2371, %v2392
        %v2397 = vsub.f32 %v2375, %v2392
        %v2398 = vsub.f32 %v2379, %v2392
        %v2399 = vsub.f32 %v2383, %v2392
        %v2400 = vsub.f32 %v2387, %v2392
        %v2401 = vand.u32 2147483647, %v2393
        %v2402 = vand.u32 2147483647, %v2394
        %v2403 = vand.u32 2147483647, %v2395
        %v2404 = vand.u32 2147483647, %v2396
        %v2405 = vand.u32 2147483647, %v2397
        %v2406 = vand.u32 2147483647, %v2398
        %v2407 = vand.u32 2147483647, %v2399
        %v2408 = vand.u32 2147483647, %v2400
        %v2409 = vadd.f32 %v2349, %v2401
        %v2410 = vadd.f32 %v2350, %v2402
        %v2411 = vadd.f32 %v2351, %v2403
        %v2412 = vadd.f32 %v2352, %v2404
        %v2413 = vadd.f32 %v2353, %v2405
        %v2414 = vadd.f32 %v2354, %v2406
        %v2415 = vadd.f32 %v2355, %v2407
        %v2416 = vadd.f32 %v2356, %v2408
        %2417 = vset.pattern.permute.xlu0 37
        %2418 = vperm.xlu0 %2417, %v176
        %v2419 = vpop.permute.xlu0 %2418
        %2421 = vset.pattern.permute.xlu0 37
        %2422 = vperm.xlu0 %2421, %v177
        %v2423 = vpop.permute.xlu0 %2422
        %2425 = vset.pattern.permute.xlu0 37
        %2426 = vperm.xlu0 %2425, %v178
        %v2427 = vpop.permute.xlu0 %2426
        %2429 = vset.pattern.permute.xlu0 37
        %2430 = vperm.xlu0 %2429, %v179
        %v2431 = vpop.permute.xlu0 %2430
        %2433 = vset.pattern.permute.xlu0 37
        %2434 = vperm.xlu0 %2433, %v180
        %v2435 = vpop.permute.xlu0 %2434
        %2437 = vset.pattern.permute.xlu0 37
        %2438 = vperm.xlu0 %2437, %v181
        %v2439 = vpop.permute.xlu0 %2438
        %2441 = vset.pattern.permute.xlu0 37
        %2442 = vperm.xlu0 %2441, %v182
        %v2443 = vpop.permute.xlu0 %2442
        %2445 = vset.pattern.permute.xlu0 37
        %2446 = vperm.xlu0 %2445, %v183
        %v2447 = vpop.permute.xlu0 %2446
        %v2449 = vlaneseq
        %v2450 = vshrl.u32 %v2449, 7
        %v2451 = vsub.s32 5, %v2450
        %v2452 = vrot.slane %v2116, %v2451
        %v2453 = vsub.f32 %v2419, %v2452
        %v2454 = vsub.f32 %v2423, %v2452
        %v2455 = vsub.f32 %v2427, %v2452
        %v2456 = vsub.f32 %v2431, %v2452
        %v2457 = vsub.f32 %v2435, %v2452
        %v2458 = vsub.f32 %v2439, %v2452
        %v2459 = vsub.f32 %v2443, %v2452
        %v2460 = vsub.f32 %v2447, %v2452
        %v2461 = vand.u32 2147483647, %v2453
        %v2462 = vand.u32 2147483647, %v2454
        %v2463 = vand.u32 2147483647, %v2455
        %v2464 = vand.u32 2147483647, %v2456
        %v2465 = vand.u32 2147483647, %v2457
        %v2466 = vand.u32 2147483647, %v2458
        %v2467 = vand.u32 2147483647, %v2459
        %v2468 = vand.u32 2147483647, %v2460
        %v2469 = vadd.f32 %v2409, %v2461
        %v2470 = vadd.f32 %v2410, %v2462
        %v2471 = vadd.f32 %v2411, %v2463
        %v2472 = vadd.f32 %v2412, %v2464
        %v2473 = vadd.f32 %v2413, %v2465
        %v2474 = vadd.f32 %v2414, %v2466
        %v2475 = vadd.f32 %v2415, %v2467
        %v2476 = vadd.f32 %v2416, %v2468
        %2477 = vset.pattern.permute.xlu0 38
        %2478 = vperm.xlu0 %2477, %v176
        %v2479 = vpop.permute.xlu0 %2478
        %2481 = vset.pattern.permute.xlu0 38
        %2482 = vperm.xlu0 %2481, %v177
        %v2483 = vpop.permute.xlu0 %2482
        %2485 = vset.pattern.permute.xlu0 38
        %2486 = vperm.xlu0 %2485, %v178
        %v2487 = vpop.permute.xlu0 %2486
        %2489 = vset.pattern.permute.xlu0 38
        %2490 = vperm.xlu0 %2489, %v179
        %v2491 = vpop.permute.xlu0 %2490
        %2493 = vset.pattern.permute.xlu0 38
        %2494 = vperm.xlu0 %2493, %v180
        %v2495 = vpop.permute.xlu0 %2494
        %2497 = vset.pattern.permute.xlu0 38
        %2498 = vperm.xlu0 %2497, %v181
        %v2499 = vpop.permute.xlu0 %2498
        %2501 = vset.pattern.permute.xlu0 38
        %2502 = vperm.xlu0 %2501, %v182
        %v2503 = vpop.permute.xlu0 %2502
        %2505 = vset.pattern.permute.xlu0 38
        %2506 = vperm.xlu0 %2505, %v183
        %v2507 = vpop.permute.xlu0 %2506
        %v2509 = vlaneseq
        %v2510 = vshrl.u32 %v2509, 7
        %v2511 = vsub.s32 6, %v2510
        %v2512 = vrot.slane %v2116, %v2511
        %v2513 = vsub.f32 %v2479, %v2512
        %v2514 = vsub.f32 %v2483, %v2512
        %v2515 = vsub.f32 %v2487, %v2512
        %v2516 = vsub.f32 %v2491, %v2512
        %v2517 = vsub.f32 %v2495, %v2512
        %v2518 = vsub.f32 %v2499, %v2512
        %v2519 = vsub.f32 %v2503, %v2512
        %v2520 = vsub.f32 %v2507, %v2512
        %v2521 = vand.u32 2147483647, %v2513
        %v2522 = vand.u32 2147483647, %v2514
        %v2523 = vand.u32 2147483647, %v2515
        %v2524 = vand.u32 2147483647, %v2516
        %v2525 = vand.u32 2147483647, %v2517
        %v2526 = vand.u32 2147483647, %v2518
        %v2527 = vand.u32 2147483647, %v2519
        %v2528 = vand.u32 2147483647, %v2520
        %v2529 = vadd.f32 %v2469, %v2521
        %v2530 = vadd.f32 %v2470, %v2522
        %v2531 = vadd.f32 %v2471, %v2523
        %v2532 = vadd.f32 %v2472, %v2524
        %v2533 = vadd.f32 %v2473, %v2525
        %v2534 = vadd.f32 %v2474, %v2526
        %v2535 = vadd.f32 %v2475, %v2527
        %v2536 = vadd.f32 %v2476, %v2528
        %2537 = vset.pattern.permute.xlu0 39
        %2538 = vperm.xlu0 %2537, %v176
        %v2539 = vpop.permute.xlu0 %2538
        %2541 = vset.pattern.permute.xlu0 39
        %2542 = vperm.xlu0 %2541, %v177
        %v2543 = vpop.permute.xlu0 %2542
        %2545 = vset.pattern.permute.xlu0 39
        %2546 = vperm.xlu0 %2545, %v178
        %v2547 = vpop.permute.xlu0 %2546
        %2549 = vset.pattern.permute.xlu0 39
        %2550 = vperm.xlu0 %2549, %v179
        %v2551 = vpop.permute.xlu0 %2550
        %2553 = vset.pattern.permute.xlu0 39
        %2554 = vperm.xlu0 %2553, %v180
        %v2555 = vpop.permute.xlu0 %2554
        %2557 = vset.pattern.permute.xlu0 39
        %2558 = vperm.xlu0 %2557, %v181
        %v2559 = vpop.permute.xlu0 %2558
        %2561 = vset.pattern.permute.xlu0 39
        %2562 = vperm.xlu0 %2561, %v182
        %v2563 = vpop.permute.xlu0 %2562
        %2565 = vset.pattern.permute.xlu0 39
        %2566 = vperm.xlu0 %2565, %v183
        %v2567 = vpop.permute.xlu0 %2566
        %v2569 = vlaneseq
        %v2570 = vshrl.u32 %v2569, 7
        %v2571 = vsub.s32 7, %v2570
        %v2572 = vrot.slane %v2116, %v2571
        %v2573 = vsub.f32 %v2539, %v2572
        %v2574 = vsub.f32 %v2543, %v2572
        %v2575 = vsub.f32 %v2547, %v2572
        %v2576 = vsub.f32 %v2551, %v2572
        %v2577 = vsub.f32 %v2555, %v2572
        %v2578 = vsub.f32 %v2559, %v2572
        %v2579 = vsub.f32 %v2563, %v2572
        %v2580 = vsub.f32 %v2567, %v2572
        %v2581 = vand.u32 2147483647, %v2573
        %v2582 = vand.u32 2147483647, %v2574
        %v2583 = vand.u32 2147483647, %v2575
        %v2584 = vand.u32 2147483647, %v2576
        %v2585 = vand.u32 2147483647, %v2577
        %v2586 = vand.u32 2147483647, %v2578
        %v2587 = vand.u32 2147483647, %v2579
        %v2588 = vand.u32 2147483647, %v2580
        %v2589 = vadd.f32 %v2529, %v2581
        %v2590 = vadd.f32 %v2530, %v2582
        %v2591 = vadd.f32 %v2531, %v2583
        %v2592 = vadd.f32 %v2532, %v2584
        %v2593 = vadd.f32 %v2533, %v2585
        %v2594 = vadd.f32 %v2534, %v2586
        %v2595 = vadd.f32 %v2535, %v2587
        %v2596 = vadd.f32 %v2536, %v2588
        %v2597 = vld [vmem:[%s174 + $0x28] sm:$0xff]
        %2598 = vset.pattern.permute.xlu0 40
        %2599 = vperm.xlu0 %2598, %v176
        %v2600 = vpop.permute.xlu0 %2599
        %2602 = vset.pattern.permute.xlu0 40
        %2603 = vperm.xlu0 %2602, %v177
        %v2604 = vpop.permute.xlu0 %2603
        %2606 = vset.pattern.permute.xlu0 40
        %2607 = vperm.xlu0 %2606, %v178
        %v2608 = vpop.permute.xlu0 %2607
        %2610 = vset.pattern.permute.xlu0 40
        %2611 = vperm.xlu0 %2610, %v179
        %v2612 = vpop.permute.xlu0 %2611
        %2614 = vset.pattern.permute.xlu0 40
        %2615 = vperm.xlu0 %2614, %v180
        %v2616 = vpop.permute.xlu0 %2615
        %2618 = vset.pattern.permute.xlu0 40
        %2619 = vperm.xlu0 %2618, %v181
        %v2620 = vpop.permute.xlu0 %2619
        %2622 = vset.pattern.permute.xlu0 40
        %2623 = vperm.xlu0 %2622, %v182
        %v2624 = vpop.permute.xlu0 %2623
        %2626 = vset.pattern.permute.xlu0 40
        %2627 = vperm.xlu0 %2626, %v183
        %v2628 = vpop.permute.xlu0 %2627
        %v2630 = vlaneseq
        %v2631 = vshrl.u32 %v2630, 7
        %v2632 = vsub.s32 0, %v2631
        %v2633 = vrot.slane %v2597, %v2632
        %v2634 = vsub.f32 %v2600, %v2633
        %v2635 = vsub.f32 %v2604, %v2633
        %v2636 = vsub.f32 %v2608, %v2633
        %v2637 = vsub.f32 %v2612, %v2633
        %v2638 = vsub.f32 %v2616, %v2633
        %v2639 = vsub.f32 %v2620, %v2633
        %v2640 = vsub.f32 %v2624, %v2633
        %v2641 = vsub.f32 %v2628, %v2633
        %v2642 = vand.u32 2147483647, %v2634
        %v2643 = vand.u32 2147483647, %v2635
        %v2644 = vand.u32 2147483647, %v2636
        %v2645 = vand.u32 2147483647, %v2637
        %v2646 = vand.u32 2147483647, %v2638
        %v2647 = vand.u32 2147483647, %v2639
        %v2648 = vand.u32 2147483647, %v2640
        %v2649 = vand.u32 2147483647, %v2641
        %v2650 = vadd.f32 %v2589, %v2642
        %v2651 = vadd.f32 %v2590, %v2643
        %v2652 = vadd.f32 %v2591, %v2644
        %v2653 = vadd.f32 %v2592, %v2645
        %v2654 = vadd.f32 %v2593, %v2646
        %v2655 = vadd.f32 %v2594, %v2647
        %v2656 = vadd.f32 %v2595, %v2648
        %v2657 = vadd.f32 %v2596, %v2649
        %2658 = vset.pattern.permute.xlu0 41
        %2659 = vperm.xlu0 %2658, %v176
        %v2660 = vpop.permute.xlu0 %2659
        %2662 = vset.pattern.permute.xlu0 41
        %2663 = vperm.xlu0 %2662, %v177
        %v2664 = vpop.permute.xlu0 %2663
        %2666 = vset.pattern.permute.xlu0 41
        %2667 = vperm.xlu0 %2666, %v178
        %v2668 = vpop.permute.xlu0 %2667
        %2670 = vset.pattern.permute.xlu0 41
        %2671 = vperm.xlu0 %2670, %v179
        %v2672 = vpop.permute.xlu0 %2671
        %2674 = vset.pattern.permute.xlu0 41
        %2675 = vperm.xlu0 %2674, %v180
        %v2676 = vpop.permute.xlu0 %2675
        %2678 = vset.pattern.permute.xlu0 41
        %2679 = vperm.xlu0 %2678, %v181
        %v2680 = vpop.permute.xlu0 %2679
        %2682 = vset.pattern.permute.xlu0 41
        %2683 = vperm.xlu0 %2682, %v182
        %v2684 = vpop.permute.xlu0 %2683
        %2686 = vset.pattern.permute.xlu0 41
        %2687 = vperm.xlu0 %2686, %v183
        %v2688 = vpop.permute.xlu0 %2687
        %v2690 = vlaneseq
        %v2691 = vshrl.u32 %v2690, 7
        %v2692 = vsub.s32 1, %v2691
        %v2693 = vrot.slane %v2597, %v2692
        %v2694 = vsub.f32 %v2660, %v2693
        %v2695 = vsub.f32 %v2664, %v2693
        %v2696 = vsub.f32 %v2668, %v2693
        %v2697 = vsub.f32 %v2672, %v2693
        %v2698 = vsub.f32 %v2676, %v2693
        %v2699 = vsub.f32 %v2680, %v2693
        %v2700 = vsub.f32 %v2684, %v2693
        %v2701 = vsub.f32 %v2688, %v2693
        %v2702 = vand.u32 2147483647, %v2694
        %v2703 = vand.u32 2147483647, %v2695
        %v2704 = vand.u32 2147483647, %v2696
        %v2705 = vand.u32 2147483647, %v2697
        %v2706 = vand.u32 2147483647, %v2698
        %v2707 = vand.u32 2147483647, %v2699
        %v2708 = vand.u32 2147483647, %v2700
        %v2709 = vand.u32 2147483647, %v2701
        %v2710 = vadd.f32 %v2650, %v2702
        %v2711 = vadd.f32 %v2651, %v2703
        %v2712 = vadd.f32 %v2652, %v2704
        %v2713 = vadd.f32 %v2653, %v2705
        %v2714 = vadd.f32 %v2654, %v2706
        %v2715 = vadd.f32 %v2655, %v2707
        %v2716 = vadd.f32 %v2656, %v2708
        %v2717 = vadd.f32 %v2657, %v2709
        %2718 = vset.pattern.permute.xlu0 42
        %2719 = vperm.xlu0 %2718, %v176
        %v2720 = vpop.permute.xlu0 %2719
        %2722 = vset.pattern.permute.xlu0 42
        %2723 = vperm.xlu0 %2722, %v177
        %v2724 = vpop.permute.xlu0 %2723
        %2726 = vset.pattern.permute.xlu0 42
        %2727 = vperm.xlu0 %2726, %v178
        %v2728 = vpop.permute.xlu0 %2727
        %2730 = vset.pattern.permute.xlu0 42
        %2731 = vperm.xlu0 %2730, %v179
        %v2732 = vpop.permute.xlu0 %2731
        %2734 = vset.pattern.permute.xlu0 42
        %2735 = vperm.xlu0 %2734, %v180
        %v2736 = vpop.permute.xlu0 %2735
        %2738 = vset.pattern.permute.xlu0 42
        %2739 = vperm.xlu0 %2738, %v181
        %v2740 = vpop.permute.xlu0 %2739
        %2742 = vset.pattern.permute.xlu0 42
        %2743 = vperm.xlu0 %2742, %v182
        %v2744 = vpop.permute.xlu0 %2743
        %2746 = vset.pattern.permute.xlu0 42
        %2747 = vperm.xlu0 %2746, %v183
        %v2748 = vpop.permute.xlu0 %2747
        %v2750 = vlaneseq
        %v2751 = vshrl.u32 %v2750, 7
        %v2752 = vsub.s32 2, %v2751
        %v2753 = vrot.slane %v2597, %v2752
        %v2754 = vsub.f32 %v2720, %v2753
        %v2755 = vsub.f32 %v2724, %v2753
        %v2756 = vsub.f32 %v2728, %v2753
        %v2757 = vsub.f32 %v2732, %v2753
        %v2758 = vsub.f32 %v2736, %v2753
        %v2759 = vsub.f32 %v2740, %v2753
        %v2760 = vsub.f32 %v2744, %v2753
        %v2761 = vsub.f32 %v2748, %v2753
        %v2762 = vand.u32 2147483647, %v2754
        %v2763 = vand.u32 2147483647, %v2755
        %v2764 = vand.u32 2147483647, %v2756
        %v2765 = vand.u32 2147483647, %v2757
        %v2766 = vand.u32 2147483647, %v2758
        %v2767 = vand.u32 2147483647, %v2759
        %v2768 = vand.u32 2147483647, %v2760
        %v2769 = vand.u32 2147483647, %v2761
        %v2770 = vadd.f32 %v2710, %v2762
        %v2771 = vadd.f32 %v2711, %v2763
        %v2772 = vadd.f32 %v2712, %v2764
        %v2773 = vadd.f32 %v2713, %v2765
        %v2774 = vadd.f32 %v2714, %v2766
        %v2775 = vadd.f32 %v2715, %v2767
        %v2776 = vadd.f32 %v2716, %v2768
        %v2777 = vadd.f32 %v2717, %v2769
        %2778 = vset.pattern.permute.xlu0 43
        %2779 = vperm.xlu0 %2778, %v176
        %v2780 = vpop.permute.xlu0 %2779
        %2782 = vset.pattern.permute.xlu0 43
        %2783 = vperm.xlu0 %2782, %v177
        %v2784 = vpop.permute.xlu0 %2783
        %2786 = vset.pattern.permute.xlu0 43
        %2787 = vperm.xlu0 %2786, %v178
        %v2788 = vpop.permute.xlu0 %2787
        %2790 = vset.pattern.permute.xlu0 43
        %2791 = vperm.xlu0 %2790, %v179
        %v2792 = vpop.permute.xlu0 %2791
        %2794 = vset.pattern.permute.xlu0 43
        %2795 = vperm.xlu0 %2794, %v180
        %v2796 = vpop.permute.xlu0 %2795
        %2798 = vset.pattern.permute.xlu0 43
        %2799 = vperm.xlu0 %2798, %v181
        %v2800 = vpop.permute.xlu0 %2799
        %2802 = vset.pattern.permute.xlu0 43
        %2803 = vperm.xlu0 %2802, %v182
        %v2804 = vpop.permute.xlu0 %2803
        %2806 = vset.pattern.permute.xlu0 43
        %2807 = vperm.xlu0 %2806, %v183
        %v2808 = vpop.permute.xlu0 %2807
        %v2810 = vlaneseq
        %v2811 = vshrl.u32 %v2810, 7
        %v2812 = vsub.s32 3, %v2811
        %v2813 = vrot.slane %v2597, %v2812
        %v2814 = vsub.f32 %v2780, %v2813
        %v2815 = vsub.f32 %v2784, %v2813
        %v2816 = vsub.f32 %v2788, %v2813
        %v2817 = vsub.f32 %v2792, %v2813
        %v2818 = vsub.f32 %v2796, %v2813
        %v2819 = vsub.f32 %v2800, %v2813
        %v2820 = vsub.f32 %v2804, %v2813
        %v2821 = vsub.f32 %v2808, %v2813
        %v2822 = vand.u32 2147483647, %v2814
        %v2823 = vand.u32 2147483647, %v2815
        %v2824 = vand.u32 2147483647, %v2816
        %v2825 = vand.u32 2147483647, %v2817
        %v2826 = vand.u32 2147483647, %v2818
        %v2827 = vand.u32 2147483647, %v2819
        %v2828 = vand.u32 2147483647, %v2820
        %v2829 = vand.u32 2147483647, %v2821
        %v2830 = vadd.f32 %v2770, %v2822
        %v2831 = vadd.f32 %v2771, %v2823
        %v2832 = vadd.f32 %v2772, %v2824
        %v2833 = vadd.f32 %v2773, %v2825
        %v2834 = vadd.f32 %v2774, %v2826
        %v2835 = vadd.f32 %v2775, %v2827
        %v2836 = vadd.f32 %v2776, %v2828
        %v2837 = vadd.f32 %v2777, %v2829
        %2838 = vset.pattern.permute.xlu0 44
        %2839 = vperm.xlu0 %2838, %v176
        %v2840 = vpop.permute.xlu0 %2839
        %2842 = vset.pattern.permute.xlu0 44
        %2843 = vperm.xlu0 %2842, %v177
        %v2844 = vpop.permute.xlu0 %2843
        %2846 = vset.pattern.permute.xlu0 44
        %2847 = vperm.xlu0 %2846, %v178
        %v2848 = vpop.permute.xlu0 %2847
        %2850 = vset.pattern.permute.xlu0 44
        %2851 = vperm.xlu0 %2850, %v179
        %v2852 = vpop.permute.xlu0 %2851
        %2854 = vset.pattern.permute.xlu0 44
        %2855 = vperm.xlu0 %2854, %v180
        %v2856 = vpop.permute.xlu0 %2855
        %2858 = vset.pattern.permute.xlu0 44
        %2859 = vperm.xlu0 %2858, %v181
        %v2860 = vpop.permute.xlu0 %2859
        %2862 = vset.pattern.permute.xlu0 44
        %2863 = vperm.xlu0 %2862, %v182
        %v2864 = vpop.permute.xlu0 %2863
        %2866 = vset.pattern.permute.xlu0 44
        %2867 = vperm.xlu0 %2866, %v183
        %v2868 = vpop.permute.xlu0 %2867
        %v2870 = vlaneseq
        %v2871 = vshrl.u32 %v2870, 7
        %v2872 = vsub.s32 4, %v2871
        %v2873 = vrot.slane %v2597, %v2872
        %v2874 = vsub.f32 %v2840, %v2873
        %v2875 = vsub.f32 %v2844, %v2873
        %v2876 = vsub.f32 %v2848, %v2873
        %v2877 = vsub.f32 %v2852, %v2873
        %v2878 = vsub.f32 %v2856, %v2873
        %v2879 = vsub.f32 %v2860, %v2873
        %v2880 = vsub.f32 %v2864, %v2873
        %v2881 = vsub.f32 %v2868, %v2873
        %v2882 = vand.u32 2147483647, %v2874
        %v2883 = vand.u32 2147483647, %v2875
        %v2884 = vand.u32 2147483647, %v2876
        %v2885 = vand.u32 2147483647, %v2877
        %v2886 = vand.u32 2147483647, %v2878
        %v2887 = vand.u32 2147483647, %v2879
        %v2888 = vand.u32 2147483647, %v2880
        %v2889 = vand.u32 2147483647, %v2881
        %v2890 = vadd.f32 %v2830, %v2882
        %v2891 = vadd.f32 %v2831, %v2883
        %v2892 = vadd.f32 %v2832, %v2884
        %v2893 = vadd.f32 %v2833, %v2885
        %v2894 = vadd.f32 %v2834, %v2886
        %v2895 = vadd.f32 %v2835, %v2887
        %v2896 = vadd.f32 %v2836, %v2888
        %v2897 = vadd.f32 %v2837, %v2889
        %2898 = vset.pattern.permute.xlu0 45
        %2899 = vperm.xlu0 %2898, %v176
        %v2900 = vpop.permute.xlu0 %2899
        %2902 = vset.pattern.permute.xlu0 45
        %2903 = vperm.xlu0 %2902, %v177
        %v2904 = vpop.permute.xlu0 %2903
        %2906 = vset.pattern.permute.xlu0 45
        %2907 = vperm.xlu0 %2906, %v178
        %v2908 = vpop.permute.xlu0 %2907
        %2910 = vset.pattern.permute.xlu0 45
        %2911 = vperm.xlu0 %2910, %v179
        %v2912 = vpop.permute.xlu0 %2911
        %2914 = vset.pattern.permute.xlu0 45
        %2915 = vperm.xlu0 %2914, %v180
        %v2916 = vpop.permute.xlu0 %2915
        %2918 = vset.pattern.permute.xlu0 45
        %2919 = vperm.xlu0 %2918, %v181
        %v2920 = vpop.permute.xlu0 %2919
        %2922 = vset.pattern.permute.xlu0 45
        %2923 = vperm.xlu0 %2922, %v182
        %v2924 = vpop.permute.xlu0 %2923
        %2926 = vset.pattern.permute.xlu0 45
        %2927 = vperm.xlu0 %2926, %v183
        %v2928 = vpop.permute.xlu0 %2927
        %v2930 = vlaneseq
        %v2931 = vshrl.u32 %v2930, 7
        %v2932 = vsub.s32 5, %v2931
        %v2933 = vrot.slane %v2597, %v2932
        %v2934 = vsub.f32 %v2900, %v2933
        %v2935 = vsub.f32 %v2904, %v2933
        %v2936 = vsub.f32 %v2908, %v2933
        %v2937 = vsub.f32 %v2912, %v2933
        %v2938 = vsub.f32 %v2916, %v2933
        %v2939 = vsub.f32 %v2920, %v2933
        %v2940 = vsub.f32 %v2924, %v2933
        %v2941 = vsub.f32 %v2928, %v2933
        %v2942 = vand.u32 2147483647, %v2934
        %v2943 = vand.u32 2147483647, %v2935
        %v2944 = vand.u32 2147483647, %v2936
        %v2945 = vand.u32 2147483647, %v2937
        %v2946 = vand.u32 2147483647, %v2938
        %v2947 = vand.u32 2147483647, %v2939
        %v2948 = vand.u32 2147483647, %v2940
        %v2949 = vand.u32 2147483647, %v2941
        %v2950 = vadd.f32 %v2890, %v2942
        %v2951 = vadd.f32 %v2891, %v2943
        %v2952 = vadd.f32 %v2892, %v2944
        %v2953 = vadd.f32 %v2893, %v2945
        %v2954 = vadd.f32 %v2894, %v2946
        %v2955 = vadd.f32 %v2895, %v2947
        %v2956 = vadd.f32 %v2896, %v2948
        %v2957 = vadd.f32 %v2897, %v2949
        %2958 = vset.pattern.permute.xlu0 46
        %2959 = vperm.xlu0 %2958, %v176
        %v2960 = vpop.permute.xlu0 %2959
        %2962 = vset.pattern.permute.xlu0 46
        %2963 = vperm.xlu0 %2962, %v177
        %v2964 = vpop.permute.xlu0 %2963
        %2966 = vset.pattern.permute.xlu0 46
        %2967 = vperm.xlu0 %2966, %v178
        %v2968 = vpop.permute.xlu0 %2967
        %2970 = vset.pattern.permute.xlu0 46
        %2971 = vperm.xlu0 %2970, %v179
        %v2972 = vpop.permute.xlu0 %2971
        %2974 = vset.pattern.permute.xlu0 46
        %2975 = vperm.xlu0 %2974, %v180
        %v2976 = vpop.permute.xlu0 %2975
        %2978 = vset.pattern.permute.xlu0 46
        %2979 = vperm.xlu0 %2978, %v181
        %v2980 = vpop.permute.xlu0 %2979
        %2982 = vset.pattern.permute.xlu0 46
        %2983 = vperm.xlu0 %2982, %v182
        %v2984 = vpop.permute.xlu0 %2983
        %2986 = vset.pattern.permute.xlu0 46
        %2987 = vperm.xlu0 %2986, %v183
        %v2988 = vpop.permute.xlu0 %2987
        %v2990 = vlaneseq
        %v2991 = vshrl.u32 %v2990, 7
        %v2992 = vsub.s32 6, %v2991
        %v2993 = vrot.slane %v2597, %v2992
        %v2994 = vsub.f32 %v2960, %v2993
        %v2995 = vsub.f32 %v2964, %v2993
        %v2996 = vsub.f32 %v2968, %v2993
        %v2997 = vsub.f32 %v2972, %v2993
        %v2998 = vsub.f32 %v2976, %v2993
        %v2999 = vsub.f32 %v2980, %v2993
        %v3000 = vsub.f32 %v2984, %v2993
        %v3001 = vsub.f32 %v2988, %v2993
        %v3002 = vand.u32 2147483647, %v2994
        %v3003 = vand.u32 2147483647, %v2995
        %v3004 = vand.u32 2147483647, %v2996
        %v3005 = vand.u32 2147483647, %v2997
        %v3006 = vand.u32 2147483647, %v2998
        %v3007 = vand.u32 2147483647, %v2999
        %v3008 = vand.u32 2147483647, %v3000
        %v3009 = vand.u32 2147483647, %v3001
        %v3010 = vadd.f32 %v2950, %v3002
        %v3011 = vadd.f32 %v2951, %v3003
        %v3012 = vadd.f32 %v2952, %v3004
        %v3013 = vadd.f32 %v2953, %v3005
        %v3014 = vadd.f32 %v2954, %v3006
        %v3015 = vadd.f32 %v2955, %v3007
        %v3016 = vadd.f32 %v2956, %v3008
        %v3017 = vadd.f32 %v2957, %v3009
        %3018 = vset.pattern.permute.xlu0 47
        %3019 = vperm.xlu0 %3018, %v176
        %v3020 = vpop.permute.xlu0 %3019
        %3022 = vset.pattern.permute.xlu0 47
        %3023 = vperm.xlu0 %3022, %v177
        %v3024 = vpop.permute.xlu0 %3023
        %3026 = vset.pattern.permute.xlu0 47
        %3027 = vperm.xlu0 %3026, %v178
        %v3028 = vpop.permute.xlu0 %3027
        %3030 = vset.pattern.permute.xlu0 47
        %3031 = vperm.xlu0 %3030, %v179
        %v3032 = vpop.permute.xlu0 %3031
        %3034 = vset.pattern.permute.xlu0 47
        %3035 = vperm.xlu0 %3034, %v180
        %v3036 = vpop.permute.xlu0 %3035
        %3038 = vset.pattern.permute.xlu0 47
        %3039 = vperm.xlu0 %3038, %v181
        %v3040 = vpop.permute.xlu0 %3039
        %3042 = vset.pattern.permute.xlu0 47
        %3043 = vperm.xlu0 %3042, %v182
        %v3044 = vpop.permute.xlu0 %3043
        %3046 = vset.pattern.permute.xlu0 47
        %3047 = vperm.xlu0 %3046, %v183
        %v3048 = vpop.permute.xlu0 %3047
        %v3050 = vlaneseq
        %v3051 = vshrl.u32 %v3050, 7
        %v3052 = vsub.s32 7, %v3051
        %v3053 = vrot.slane %v2597, %v3052
        %v3054 = vsub.f32 %v3020, %v3053
        %v3055 = vsub.f32 %v3024, %v3053
        %v3056 = vsub.f32 %v3028, %v3053
        %v3057 = vsub.f32 %v3032, %v3053
        %v3058 = vsub.f32 %v3036, %v3053
        %v3059 = vsub.f32 %v3040, %v3053
        %v3060 = vsub.f32 %v3044, %v3053
        %v3061 = vsub.f32 %v3048, %v3053
        %v3062 = vand.u32 2147483647, %v3054
        %v3063 = vand.u32 2147483647, %v3055
        %v3064 = vand.u32 2147483647, %v3056
        %v3065 = vand.u32 2147483647, %v3057
        %v3066 = vand.u32 2147483647, %v3058
        %v3067 = vand.u32 2147483647, %v3059
        %v3068 = vand.u32 2147483647, %v3060
        %v3069 = vand.u32 2147483647, %v3061
        %v3070 = vadd.f32 %v3010, %v3062
        %v3071 = vadd.f32 %v3011, %v3063
        %v3072 = vadd.f32 %v3012, %v3064
        %v3073 = vadd.f32 %v3013, %v3065
        %v3074 = vadd.f32 %v3014, %v3066
        %v3075 = vadd.f32 %v3015, %v3067
        %v3076 = vadd.f32 %v3016, %v3068
        %v3077 = vadd.f32 %v3017, %v3069
        %v3078 = vld [vmem:[%s174 + $0x30] sm:$0xff]
        %3079 = vset.pattern.permute.xlu0 48
        %3080 = vperm.xlu0 %3079, %v176
        %v3081 = vpop.permute.xlu0 %3080
        %3083 = vset.pattern.permute.xlu0 48
        %3084 = vperm.xlu0 %3083, %v177
        %v3085 = vpop.permute.xlu0 %3084
        %3087 = vset.pattern.permute.xlu0 48
        %3088 = vperm.xlu0 %3087, %v178
        %v3089 = vpop.permute.xlu0 %3088
        %3091 = vset.pattern.permute.xlu0 48
        %3092 = vperm.xlu0 %3091, %v179
        %v3093 = vpop.permute.xlu0 %3092
        %3095 = vset.pattern.permute.xlu0 48
        %3096 = vperm.xlu0 %3095, %v180
        %v3097 = vpop.permute.xlu0 %3096
        %3099 = vset.pattern.permute.xlu0 48
        %3100 = vperm.xlu0 %3099, %v181
        %v3101 = vpop.permute.xlu0 %3100
        %3103 = vset.pattern.permute.xlu0 48
        %3104 = vperm.xlu0 %3103, %v182
        %v3105 = vpop.permute.xlu0 %3104
        %3107 = vset.pattern.permute.xlu0 48
        %3108 = vperm.xlu0 %3107, %v183
        %v3109 = vpop.permute.xlu0 %3108
        %v3111 = vlaneseq
        %v3112 = vshrl.u32 %v3111, 7
        %v3113 = vsub.s32 0, %v3112
        %v3114 = vrot.slane %v3078, %v3113
        %v3115 = vsub.f32 %v3081, %v3114
        %v3116 = vsub.f32 %v3085, %v3114
        %v3117 = vsub.f32 %v3089, %v3114
        %v3118 = vsub.f32 %v3093, %v3114
        %v3119 = vsub.f32 %v3097, %v3114
        %v3120 = vsub.f32 %v3101, %v3114
        %v3121 = vsub.f32 %v3105, %v3114
        %v3122 = vsub.f32 %v3109, %v3114
        %v3123 = vand.u32 2147483647, %v3115
        %v3124 = vand.u32 2147483647, %v3116
        %v3125 = vand.u32 2147483647, %v3117
        %v3126 = vand.u32 2147483647, %v3118
        %v3127 = vand.u32 2147483647, %v3119
        %v3128 = vand.u32 2147483647, %v3120
        %v3129 = vand.u32 2147483647, %v3121
        %v3130 = vand.u32 2147483647, %v3122
        %v3131 = vadd.f32 %v3070, %v3123
        %v3132 = vadd.f32 %v3071, %v3124
        %v3133 = vadd.f32 %v3072, %v3125
        %v3134 = vadd.f32 %v3073, %v3126
        %v3135 = vadd.f32 %v3074, %v3127
        %v3136 = vadd.f32 %v3075, %v3128
        %v3137 = vadd.f32 %v3076, %v3129
        %v3138 = vadd.f32 %v3077, %v3130
        %3139 = vset.pattern.permute.xlu0 49
        %3140 = vperm.xlu0 %3139, %v176
        %v3141 = vpop.permute.xlu0 %3140
        %3143 = vset.pattern.permute.xlu0 49
        %3144 = vperm.xlu0 %3143, %v177
        %v3145 = vpop.permute.xlu0 %3144
        %3147 = vset.pattern.permute.xlu0 49
        %3148 = vperm.xlu0 %3147, %v178
        %v3149 = vpop.permute.xlu0 %3148
        %3151 = vset.pattern.permute.xlu0 49
        %3152 = vperm.xlu0 %3151, %v179
        %v3153 = vpop.permute.xlu0 %3152
        %3155 = vset.pattern.permute.xlu0 49
        %3156 = vperm.xlu0 %3155, %v180
        %v3157 = vpop.permute.xlu0 %3156
        %3159 = vset.pattern.permute.xlu0 49
        %3160 = vperm.xlu0 %3159, %v181
        %v3161 = vpop.permute.xlu0 %3160
        %3163 = vset.pattern.permute.xlu0 49
        %3164 = vperm.xlu0 %3163, %v182
        %v3165 = vpop.permute.xlu0 %3164
        %3167 = vset.pattern.permute.xlu0 49
        %3168 = vperm.xlu0 %3167, %v183
        %v3169 = vpop.permute.xlu0 %3168
        %v3171 = vlaneseq
        %v3172 = vshrl.u32 %v3171, 7
        %v3173 = vsub.s32 1, %v3172
        %v3174 = vrot.slane %v3078, %v3173
        %v3175 = vsub.f32 %v3141, %v3174
        %v3176 = vsub.f32 %v3145, %v3174
        %v3177 = vsub.f32 %v3149, %v3174
        %v3178 = vsub.f32 %v3153, %v3174
        %v3179 = vsub.f32 %v3157, %v3174
        %v3180 = vsub.f32 %v3161, %v3174
        %v3181 = vsub.f32 %v3165, %v3174
        %v3182 = vsub.f32 %v3169, %v3174
        %v3183 = vand.u32 2147483647, %v3175
        %v3184 = vand.u32 2147483647, %v3176
        %v3185 = vand.u32 2147483647, %v3177
        %v3186 = vand.u32 2147483647, %v3178
        %v3187 = vand.u32 2147483647, %v3179
        %v3188 = vand.u32 2147483647, %v3180
        %v3189 = vand.u32 2147483647, %v3181
        %v3190 = vand.u32 2147483647, %v3182
        %v3191 = vadd.f32 %v3131, %v3183
        %v3192 = vadd.f32 %v3132, %v3184
        %v3193 = vadd.f32 %v3133, %v3185
        %v3194 = vadd.f32 %v3134, %v3186
        %v3195 = vadd.f32 %v3135, %v3187
        %v3196 = vadd.f32 %v3136, %v3188
        %v3197 = vadd.f32 %v3137, %v3189
        %v3198 = vadd.f32 %v3138, %v3190
        %3199 = vset.pattern.permute.xlu0 50
        %3200 = vperm.xlu0 %3199, %v176
        %v3201 = vpop.permute.xlu0 %3200
        %3203 = vset.pattern.permute.xlu0 50
        %3204 = vperm.xlu0 %3203, %v177
        %v3205 = vpop.permute.xlu0 %3204
        %3207 = vset.pattern.permute.xlu0 50
        %3208 = vperm.xlu0 %3207, %v178
        %v3209 = vpop.permute.xlu0 %3208
        %3211 = vset.pattern.permute.xlu0 50
        %3212 = vperm.xlu0 %3211, %v179
        %v3213 = vpop.permute.xlu0 %3212
        %3215 = vset.pattern.permute.xlu0 50
        %3216 = vperm.xlu0 %3215, %v180
        %v3217 = vpop.permute.xlu0 %3216
        %3219 = vset.pattern.permute.xlu0 50
        %3220 = vperm.xlu0 %3219, %v181
        %v3221 = vpop.permute.xlu0 %3220
        %3223 = vset.pattern.permute.xlu0 50
        %3224 = vperm.xlu0 %3223, %v182
        %v3225 = vpop.permute.xlu0 %3224
        %3227 = vset.pattern.permute.xlu0 50
        %3228 = vperm.xlu0 %3227, %v183
        %v3229 = vpop.permute.xlu0 %3228
        %v3231 = vlaneseq
        %v3232 = vshrl.u32 %v3231, 7
        %v3233 = vsub.s32 2, %v3232
        %v3234 = vrot.slane %v3078, %v3233
        %v3235 = vsub.f32 %v3201, %v3234
        %v3236 = vsub.f32 %v3205, %v3234
        %v3237 = vsub.f32 %v3209, %v3234
        %v3238 = vsub.f32 %v3213, %v3234
        %v3239 = vsub.f32 %v3217, %v3234
        %v3240 = vsub.f32 %v3221, %v3234
        %v3241 = vsub.f32 %v3225, %v3234
        %v3242 = vsub.f32 %v3229, %v3234
        %v3243 = vand.u32 2147483647, %v3235
        %v3244 = vand.u32 2147483647, %v3236
        %v3245 = vand.u32 2147483647, %v3237
        %v3246 = vand.u32 2147483647, %v3238
        %v3247 = vand.u32 2147483647, %v3239
        %v3248 = vand.u32 2147483647, %v3240
        %v3249 = vand.u32 2147483647, %v3241
        %v3250 = vand.u32 2147483647, %v3242
        %v3251 = vadd.f32 %v3191, %v3243
        %v3252 = vadd.f32 %v3192, %v3244
        %v3253 = vadd.f32 %v3193, %v3245
        %v3254 = vadd.f32 %v3194, %v3246
        %v3255 = vadd.f32 %v3195, %v3247
        %v3256 = vadd.f32 %v3196, %v3248
        %v3257 = vadd.f32 %v3197, %v3249
        %v3258 = vadd.f32 %v3198, %v3250
        %3259 = vset.pattern.permute.xlu0 51
        %3260 = vperm.xlu0 %3259, %v176
        %v3261 = vpop.permute.xlu0 %3260
        %3263 = vset.pattern.permute.xlu0 51
        %3264 = vperm.xlu0 %3263, %v177
        %v3265 = vpop.permute.xlu0 %3264
        %3267 = vset.pattern.permute.xlu0 51
        %3268 = vperm.xlu0 %3267, %v178
        %v3269 = vpop.permute.xlu0 %3268
        %3271 = vset.pattern.permute.xlu0 51
        %3272 = vperm.xlu0 %3271, %v179
        %v3273 = vpop.permute.xlu0 %3272
        %3275 = vset.pattern.permute.xlu0 51
        %3276 = vperm.xlu0 %3275, %v180
        %v3277 = vpop.permute.xlu0 %3276
        %3279 = vset.pattern.permute.xlu0 51
        %3280 = vperm.xlu0 %3279, %v181
        %v3281 = vpop.permute.xlu0 %3280
        %3283 = vset.pattern.permute.xlu0 51
        %3284 = vperm.xlu0 %3283, %v182
        %v3285 = vpop.permute.xlu0 %3284
        %3287 = vset.pattern.permute.xlu0 51
        %3288 = vperm.xlu0 %3287, %v183
        %v3289 = vpop.permute.xlu0 %3288
        %v3291 = vlaneseq
        %v3292 = vshrl.u32 %v3291, 7
        %v3293 = vsub.s32 3, %v3292
        %v3294 = vrot.slane %v3078, %v3293
        %v3295 = vsub.f32 %v3261, %v3294
        %v3296 = vsub.f32 %v3265, %v3294
        %v3297 = vsub.f32 %v3269, %v3294
        %v3298 = vsub.f32 %v3273, %v3294
        %v3299 = vsub.f32 %v3277, %v3294
        %v3300 = vsub.f32 %v3281, %v3294
        %v3301 = vsub.f32 %v3285, %v3294
        %v3302 = vsub.f32 %v3289, %v3294
        %v3303 = vand.u32 2147483647, %v3295
        %v3304 = vand.u32 2147483647, %v3296
        %v3305 = vand.u32 2147483647, %v3297
        %v3306 = vand.u32 2147483647, %v3298
        %v3307 = vand.u32 2147483647, %v3299
        %v3308 = vand.u32 2147483647, %v3300
        %v3309 = vand.u32 2147483647, %v3301
        %v3310 = vand.u32 2147483647, %v3302
        %v3311 = vadd.f32 %v3251, %v3303
        %v3312 = vadd.f32 %v3252, %v3304
        %v3313 = vadd.f32 %v3253, %v3305
        %v3314 = vadd.f32 %v3254, %v3306
        %v3315 = vadd.f32 %v3255, %v3307
        %v3316 = vadd.f32 %v3256, %v3308
        %v3317 = vadd.f32 %v3257, %v3309
        %v3318 = vadd.f32 %v3258, %v3310
        %3319 = vset.pattern.permute.xlu0 52
        %3320 = vperm.xlu0 %3319, %v176
        %v3321 = vpop.permute.xlu0 %3320
        %3323 = vset.pattern.permute.xlu0 52
        %3324 = vperm.xlu0 %3323, %v177
        %v3325 = vpop.permute.xlu0 %3324
        %3327 = vset.pattern.permute.xlu0 52
        %3328 = vperm.xlu0 %3327, %v178
        %v3329 = vpop.permute.xlu0 %3328
        %3331 = vset.pattern.permute.xlu0 52
        %3332 = vperm.xlu0 %3331, %v179
        %v3333 = vpop.permute.xlu0 %3332
        %3335 = vset.pattern.permute.xlu0 52
        %3336 = vperm.xlu0 %3335, %v180
        %v3337 = vpop.permute.xlu0 %3336
        %3339 = vset.pattern.permute.xlu0 52
        %3340 = vperm.xlu0 %3339, %v181
        %v3341 = vpop.permute.xlu0 %3340
        %3343 = vset.pattern.permute.xlu0 52
        %3344 = vperm.xlu0 %3343, %v182
        %v3345 = vpop.permute.xlu0 %3344
        %3347 = vset.pattern.permute.xlu0 52
        %3348 = vperm.xlu0 %3347, %v183
        %v3349 = vpop.permute.xlu0 %3348
        %v3351 = vlaneseq
        %v3352 = vshrl.u32 %v3351, 7
        %v3353 = vsub.s32 4, %v3352
        %v3354 = vrot.slane %v3078, %v3353
        %v3355 = vsub.f32 %v3321, %v3354
        %v3356 = vsub.f32 %v3325, %v3354
        %v3357 = vsub.f32 %v3329, %v3354
        %v3358 = vsub.f32 %v3333, %v3354
        %v3359 = vsub.f32 %v3337, %v3354
        %v3360 = vsub.f32 %v3341, %v3354
        %v3361 = vsub.f32 %v3345, %v3354
        %v3362 = vsub.f32 %v3349, %v3354
        %v3363 = vand.u32 2147483647, %v3355
        %v3364 = vand.u32 2147483647, %v3356
        %v3365 = vand.u32 2147483647, %v3357
        %v3366 = vand.u32 2147483647, %v3358
        %v3367 = vand.u32 2147483647, %v3359
        %v3368 = vand.u32 2147483647, %v3360
        %v3369 = vand.u32 2147483647, %v3361
        %v3370 = vand.u32 2147483647, %v3362
        %v3371 = vadd.f32 %v3311, %v3363
        %v3372 = vadd.f32 %v3312, %v3364
        %v3373 = vadd.f32 %v3313, %v3365
        %v3374 = vadd.f32 %v3314, %v3366
        %v3375 = vadd.f32 %v3315, %v3367
        %v3376 = vadd.f32 %v3316, %v3368
        %v3377 = vadd.f32 %v3317, %v3369
        %v3378 = vadd.f32 %v3318, %v3370
        %3379 = vset.pattern.permute.xlu0 53
        %3380 = vperm.xlu0 %3379, %v176
        %v3381 = vpop.permute.xlu0 %3380
        %3383 = vset.pattern.permute.xlu0 53
        %3384 = vperm.xlu0 %3383, %v177
        %v3385 = vpop.permute.xlu0 %3384
        %3387 = vset.pattern.permute.xlu0 53
        %3388 = vperm.xlu0 %3387, %v178
        %v3389 = vpop.permute.xlu0 %3388
        %3391 = vset.pattern.permute.xlu0 53
        %3392 = vperm.xlu0 %3391, %v179
        %v3393 = vpop.permute.xlu0 %3392
        %3395 = vset.pattern.permute.xlu0 53
        %3396 = vperm.xlu0 %3395, %v180
        %v3397 = vpop.permute.xlu0 %3396
        %3399 = vset.pattern.permute.xlu0 53
        %3400 = vperm.xlu0 %3399, %v181
        %v3401 = vpop.permute.xlu0 %3400
        %3403 = vset.pattern.permute.xlu0 53
        %3404 = vperm.xlu0 %3403, %v182
        %v3405 = vpop.permute.xlu0 %3404
        %3407 = vset.pattern.permute.xlu0 53
        %3408 = vperm.xlu0 %3407, %v183
        %v3409 = vpop.permute.xlu0 %3408
        %v3411 = vlaneseq
        %v3412 = vshrl.u32 %v3411, 7
        %v3413 = vsub.s32 5, %v3412
        %v3414 = vrot.slane %v3078, %v3413
        %v3415 = vsub.f32 %v3381, %v3414
        %v3416 = vsub.f32 %v3385, %v3414
        %v3417 = vsub.f32 %v3389, %v3414
        %v3418 = vsub.f32 %v3393, %v3414
        %v3419 = vsub.f32 %v3397, %v3414
        %v3420 = vsub.f32 %v3401, %v3414
        %v3421 = vsub.f32 %v3405, %v3414
        %v3422 = vsub.f32 %v3409, %v3414
        %v3423 = vand.u32 2147483647, %v3415
        %v3424 = vand.u32 2147483647, %v3416
        %v3425 = vand.u32 2147483647, %v3417
        %v3426 = vand.u32 2147483647, %v3418
        %v3427 = vand.u32 2147483647, %v3419
        %v3428 = vand.u32 2147483647, %v3420
        %v3429 = vand.u32 2147483647, %v3421
        %v3430 = vand.u32 2147483647, %v3422
        %v3431 = vadd.f32 %v3371, %v3423
        %v3432 = vadd.f32 %v3372, %v3424
        %v3433 = vadd.f32 %v3373, %v3425
        %v3434 = vadd.f32 %v3374, %v3426
        %v3435 = vadd.f32 %v3375, %v3427
        %v3436 = vadd.f32 %v3376, %v3428
        %v3437 = vadd.f32 %v3377, %v3429
        %v3438 = vadd.f32 %v3378, %v3430
        %3439 = vset.pattern.permute.xlu0 54
        %3440 = vperm.xlu0 %3439, %v176
        %v3441 = vpop.permute.xlu0 %3440
        %3443 = vset.pattern.permute.xlu0 54
        %3444 = vperm.xlu0 %3443, %v177
        %v3445 = vpop.permute.xlu0 %3444
        %3447 = vset.pattern.permute.xlu0 54
        %3448 = vperm.xlu0 %3447, %v178
        %v3449 = vpop.permute.xlu0 %3448
        %3451 = vset.pattern.permute.xlu0 54
        %3452 = vperm.xlu0 %3451, %v179
        %v3453 = vpop.permute.xlu0 %3452
        %3455 = vset.pattern.permute.xlu0 54
        %3456 = vperm.xlu0 %3455, %v180
        %v3457 = vpop.permute.xlu0 %3456
        %3459 = vset.pattern.permute.xlu0 54
        %3460 = vperm.xlu0 %3459, %v181
        %v3461 = vpop.permute.xlu0 %3460
        %3463 = vset.pattern.permute.xlu0 54
        %3464 = vperm.xlu0 %3463, %v182
        %v3465 = vpop.permute.xlu0 %3464
        %3467 = vset.pattern.permute.xlu0 54
        %3468 = vperm.xlu0 %3467, %v183
        %v3469 = vpop.permute.xlu0 %3468
        %v3471 = vlaneseq
        %v3472 = vshrl.u32 %v3471, 7
        %v3473 = vsub.s32 6, %v3472
        %v3474 = vrot.slane %v3078, %v3473
        %v3475 = vsub.f32 %v3441, %v3474
        %v3476 = vsub.f32 %v3445, %v3474
        %v3477 = vsub.f32 %v3449, %v3474
        %v3478 = vsub.f32 %v3453, %v3474
        %v3479 = vsub.f32 %v3457, %v3474
        %v3480 = vsub.f32 %v3461, %v3474
        %v3481 = vsub.f32 %v3465, %v3474
        %v3482 = vsub.f32 %v3469, %v3474
        %v3483 = vand.u32 2147483647, %v3475
        %v3484 = vand.u32 2147483647, %v3476
        %v3485 = vand.u32 2147483647, %v3477
        %v3486 = vand.u32 2147483647, %v3478
        %v3487 = vand.u32 2147483647, %v3479
        %v3488 = vand.u32 2147483647, %v3480
        %v3489 = vand.u32 2147483647, %v3481
        %v3490 = vand.u32 2147483647, %v3482
        %v3491 = vadd.f32 %v3431, %v3483
        %v3492 = vadd.f32 %v3432, %v3484
        %v3493 = vadd.f32 %v3433, %v3485
        %v3494 = vadd.f32 %v3434, %v3486
        %v3495 = vadd.f32 %v3435, %v3487
        %v3496 = vadd.f32 %v3436, %v3488
        %v3497 = vadd.f32 %v3437, %v3489
        %v3498 = vadd.f32 %v3438, %v3490
        %3499 = vset.pattern.permute.xlu0 55
        %3500 = vperm.xlu0 %3499, %v176
        %v3501 = vpop.permute.xlu0 %3500
        %3503 = vset.pattern.permute.xlu0 55
        %3504 = vperm.xlu0 %3503, %v177
        %v3505 = vpop.permute.xlu0 %3504
        %3507 = vset.pattern.permute.xlu0 55
        %3508 = vperm.xlu0 %3507, %v178
        %v3509 = vpop.permute.xlu0 %3508
        %3511 = vset.pattern.permute.xlu0 55
        %3512 = vperm.xlu0 %3511, %v179
        %v3513 = vpop.permute.xlu0 %3512
        %3515 = vset.pattern.permute.xlu0 55
        %3516 = vperm.xlu0 %3515, %v180
        %v3517 = vpop.permute.xlu0 %3516
        %3519 = vset.pattern.permute.xlu0 55
        %3520 = vperm.xlu0 %3519, %v181
        %v3521 = vpop.permute.xlu0 %3520
        %3523 = vset.pattern.permute.xlu0 55
        %3524 = vperm.xlu0 %3523, %v182
        %v3525 = vpop.permute.xlu0 %3524
        %3527 = vset.pattern.permute.xlu0 55
        %3528 = vperm.xlu0 %3527, %v183
        %v3529 = vpop.permute.xlu0 %3528
        %v3531 = vlaneseq
        %v3532 = vshrl.u32 %v3531, 7
        %v3533 = vsub.s32 7, %v3532
        %v3534 = vrot.slane %v3078, %v3533
        %v3535 = vsub.f32 %v3501, %v3534
        %v3536 = vsub.f32 %v3505, %v3534
        %v3537 = vsub.f32 %v3509, %v3534
        %v3538 = vsub.f32 %v3513, %v3534
        %v3539 = vsub.f32 %v3517, %v3534
        %v3540 = vsub.f32 %v3521, %v3534
        %v3541 = vsub.f32 %v3525, %v3534
        %v3542 = vsub.f32 %v3529, %v3534
        %v3543 = vand.u32 2147483647, %v3535
        %v3544 = vand.u32 2147483647, %v3536
        %v3545 = vand.u32 2147483647, %v3537
        %v3546 = vand.u32 2147483647, %v3538
        %v3547 = vand.u32 2147483647, %v3539
        %v3548 = vand.u32 2147483647, %v3540
        %v3549 = vand.u32 2147483647, %v3541
        %v3550 = vand.u32 2147483647, %v3542
        %v3551 = vadd.f32 %v3491, %v3543
        %v3552 = vadd.f32 %v3492, %v3544
        %v3553 = vadd.f32 %v3493, %v3545
        %v3554 = vadd.f32 %v3494, %v3546
        %v3555 = vadd.f32 %v3495, %v3547
        %v3556 = vadd.f32 %v3496, %v3548
        %v3557 = vadd.f32 %v3497, %v3549
        %v3558 = vadd.f32 %v3498, %v3550
        %v3559 = vld [vmem:[%s174 + $0x38] sm:$0xff]
        %3560 = vset.pattern.permute.xlu0 56
        %3561 = vperm.xlu0 %3560, %v176
        %v3562 = vpop.permute.xlu0 %3561
        %3564 = vset.pattern.permute.xlu0 56
        %3565 = vperm.xlu0 %3564, %v177
        %v3566 = vpop.permute.xlu0 %3565
        %3568 = vset.pattern.permute.xlu0 56
        %3569 = vperm.xlu0 %3568, %v178
        %v3570 = vpop.permute.xlu0 %3569
        %3572 = vset.pattern.permute.xlu0 56
        %3573 = vperm.xlu0 %3572, %v179
        %v3574 = vpop.permute.xlu0 %3573
        %3576 = vset.pattern.permute.xlu0 56
        %3577 = vperm.xlu0 %3576, %v180
        %v3578 = vpop.permute.xlu0 %3577
        %3580 = vset.pattern.permute.xlu0 56
        %3581 = vperm.xlu0 %3580, %v181
        %v3582 = vpop.permute.xlu0 %3581
        %3584 = vset.pattern.permute.xlu0 56
        %3585 = vperm.xlu0 %3584, %v182
        %v3586 = vpop.permute.xlu0 %3585
        %3588 = vset.pattern.permute.xlu0 56
        %3589 = vperm.xlu0 %3588, %v183
        %v3590 = vpop.permute.xlu0 %3589
        %v3592 = vlaneseq
        %v3593 = vshrl.u32 %v3592, 7
        %v3594 = vsub.s32 0, %v3593
        %v3595 = vrot.slane %v3559, %v3594
        %v3596 = vsub.f32 %v3562, %v3595
        %v3597 = vsub.f32 %v3566, %v3595
        %v3598 = vsub.f32 %v3570, %v3595
        %v3599 = vsub.f32 %v3574, %v3595
        %v3600 = vsub.f32 %v3578, %v3595
        %v3601 = vsub.f32 %v3582, %v3595
        %v3602 = vsub.f32 %v3586, %v3595
        %v3603 = vsub.f32 %v3590, %v3595
        %v3604 = vand.u32 2147483647, %v3596
        %v3605 = vand.u32 2147483647, %v3597
        %v3606 = vand.u32 2147483647, %v3598
        %v3607 = vand.u32 2147483647, %v3599
        %v3608 = vand.u32 2147483647, %v3600
        %v3609 = vand.u32 2147483647, %v3601
        %v3610 = vand.u32 2147483647, %v3602
        %v3611 = vand.u32 2147483647, %v3603
        %v3612 = vadd.f32 %v3551, %v3604
        %v3613 = vadd.f32 %v3552, %v3605
        %v3614 = vadd.f32 %v3553, %v3606
        %v3615 = vadd.f32 %v3554, %v3607
        %v3616 = vadd.f32 %v3555, %v3608
        %v3617 = vadd.f32 %v3556, %v3609
        %v3618 = vadd.f32 %v3557, %v3610
        %v3619 = vadd.f32 %v3558, %v3611
        %3620 = vset.pattern.permute.xlu0 57
        %3621 = vperm.xlu0 %3620, %v176
        %v3622 = vpop.permute.xlu0 %3621
        %3624 = vset.pattern.permute.xlu0 57
        %3625 = vperm.xlu0 %3624, %v177
        %v3626 = vpop.permute.xlu0 %3625
        %3628 = vset.pattern.permute.xlu0 57
        %3629 = vperm.xlu0 %3628, %v178
        %v3630 = vpop.permute.xlu0 %3629
        %3632 = vset.pattern.permute.xlu0 57
        %3633 = vperm.xlu0 %3632, %v179
        %v3634 = vpop.permute.xlu0 %3633
        %3636 = vset.pattern.permute.xlu0 57
        %3637 = vperm.xlu0 %3636, %v180
        %v3638 = vpop.permute.xlu0 %3637
        %3640 = vset.pattern.permute.xlu0 57
        %3641 = vperm.xlu0 %3640, %v181
        %v3642 = vpop.permute.xlu0 %3641
        %3644 = vset.pattern.permute.xlu0 57
        %3645 = vperm.xlu0 %3644, %v182
        %v3646 = vpop.permute.xlu0 %3645
        %3648 = vset.pattern.permute.xlu0 57
        %3649 = vperm.xlu0 %3648, %v183
        %v3650 = vpop.permute.xlu0 %3649
        %v3652 = vlaneseq
        %v3653 = vshrl.u32 %v3652, 7
        %v3654 = vsub.s32 1, %v3653
        %v3655 = vrot.slane %v3559, %v3654
        %v3656 = vsub.f32 %v3622, %v3655
        %v3657 = vsub.f32 %v3626, %v3655
        %v3658 = vsub.f32 %v3630, %v3655
        %v3659 = vsub.f32 %v3634, %v3655
        %v3660 = vsub.f32 %v3638, %v3655
        %v3661 = vsub.f32 %v3642, %v3655
        %v3662 = vsub.f32 %v3646, %v3655
        %v3663 = vsub.f32 %v3650, %v3655
        %v3664 = vand.u32 2147483647, %v3656
        %v3665 = vand.u32 2147483647, %v3657
        %v3666 = vand.u32 2147483647, %v3658
        %v3667 = vand.u32 2147483647, %v3659
        %v3668 = vand.u32 2147483647, %v3660
        %v3669 = vand.u32 2147483647, %v3661
        %v3670 = vand.u32 2147483647, %v3662
        %v3671 = vand.u32 2147483647, %v3663
        %v3672 = vadd.f32 %v3612, %v3664
        %v3673 = vadd.f32 %v3613, %v3665
        %v3674 = vadd.f32 %v3614, %v3666
        %v3675 = vadd.f32 %v3615, %v3667
        %v3676 = vadd.f32 %v3616, %v3668
        %v3677 = vadd.f32 %v3617, %v3669
        %v3678 = vadd.f32 %v3618, %v3670
        %v3679 = vadd.f32 %v3619, %v3671
        %3680 = vset.pattern.permute.xlu0 58
        %3681 = vperm.xlu0 %3680, %v176
        %v3682 = vpop.permute.xlu0 %3681
        %3684 = vset.pattern.permute.xlu0 58
        %3685 = vperm.xlu0 %3684, %v177
        %v3686 = vpop.permute.xlu0 %3685
        %3688 = vset.pattern.permute.xlu0 58
        %3689 = vperm.xlu0 %3688, %v178
        %v3690 = vpop.permute.xlu0 %3689
        %3692 = vset.pattern.permute.xlu0 58
        %3693 = vperm.xlu0 %3692, %v179
        %v3694 = vpop.permute.xlu0 %3693
        %3696 = vset.pattern.permute.xlu0 58
        %3697 = vperm.xlu0 %3696, %v180
        %v3698 = vpop.permute.xlu0 %3697
        %3700 = vset.pattern.permute.xlu0 58
        %3701 = vperm.xlu0 %3700, %v181
        %v3702 = vpop.permute.xlu0 %3701
        %3704 = vset.pattern.permute.xlu0 58
        %3705 = vperm.xlu0 %3704, %v182
        %v3706 = vpop.permute.xlu0 %3705
        %3708 = vset.pattern.permute.xlu0 58
        %3709 = vperm.xlu0 %3708, %v183
        %v3710 = vpop.permute.xlu0 %3709
        %v3712 = vlaneseq
        %v3713 = vshrl.u32 %v3712, 7
        %v3714 = vsub.s32 2, %v3713
        %v3715 = vrot.slane %v3559, %v3714
        %v3716 = vsub.f32 %v3682, %v3715
        %v3717 = vsub.f32 %v3686, %v3715
        %v3718 = vsub.f32 %v3690, %v3715
        %v3719 = vsub.f32 %v3694, %v3715
        %v3720 = vsub.f32 %v3698, %v3715
        %v3721 = vsub.f32 %v3702, %v3715
        %v3722 = vsub.f32 %v3706, %v3715
        %v3723 = vsub.f32 %v3710, %v3715
        %v3724 = vand.u32 2147483647, %v3716
        %v3725 = vand.u32 2147483647, %v3717
        %v3726 = vand.u32 2147483647, %v3718
        %v3727 = vand.u32 2147483647, %v3719
        %v3728 = vand.u32 2147483647, %v3720
        %v3729 = vand.u32 2147483647, %v3721
        %v3730 = vand.u32 2147483647, %v3722
        %v3731 = vand.u32 2147483647, %v3723
        %v3732 = vadd.f32 %v3672, %v3724
        %v3733 = vadd.f32 %v3673, %v3725
        %v3734 = vadd.f32 %v3674, %v3726
        %v3735 = vadd.f32 %v3675, %v3727
        %v3736 = vadd.f32 %v3676, %v3728
        %v3737 = vadd.f32 %v3677, %v3729
        %v3738 = vadd.f32 %v3678, %v3730
        %v3739 = vadd.f32 %v3679, %v3731
        %3740 = vset.pattern.permute.xlu0 59
        %3741 = vperm.xlu0 %3740, %v176
        %v3742 = vpop.permute.xlu0 %3741
        %3744 = vset.pattern.permute.xlu0 59
        %3745 = vperm.xlu0 %3744, %v177
        %v3746 = vpop.permute.xlu0 %3745
        %3748 = vset.pattern.permute.xlu0 59
        %3749 = vperm.xlu0 %3748, %v178
        %v3750 = vpop.permute.xlu0 %3749
        %3752 = vset.pattern.permute.xlu0 59
        %3753 = vperm.xlu0 %3752, %v179
        %v3754 = vpop.permute.xlu0 %3753
        %3756 = vset.pattern.permute.xlu0 59
        %3757 = vperm.xlu0 %3756, %v180
        %v3758 = vpop.permute.xlu0 %3757
        %3760 = vset.pattern.permute.xlu0 59
        %3761 = vperm.xlu0 %3760, %v181
        %v3762 = vpop.permute.xlu0 %3761
        %3764 = vset.pattern.permute.xlu0 59
        %3765 = vperm.xlu0 %3764, %v182
        %v3766 = vpop.permute.xlu0 %3765
        %3768 = vset.pattern.permute.xlu0 59
        %3769 = vperm.xlu0 %3768, %v183
        %v3770 = vpop.permute.xlu0 %3769
        %v3772 = vlaneseq
        %v3773 = vshrl.u32 %v3772, 7
        %v3774 = vsub.s32 3, %v3773
        %v3775 = vrot.slane %v3559, %v3774
        %v3776 = vsub.f32 %v3742, %v3775
        %v3777 = vsub.f32 %v3746, %v3775
        %v3778 = vsub.f32 %v3750, %v3775
        %v3779 = vsub.f32 %v3754, %v3775
        %v3780 = vsub.f32 %v3758, %v3775
        %v3781 = vsub.f32 %v3762, %v3775
        %v3782 = vsub.f32 %v3766, %v3775
        %v3783 = vsub.f32 %v3770, %v3775
        %v3784 = vand.u32 2147483647, %v3776
        %v3785 = vand.u32 2147483647, %v3777
        %v3786 = vand.u32 2147483647, %v3778
        %v3787 = vand.u32 2147483647, %v3779
        %v3788 = vand.u32 2147483647, %v3780
        %v3789 = vand.u32 2147483647, %v3781
        %v3790 = vand.u32 2147483647, %v3782
        %v3791 = vand.u32 2147483647, %v3783
        %v3792 = vadd.f32 %v3732, %v3784
        %v3793 = vadd.f32 %v3733, %v3785
        %v3794 = vadd.f32 %v3734, %v3786
        %v3795 = vadd.f32 %v3735, %v3787
        %v3796 = vadd.f32 %v3736, %v3788
        %v3797 = vadd.f32 %v3737, %v3789
        %v3798 = vadd.f32 %v3738, %v3790
        %v3799 = vadd.f32 %v3739, %v3791
        %3800 = vset.pattern.permute.xlu0 60
        %3801 = vperm.xlu0 %3800, %v176
        %v3802 = vpop.permute.xlu0 %3801
        %3804 = vset.pattern.permute.xlu0 60
        %3805 = vperm.xlu0 %3804, %v177
        %v3806 = vpop.permute.xlu0 %3805
        %3808 = vset.pattern.permute.xlu0 60
        %3809 = vperm.xlu0 %3808, %v178
        %v3810 = vpop.permute.xlu0 %3809
        %3812 = vset.pattern.permute.xlu0 60
        %3813 = vperm.xlu0 %3812, %v179
        %v3814 = vpop.permute.xlu0 %3813
        %3816 = vset.pattern.permute.xlu0 60
        %3817 = vperm.xlu0 %3816, %v180
        %v3818 = vpop.permute.xlu0 %3817
        %3820 = vset.pattern.permute.xlu0 60
        %3821 = vperm.xlu0 %3820, %v181
        %v3822 = vpop.permute.xlu0 %3821
        %3824 = vset.pattern.permute.xlu0 60
        %3825 = vperm.xlu0 %3824, %v182
        %v3826 = vpop.permute.xlu0 %3825
        %3828 = vset.pattern.permute.xlu0 60
        %3829 = vperm.xlu0 %3828, %v183
        %v3830 = vpop.permute.xlu0 %3829
        %v3832 = vlaneseq
        %v3833 = vshrl.u32 %v3832, 7
        %v3834 = vsub.s32 4, %v3833
        %v3835 = vrot.slane %v3559, %v3834
        %v3836 = vsub.f32 %v3802, %v3835
        %v3837 = vsub.f32 %v3806, %v3835
        %v3838 = vsub.f32 %v3810, %v3835
        %v3839 = vsub.f32 %v3814, %v3835
        %v3840 = vsub.f32 %v3818, %v3835
        %v3841 = vsub.f32 %v3822, %v3835
        %v3842 = vsub.f32 %v3826, %v3835
        %v3843 = vsub.f32 %v3830, %v3835
        %v3844 = vand.u32 2147483647, %v3836
        %v3845 = vand.u32 2147483647, %v3837
        %v3846 = vand.u32 2147483647, %v3838
        %v3847 = vand.u32 2147483647, %v3839
        %v3848 = vand.u32 2147483647, %v3840
        %v3849 = vand.u32 2147483647, %v3841
        %v3850 = vand.u32 2147483647, %v3842
        %v3851 = vand.u32 2147483647, %v3843
        %v3852 = vadd.f32 %v3792, %v3844
        %v3853 = vadd.f32 %v3793, %v3845
        %v3854 = vadd.f32 %v3794, %v3846
        %v3855 = vadd.f32 %v3795, %v3847
        %v3856 = vadd.f32 %v3796, %v3848
        %v3857 = vadd.f32 %v3797, %v3849
        %v3858 = vadd.f32 %v3798, %v3850
        %v3859 = vadd.f32 %v3799, %v3851
        %3860 = vset.pattern.permute.xlu0 61
        %3861 = vperm.xlu0 %3860, %v176
        %v3862 = vpop.permute.xlu0 %3861
        %3864 = vset.pattern.permute.xlu0 61
        %3865 = vperm.xlu0 %3864, %v177
        %v3866 = vpop.permute.xlu0 %3865
        %3868 = vset.pattern.permute.xlu0 61
        %3869 = vperm.xlu0 %3868, %v178
        %v3870 = vpop.permute.xlu0 %3869
        %3872 = vset.pattern.permute.xlu0 61
        %3873 = vperm.xlu0 %3872, %v179
        %v3874 = vpop.permute.xlu0 %3873
        %3876 = vset.pattern.permute.xlu0 61
        %3877 = vperm.xlu0 %3876, %v180
        %v3878 = vpop.permute.xlu0 %3877
        %3880 = vset.pattern.permute.xlu0 61
        %3881 = vperm.xlu0 %3880, %v181
        %v3882 = vpop.permute.xlu0 %3881
        %3884 = vset.pattern.permute.xlu0 61
        %3885 = vperm.xlu0 %3884, %v182
        %v3886 = vpop.permute.xlu0 %3885
        %3888 = vset.pattern.permute.xlu0 61
        %3889 = vperm.xlu0 %3888, %v183
        %v3890 = vpop.permute.xlu0 %3889
        %v3892 = vlaneseq
        %v3893 = vshrl.u32 %v3892, 7
        %v3894 = vsub.s32 5, %v3893
        %v3895 = vrot.slane %v3559, %v3894
        %v3896 = vsub.f32 %v3862, %v3895
        %v3897 = vsub.f32 %v3866, %v3895
        %v3898 = vsub.f32 %v3870, %v3895
        %v3899 = vsub.f32 %v3874, %v3895
        %v3900 = vsub.f32 %v3878, %v3895
        %v3901 = vsub.f32 %v3882, %v3895
        %v3902 = vsub.f32 %v3886, %v3895
        %v3903 = vsub.f32 %v3890, %v3895
        %v3904 = vand.u32 2147483647, %v3896
        %v3905 = vand.u32 2147483647, %v3897
        %v3906 = vand.u32 2147483647, %v3898
        %v3907 = vand.u32 2147483647, %v3899
        %v3908 = vand.u32 2147483647, %v3900
        %v3909 = vand.u32 2147483647, %v3901
        %v3910 = vand.u32 2147483647, %v3902
        %v3911 = vand.u32 2147483647, %v3903
        %v3912 = vadd.f32 %v3852, %v3904
        %v3913 = vadd.f32 %v3853, %v3905
        %v3914 = vadd.f32 %v3854, %v3906
        %v3915 = vadd.f32 %v3855, %v3907
        %v3916 = vadd.f32 %v3856, %v3908
        %v3917 = vadd.f32 %v3857, %v3909
        %v3918 = vadd.f32 %v3858, %v3910
        %v3919 = vadd.f32 %v3859, %v3911
        %3920 = vset.pattern.permute.xlu0 62
        %3921 = vperm.xlu0 %3920, %v176
        %v3922 = vpop.permute.xlu0 %3921
        %3924 = vset.pattern.permute.xlu0 62
        %3925 = vperm.xlu0 %3924, %v177
        %v3926 = vpop.permute.xlu0 %3925
        %3928 = vset.pattern.permute.xlu0 62
        %3929 = vperm.xlu0 %3928, %v178
        %v3930 = vpop.permute.xlu0 %3929
        %3932 = vset.pattern.permute.xlu0 62
        %3933 = vperm.xlu0 %3932, %v179
        %v3934 = vpop.permute.xlu0 %3933
        %3936 = vset.pattern.permute.xlu0 62
        %3937 = vperm.xlu0 %3936, %v180
        %v3938 = vpop.permute.xlu0 %3937
        %3940 = vset.pattern.permute.xlu0 62
        %3941 = vperm.xlu0 %3940, %v181
        %v3942 = vpop.permute.xlu0 %3941
        %3944 = vset.pattern.permute.xlu0 62
        %3945 = vperm.xlu0 %3944, %v182
        %v3946 = vpop.permute.xlu0 %3945
        %3948 = vset.pattern.permute.xlu0 62
        %3949 = vperm.xlu0 %3948, %v183
        %v3950 = vpop.permute.xlu0 %3949
        %v3952 = vlaneseq
        %v3953 = vshrl.u32 %v3952, 7
        %v3954 = vsub.s32 6, %v3953
        %v3955 = vrot.slane %v3559, %v3954
        %v3956 = vsub.f32 %v3922, %v3955
        %v3957 = vsub.f32 %v3926, %v3955
        %v3958 = vsub.f32 %v3930, %v3955
        %v3959 = vsub.f32 %v3934, %v3955
        %v3960 = vsub.f32 %v3938, %v3955
        %v3961 = vsub.f32 %v3942, %v3955
        %v3962 = vsub.f32 %v3946, %v3955
        %v3963 = vsub.f32 %v3950, %v3955
        %v3964 = vand.u32 2147483647, %v3956
        %v3965 = vand.u32 2147483647, %v3957
        %v3966 = vand.u32 2147483647, %v3958
        %v3967 = vand.u32 2147483647, %v3959
        %v3968 = vand.u32 2147483647, %v3960
        %v3969 = vand.u32 2147483647, %v3961
        %v3970 = vand.u32 2147483647, %v3962
        %v3971 = vand.u32 2147483647, %v3963
        %v3972 = vadd.f32 %v3912, %v3964
        %v3973 = vadd.f32 %v3913, %v3965
        %v3974 = vadd.f32 %v3914, %v3966
        %v3975 = vadd.f32 %v3915, %v3967
        %v3976 = vadd.f32 %v3916, %v3968
        %v3977 = vadd.f32 %v3917, %v3969
        %v3978 = vadd.f32 %v3918, %v3970
        %v3979 = vadd.f32 %v3919, %v3971
        %3980 = vset.pattern.permute.xlu0 63
        %3981 = vperm.xlu0 %3980, %v176
        %v3982 = vpop.permute.xlu0 %3981
        %3984 = vset.pattern.permute.xlu0 63
        %3985 = vperm.xlu0 %3984, %v177
        %v3986 = vpop.permute.xlu0 %3985
        %3988 = vset.pattern.permute.xlu0 63
        %3989 = vperm.xlu0 %3988, %v178
        %v3990 = vpop.permute.xlu0 %3989
        %3992 = vset.pattern.permute.xlu0 63
        %3993 = vperm.xlu0 %3992, %v179
        %v3994 = vpop.permute.xlu0 %3993
        %3996 = vset.pattern.permute.xlu0 63
        %3997 = vperm.xlu0 %3996, %v180
        %v3998 = vpop.permute.xlu0 %3997
        %4000 = vset.pattern.permute.xlu0 63
        %4001 = vperm.xlu0 %4000, %v181
        %v4002 = vpop.permute.xlu0 %4001
        %4004 = vset.pattern.permute.xlu0 63
        %4005 = vperm.xlu0 %4004, %v182
        %v4006 = vpop.permute.xlu0 %4005
        %4008 = vset.pattern.permute.xlu0 63
        %4009 = vperm.xlu0 %4008, %v183
        %v4010 = vpop.permute.xlu0 %4009
        %v4012 = vlaneseq
        %v4013 = vshrl.u32 %v4012, 7
        %v4014 = vsub.s32 7, %v4013
        %v4015 = vrot.slane %v3559, %v4014
        %v4016 = vsub.f32 %v3982, %v4015
        %v4017 = vsub.f32 %v3986, %v4015
        %v4018 = vsub.f32 %v3990, %v4015
        %v4019 = vsub.f32 %v3994, %v4015
        %v4020 = vsub.f32 %v3998, %v4015
        %v4021 = vsub.f32 %v4002, %v4015
        %v4022 = vsub.f32 %v4006, %v4015
        %v4023 = vsub.f32 %v4010, %v4015
        %v4024 = vand.u32 2147483647, %v4016
        %v4025 = vand.u32 2147483647, %v4017
        %v4026 = vand.u32 2147483647, %v4018
        %v4027 = vand.u32 2147483647, %v4019
        %v4028 = vand.u32 2147483647, %v4020
        %v4029 = vand.u32 2147483647, %v4021
        %v4030 = vand.u32 2147483647, %v4022
        %v4031 = vand.u32 2147483647, %v4023
        %v4032 = vadd.f32 %v3972, %v4024
        %v4033 = vadd.f32 %v3973, %v4025
        %v4034 = vadd.f32 %v3974, %v4026
        %v4035 = vadd.f32 %v3975, %v4027
        %v4036 = vadd.f32 %v3976, %v4028
        %v4037 = vadd.f32 %v3977, %v4029
        %v4038 = vadd.f32 %v3978, %v4030
        %v4039 = vadd.f32 %v3979, %v4031
        %v4040 = vld [vmem:[%s174 + $0x40] sm:$0xff]
        %4041 = vset.pattern.permute.xlu0 64
        %4042 = vperm.xlu0 %4041, %v176
        %v4043 = vpop.permute.xlu0 %4042
        %4045 = vset.pattern.permute.xlu0 64
        %4046 = vperm.xlu0 %4045, %v177
        %v4047 = vpop.permute.xlu0 %4046
        %4049 = vset.pattern.permute.xlu0 64
        %4050 = vperm.xlu0 %4049, %v178
        %v4051 = vpop.permute.xlu0 %4050
        %4053 = vset.pattern.permute.xlu0 64
        %4054 = vperm.xlu0 %4053, %v179
        %v4055 = vpop.permute.xlu0 %4054
        %4057 = vset.pattern.permute.xlu0 64
        %4058 = vperm.xlu0 %4057, %v180
        %v4059 = vpop.permute.xlu0 %4058
        %4061 = vset.pattern.permute.xlu0 64
        %4062 = vperm.xlu0 %4061, %v181
        %v4063 = vpop.permute.xlu0 %4062
        %4065 = vset.pattern.permute.xlu0 64
        %4066 = vperm.xlu0 %4065, %v182
        %v4067 = vpop.permute.xlu0 %4066
        %4069 = vset.pattern.permute.xlu0 64
        %4070 = vperm.xlu0 %4069, %v183
        %v4071 = vpop.permute.xlu0 %4070
        %v4073 = vlaneseq
        %v4074 = vshrl.u32 %v4073, 7
        %v4075 = vsub.s32 0, %v4074
        %v4076 = vrot.slane %v4040, %v4075
        %v4077 = vsub.f32 %v4043, %v4076
        %v4078 = vsub.f32 %v4047, %v4076
        %v4079 = vsub.f32 %v4051, %v4076
        %v4080 = vsub.f32 %v4055, %v4076
        %v4081 = vsub.f32 %v4059, %v4076
        %v4082 = vsub.f32 %v4063, %v4076
        %v4083 = vsub.f32 %v4067, %v4076
        %v4084 = vsub.f32 %v4071, %v4076
        %v4085 = vand.u32 2147483647, %v4077
        %v4086 = vand.u32 2147483647, %v4078
        %v4087 = vand.u32 2147483647, %v4079
        %v4088 = vand.u32 2147483647, %v4080
        %v4089 = vand.u32 2147483647, %v4081
        %v4090 = vand.u32 2147483647, %v4082
        %v4091 = vand.u32 2147483647, %v4083
        %v4092 = vand.u32 2147483647, %v4084
        %v4093 = vadd.f32 %v4032, %v4085
        %v4094 = vadd.f32 %v4033, %v4086
        %v4095 = vadd.f32 %v4034, %v4087
        %v4096 = vadd.f32 %v4035, %v4088
        %v4097 = vadd.f32 %v4036, %v4089
        %v4098 = vadd.f32 %v4037, %v4090
        %v4099 = vadd.f32 %v4038, %v4091
        %v4100 = vadd.f32 %v4039, %v4092
        %4101 = vset.pattern.permute.xlu0 65
        %4102 = vperm.xlu0 %4101, %v176
        %v4103 = vpop.permute.xlu0 %4102
        %4105 = vset.pattern.permute.xlu0 65
        %4106 = vperm.xlu0 %4105, %v177
        %v4107 = vpop.permute.xlu0 %4106
        %4109 = vset.pattern.permute.xlu0 65
        %4110 = vperm.xlu0 %4109, %v178
        %v4111 = vpop.permute.xlu0 %4110
        %4113 = vset.pattern.permute.xlu0 65
        %4114 = vperm.xlu0 %4113, %v179
        %v4115 = vpop.permute.xlu0 %4114
        %4117 = vset.pattern.permute.xlu0 65
        %4118 = vperm.xlu0 %4117, %v180
        %v4119 = vpop.permute.xlu0 %4118
        %4121 = vset.pattern.permute.xlu0 65
        %4122 = vperm.xlu0 %4121, %v181
        %v4123 = vpop.permute.xlu0 %4122
        %4125 = vset.pattern.permute.xlu0 65
        %4126 = vperm.xlu0 %4125, %v182
        %v4127 = vpop.permute.xlu0 %4126
        %4129 = vset.pattern.permute.xlu0 65
        %4130 = vperm.xlu0 %4129, %v183
        %v4131 = vpop.permute.xlu0 %4130
        %v4133 = vlaneseq
        %v4134 = vshrl.u32 %v4133, 7
        %v4135 = vsub.s32 1, %v4134
        %v4136 = vrot.slane %v4040, %v4135
        %v4137 = vsub.f32 %v4103, %v4136
        %v4138 = vsub.f32 %v4107, %v4136
        %v4139 = vsub.f32 %v4111, %v4136
        %v4140 = vsub.f32 %v4115, %v4136
        %v4141 = vsub.f32 %v4119, %v4136
        %v4142 = vsub.f32 %v4123, %v4136
        %v4143 = vsub.f32 %v4127, %v4136
        %v4144 = vsub.f32 %v4131, %v4136
        %v4145 = vand.u32 2147483647, %v4137
        %v4146 = vand.u32 2147483647, %v4138
        %v4147 = vand.u32 2147483647, %v4139
        %v4148 = vand.u32 2147483647, %v4140
        %v4149 = vand.u32 2147483647, %v4141
        %v4150 = vand.u32 2147483647, %v4142
        %v4151 = vand.u32 2147483647, %v4143
        %v4152 = vand.u32 2147483647, %v4144
        %v4153 = vadd.f32 %v4093, %v4145
        %v4154 = vadd.f32 %v4094, %v4146
        %v4155 = vadd.f32 %v4095, %v4147
        %v4156 = vadd.f32 %v4096, %v4148
        %v4157 = vadd.f32 %v4097, %v4149
        %v4158 = vadd.f32 %v4098, %v4150
        %v4159 = vadd.f32 %v4099, %v4151
        %v4160 = vadd.f32 %v4100, %v4152
        %4161 = vset.pattern.permute.xlu0 66
        %4162 = vperm.xlu0 %4161, %v176
        %v4163 = vpop.permute.xlu0 %4162
        %4165 = vset.pattern.permute.xlu0 66
        %4166 = vperm.xlu0 %4165, %v177
        %v4167 = vpop.permute.xlu0 %4166
        %4169 = vset.pattern.permute.xlu0 66
        %4170 = vperm.xlu0 %4169, %v178
        %v4171 = vpop.permute.xlu0 %4170
        %4173 = vset.pattern.permute.xlu0 66
        %4174 = vperm.xlu0 %4173, %v179
        %v4175 = vpop.permute.xlu0 %4174
        %4177 = vset.pattern.permute.xlu0 66
        %4178 = vperm.xlu0 %4177, %v180
        %v4179 = vpop.permute.xlu0 %4178
        %4181 = vset.pattern.permute.xlu0 66
        %4182 = vperm.xlu0 %4181, %v181
        %v4183 = vpop.permute.xlu0 %4182
        %4185 = vset.pattern.permute.xlu0 66
        %4186 = vperm.xlu0 %4185, %v182
        %v4187 = vpop.permute.xlu0 %4186
        %4189 = vset.pattern.permute.xlu0 66
        %4190 = vperm.xlu0 %4189, %v183
        %v4191 = vpop.permute.xlu0 %4190
        %v4193 = vlaneseq
        %v4194 = vshrl.u32 %v4193, 7
        %v4195 = vsub.s32 2, %v4194
        %v4196 = vrot.slane %v4040, %v4195
        %v4197 = vsub.f32 %v4163, %v4196
        %v4198 = vsub.f32 %v4167, %v4196
        %v4199 = vsub.f32 %v4171, %v4196
        %v4200 = vsub.f32 %v4175, %v4196
        %v4201 = vsub.f32 %v4179, %v4196
        %v4202 = vsub.f32 %v4183, %v4196
        %v4203 = vsub.f32 %v4187, %v4196
        %v4204 = vsub.f32 %v4191, %v4196
        %v4205 = vand.u32 2147483647, %v4197
        %v4206 = vand.u32 2147483647, %v4198
        %v4207 = vand.u32 2147483647, %v4199
        %v4208 = vand.u32 2147483647, %v4200
        %v4209 = vand.u32 2147483647, %v4201
        %v4210 = vand.u32 2147483647, %v4202
        %v4211 = vand.u32 2147483647, %v4203
        %v4212 = vand.u32 2147483647, %v4204
        %v4213 = vadd.f32 %v4153, %v4205
        %v4214 = vadd.f32 %v4154, %v4206
        %v4215 = vadd.f32 %v4155, %v4207
        %v4216 = vadd.f32 %v4156, %v4208
        %v4217 = vadd.f32 %v4157, %v4209
        %v4218 = vadd.f32 %v4158, %v4210
        %v4219 = vadd.f32 %v4159, %v4211
        %v4220 = vadd.f32 %v4160, %v4212
        %4221 = vset.pattern.permute.xlu0 67
        %4222 = vperm.xlu0 %4221, %v176
        %v4223 = vpop.permute.xlu0 %4222
        %4225 = vset.pattern.permute.xlu0 67
        %4226 = vperm.xlu0 %4225, %v177
        %v4227 = vpop.permute.xlu0 %4226
        %4229 = vset.pattern.permute.xlu0 67
        %4230 = vperm.xlu0 %4229, %v178
        %v4231 = vpop.permute.xlu0 %4230
        %4233 = vset.pattern.permute.xlu0 67
        %4234 = vperm.xlu0 %4233, %v179
        %v4235 = vpop.permute.xlu0 %4234
        %4237 = vset.pattern.permute.xlu0 67
        %4238 = vperm.xlu0 %4237, %v180
        %v4239 = vpop.permute.xlu0 %4238
        %4241 = vset.pattern.permute.xlu0 67
        %4242 = vperm.xlu0 %4241, %v181
        %v4243 = vpop.permute.xlu0 %4242
        %4245 = vset.pattern.permute.xlu0 67
        %4246 = vperm.xlu0 %4245, %v182
        %v4247 = vpop.permute.xlu0 %4246
        %4249 = vset.pattern.permute.xlu0 67
        %4250 = vperm.xlu0 %4249, %v183
        %v4251 = vpop.permute.xlu0 %4250
        %v4253 = vlaneseq
        %v4254 = vshrl.u32 %v4253, 7
        %v4255 = vsub.s32 3, %v4254
        %v4256 = vrot.slane %v4040, %v4255
        %v4257 = vsub.f32 %v4223, %v4256
        %v4258 = vsub.f32 %v4227, %v4256
        %v4259 = vsub.f32 %v4231, %v4256
        %v4260 = vsub.f32 %v4235, %v4256
        %v4261 = vsub.f32 %v4239, %v4256
        %v4262 = vsub.f32 %v4243, %v4256
        %v4263 = vsub.f32 %v4247, %v4256
        %v4264 = vsub.f32 %v4251, %v4256
        %v4265 = vand.u32 2147483647, %v4257
        %v4266 = vand.u32 2147483647, %v4258
        %v4267 = vand.u32 2147483647, %v4259
        %v4268 = vand.u32 2147483647, %v4260
        %v4269 = vand.u32 2147483647, %v4261
        %v4270 = vand.u32 2147483647, %v4262
        %v4271 = vand.u32 2147483647, %v4263
        %v4272 = vand.u32 2147483647, %v4264
        %v4273 = vadd.f32 %v4213, %v4265
        %v4274 = vadd.f32 %v4214, %v4266
        %v4275 = vadd.f32 %v4215, %v4267
        %v4276 = vadd.f32 %v4216, %v4268
        %v4277 = vadd.f32 %v4217, %v4269
        %v4278 = vadd.f32 %v4218, %v4270
        %v4279 = vadd.f32 %v4219, %v4271
        %v4280 = vadd.f32 %v4220, %v4272
        %4281 = vset.pattern.permute.xlu0 68
        %4282 = vperm.xlu0 %4281, %v176
        %v4283 = vpop.permute.xlu0 %4282
        %4285 = vset.pattern.permute.xlu0 68
        %4286 = vperm.xlu0 %4285, %v177
        %v4287 = vpop.permute.xlu0 %4286
        %4289 = vset.pattern.permute.xlu0 68
        %4290 = vperm.xlu0 %4289, %v178
        %v4291 = vpop.permute.xlu0 %4290
        %4293 = vset.pattern.permute.xlu0 68
        %4294 = vperm.xlu0 %4293, %v179
        %v4295 = vpop.permute.xlu0 %4294
        %4297 = vset.pattern.permute.xlu0 68
        %4298 = vperm.xlu0 %4297, %v180
        %v4299 = vpop.permute.xlu0 %4298
        %4301 = vset.pattern.permute.xlu0 68
        %4302 = vperm.xlu0 %4301, %v181
        %v4303 = vpop.permute.xlu0 %4302
        %4305 = vset.pattern.permute.xlu0 68
        %4306 = vperm.xlu0 %4305, %v182
        %v4307 = vpop.permute.xlu0 %4306
        %4309 = vset.pattern.permute.xlu0 68
        %4310 = vperm.xlu0 %4309, %v183
        %v4311 = vpop.permute.xlu0 %4310
        %v4313 = vlaneseq
        %v4314 = vshrl.u32 %v4313, 7
        %v4315 = vsub.s32 4, %v4314
        %v4316 = vrot.slane %v4040, %v4315
        %v4317 = vsub.f32 %v4283, %v4316
        %v4318 = vsub.f32 %v4287, %v4316
        %v4319 = vsub.f32 %v4291, %v4316
        %v4320 = vsub.f32 %v4295, %v4316
        %v4321 = vsub.f32 %v4299, %v4316
        %v4322 = vsub.f32 %v4303, %v4316
        %v4323 = vsub.f32 %v4307, %v4316
        %v4324 = vsub.f32 %v4311, %v4316
        %v4325 = vand.u32 2147483647, %v4317
        %v4326 = vand.u32 2147483647, %v4318
        %v4327 = vand.u32 2147483647, %v4319
        %v4328 = vand.u32 2147483647, %v4320
        %v4329 = vand.u32 2147483647, %v4321
        %v4330 = vand.u32 2147483647, %v4322
        %v4331 = vand.u32 2147483647, %v4323
        %v4332 = vand.u32 2147483647, %v4324
        %v4333 = vadd.f32 %v4273, %v4325
        %v4334 = vadd.f32 %v4274, %v4326
        %v4335 = vadd.f32 %v4275, %v4327
        %v4336 = vadd.f32 %v4276, %v4328
        %v4337 = vadd.f32 %v4277, %v4329
        %v4338 = vadd.f32 %v4278, %v4330
        %v4339 = vadd.f32 %v4279, %v4331
        %v4340 = vadd.f32 %v4280, %v4332
        %4341 = vset.pattern.permute.xlu0 69
        %4342 = vperm.xlu0 %4341, %v176
        %v4343 = vpop.permute.xlu0 %4342
        %4345 = vset.pattern.permute.xlu0 69
        %4346 = vperm.xlu0 %4345, %v177
        %v4347 = vpop.permute.xlu0 %4346
        %4349 = vset.pattern.permute.xlu0 69
        %4350 = vperm.xlu0 %4349, %v178
        %v4351 = vpop.permute.xlu0 %4350
        %4353 = vset.pattern.permute.xlu0 69
        %4354 = vperm.xlu0 %4353, %v179
        %v4355 = vpop.permute.xlu0 %4354
        %4357 = vset.pattern.permute.xlu0 69
        %4358 = vperm.xlu0 %4357, %v180
        %v4359 = vpop.permute.xlu0 %4358
        %4361 = vset.pattern.permute.xlu0 69
        %4362 = vperm.xlu0 %4361, %v181
        %v4363 = vpop.permute.xlu0 %4362
        %4365 = vset.pattern.permute.xlu0 69
        %4366 = vperm.xlu0 %4365, %v182
        %v4367 = vpop.permute.xlu0 %4366
        %4369 = vset.pattern.permute.xlu0 69
        %4370 = vperm.xlu0 %4369, %v183
        %v4371 = vpop.permute.xlu0 %4370
        %v4373 = vlaneseq
        %v4374 = vshrl.u32 %v4373, 7
        %v4375 = vsub.s32 5, %v4374
        %v4376 = vrot.slane %v4040, %v4375
        %v4377 = vsub.f32 %v4343, %v4376
        %v4378 = vsub.f32 %v4347, %v4376
        %v4379 = vsub.f32 %v4351, %v4376
        %v4380 = vsub.f32 %v4355, %v4376
        %v4381 = vsub.f32 %v4359, %v4376
        %v4382 = vsub.f32 %v4363, %v4376
        %v4383 = vsub.f32 %v4367, %v4376
        %v4384 = vsub.f32 %v4371, %v4376
        %v4385 = vand.u32 2147483647, %v4377
        %v4386 = vand.u32 2147483647, %v4378
        %v4387 = vand.u32 2147483647, %v4379
        %v4388 = vand.u32 2147483647, %v4380
        %v4389 = vand.u32 2147483647, %v4381
        %v4390 = vand.u32 2147483647, %v4382
        %v4391 = vand.u32 2147483647, %v4383
        %v4392 = vand.u32 2147483647, %v4384
        %v4393 = vadd.f32 %v4333, %v4385
        %v4394 = vadd.f32 %v4334, %v4386
        %v4395 = vadd.f32 %v4335, %v4387
        %v4396 = vadd.f32 %v4336, %v4388
        %v4397 = vadd.f32 %v4337, %v4389
        %v4398 = vadd.f32 %v4338, %v4390
        %v4399 = vadd.f32 %v4339, %v4391
        %v4400 = vadd.f32 %v4340, %v4392
        %4401 = vset.pattern.permute.xlu0 70
        %4402 = vperm.xlu0 %4401, %v176
        %v4403 = vpop.permute.xlu0 %4402
        %4405 = vset.pattern.permute.xlu0 70
        %4406 = vperm.xlu0 %4405, %v177
        %v4407 = vpop.permute.xlu0 %4406
        %4409 = vset.pattern.permute.xlu0 70
        %4410 = vperm.xlu0 %4409, %v178
        %v4411 = vpop.permute.xlu0 %4410
        %4413 = vset.pattern.permute.xlu0 70
        %4414 = vperm.xlu0 %4413, %v179
        %v4415 = vpop.permute.xlu0 %4414
        %4417 = vset.pattern.permute.xlu0 70
        %4418 = vperm.xlu0 %4417, %v180
        %v4419 = vpop.permute.xlu0 %4418
        %4421 = vset.pattern.permute.xlu0 70
        %4422 = vperm.xlu0 %4421, %v181
        %v4423 = vpop.permute.xlu0 %4422
        %4425 = vset.pattern.permute.xlu0 70
        %4426 = vperm.xlu0 %4425, %v182
        %v4427 = vpop.permute.xlu0 %4426
        %4429 = vset.pattern.permute.xlu0 70
        %4430 = vperm.xlu0 %4429, %v183
        %v4431 = vpop.permute.xlu0 %4430
        %v4433 = vlaneseq
        %v4434 = vshrl.u32 %v4433, 7
        %v4435 = vsub.s32 6, %v4434
        %v4436 = vrot.slane %v4040, %v4435
        %v4437 = vsub.f32 %v4403, %v4436
        %v4438 = vsub.f32 %v4407, %v4436
        %v4439 = vsub.f32 %v4411, %v4436
        %v4440 = vsub.f32 %v4415, %v4436
        %v4441 = vsub.f32 %v4419, %v4436
        %v4442 = vsub.f32 %v4423, %v4436
        %v4443 = vsub.f32 %v4427, %v4436
        %v4444 = vsub.f32 %v4431, %v4436
        %v4445 = vand.u32 2147483647, %v4437
        %v4446 = vand.u32 2147483647, %v4438
        %v4447 = vand.u32 2147483647, %v4439
        %v4448 = vand.u32 2147483647, %v4440
        %v4449 = vand.u32 2147483647, %v4441
        %v4450 = vand.u32 2147483647, %v4442
        %v4451 = vand.u32 2147483647, %v4443
        %v4452 = vand.u32 2147483647, %v4444
        %v4453 = vadd.f32 %v4393, %v4445
        %v4454 = vadd.f32 %v4394, %v4446
        %v4455 = vadd.f32 %v4395, %v4447
        %v4456 = vadd.f32 %v4396, %v4448
        %v4457 = vadd.f32 %v4397, %v4449
        %v4458 = vadd.f32 %v4398, %v4450
        %v4459 = vadd.f32 %v4399, %v4451
        %v4460 = vadd.f32 %v4400, %v4452
        %4461 = vset.pattern.permute.xlu0 71
        %4462 = vperm.xlu0 %4461, %v176
        %v4463 = vpop.permute.xlu0 %4462
        %4465 = vset.pattern.permute.xlu0 71
        %4466 = vperm.xlu0 %4465, %v177
        %v4467 = vpop.permute.xlu0 %4466
        %4469 = vset.pattern.permute.xlu0 71
        %4470 = vperm.xlu0 %4469, %v178
        %v4471 = vpop.permute.xlu0 %4470
        %4473 = vset.pattern.permute.xlu0 71
        %4474 = vperm.xlu0 %4473, %v179
        %v4475 = vpop.permute.xlu0 %4474
        %4477 = vset.pattern.permute.xlu0 71
        %4478 = vperm.xlu0 %4477, %v180
        %v4479 = vpop.permute.xlu0 %4478
        %4481 = vset.pattern.permute.xlu0 71
        %4482 = vperm.xlu0 %4481, %v181
        %v4483 = vpop.permute.xlu0 %4482
        %4485 = vset.pattern.permute.xlu0 71
        %4486 = vperm.xlu0 %4485, %v182
        %v4487 = vpop.permute.xlu0 %4486
        %4489 = vset.pattern.permute.xlu0 71
        %4490 = vperm.xlu0 %4489, %v183
        %v4491 = vpop.permute.xlu0 %4490
        %v4493 = vlaneseq
        %v4494 = vshrl.u32 %v4493, 7
        %v4495 = vsub.s32 7, %v4494
        %v4496 = vrot.slane %v4040, %v4495
        %v4497 = vsub.f32 %v4463, %v4496
        %v4498 = vsub.f32 %v4467, %v4496
        %v4499 = vsub.f32 %v4471, %v4496
        %v4500 = vsub.f32 %v4475, %v4496
        %v4501 = vsub.f32 %v4479, %v4496
        %v4502 = vsub.f32 %v4483, %v4496
        %v4503 = vsub.f32 %v4487, %v4496
        %v4504 = vsub.f32 %v4491, %v4496
        %v4505 = vand.u32 2147483647, %v4497
        %v4506 = vand.u32 2147483647, %v4498
        %v4507 = vand.u32 2147483647, %v4499
        %v4508 = vand.u32 2147483647, %v4500
        %v4509 = vand.u32 2147483647, %v4501
        %v4510 = vand.u32 2147483647, %v4502
        %v4511 = vand.u32 2147483647, %v4503
        %v4512 = vand.u32 2147483647, %v4504
        %v4513 = vadd.f32 %v4453, %v4505
        %v4514 = vadd.f32 %v4454, %v4506
        %v4515 = vadd.f32 %v4455, %v4507
        %v4516 = vadd.f32 %v4456, %v4508
        %v4517 = vadd.f32 %v4457, %v4509
        %v4518 = vadd.f32 %v4458, %v4510
        %v4519 = vadd.f32 %v4459, %v4511
        %v4520 = vadd.f32 %v4460, %v4512
        %v4521 = vld [vmem:[%s174 + $0x48] sm:$0xff]
        %4522 = vset.pattern.permute.xlu0 72
        %4523 = vperm.xlu0 %4522, %v176
        %v4524 = vpop.permute.xlu0 %4523
        %4526 = vset.pattern.permute.xlu0 72
        %4527 = vperm.xlu0 %4526, %v177
        %v4528 = vpop.permute.xlu0 %4527
        %4530 = vset.pattern.permute.xlu0 72
        %4531 = vperm.xlu0 %4530, %v178
        %v4532 = vpop.permute.xlu0 %4531
        %4534 = vset.pattern.permute.xlu0 72
        %4535 = vperm.xlu0 %4534, %v179
        %v4536 = vpop.permute.xlu0 %4535
        %4538 = vset.pattern.permute.xlu0 72
        %4539 = vperm.xlu0 %4538, %v180
        %v4540 = vpop.permute.xlu0 %4539
        %4542 = vset.pattern.permute.xlu0 72
        %4543 = vperm.xlu0 %4542, %v181
        %v4544 = vpop.permute.xlu0 %4543
        %4546 = vset.pattern.permute.xlu0 72
        %4547 = vperm.xlu0 %4546, %v182
        %v4548 = vpop.permute.xlu0 %4547
        %4550 = vset.pattern.permute.xlu0 72
        %4551 = vperm.xlu0 %4550, %v183
        %v4552 = vpop.permute.xlu0 %4551
        %v4554 = vlaneseq
        %v4555 = vshrl.u32 %v4554, 7
        %v4556 = vsub.s32 0, %v4555
        %v4557 = vrot.slane %v4521, %v4556
        %v4558 = vsub.f32 %v4524, %v4557
        %v4559 = vsub.f32 %v4528, %v4557
        %v4560 = vsub.f32 %v4532, %v4557
        %v4561 = vsub.f32 %v4536, %v4557
        %v4562 = vsub.f32 %v4540, %v4557
        %v4563 = vsub.f32 %v4544, %v4557
        %v4564 = vsub.f32 %v4548, %v4557
        %v4565 = vsub.f32 %v4552, %v4557
        %v4566 = vand.u32 2147483647, %v4558
        %v4567 = vand.u32 2147483647, %v4559
        %v4568 = vand.u32 2147483647, %v4560
        %v4569 = vand.u32 2147483647, %v4561
        %v4570 = vand.u32 2147483647, %v4562
        %v4571 = vand.u32 2147483647, %v4563
        %v4572 = vand.u32 2147483647, %v4564
        %v4573 = vand.u32 2147483647, %v4565
        %v4574 = vadd.f32 %v4513, %v4566
        %v4575 = vadd.f32 %v4514, %v4567
        %v4576 = vadd.f32 %v4515, %v4568
        %v4577 = vadd.f32 %v4516, %v4569
        %v4578 = vadd.f32 %v4517, %v4570
        %v4579 = vadd.f32 %v4518, %v4571
        %v4580 = vadd.f32 %v4519, %v4572
        %v4581 = vadd.f32 %v4520, %v4573
        %4582 = vset.pattern.permute.xlu0 73
        %4583 = vperm.xlu0 %4582, %v176
        %v4584 = vpop.permute.xlu0 %4583
        %4586 = vset.pattern.permute.xlu0 73
        %4587 = vperm.xlu0 %4586, %v177
        %v4588 = vpop.permute.xlu0 %4587
        %4590 = vset.pattern.permute.xlu0 73
        %4591 = vperm.xlu0 %4590, %v178
        %v4592 = vpop.permute.xlu0 %4591
        %4594 = vset.pattern.permute.xlu0 73
        %4595 = vperm.xlu0 %4594, %v179
        %v4596 = vpop.permute.xlu0 %4595
        %4598 = vset.pattern.permute.xlu0 73
        %4599 = vperm.xlu0 %4598, %v180
        %v4600 = vpop.permute.xlu0 %4599
        %4602 = vset.pattern.permute.xlu0 73
        %4603 = vperm.xlu0 %4602, %v181
        %v4604 = vpop.permute.xlu0 %4603
        %4606 = vset.pattern.permute.xlu0 73
        %4607 = vperm.xlu0 %4606, %v182
        %v4608 = vpop.permute.xlu0 %4607
        %4610 = vset.pattern.permute.xlu0 73
        %4611 = vperm.xlu0 %4610, %v183
        %v4612 = vpop.permute.xlu0 %4611
        %v4614 = vlaneseq
        %v4615 = vshrl.u32 %v4614, 7
        %v4616 = vsub.s32 1, %v4615
        %v4617 = vrot.slane %v4521, %v4616
        %v4618 = vsub.f32 %v4584, %v4617
        %v4619 = vsub.f32 %v4588, %v4617
        %v4620 = vsub.f32 %v4592, %v4617
        %v4621 = vsub.f32 %v4596, %v4617
        %v4622 = vsub.f32 %v4600, %v4617
        %v4623 = vsub.f32 %v4604, %v4617
        %v4624 = vsub.f32 %v4608, %v4617
        %v4625 = vsub.f32 %v4612, %v4617
        %v4626 = vand.u32 2147483647, %v4618
        %v4627 = vand.u32 2147483647, %v4619
        %v4628 = vand.u32 2147483647, %v4620
        %v4629 = vand.u32 2147483647, %v4621
        %v4630 = vand.u32 2147483647, %v4622
        %v4631 = vand.u32 2147483647, %v4623
        %v4632 = vand.u32 2147483647, %v4624
        %v4633 = vand.u32 2147483647, %v4625
        %v4634 = vadd.f32 %v4574, %v4626
        %v4635 = vadd.f32 %v4575, %v4627
        %v4636 = vadd.f32 %v4576, %v4628
        %v4637 = vadd.f32 %v4577, %v4629
        %v4638 = vadd.f32 %v4578, %v4630
        %v4639 = vadd.f32 %v4579, %v4631
        %v4640 = vadd.f32 %v4580, %v4632
        %v4641 = vadd.f32 %v4581, %v4633
        %4642 = vset.pattern.permute.xlu0 74
        %4643 = vperm.xlu0 %4642, %v176
        %v4644 = vpop.permute.xlu0 %4643
        %4646 = vset.pattern.permute.xlu0 74
        %4647 = vperm.xlu0 %4646, %v177
        %v4648 = vpop.permute.xlu0 %4647
        %4650 = vset.pattern.permute.xlu0 74
        %4651 = vperm.xlu0 %4650, %v178
        %v4652 = vpop.permute.xlu0 %4651
        %4654 = vset.pattern.permute.xlu0 74
        %4655 = vperm.xlu0 %4654, %v179
        %v4656 = vpop.permute.xlu0 %4655
        %4658 = vset.pattern.permute.xlu0 74
        %4659 = vperm.xlu0 %4658, %v180
        %v4660 = vpop.permute.xlu0 %4659
        %4662 = vset.pattern.permute.xlu0 74
        %4663 = vperm.xlu0 %4662, %v181
        %v4664 = vpop.permute.xlu0 %4663
        %4666 = vset.pattern.permute.xlu0 74
        %4667 = vperm.xlu0 %4666, %v182
        %v4668 = vpop.permute.xlu0 %4667
        %4670 = vset.pattern.permute.xlu0 74
        %4671 = vperm.xlu0 %4670, %v183
        %v4672 = vpop.permute.xlu0 %4671
        %v4674 = vlaneseq
        %v4675 = vshrl.u32 %v4674, 7
        %v4676 = vsub.s32 2, %v4675
        %v4677 = vrot.slane %v4521, %v4676
        %v4678 = vsub.f32 %v4644, %v4677
        %v4679 = vsub.f32 %v4648, %v4677
        %v4680 = vsub.f32 %v4652, %v4677
        %v4681 = vsub.f32 %v4656, %v4677
        %v4682 = vsub.f32 %v4660, %v4677
        %v4683 = vsub.f32 %v4664, %v4677
        %v4684 = vsub.f32 %v4668, %v4677
        %v4685 = vsub.f32 %v4672, %v4677
        %v4686 = vand.u32 2147483647, %v4678
        %v4687 = vand.u32 2147483647, %v4679
        %v4688 = vand.u32 2147483647, %v4680
        %v4689 = vand.u32 2147483647, %v4681
        %v4690 = vand.u32 2147483647, %v4682
        %v4691 = vand.u32 2147483647, %v4683
        %v4692 = vand.u32 2147483647, %v4684
        %v4693 = vand.u32 2147483647, %v4685
        %v4694 = vadd.f32 %v4634, %v4686
        %v4695 = vadd.f32 %v4635, %v4687
        %v4696 = vadd.f32 %v4636, %v4688
        %v4697 = vadd.f32 %v4637, %v4689
        %v4698 = vadd.f32 %v4638, %v4690
        %v4699 = vadd.f32 %v4639, %v4691
        %v4700 = vadd.f32 %v4640, %v4692
        %v4701 = vadd.f32 %v4641, %v4693
        %4702 = vset.pattern.permute.xlu0 75
        %4703 = vperm.xlu0 %4702, %v176
        %v4704 = vpop.permute.xlu0 %4703
        %4706 = vset.pattern.permute.xlu0 75
        %4707 = vperm.xlu0 %4706, %v177
        %v4708 = vpop.permute.xlu0 %4707
        %4710 = vset.pattern.permute.xlu0 75
        %4711 = vperm.xlu0 %4710, %v178
        %v4712 = vpop.permute.xlu0 %4711
        %4714 = vset.pattern.permute.xlu0 75
        %4715 = vperm.xlu0 %4714, %v179
        %v4716 = vpop.permute.xlu0 %4715
        %4718 = vset.pattern.permute.xlu0 75
        %4719 = vperm.xlu0 %4718, %v180
        %v4720 = vpop.permute.xlu0 %4719
        %4722 = vset.pattern.permute.xlu0 75
        %4723 = vperm.xlu0 %4722, %v181
        %v4724 = vpop.permute.xlu0 %4723
        %4726 = vset.pattern.permute.xlu0 75
        %4727 = vperm.xlu0 %4726, %v182
        %v4728 = vpop.permute.xlu0 %4727
        %4730 = vset.pattern.permute.xlu0 75
        %4731 = vperm.xlu0 %4730, %v183
        %v4732 = vpop.permute.xlu0 %4731
        %v4734 = vlaneseq
        %v4735 = vshrl.u32 %v4734, 7
        %v4736 = vsub.s32 3, %v4735
        %v4737 = vrot.slane %v4521, %v4736
        %v4738 = vsub.f32 %v4704, %v4737
        %v4739 = vsub.f32 %v4708, %v4737
        %v4740 = vsub.f32 %v4712, %v4737
        %v4741 = vsub.f32 %v4716, %v4737
        %v4742 = vsub.f32 %v4720, %v4737
        %v4743 = vsub.f32 %v4724, %v4737
        %v4744 = vsub.f32 %v4728, %v4737
        %v4745 = vsub.f32 %v4732, %v4737
        %v4746 = vand.u32 2147483647, %v4738
        %v4747 = vand.u32 2147483647, %v4739
        %v4748 = vand.u32 2147483647, %v4740
        %v4749 = vand.u32 2147483647, %v4741
        %v4750 = vand.u32 2147483647, %v4742
        %v4751 = vand.u32 2147483647, %v4743
        %v4752 = vand.u32 2147483647, %v4744
        %v4753 = vand.u32 2147483647, %v4745
        %v4754 = vadd.f32 %v4694, %v4746
        %v4755 = vadd.f32 %v4695, %v4747
        %v4756 = vadd.f32 %v4696, %v4748
        %v4757 = vadd.f32 %v4697, %v4749
        %v4758 = vadd.f32 %v4698, %v4750
        %v4759 = vadd.f32 %v4699, %v4751
        %v4760 = vadd.f32 %v4700, %v4752
        %v4761 = vadd.f32 %v4701, %v4753
        %4762 = vset.pattern.permute.xlu0 76
        %4763 = vperm.xlu0 %4762, %v176
        %v4764 = vpop.permute.xlu0 %4763
        %4766 = vset.pattern.permute.xlu0 76
        %4767 = vperm.xlu0 %4766, %v177
        %v4768 = vpop.permute.xlu0 %4767
        %4770 = vset.pattern.permute.xlu0 76
        %4771 = vperm.xlu0 %4770, %v178
        %v4772 = vpop.permute.xlu0 %4771
        %4774 = vset.pattern.permute.xlu0 76
        %4775 = vperm.xlu0 %4774, %v179
        %v4776 = vpop.permute.xlu0 %4775
        %4778 = vset.pattern.permute.xlu0 76
        %4779 = vperm.xlu0 %4778, %v180
        %v4780 = vpop.permute.xlu0 %4779
        %4782 = vset.pattern.permute.xlu0 76
        %4783 = vperm.xlu0 %4782, %v181
        %v4784 = vpop.permute.xlu0 %4783
        %4786 = vset.pattern.permute.xlu0 76
        %4787 = vperm.xlu0 %4786, %v182
        %v4788 = vpop.permute.xlu0 %4787
        %4790 = vset.pattern.permute.xlu0 76
        %4791 = vperm.xlu0 %4790, %v183
        %v4792 = vpop.permute.xlu0 %4791
        %v4794 = vlaneseq
        %v4795 = vshrl.u32 %v4794, 7
        %v4796 = vsub.s32 4, %v4795
        %v4797 = vrot.slane %v4521, %v4796
        %v4798 = vsub.f32 %v4764, %v4797
        %v4799 = vsub.f32 %v4768, %v4797
        %v4800 = vsub.f32 %v4772, %v4797
        %v4801 = vsub.f32 %v4776, %v4797
        %v4802 = vsub.f32 %v4780, %v4797
        %v4803 = vsub.f32 %v4784, %v4797
        %v4804 = vsub.f32 %v4788, %v4797
        %v4805 = vsub.f32 %v4792, %v4797
        %v4806 = vand.u32 2147483647, %v4798
        %v4807 = vand.u32 2147483647, %v4799
        %v4808 = vand.u32 2147483647, %v4800
        %v4809 = vand.u32 2147483647, %v4801
        %v4810 = vand.u32 2147483647, %v4802
        %v4811 = vand.u32 2147483647, %v4803
        %v4812 = vand.u32 2147483647, %v4804
        %v4813 = vand.u32 2147483647, %v4805
        %v4814 = vadd.f32 %v4754, %v4806
        %v4815 = vadd.f32 %v4755, %v4807
        %v4816 = vadd.f32 %v4756, %v4808
        %v4817 = vadd.f32 %v4757, %v4809
        %v4818 = vadd.f32 %v4758, %v4810
        %v4819 = vadd.f32 %v4759, %v4811
        %v4820 = vadd.f32 %v4760, %v4812
        %v4821 = vadd.f32 %v4761, %v4813
        %4822 = vset.pattern.permute.xlu0 77
        %4823 = vperm.xlu0 %4822, %v176
        %v4824 = vpop.permute.xlu0 %4823
        %4826 = vset.pattern.permute.xlu0 77
        %4827 = vperm.xlu0 %4826, %v177
        %v4828 = vpop.permute.xlu0 %4827
        %4830 = vset.pattern.permute.xlu0 77
        %4831 = vperm.xlu0 %4830, %v178
        %v4832 = vpop.permute.xlu0 %4831
        %4834 = vset.pattern.permute.xlu0 77
        %4835 = vperm.xlu0 %4834, %v179
        %v4836 = vpop.permute.xlu0 %4835
        %4838 = vset.pattern.permute.xlu0 77
        %4839 = vperm.xlu0 %4838, %v180
        %v4840 = vpop.permute.xlu0 %4839
        %4842 = vset.pattern.permute.xlu0 77
        %4843 = vperm.xlu0 %4842, %v181
        %v4844 = vpop.permute.xlu0 %4843
        %4846 = vset.pattern.permute.xlu0 77
        %4847 = vperm.xlu0 %4846, %v182
        %v4848 = vpop.permute.xlu0 %4847
        %4850 = vset.pattern.permute.xlu0 77
        %4851 = vperm.xlu0 %4850, %v183
        %v4852 = vpop.permute.xlu0 %4851
        %v4854 = vlaneseq
        %v4855 = vshrl.u32 %v4854, 7
        %v4856 = vsub.s32 5, %v4855
        %v4857 = vrot.slane %v4521, %v4856
        %v4858 = vsub.f32 %v4824, %v4857
        %v4859 = vsub.f32 %v4828, %v4857
        %v4860 = vsub.f32 %v4832, %v4857
        %v4861 = vsub.f32 %v4836, %v4857
        %v4862 = vsub.f32 %v4840, %v4857
        %v4863 = vsub.f32 %v4844, %v4857
        %v4864 = vsub.f32 %v4848, %v4857
        %v4865 = vsub.f32 %v4852, %v4857
        %v4866 = vand.u32 2147483647, %v4858
        %v4867 = vand.u32 2147483647, %v4859
        %v4868 = vand.u32 2147483647, %v4860
        %v4869 = vand.u32 2147483647, %v4861
        %v4870 = vand.u32 2147483647, %v4862
        %v4871 = vand.u32 2147483647, %v4863
        %v4872 = vand.u32 2147483647, %v4864
        %v4873 = vand.u32 2147483647, %v4865
        %v4874 = vadd.f32 %v4814, %v4866
        %v4875 = vadd.f32 %v4815, %v4867
        %v4876 = vadd.f32 %v4816, %v4868
        %v4877 = vadd.f32 %v4817, %v4869
        %v4878 = vadd.f32 %v4818, %v4870
        %v4879 = vadd.f32 %v4819, %v4871
        %v4880 = vadd.f32 %v4820, %v4872
        %v4881 = vadd.f32 %v4821, %v4873
        %4882 = vset.pattern.permute.xlu0 78
        %4883 = vperm.xlu0 %4882, %v176
        %v4884 = vpop.permute.xlu0 %4883
        %4886 = vset.pattern.permute.xlu0 78
        %4887 = vperm.xlu0 %4886, %v177
        %v4888 = vpop.permute.xlu0 %4887
        %4890 = vset.pattern.permute.xlu0 78
        %4891 = vperm.xlu0 %4890, %v178
        %v4892 = vpop.permute.xlu0 %4891
        %4894 = vset.pattern.permute.xlu0 78
        %4895 = vperm.xlu0 %4894, %v179
        %v4896 = vpop.permute.xlu0 %4895
        %4898 = vset.pattern.permute.xlu0 78
        %4899 = vperm.xlu0 %4898, %v180
        %v4900 = vpop.permute.xlu0 %4899
        %4902 = vset.pattern.permute.xlu0 78
        %4903 = vperm.xlu0 %4902, %v181
        %v4904 = vpop.permute.xlu0 %4903
        %4906 = vset.pattern.permute.xlu0 78
        %4907 = vperm.xlu0 %4906, %v182
        %v4908 = vpop.permute.xlu0 %4907
        %4910 = vset.pattern.permute.xlu0 78
        %4911 = vperm.xlu0 %4910, %v183
        %v4912 = vpop.permute.xlu0 %4911
        %v4914 = vlaneseq
        %v4915 = vshrl.u32 %v4914, 7
        %v4916 = vsub.s32 6, %v4915
        %v4917 = vrot.slane %v4521, %v4916
        %v4918 = vsub.f32 %v4884, %v4917
        %v4919 = vsub.f32 %v4888, %v4917
        %v4920 = vsub.f32 %v4892, %v4917
        %v4921 = vsub.f32 %v4896, %v4917
        %v4922 = vsub.f32 %v4900, %v4917
        %v4923 = vsub.f32 %v4904, %v4917
        %v4924 = vsub.f32 %v4908, %v4917
        %v4925 = vsub.f32 %v4912, %v4917
        %v4926 = vand.u32 2147483647, %v4918
        %v4927 = vand.u32 2147483647, %v4919
        %v4928 = vand.u32 2147483647, %v4920
        %v4929 = vand.u32 2147483647, %v4921
        %v4930 = vand.u32 2147483647, %v4922
        %v4931 = vand.u32 2147483647, %v4923
        %v4932 = vand.u32 2147483647, %v4924
        %v4933 = vand.u32 2147483647, %v4925
        %v4934 = vadd.f32 %v4874, %v4926
        %v4935 = vadd.f32 %v4875, %v4927
        %v4936 = vadd.f32 %v4876, %v4928
        %v4937 = vadd.f32 %v4877, %v4929
        %v4938 = vadd.f32 %v4878, %v4930
        %v4939 = vadd.f32 %v4879, %v4931
        %v4940 = vadd.f32 %v4880, %v4932
        %v4941 = vadd.f32 %v4881, %v4933
        %4942 = vset.pattern.permute.xlu0 79
        %4943 = vperm.xlu0 %4942, %v176
        %v4944 = vpop.permute.xlu0 %4943
        %4946 = vset.pattern.permute.xlu0 79
        %4947 = vperm.xlu0 %4946, %v177
        %v4948 = vpop.permute.xlu0 %4947
        %4950 = vset.pattern.permute.xlu0 79
        %4951 = vperm.xlu0 %4950, %v178
        %v4952 = vpop.permute.xlu0 %4951
        %4954 = vset.pattern.permute.xlu0 79
        %4955 = vperm.xlu0 %4954, %v179
        %v4956 = vpop.permute.xlu0 %4955
        %4958 = vset.pattern.permute.xlu0 79
        %4959 = vperm.xlu0 %4958, %v180
        %v4960 = vpop.permute.xlu0 %4959
        %4962 = vset.pattern.permute.xlu0 79
        %4963 = vperm.xlu0 %4962, %v181
        %v4964 = vpop.permute.xlu0 %4963
        %4966 = vset.pattern.permute.xlu0 79
        %4967 = vperm.xlu0 %4966, %v182
        %v4968 = vpop.permute.xlu0 %4967
        %4970 = vset.pattern.permute.xlu0 79
        %4971 = vperm.xlu0 %4970, %v183
        %v4972 = vpop.permute.xlu0 %4971
        %v4974 = vlaneseq
        %v4975 = vshrl.u32 %v4974, 7
        %v4976 = vsub.s32 7, %v4975
        %v4977 = vrot.slane %v4521, %v4976
        %v4978 = vsub.f32 %v4944, %v4977
        %v4979 = vsub.f32 %v4948, %v4977
        %v4980 = vsub.f32 %v4952, %v4977
        %v4981 = vsub.f32 %v4956, %v4977
        %v4982 = vsub.f32 %v4960, %v4977
        %v4983 = vsub.f32 %v4964, %v4977
        %v4984 = vsub.f32 %v4968, %v4977
        %v4985 = vsub.f32 %v4972, %v4977
        %v4986 = vand.u32 2147483647, %v4978
        %v4987 = vand.u32 2147483647, %v4979
        %v4988 = vand.u32 2147483647, %v4980
        %v4989 = vand.u32 2147483647, %v4981
        %v4990 = vand.u32 2147483647, %v4982
        %v4991 = vand.u32 2147483647, %v4983
        %v4992 = vand.u32 2147483647, %v4984
        %v4993 = vand.u32 2147483647, %v4985
        %v4994 = vadd.f32 %v4934, %v4986
        %v4995 = vadd.f32 %v4935, %v4987
        %v4996 = vadd.f32 %v4936, %v4988
        %v4997 = vadd.f32 %v4937, %v4989
        %v4998 = vadd.f32 %v4938, %v4990
        %v4999 = vadd.f32 %v4939, %v4991
        %v5000 = vadd.f32 %v4940, %v4992
        %v5001 = vadd.f32 %v4941, %v4993
        %v5002 = vld [vmem:[%s174 + $0x50] sm:$0xff]
        %5003 = vset.pattern.permute.xlu0 80
        %5004 = vperm.xlu0 %5003, %v176
        %v5005 = vpop.permute.xlu0 %5004
        %5007 = vset.pattern.permute.xlu0 80
        %5008 = vperm.xlu0 %5007, %v177
        %v5009 = vpop.permute.xlu0 %5008
        %5011 = vset.pattern.permute.xlu0 80
        %5012 = vperm.xlu0 %5011, %v178
        %v5013 = vpop.permute.xlu0 %5012
        %5015 = vset.pattern.permute.xlu0 80
        %5016 = vperm.xlu0 %5015, %v179
        %v5017 = vpop.permute.xlu0 %5016
        %5019 = vset.pattern.permute.xlu0 80
        %5020 = vperm.xlu0 %5019, %v180
        %v5021 = vpop.permute.xlu0 %5020
        %5023 = vset.pattern.permute.xlu0 80
        %5024 = vperm.xlu0 %5023, %v181
        %v5025 = vpop.permute.xlu0 %5024
        %5027 = vset.pattern.permute.xlu0 80
        %5028 = vperm.xlu0 %5027, %v182
        %v5029 = vpop.permute.xlu0 %5028
        %5031 = vset.pattern.permute.xlu0 80
        %5032 = vperm.xlu0 %5031, %v183
        %v5033 = vpop.permute.xlu0 %5032
        %v5035 = vlaneseq
        %v5036 = vshrl.u32 %v5035, 7
        %v5037 = vsub.s32 0, %v5036
        %v5038 = vrot.slane %v5002, %v5037
        %v5039 = vsub.f32 %v5005, %v5038
        %v5040 = vsub.f32 %v5009, %v5038
        %v5041 = vsub.f32 %v5013, %v5038
        %v5042 = vsub.f32 %v5017, %v5038
        %v5043 = vsub.f32 %v5021, %v5038
        %v5044 = vsub.f32 %v5025, %v5038
        %v5045 = vsub.f32 %v5029, %v5038
        %v5046 = vsub.f32 %v5033, %v5038
        %v5047 = vand.u32 2147483647, %v5039
        %v5048 = vand.u32 2147483647, %v5040
        %v5049 = vand.u32 2147483647, %v5041
        %v5050 = vand.u32 2147483647, %v5042
        %v5051 = vand.u32 2147483647, %v5043
        %v5052 = vand.u32 2147483647, %v5044
        %v5053 = vand.u32 2147483647, %v5045
        %v5054 = vand.u32 2147483647, %v5046
        %v5055 = vadd.f32 %v4994, %v5047
        %v5056 = vadd.f32 %v4995, %v5048
        %v5057 = vadd.f32 %v4996, %v5049
        %v5058 = vadd.f32 %v4997, %v5050
        %v5059 = vadd.f32 %v4998, %v5051
        %v5060 = vadd.f32 %v4999, %v5052
        %v5061 = vadd.f32 %v5000, %v5053
        %v5062 = vadd.f32 %v5001, %v5054
        %5063 = vset.pattern.permute.xlu0 81
        %5064 = vperm.xlu0 %5063, %v176
        %v5065 = vpop.permute.xlu0 %5064
        %5067 = vset.pattern.permute.xlu0 81
        %5068 = vperm.xlu0 %5067, %v177
        %v5069 = vpop.permute.xlu0 %5068
        %5071 = vset.pattern.permute.xlu0 81
        %5072 = vperm.xlu0 %5071, %v178
        %v5073 = vpop.permute.xlu0 %5072
        %5075 = vset.pattern.permute.xlu0 81
        %5076 = vperm.xlu0 %5075, %v179
        %v5077 = vpop.permute.xlu0 %5076
        %5079 = vset.pattern.permute.xlu0 81
        %5080 = vperm.xlu0 %5079, %v180
        %v5081 = vpop.permute.xlu0 %5080
        %5083 = vset.pattern.permute.xlu0 81
        %5084 = vperm.xlu0 %5083, %v181
        %v5085 = vpop.permute.xlu0 %5084
        %5087 = vset.pattern.permute.xlu0 81
        %5088 = vperm.xlu0 %5087, %v182
        %v5089 = vpop.permute.xlu0 %5088
        %5091 = vset.pattern.permute.xlu0 81
        %5092 = vperm.xlu0 %5091, %v183
        %v5093 = vpop.permute.xlu0 %5092
        %v5095 = vlaneseq
        %v5096 = vshrl.u32 %v5095, 7
        %v5097 = vsub.s32 1, %v5096
        %v5098 = vrot.slane %v5002, %v5097
        %v5099 = vsub.f32 %v5065, %v5098
        %v5100 = vsub.f32 %v5069, %v5098
        %v5101 = vsub.f32 %v5073, %v5098
        %v5102 = vsub.f32 %v5077, %v5098
        %v5103 = vsub.f32 %v5081, %v5098
        %v5104 = vsub.f32 %v5085, %v5098
        %v5105 = vsub.f32 %v5089, %v5098
        %v5106 = vsub.f32 %v5093, %v5098
        %v5107 = vand.u32 2147483647, %v5099
        %v5108 = vand.u32 2147483647, %v5100
        %v5109 = vand.u32 2147483647, %v5101
        %v5110 = vand.u32 2147483647, %v5102
        %v5111 = vand.u32 2147483647, %v5103
        %v5112 = vand.u32 2147483647, %v5104
        %v5113 = vand.u32 2147483647, %v5105
        %v5114 = vand.u32 2147483647, %v5106
        %v5115 = vadd.f32 %v5055, %v5107
        %v5116 = vadd.f32 %v5056, %v5108
        %v5117 = vadd.f32 %v5057, %v5109
        %v5118 = vadd.f32 %v5058, %v5110
        %v5119 = vadd.f32 %v5059, %v5111
        %v5120 = vadd.f32 %v5060, %v5112
        %v5121 = vadd.f32 %v5061, %v5113
        %v5122 = vadd.f32 %v5062, %v5114
        %5123 = vset.pattern.permute.xlu0 82
        %5124 = vperm.xlu0 %5123, %v176
        %v5125 = vpop.permute.xlu0 %5124
        %5127 = vset.pattern.permute.xlu0 82
        %5128 = vperm.xlu0 %5127, %v177
        %v5129 = vpop.permute.xlu0 %5128
        %5131 = vset.pattern.permute.xlu0 82
        %5132 = vperm.xlu0 %5131, %v178
        %v5133 = vpop.permute.xlu0 %5132
        %5135 = vset.pattern.permute.xlu0 82
        %5136 = vperm.xlu0 %5135, %v179
        %v5137 = vpop.permute.xlu0 %5136
        %5139 = vset.pattern.permute.xlu0 82
        %5140 = vperm.xlu0 %5139, %v180
        %v5141 = vpop.permute.xlu0 %5140
        %5143 = vset.pattern.permute.xlu0 82
        %5144 = vperm.xlu0 %5143, %v181
        %v5145 = vpop.permute.xlu0 %5144
        %5147 = vset.pattern.permute.xlu0 82
        %5148 = vperm.xlu0 %5147, %v182
        %v5149 = vpop.permute.xlu0 %5148
        %5151 = vset.pattern.permute.xlu0 82
        %5152 = vperm.xlu0 %5151, %v183
        %v5153 = vpop.permute.xlu0 %5152
        %v5155 = vlaneseq
        %v5156 = vshrl.u32 %v5155, 7
        %v5157 = vsub.s32 2, %v5156
        %v5158 = vrot.slane %v5002, %v5157
        %v5159 = vsub.f32 %v5125, %v5158
        %v5160 = vsub.f32 %v5129, %v5158
        %v5161 = vsub.f32 %v5133, %v5158
        %v5162 = vsub.f32 %v5137, %v5158
        %v5163 = vsub.f32 %v5141, %v5158
        %v5164 = vsub.f32 %v5145, %v5158
        %v5165 = vsub.f32 %v5149, %v5158
        %v5166 = vsub.f32 %v5153, %v5158
        %v5167 = vand.u32 2147483647, %v5159
        %v5168 = vand.u32 2147483647, %v5160
        %v5169 = vand.u32 2147483647, %v5161
        %v5170 = vand.u32 2147483647, %v5162
        %v5171 = vand.u32 2147483647, %v5163
        %v5172 = vand.u32 2147483647, %v5164
        %v5173 = vand.u32 2147483647, %v5165
        %v5174 = vand.u32 2147483647, %v5166
        %v5175 = vadd.f32 %v5115, %v5167
        %v5176 = vadd.f32 %v5116, %v5168
        %v5177 = vadd.f32 %v5117, %v5169
        %v5178 = vadd.f32 %v5118, %v5170
        %v5179 = vadd.f32 %v5119, %v5171
        %v5180 = vadd.f32 %v5120, %v5172
        %v5181 = vadd.f32 %v5121, %v5173
        %v5182 = vadd.f32 %v5122, %v5174
        %5183 = vset.pattern.permute.xlu0 83
        %5184 = vperm.xlu0 %5183, %v176
        %v5185 = vpop.permute.xlu0 %5184
        %5187 = vset.pattern.permute.xlu0 83
        %5188 = vperm.xlu0 %5187, %v177
        %v5189 = vpop.permute.xlu0 %5188
        %5191 = vset.pattern.permute.xlu0 83
        %5192 = vperm.xlu0 %5191, %v178
        %v5193 = vpop.permute.xlu0 %5192
        %5195 = vset.pattern.permute.xlu0 83
        %5196 = vperm.xlu0 %5195, %v179
        %v5197 = vpop.permute.xlu0 %5196
        %5199 = vset.pattern.permute.xlu0 83
        %5200 = vperm.xlu0 %5199, %v180
        %v5201 = vpop.permute.xlu0 %5200
        %5203 = vset.pattern.permute.xlu0 83
        %5204 = vperm.xlu0 %5203, %v181
        %v5205 = vpop.permute.xlu0 %5204
        %5207 = vset.pattern.permute.xlu0 83
        %5208 = vperm.xlu0 %5207, %v182
        %v5209 = vpop.permute.xlu0 %5208
        %5211 = vset.pattern.permute.xlu0 83
        %5212 = vperm.xlu0 %5211, %v183
        %v5213 = vpop.permute.xlu0 %5212
        %v5215 = vlaneseq
        %v5216 = vshrl.u32 %v5215, 7
        %v5217 = vsub.s32 3, %v5216
        %v5218 = vrot.slane %v5002, %v5217
        %v5219 = vsub.f32 %v5185, %v5218
        %v5220 = vsub.f32 %v5189, %v5218
        %v5221 = vsub.f32 %v5193, %v5218
        %v5222 = vsub.f32 %v5197, %v5218
        %v5223 = vsub.f32 %v5201, %v5218
        %v5224 = vsub.f32 %v5205, %v5218
        %v5225 = vsub.f32 %v5209, %v5218
        %v5226 = vsub.f32 %v5213, %v5218
        %v5227 = vand.u32 2147483647, %v5219
        %v5228 = vand.u32 2147483647, %v5220
        %v5229 = vand.u32 2147483647, %v5221
        %v5230 = vand.u32 2147483647, %v5222
        %v5231 = vand.u32 2147483647, %v5223
        %v5232 = vand.u32 2147483647, %v5224
        %v5233 = vand.u32 2147483647, %v5225
        %v5234 = vand.u32 2147483647, %v5226
        %v5235 = vadd.f32 %v5175, %v5227
        %v5236 = vadd.f32 %v5176, %v5228
        %v5237 = vadd.f32 %v5177, %v5229
        %v5238 = vadd.f32 %v5178, %v5230
        %v5239 = vadd.f32 %v5179, %v5231
        %v5240 = vadd.f32 %v5180, %v5232
        %v5241 = vadd.f32 %v5181, %v5233
        %v5242 = vadd.f32 %v5182, %v5234
        %5243 = vset.pattern.permute.xlu0 84
        %5244 = vperm.xlu0 %5243, %v176
        %v5245 = vpop.permute.xlu0 %5244
        %5247 = vset.pattern.permute.xlu0 84
        %5248 = vperm.xlu0 %5247, %v177
        %v5249 = vpop.permute.xlu0 %5248
        %5251 = vset.pattern.permute.xlu0 84
        %5252 = vperm.xlu0 %5251, %v178
        %v5253 = vpop.permute.xlu0 %5252
        %5255 = vset.pattern.permute.xlu0 84
        %5256 = vperm.xlu0 %5255, %v179
        %v5257 = vpop.permute.xlu0 %5256
        %5259 = vset.pattern.permute.xlu0 84
        %5260 = vperm.xlu0 %5259, %v180
        %v5261 = vpop.permute.xlu0 %5260
        %5263 = vset.pattern.permute.xlu0 84
        %5264 = vperm.xlu0 %5263, %v181
        %v5265 = vpop.permute.xlu0 %5264
        %5267 = vset.pattern.permute.xlu0 84
        %5268 = vperm.xlu0 %5267, %v182
        %v5269 = vpop.permute.xlu0 %5268
        %5271 = vset.pattern.permute.xlu0 84
        %5272 = vperm.xlu0 %5271, %v183
        %v5273 = vpop.permute.xlu0 %5272
        %v5275 = vlaneseq
        %v5276 = vshrl.u32 %v5275, 7
        %v5277 = vsub.s32 4, %v5276
        %v5278 = vrot.slane %v5002, %v5277
        %v5279 = vsub.f32 %v5245, %v5278
        %v5280 = vsub.f32 %v5249, %v5278
        %v5281 = vsub.f32 %v5253, %v5278
        %v5282 = vsub.f32 %v5257, %v5278
        %v5283 = vsub.f32 %v5261, %v5278
        %v5284 = vsub.f32 %v5265, %v5278
        %v5285 = vsub.f32 %v5269, %v5278
        %v5286 = vsub.f32 %v5273, %v5278
        %v5287 = vand.u32 2147483647, %v5279
        %v5288 = vand.u32 2147483647, %v5280
        %v5289 = vand.u32 2147483647, %v5281
        %v5290 = vand.u32 2147483647, %v5282
        %v5291 = vand.u32 2147483647, %v5283
        %v5292 = vand.u32 2147483647, %v5284
        %v5293 = vand.u32 2147483647, %v5285
        %v5294 = vand.u32 2147483647, %v5286
        %v5295 = vadd.f32 %v5235, %v5287
        %v5296 = vadd.f32 %v5236, %v5288
        %v5297 = vadd.f32 %v5237, %v5289
        %v5298 = vadd.f32 %v5238, %v5290
        %v5299 = vadd.f32 %v5239, %v5291
        %v5300 = vadd.f32 %v5240, %v5292
        %v5301 = vadd.f32 %v5241, %v5293
        %v5302 = vadd.f32 %v5242, %v5294
        %5303 = vset.pattern.permute.xlu0 85
        %5304 = vperm.xlu0 %5303, %v176
        %v5305 = vpop.permute.xlu0 %5304
        %5307 = vset.pattern.permute.xlu0 85
        %5308 = vperm.xlu0 %5307, %v177
        %v5309 = vpop.permute.xlu0 %5308
        %5311 = vset.pattern.permute.xlu0 85
        %5312 = vperm.xlu0 %5311, %v178
        %v5313 = vpop.permute.xlu0 %5312
        %5315 = vset.pattern.permute.xlu0 85
        %5316 = vperm.xlu0 %5315, %v179
        %v5317 = vpop.permute.xlu0 %5316
        %5319 = vset.pattern.permute.xlu0 85
        %5320 = vperm.xlu0 %5319, %v180
        %v5321 = vpop.permute.xlu0 %5320
        %5323 = vset.pattern.permute.xlu0 85
        %5324 = vperm.xlu0 %5323, %v181
        %v5325 = vpop.permute.xlu0 %5324
        %5327 = vset.pattern.permute.xlu0 85
        %5328 = vperm.xlu0 %5327, %v182
        %v5329 = vpop.permute.xlu0 %5328
        %5331 = vset.pattern.permute.xlu0 85
        %5332 = vperm.xlu0 %5331, %v183
        %v5333 = vpop.permute.xlu0 %5332
        %v5335 = vlaneseq
        %v5336 = vshrl.u32 %v5335, 7
        %v5337 = vsub.s32 5, %v5336
        %v5338 = vrot.slane %v5002, %v5337
        %v5339 = vsub.f32 %v5305, %v5338
        %v5340 = vsub.f32 %v5309, %v5338
        %v5341 = vsub.f32 %v5313, %v5338
        %v5342 = vsub.f32 %v5317, %v5338
        %v5343 = vsub.f32 %v5321, %v5338
        %v5344 = vsub.f32 %v5325, %v5338
        %v5345 = vsub.f32 %v5329, %v5338
        %v5346 = vsub.f32 %v5333, %v5338
        %v5347 = vand.u32 2147483647, %v5339
        %v5348 = vand.u32 2147483647, %v5340
        %v5349 = vand.u32 2147483647, %v5341
        %v5350 = vand.u32 2147483647, %v5342
        %v5351 = vand.u32 2147483647, %v5343
        %v5352 = vand.u32 2147483647, %v5344
        %v5353 = vand.u32 2147483647, %v5345
        %v5354 = vand.u32 2147483647, %v5346
        %v5355 = vadd.f32 %v5295, %v5347
        %v5356 = vadd.f32 %v5296, %v5348
        %v5357 = vadd.f32 %v5297, %v5349
        %v5358 = vadd.f32 %v5298, %v5350
        %v5359 = vadd.f32 %v5299, %v5351
        %v5360 = vadd.f32 %v5300, %v5352
        %v5361 = vadd.f32 %v5301, %v5353
        %v5362 = vadd.f32 %v5302, %v5354
        %5363 = vset.pattern.permute.xlu0 86
        %5364 = vperm.xlu0 %5363, %v176
        %v5365 = vpop.permute.xlu0 %5364
        %5367 = vset.pattern.permute.xlu0 86
        %5368 = vperm.xlu0 %5367, %v177
        %v5369 = vpop.permute.xlu0 %5368
        %5371 = vset.pattern.permute.xlu0 86
        %5372 = vperm.xlu0 %5371, %v178
        %v5373 = vpop.permute.xlu0 %5372
        %5375 = vset.pattern.permute.xlu0 86
        %5376 = vperm.xlu0 %5375, %v179
        %v5377 = vpop.permute.xlu0 %5376
        %5379 = vset.pattern.permute.xlu0 86
        %5380 = vperm.xlu0 %5379, %v180
        %v5381 = vpop.permute.xlu0 %5380
        %5383 = vset.pattern.permute.xlu0 86
        %5384 = vperm.xlu0 %5383, %v181
        %v5385 = vpop.permute.xlu0 %5384
        %5387 = vset.pattern.permute.xlu0 86
        %5388 = vperm.xlu0 %5387, %v182
        %v5389 = vpop.permute.xlu0 %5388
        %5391 = vset.pattern.permute.xlu0 86
        %5392 = vperm.xlu0 %5391, %v183
        %v5393 = vpop.permute.xlu0 %5392
        %v5395 = vlaneseq
        %v5396 = vshrl.u32 %v5395, 7
        %v5397 = vsub.s32 6, %v5396
        %v5398 = vrot.slane %v5002, %v5397
        %v5399 = vsub.f32 %v5365, %v5398
        %v5400 = vsub.f32 %v5369, %v5398
        %v5401 = vsub.f32 %v5373, %v5398
        %v5402 = vsub.f32 %v5377, %v5398
        %v5403 = vsub.f32 %v5381, %v5398
        %v5404 = vsub.f32 %v5385, %v5398
        %v5405 = vsub.f32 %v5389, %v5398
        %v5406 = vsub.f32 %v5393, %v5398
        %v5407 = vand.u32 2147483647, %v5399
        %v5408 = vand.u32 2147483647, %v5400
        %v5409 = vand.u32 2147483647, %v5401
        %v5410 = vand.u32 2147483647, %v5402
        %v5411 = vand.u32 2147483647, %v5403
        %v5412 = vand.u32 2147483647, %v5404
        %v5413 = vand.u32 2147483647, %v5405
        %v5414 = vand.u32 2147483647, %v5406
        %v5415 = vadd.f32 %v5355, %v5407
        %v5416 = vadd.f32 %v5356, %v5408
        %v5417 = vadd.f32 %v5357, %v5409
        %v5418 = vadd.f32 %v5358, %v5410
        %v5419 = vadd.f32 %v5359, %v5411
        %v5420 = vadd.f32 %v5360, %v5412
        %v5421 = vadd.f32 %v5361, %v5413
        %v5422 = vadd.f32 %v5362, %v5414
        %5423 = vset.pattern.permute.xlu0 87
        %5424 = vperm.xlu0 %5423, %v176
        %v5425 = vpop.permute.xlu0 %5424
        %5427 = vset.pattern.permute.xlu0 87
        %5428 = vperm.xlu0 %5427, %v177
        %v5429 = vpop.permute.xlu0 %5428
        %5431 = vset.pattern.permute.xlu0 87
        %5432 = vperm.xlu0 %5431, %v178
        %v5433 = vpop.permute.xlu0 %5432
        %5435 = vset.pattern.permute.xlu0 87
        %5436 = vperm.xlu0 %5435, %v179
        %v5437 = vpop.permute.xlu0 %5436
        %5439 = vset.pattern.permute.xlu0 87
        %5440 = vperm.xlu0 %5439, %v180
        %v5441 = vpop.permute.xlu0 %5440
        %5443 = vset.pattern.permute.xlu0 87
        %5444 = vperm.xlu0 %5443, %v181
        %v5445 = vpop.permute.xlu0 %5444
        %5447 = vset.pattern.permute.xlu0 87
        %5448 = vperm.xlu0 %5447, %v182
        %v5449 = vpop.permute.xlu0 %5448
        %5451 = vset.pattern.permute.xlu0 87
        %5452 = vperm.xlu0 %5451, %v183
        %v5453 = vpop.permute.xlu0 %5452
        %v5455 = vlaneseq
        %v5456 = vshrl.u32 %v5455, 7
        %v5457 = vsub.s32 7, %v5456
        %v5458 = vrot.slane %v5002, %v5457
        %v5459 = vsub.f32 %v5425, %v5458
        %v5460 = vsub.f32 %v5429, %v5458
        %v5461 = vsub.f32 %v5433, %v5458
        %v5462 = vsub.f32 %v5437, %v5458
        %v5463 = vsub.f32 %v5441, %v5458
        %v5464 = vsub.f32 %v5445, %v5458
        %v5465 = vsub.f32 %v5449, %v5458
        %v5466 = vsub.f32 %v5453, %v5458
        %v5467 = vand.u32 2147483647, %v5459
        %v5468 = vand.u32 2147483647, %v5460
        %v5469 = vand.u32 2147483647, %v5461
        %v5470 = vand.u32 2147483647, %v5462
        %v5471 = vand.u32 2147483647, %v5463
        %v5472 = vand.u32 2147483647, %v5464
        %v5473 = vand.u32 2147483647, %v5465
        %v5474 = vand.u32 2147483647, %v5466
        %v5475 = vadd.f32 %v5415, %v5467
        %v5476 = vadd.f32 %v5416, %v5468
        %v5477 = vadd.f32 %v5417, %v5469
        %v5478 = vadd.f32 %v5418, %v5470
        %v5479 = vadd.f32 %v5419, %v5471
        %v5480 = vadd.f32 %v5420, %v5472
        %v5481 = vadd.f32 %v5421, %v5473
        %v5482 = vadd.f32 %v5422, %v5474
        %v5483 = vld [vmem:[%s174 + $0x58] sm:$0xff]
        %5484 = vset.pattern.permute.xlu0 88
        %5485 = vperm.xlu0 %5484, %v176
        %v5486 = vpop.permute.xlu0 %5485
        %5488 = vset.pattern.permute.xlu0 88
        %5489 = vperm.xlu0 %5488, %v177
        %v5490 = vpop.permute.xlu0 %5489
        %5492 = vset.pattern.permute.xlu0 88
        %5493 = vperm.xlu0 %5492, %v178
        %v5494 = vpop.permute.xlu0 %5493
        %5496 = vset.pattern.permute.xlu0 88
        %5497 = vperm.xlu0 %5496, %v179
        %v5498 = vpop.permute.xlu0 %5497
        %5500 = vset.pattern.permute.xlu0 88
        %5501 = vperm.xlu0 %5500, %v180
        %v5502 = vpop.permute.xlu0 %5501
        %5504 = vset.pattern.permute.xlu0 88
        %5505 = vperm.xlu0 %5504, %v181
        %v5506 = vpop.permute.xlu0 %5505
        %5508 = vset.pattern.permute.xlu0 88
        %5509 = vperm.xlu0 %5508, %v182
        %v5510 = vpop.permute.xlu0 %5509
        %5512 = vset.pattern.permute.xlu0 88
        %5513 = vperm.xlu0 %5512, %v183
        %v5514 = vpop.permute.xlu0 %5513
        %v5516 = vlaneseq
        %v5517 = vshrl.u32 %v5516, 7
        %v5518 = vsub.s32 0, %v5517
        %v5519 = vrot.slane %v5483, %v5518
        %v5520 = vsub.f32 %v5486, %v5519
        %v5521 = vsub.f32 %v5490, %v5519
        %v5522 = vsub.f32 %v5494, %v5519
        %v5523 = vsub.f32 %v5498, %v5519
        %v5524 = vsub.f32 %v5502, %v5519
        %v5525 = vsub.f32 %v5506, %v5519
        %v5526 = vsub.f32 %v5510, %v5519
        %v5527 = vsub.f32 %v5514, %v5519
        %v5528 = vand.u32 2147483647, %v5520
        %v5529 = vand.u32 2147483647, %v5521
        %v5530 = vand.u32 2147483647, %v5522
        %v5531 = vand.u32 2147483647, %v5523
        %v5532 = vand.u32 2147483647, %v5524
        %v5533 = vand.u32 2147483647, %v5525
        %v5534 = vand.u32 2147483647, %v5526
        %v5535 = vand.u32 2147483647, %v5527
        %v5536 = vadd.f32 %v5475, %v5528
        %v5537 = vadd.f32 %v5476, %v5529
        %v5538 = vadd.f32 %v5477, %v5530
        %v5539 = vadd.f32 %v5478, %v5531
        %v5540 = vadd.f32 %v5479, %v5532
        %v5541 = vadd.f32 %v5480, %v5533
        %v5542 = vadd.f32 %v5481, %v5534
        %v5543 = vadd.f32 %v5482, %v5535
        %5544 = vset.pattern.permute.xlu0 89
        %5545 = vperm.xlu0 %5544, %v176
        %v5546 = vpop.permute.xlu0 %5545
        %5548 = vset.pattern.permute.xlu0 89
        %5549 = vperm.xlu0 %5548, %v177
        %v5550 = vpop.permute.xlu0 %5549
        %5552 = vset.pattern.permute.xlu0 89
        %5553 = vperm.xlu0 %5552, %v178
        %v5554 = vpop.permute.xlu0 %5553
        %5556 = vset.pattern.permute.xlu0 89
        %5557 = vperm.xlu0 %5556, %v179
        %v5558 = vpop.permute.xlu0 %5557
        %5560 = vset.pattern.permute.xlu0 89
        %5561 = vperm.xlu0 %5560, %v180
        %v5562 = vpop.permute.xlu0 %5561
        %5564 = vset.pattern.permute.xlu0 89
        %5565 = vperm.xlu0 %5564, %v181
        %v5566 = vpop.permute.xlu0 %5565
        %5568 = vset.pattern.permute.xlu0 89
        %5569 = vperm.xlu0 %5568, %v182
        %v5570 = vpop.permute.xlu0 %5569
        %5572 = vset.pattern.permute.xlu0 89
        %5573 = vperm.xlu0 %5572, %v183
        %v5574 = vpop.permute.xlu0 %5573
        %v5576 = vlaneseq
        %v5577 = vshrl.u32 %v5576, 7
        %v5578 = vsub.s32 1, %v5577
        %v5579 = vrot.slane %v5483, %v5578
        %v5580 = vsub.f32 %v5546, %v5579
        %v5581 = vsub.f32 %v5550, %v5579
        %v5582 = vsub.f32 %v5554, %v5579
        %v5583 = vsub.f32 %v5558, %v5579
        %v5584 = vsub.f32 %v5562, %v5579
        %v5585 = vsub.f32 %v5566, %v5579
        %v5586 = vsub.f32 %v5570, %v5579
        %v5587 = vsub.f32 %v5574, %v5579
        %v5588 = vand.u32 2147483647, %v5580
        %v5589 = vand.u32 2147483647, %v5581
        %v5590 = vand.u32 2147483647, %v5582
        %v5591 = vand.u32 2147483647, %v5583
        %v5592 = vand.u32 2147483647, %v5584
        %v5593 = vand.u32 2147483647, %v5585
        %v5594 = vand.u32 2147483647, %v5586
        %v5595 = vand.u32 2147483647, %v5587
        %v5596 = vadd.f32 %v5536, %v5588
        %v5597 = vadd.f32 %v5537, %v5589
        %v5598 = vadd.f32 %v5538, %v5590
        %v5599 = vadd.f32 %v5539, %v5591
        %v5600 = vadd.f32 %v5540, %v5592
        %v5601 = vadd.f32 %v5541, %v5593
        %v5602 = vadd.f32 %v5542, %v5594
        %v5603 = vadd.f32 %v5543, %v5595
        %5604 = vset.pattern.permute.xlu0 90
        %5605 = vperm.xlu0 %5604, %v176
        %v5606 = vpop.permute.xlu0 %5605
        %5608 = vset.pattern.permute.xlu0 90
        %5609 = vperm.xlu0 %5608, %v177
        %v5610 = vpop.permute.xlu0 %5609
        %5612 = vset.pattern.permute.xlu0 90
        %5613 = vperm.xlu0 %5612, %v178
        %v5614 = vpop.permute.xlu0 %5613
        %5616 = vset.pattern.permute.xlu0 90
        %5617 = vperm.xlu0 %5616, %v179
        %v5618 = vpop.permute.xlu0 %5617
        %5620 = vset.pattern.permute.xlu0 90
        %5621 = vperm.xlu0 %5620, %v180
        %v5622 = vpop.permute.xlu0 %5621
        %5624 = vset.pattern.permute.xlu0 90
        %5625 = vperm.xlu0 %5624, %v181
        %v5626 = vpop.permute.xlu0 %5625
        %5628 = vset.pattern.permute.xlu0 90
        %5629 = vperm.xlu0 %5628, %v182
        %v5630 = vpop.permute.xlu0 %5629
        %5632 = vset.pattern.permute.xlu0 90
        %5633 = vperm.xlu0 %5632, %v183
        %v5634 = vpop.permute.xlu0 %5633
        %v5636 = vlaneseq
        %v5637 = vshrl.u32 %v5636, 7
        %v5638 = vsub.s32 2, %v5637
        %v5639 = vrot.slane %v5483, %v5638
        %v5640 = vsub.f32 %v5606, %v5639
        %v5641 = vsub.f32 %v5610, %v5639
        %v5642 = vsub.f32 %v5614, %v5639
        %v5643 = vsub.f32 %v5618, %v5639
        %v5644 = vsub.f32 %v5622, %v5639
        %v5645 = vsub.f32 %v5626, %v5639
        %v5646 = vsub.f32 %v5630, %v5639
        %v5647 = vsub.f32 %v5634, %v5639
        %v5648 = vand.u32 2147483647, %v5640
        %v5649 = vand.u32 2147483647, %v5641
        %v5650 = vand.u32 2147483647, %v5642
        %v5651 = vand.u32 2147483647, %v5643
        %v5652 = vand.u32 2147483647, %v5644
        %v5653 = vand.u32 2147483647, %v5645
        %v5654 = vand.u32 2147483647, %v5646
        %v5655 = vand.u32 2147483647, %v5647
        %v5656 = vadd.f32 %v5596, %v5648
        %v5657 = vadd.f32 %v5597, %v5649
        %v5658 = vadd.f32 %v5598, %v5650
        %v5659 = vadd.f32 %v5599, %v5651
        %v5660 = vadd.f32 %v5600, %v5652
        %v5661 = vadd.f32 %v5601, %v5653
        %v5662 = vadd.f32 %v5602, %v5654
        %v5663 = vadd.f32 %v5603, %v5655
        %5664 = vset.pattern.permute.xlu0 91
        %5665 = vperm.xlu0 %5664, %v176
        %v5666 = vpop.permute.xlu0 %5665
        %5668 = vset.pattern.permute.xlu0 91
        %5669 = vperm.xlu0 %5668, %v177
        %v5670 = vpop.permute.xlu0 %5669
        %5672 = vset.pattern.permute.xlu0 91
        %5673 = vperm.xlu0 %5672, %v178
        %v5674 = vpop.permute.xlu0 %5673
        %5676 = vset.pattern.permute.xlu0 91
        %5677 = vperm.xlu0 %5676, %v179
        %v5678 = vpop.permute.xlu0 %5677
        %5680 = vset.pattern.permute.xlu0 91
        %5681 = vperm.xlu0 %5680, %v180
        %v5682 = vpop.permute.xlu0 %5681
        %5684 = vset.pattern.permute.xlu0 91
        %5685 = vperm.xlu0 %5684, %v181
        %v5686 = vpop.permute.xlu0 %5685
        %5688 = vset.pattern.permute.xlu0 91
        %5689 = vperm.xlu0 %5688, %v182
        %v5690 = vpop.permute.xlu0 %5689
        %5692 = vset.pattern.permute.xlu0 91
        %5693 = vperm.xlu0 %5692, %v183
        %v5694 = vpop.permute.xlu0 %5693
        %v5696 = vlaneseq
        %v5697 = vshrl.u32 %v5696, 7
        %v5698 = vsub.s32 3, %v5697
        %v5699 = vrot.slane %v5483, %v5698
        %v5700 = vsub.f32 %v5666, %v5699
        %v5701 = vsub.f32 %v5670, %v5699
        %v5702 = vsub.f32 %v5674, %v5699
        %v5703 = vsub.f32 %v5678, %v5699
        %v5704 = vsub.f32 %v5682, %v5699
        %v5705 = vsub.f32 %v5686, %v5699
        %v5706 = vsub.f32 %v5690, %v5699
        %v5707 = vsub.f32 %v5694, %v5699
        %v5708 = vand.u32 2147483647, %v5700
        %v5709 = vand.u32 2147483647, %v5701
        %v5710 = vand.u32 2147483647, %v5702
        %v5711 = vand.u32 2147483647, %v5703
        %v5712 = vand.u32 2147483647, %v5704
        %v5713 = vand.u32 2147483647, %v5705
        %v5714 = vand.u32 2147483647, %v5706
        %v5715 = vand.u32 2147483647, %v5707
        %v5716 = vadd.f32 %v5656, %v5708
        %v5717 = vadd.f32 %v5657, %v5709
        %v5718 = vadd.f32 %v5658, %v5710
        %v5719 = vadd.f32 %v5659, %v5711
        %v5720 = vadd.f32 %v5660, %v5712
        %v5721 = vadd.f32 %v5661, %v5713
        %v5722 = vadd.f32 %v5662, %v5714
        %v5723 = vadd.f32 %v5663, %v5715
        %5724 = vset.pattern.permute.xlu0 92
        %5725 = vperm.xlu0 %5724, %v176
        %v5726 = vpop.permute.xlu0 %5725
        %5728 = vset.pattern.permute.xlu0 92
        %5729 = vperm.xlu0 %5728, %v177
        %v5730 = vpop.permute.xlu0 %5729
        %5732 = vset.pattern.permute.xlu0 92
        %5733 = vperm.xlu0 %5732, %v178
        %v5734 = vpop.permute.xlu0 %5733
        %5736 = vset.pattern.permute.xlu0 92
        %5737 = vperm.xlu0 %5736, %v179
        %v5738 = vpop.permute.xlu0 %5737
        %5740 = vset.pattern.permute.xlu0 92
        %5741 = vperm.xlu0 %5740, %v180
        %v5742 = vpop.permute.xlu0 %5741
        %5744 = vset.pattern.permute.xlu0 92
        %5745 = vperm.xlu0 %5744, %v181
        %v5746 = vpop.permute.xlu0 %5745
        %5748 = vset.pattern.permute.xlu0 92
        %5749 = vperm.xlu0 %5748, %v182
        %v5750 = vpop.permute.xlu0 %5749
        %5752 = vset.pattern.permute.xlu0 92
        %5753 = vperm.xlu0 %5752, %v183
        %v5754 = vpop.permute.xlu0 %5753
        %v5756 = vlaneseq
        %v5757 = vshrl.u32 %v5756, 7
        %v5758 = vsub.s32 4, %v5757
        %v5759 = vrot.slane %v5483, %v5758
        %v5760 = vsub.f32 %v5726, %v5759
        %v5761 = vsub.f32 %v5730, %v5759
        %v5762 = vsub.f32 %v5734, %v5759
        %v5763 = vsub.f32 %v5738, %v5759
        %v5764 = vsub.f32 %v5742, %v5759
        %v5765 = vsub.f32 %v5746, %v5759
        %v5766 = vsub.f32 %v5750, %v5759
        %v5767 = vsub.f32 %v5754, %v5759
        %v5768 = vand.u32 2147483647, %v5760
        %v5769 = vand.u32 2147483647, %v5761
        %v5770 = vand.u32 2147483647, %v5762
        %v5771 = vand.u32 2147483647, %v5763
        %v5772 = vand.u32 2147483647, %v5764
        %v5773 = vand.u32 2147483647, %v5765
        %v5774 = vand.u32 2147483647, %v5766
        %v5775 = vand.u32 2147483647, %v5767
        %v5776 = vadd.f32 %v5716, %v5768
        %v5777 = vadd.f32 %v5717, %v5769
        %v5778 = vadd.f32 %v5718, %v5770
        %v5779 = vadd.f32 %v5719, %v5771
        %v5780 = vadd.f32 %v5720, %v5772
        %v5781 = vadd.f32 %v5721, %v5773
        %v5782 = vadd.f32 %v5722, %v5774
        %v5783 = vadd.f32 %v5723, %v5775
        %5784 = vset.pattern.permute.xlu0 93
        %5785 = vperm.xlu0 %5784, %v176
        %v5786 = vpop.permute.xlu0 %5785
        %5788 = vset.pattern.permute.xlu0 93
        %5789 = vperm.xlu0 %5788, %v177
        %v5790 = vpop.permute.xlu0 %5789
        %5792 = vset.pattern.permute.xlu0 93
        %5793 = vperm.xlu0 %5792, %v178
        %v5794 = vpop.permute.xlu0 %5793
        %5796 = vset.pattern.permute.xlu0 93
        %5797 = vperm.xlu0 %5796, %v179
        %v5798 = vpop.permute.xlu0 %5797
        %5800 = vset.pattern.permute.xlu0 93
        %5801 = vperm.xlu0 %5800, %v180
        %v5802 = vpop.permute.xlu0 %5801
        %5804 = vset.pattern.permute.xlu0 93
        %5805 = vperm.xlu0 %5804, %v181
        %v5806 = vpop.permute.xlu0 %5805
        %5808 = vset.pattern.permute.xlu0 93
        %5809 = vperm.xlu0 %5808, %v182
        %v5810 = vpop.permute.xlu0 %5809
        %5812 = vset.pattern.permute.xlu0 93
        %5813 = vperm.xlu0 %5812, %v183
        %v5814 = vpop.permute.xlu0 %5813
        %v5816 = vlaneseq
        %v5817 = vshrl.u32 %v5816, 7
        %v5818 = vsub.s32 5, %v5817
        %v5819 = vrot.slane %v5483, %v5818
        %v5820 = vsub.f32 %v5786, %v5819
        %v5821 = vsub.f32 %v5790, %v5819
        %v5822 = vsub.f32 %v5794, %v5819
        %v5823 = vsub.f32 %v5798, %v5819
        %v5824 = vsub.f32 %v5802, %v5819
        %v5825 = vsub.f32 %v5806, %v5819
        %v5826 = vsub.f32 %v5810, %v5819
        %v5827 = vsub.f32 %v5814, %v5819
        %v5828 = vand.u32 2147483647, %v5820
        %v5829 = vand.u32 2147483647, %v5821
        %v5830 = vand.u32 2147483647, %v5822
        %v5831 = vand.u32 2147483647, %v5823
        %v5832 = vand.u32 2147483647, %v5824
        %v5833 = vand.u32 2147483647, %v5825
        %v5834 = vand.u32 2147483647, %v5826
        %v5835 = vand.u32 2147483647, %v5827
        %v5836 = vadd.f32 %v5776, %v5828
        %v5837 = vadd.f32 %v5777, %v5829
        %v5838 = vadd.f32 %v5778, %v5830
        %v5839 = vadd.f32 %v5779, %v5831
        %v5840 = vadd.f32 %v5780, %v5832
        %v5841 = vadd.f32 %v5781, %v5833
        %v5842 = vadd.f32 %v5782, %v5834
        %v5843 = vadd.f32 %v5783, %v5835
        %5844 = vset.pattern.permute.xlu0 94
        %5845 = vperm.xlu0 %5844, %v176
        %v5846 = vpop.permute.xlu0 %5845
        %5848 = vset.pattern.permute.xlu0 94
        %5849 = vperm.xlu0 %5848, %v177
        %v5850 = vpop.permute.xlu0 %5849
        %5852 = vset.pattern.permute.xlu0 94
        %5853 = vperm.xlu0 %5852, %v178
        %v5854 = vpop.permute.xlu0 %5853
        %5856 = vset.pattern.permute.xlu0 94
        %5857 = vperm.xlu0 %5856, %v179
        %v5858 = vpop.permute.xlu0 %5857
        %5860 = vset.pattern.permute.xlu0 94
        %5861 = vperm.xlu0 %5860, %v180
        %v5862 = vpop.permute.xlu0 %5861
        %5864 = vset.pattern.permute.xlu0 94
        %5865 = vperm.xlu0 %5864, %v181
        %v5866 = vpop.permute.xlu0 %5865
        %5868 = vset.pattern.permute.xlu0 94
        %5869 = vperm.xlu0 %5868, %v182
        %v5870 = vpop.permute.xlu0 %5869
        %5872 = vset.pattern.permute.xlu0 94
        %5873 = vperm.xlu0 %5872, %v183
        %v5874 = vpop.permute.xlu0 %5873
        %v5876 = vlaneseq
        %v5877 = vshrl.u32 %v5876, 7
        %v5878 = vsub.s32 6, %v5877
        %v5879 = vrot.slane %v5483, %v5878
        %v5880 = vsub.f32 %v5846, %v5879
        %v5881 = vsub.f32 %v5850, %v5879
        %v5882 = vsub.f32 %v5854, %v5879
        %v5883 = vsub.f32 %v5858, %v5879
        %v5884 = vsub.f32 %v5862, %v5879
        %v5885 = vsub.f32 %v5866, %v5879
        %v5886 = vsub.f32 %v5870, %v5879
        %v5887 = vsub.f32 %v5874, %v5879
        %v5888 = vand.u32 2147483647, %v5880
        %v5889 = vand.u32 2147483647, %v5881
        %v5890 = vand.u32 2147483647, %v5882
        %v5891 = vand.u32 2147483647, %v5883
        %v5892 = vand.u32 2147483647, %v5884
        %v5893 = vand.u32 2147483647, %v5885
        %v5894 = vand.u32 2147483647, %v5886
        %v5895 = vand.u32 2147483647, %v5887
        %v5896 = vadd.f32 %v5836, %v5888
        %v5897 = vadd.f32 %v5837, %v5889
        %v5898 = vadd.f32 %v5838, %v5890
        %v5899 = vadd.f32 %v5839, %v5891
        %v5900 = vadd.f32 %v5840, %v5892
        %v5901 = vadd.f32 %v5841, %v5893
        %v5902 = vadd.f32 %v5842, %v5894
        %v5903 = vadd.f32 %v5843, %v5895
        %5904 = vset.pattern.permute.xlu0 95
        %5905 = vperm.xlu0 %5904, %v176
        %v5906 = vpop.permute.xlu0 %5905
        %5908 = vset.pattern.permute.xlu0 95
        %5909 = vperm.xlu0 %5908, %v177
        %v5910 = vpop.permute.xlu0 %5909
        %5912 = vset.pattern.permute.xlu0 95
        %5913 = vperm.xlu0 %5912, %v178
        %v5914 = vpop.permute.xlu0 %5913
        %5916 = vset.pattern.permute.xlu0 95
        %5917 = vperm.xlu0 %5916, %v179
        %v5918 = vpop.permute.xlu0 %5917
        %5920 = vset.pattern.permute.xlu0 95
        %5921 = vperm.xlu0 %5920, %v180
        %v5922 = vpop.permute.xlu0 %5921
        %5924 = vset.pattern.permute.xlu0 95
        %5925 = vperm.xlu0 %5924, %v181
        %v5926 = vpop.permute.xlu0 %5925
        %5928 = vset.pattern.permute.xlu0 95
        %5929 = vperm.xlu0 %5928, %v182
        %v5930 = vpop.permute.xlu0 %5929
        %5932 = vset.pattern.permute.xlu0 95
        %5933 = vperm.xlu0 %5932, %v183
        %v5934 = vpop.permute.xlu0 %5933
        %v5936 = vlaneseq
        %v5937 = vshrl.u32 %v5936, 7
        %v5938 = vsub.s32 7, %v5937
        %v5939 = vrot.slane %v5483, %v5938
        %v5940 = vsub.f32 %v5906, %v5939
        %v5941 = vsub.f32 %v5910, %v5939
        %v5942 = vsub.f32 %v5914, %v5939
        %v5943 = vsub.f32 %v5918, %v5939
        %v5944 = vsub.f32 %v5922, %v5939
        %v5945 = vsub.f32 %v5926, %v5939
        %v5946 = vsub.f32 %v5930, %v5939
        %v5947 = vsub.f32 %v5934, %v5939
        %v5948 = vand.u32 2147483647, %v5940
        %v5949 = vand.u32 2147483647, %v5941
        %v5950 = vand.u32 2147483647, %v5942
        %v5951 = vand.u32 2147483647, %v5943
        %v5952 = vand.u32 2147483647, %v5944
        %v5953 = vand.u32 2147483647, %v5945
        %v5954 = vand.u32 2147483647, %v5946
        %v5955 = vand.u32 2147483647, %v5947
        %v5956 = vadd.f32 %v5896, %v5948
        %v5957 = vadd.f32 %v5897, %v5949
        %v5958 = vadd.f32 %v5898, %v5950
        %v5959 = vadd.f32 %v5899, %v5951
        %v5960 = vadd.f32 %v5900, %v5952
        %v5961 = vadd.f32 %v5901, %v5953
        %v5962 = vadd.f32 %v5902, %v5954
        %v5963 = vadd.f32 %v5903, %v5955
        %v5964 = vld [vmem:[%s174 + $0x60] sm:$0xff]
        %5965 = vset.pattern.permute.xlu0 96
        %5966 = vperm.xlu0 %5965, %v176
        %v5967 = vpop.permute.xlu0 %5966
        %5969 = vset.pattern.permute.xlu0 96
        %5970 = vperm.xlu0 %5969, %v177
        %v5971 = vpop.permute.xlu0 %5970
        %5973 = vset.pattern.permute.xlu0 96
        %5974 = vperm.xlu0 %5973, %v178
        %v5975 = vpop.permute.xlu0 %5974
        %5977 = vset.pattern.permute.xlu0 96
        %5978 = vperm.xlu0 %5977, %v179
        %v5979 = vpop.permute.xlu0 %5978
        %5981 = vset.pattern.permute.xlu0 96
        %5982 = vperm.xlu0 %5981, %v180
        %v5983 = vpop.permute.xlu0 %5982
        %5985 = vset.pattern.permute.xlu0 96
        %5986 = vperm.xlu0 %5985, %v181
        %v5987 = vpop.permute.xlu0 %5986
        %5989 = vset.pattern.permute.xlu0 96
        %5990 = vperm.xlu0 %5989, %v182
        %v5991 = vpop.permute.xlu0 %5990
        %5993 = vset.pattern.permute.xlu0 96
        %5994 = vperm.xlu0 %5993, %v183
        %v5995 = vpop.permute.xlu0 %5994
        %v5997 = vlaneseq
        %v5998 = vshrl.u32 %v5997, 7
        %v5999 = vsub.s32 0, %v5998
        %v6000 = vrot.slane %v5964, %v5999
        %v6001 = vsub.f32 %v5967, %v6000
        %v6002 = vsub.f32 %v5971, %v6000
        %v6003 = vsub.f32 %v5975, %v6000
        %v6004 = vsub.f32 %v5979, %v6000
        %v6005 = vsub.f32 %v5983, %v6000
        %v6006 = vsub.f32 %v5987, %v6000
        %v6007 = vsub.f32 %v5991, %v6000
        %v6008 = vsub.f32 %v5995, %v6000
        %v6009 = vand.u32 2147483647, %v6001
        %v6010 = vand.u32 2147483647, %v6002
        %v6011 = vand.u32 2147483647, %v6003
        %v6012 = vand.u32 2147483647, %v6004
        %v6013 = vand.u32 2147483647, %v6005
        %v6014 = vand.u32 2147483647, %v6006
        %v6015 = vand.u32 2147483647, %v6007
        %v6016 = vand.u32 2147483647, %v6008
        %v6017 = vadd.f32 %v5956, %v6009
        %v6018 = vadd.f32 %v5957, %v6010
        %v6019 = vadd.f32 %v5958, %v6011
        %v6020 = vadd.f32 %v5959, %v6012
        %v6021 = vadd.f32 %v5960, %v6013
        %v6022 = vadd.f32 %v5961, %v6014
        %v6023 = vadd.f32 %v5962, %v6015
        %v6024 = vadd.f32 %v5963, %v6016
        %6025 = vset.pattern.permute.xlu0 97
        %6026 = vperm.xlu0 %6025, %v176
        %v6027 = vpop.permute.xlu0 %6026
        %6029 = vset.pattern.permute.xlu0 97
        %6030 = vperm.xlu0 %6029, %v177
        %v6031 = vpop.permute.xlu0 %6030
        %6033 = vset.pattern.permute.xlu0 97
        %6034 = vperm.xlu0 %6033, %v178
        %v6035 = vpop.permute.xlu0 %6034
        %6037 = vset.pattern.permute.xlu0 97
        %6038 = vperm.xlu0 %6037, %v179
        %v6039 = vpop.permute.xlu0 %6038
        %6041 = vset.pattern.permute.xlu0 97
        %6042 = vperm.xlu0 %6041, %v180
        %v6043 = vpop.permute.xlu0 %6042
        %6045 = vset.pattern.permute.xlu0 97
        %6046 = vperm.xlu0 %6045, %v181
        %v6047 = vpop.permute.xlu0 %6046
        %6049 = vset.pattern.permute.xlu0 97
        %6050 = vperm.xlu0 %6049, %v182
        %v6051 = vpop.permute.xlu0 %6050
        %6053 = vset.pattern.permute.xlu0 97
        %6054 = vperm.xlu0 %6053, %v183
        %v6055 = vpop.permute.xlu0 %6054
        %v6057 = vlaneseq
        %v6058 = vshrl.u32 %v6057, 7
        %v6059 = vsub.s32 1, %v6058
        %v6060 = vrot.slane %v5964, %v6059
        %v6061 = vsub.f32 %v6027, %v6060
        %v6062 = vsub.f32 %v6031, %v6060
        %v6063 = vsub.f32 %v6035, %v6060
        %v6064 = vsub.f32 %v6039, %v6060
        %v6065 = vsub.f32 %v6043, %v6060
        %v6066 = vsub.f32 %v6047, %v6060
        %v6067 = vsub.f32 %v6051, %v6060
        %v6068 = vsub.f32 %v6055, %v6060
        %v6069 = vand.u32 2147483647, %v6061
        %v6070 = vand.u32 2147483647, %v6062
        %v6071 = vand.u32 2147483647, %v6063
        %v6072 = vand.u32 2147483647, %v6064
        %v6073 = vand.u32 2147483647, %v6065
        %v6074 = vand.u32 2147483647, %v6066
        %v6075 = vand.u32 2147483647, %v6067
        %v6076 = vand.u32 2147483647, %v6068
        %v6077 = vadd.f32 %v6017, %v6069
        %v6078 = vadd.f32 %v6018, %v6070
        %v6079 = vadd.f32 %v6019, %v6071
        %v6080 = vadd.f32 %v6020, %v6072
        %v6081 = vadd.f32 %v6021, %v6073
        %v6082 = vadd.f32 %v6022, %v6074
        %v6083 = vadd.f32 %v6023, %v6075
        %v6084 = vadd.f32 %v6024, %v6076
        %6085 = vset.pattern.permute.xlu0 98
        %6086 = vperm.xlu0 %6085, %v176
        %v6087 = vpop.permute.xlu0 %6086
        %6089 = vset.pattern.permute.xlu0 98
        %6090 = vperm.xlu0 %6089, %v177
        %v6091 = vpop.permute.xlu0 %6090
        %6093 = vset.pattern.permute.xlu0 98
        %6094 = vperm.xlu0 %6093, %v178
        %v6095 = vpop.permute.xlu0 %6094
        %6097 = vset.pattern.permute.xlu0 98
        %6098 = vperm.xlu0 %6097, %v179
        %v6099 = vpop.permute.xlu0 %6098
        %6101 = vset.pattern.permute.xlu0 98
        %6102 = vperm.xlu0 %6101, %v180
        %v6103 = vpop.permute.xlu0 %6102
        %6105 = vset.pattern.permute.xlu0 98
        %6106 = vperm.xlu0 %6105, %v181
        %v6107 = vpop.permute.xlu0 %6106
        %6109 = vset.pattern.permute.xlu0 98
        %6110 = vperm.xlu0 %6109, %v182
        %v6111 = vpop.permute.xlu0 %6110
        %6113 = vset.pattern.permute.xlu0 98
        %6114 = vperm.xlu0 %6113, %v183
        %v6115 = vpop.permute.xlu0 %6114
        %v6117 = vlaneseq
        %v6118 = vshrl.u32 %v6117, 7
        %v6119 = vsub.s32 2, %v6118
        %v6120 = vrot.slane %v5964, %v6119
        %v6121 = vsub.f32 %v6087, %v6120
        %v6122 = vsub.f32 %v6091, %v6120
        %v6123 = vsub.f32 %v6095, %v6120
        %v6124 = vsub.f32 %v6099, %v6120
        %v6125 = vsub.f32 %v6103, %v6120
        %v6126 = vsub.f32 %v6107, %v6120
        %v6127 = vsub.f32 %v6111, %v6120
        %v6128 = vsub.f32 %v6115, %v6120
        %v6129 = vand.u32 2147483647, %v6121
        %v6130 = vand.u32 2147483647, %v6122
        %v6131 = vand.u32 2147483647, %v6123
        %v6132 = vand.u32 2147483647, %v6124
        %v6133 = vand.u32 2147483647, %v6125
        %v6134 = vand.u32 2147483647, %v6126
        %v6135 = vand.u32 2147483647, %v6127
        %v6136 = vand.u32 2147483647, %v6128
        %v6137 = vadd.f32 %v6077, %v6129
        %v6138 = vadd.f32 %v6078, %v6130
        %v6139 = vadd.f32 %v6079, %v6131
        %v6140 = vadd.f32 %v6080, %v6132
        %v6141 = vadd.f32 %v6081, %v6133
        %v6142 = vadd.f32 %v6082, %v6134
        %v6143 = vadd.f32 %v6083, %v6135
        %v6144 = vadd.f32 %v6084, %v6136
        %6145 = vset.pattern.permute.xlu0 99
        %6146 = vperm.xlu0 %6145, %v176
        %v6147 = vpop.permute.xlu0 %6146
        %6149 = vset.pattern.permute.xlu0 99
        %6150 = vperm.xlu0 %6149, %v177
        %v6151 = vpop.permute.xlu0 %6150
        %6153 = vset.pattern.permute.xlu0 99
        %6154 = vperm.xlu0 %6153, %v178
        %v6155 = vpop.permute.xlu0 %6154
        %6157 = vset.pattern.permute.xlu0 99
        %6158 = vperm.xlu0 %6157, %v179
        %v6159 = vpop.permute.xlu0 %6158
        %6161 = vset.pattern.permute.xlu0 99
        %6162 = vperm.xlu0 %6161, %v180
        %v6163 = vpop.permute.xlu0 %6162
        %6165 = vset.pattern.permute.xlu0 99
        %6166 = vperm.xlu0 %6165, %v181
        %v6167 = vpop.permute.xlu0 %6166
        %6169 = vset.pattern.permute.xlu0 99
        %6170 = vperm.xlu0 %6169, %v182
        %v6171 = vpop.permute.xlu0 %6170
        %6173 = vset.pattern.permute.xlu0 99
        %6174 = vperm.xlu0 %6173, %v183
        %v6175 = vpop.permute.xlu0 %6174
        %v6177 = vlaneseq
        %v6178 = vshrl.u32 %v6177, 7
        %v6179 = vsub.s32 3, %v6178
        %v6180 = vrot.slane %v5964, %v6179
        %v6181 = vsub.f32 %v6147, %v6180
        %v6182 = vsub.f32 %v6151, %v6180
        %v6183 = vsub.f32 %v6155, %v6180
        %v6184 = vsub.f32 %v6159, %v6180
        %v6185 = vsub.f32 %v6163, %v6180
        %v6186 = vsub.f32 %v6167, %v6180
        %v6187 = vsub.f32 %v6171, %v6180
        %v6188 = vsub.f32 %v6175, %v6180
        %v6189 = vand.u32 2147483647, %v6181
        %v6190 = vand.u32 2147483647, %v6182
        %v6191 = vand.u32 2147483647, %v6183
        %v6192 = vand.u32 2147483647, %v6184
        %v6193 = vand.u32 2147483647, %v6185
        %v6194 = vand.u32 2147483647, %v6186
        %v6195 = vand.u32 2147483647, %v6187
        %v6196 = vand.u32 2147483647, %v6188
        %v6197 = vadd.f32 %v6137, %v6189
        %v6198 = vadd.f32 %v6138, %v6190
        %v6199 = vadd.f32 %v6139, %v6191
        %v6200 = vadd.f32 %v6140, %v6192
        %v6201 = vadd.f32 %v6141, %v6193
        %v6202 = vadd.f32 %v6142, %v6194
        %v6203 = vadd.f32 %v6143, %v6195
        %v6204 = vadd.f32 %v6144, %v6196
        %6205 = vset.pattern.permute.xlu0 100
        %6206 = vperm.xlu0 %6205, %v176
        %v6207 = vpop.permute.xlu0 %6206
        %6209 = vset.pattern.permute.xlu0 100
        %6210 = vperm.xlu0 %6209, %v177
        %v6211 = vpop.permute.xlu0 %6210
        %6213 = vset.pattern.permute.xlu0 100
        %6214 = vperm.xlu0 %6213, %v178
        %v6215 = vpop.permute.xlu0 %6214
        %6217 = vset.pattern.permute.xlu0 100
        %6218 = vperm.xlu0 %6217, %v179
        %v6219 = vpop.permute.xlu0 %6218
        %6221 = vset.pattern.permute.xlu0 100
        %6222 = vperm.xlu0 %6221, %v180
        %v6223 = vpop.permute.xlu0 %6222
        %6225 = vset.pattern.permute.xlu0 100
        %6226 = vperm.xlu0 %6225, %v181
        %v6227 = vpop.permute.xlu0 %6226
        %6229 = vset.pattern.permute.xlu0 100
        %6230 = vperm.xlu0 %6229, %v182
        %v6231 = vpop.permute.xlu0 %6230
        %6233 = vset.pattern.permute.xlu0 100
        %6234 = vperm.xlu0 %6233, %v183
        %v6235 = vpop.permute.xlu0 %6234
        %v6237 = vlaneseq
        %v6238 = vshrl.u32 %v6237, 7
        %v6239 = vsub.s32 4, %v6238
        %v6240 = vrot.slane %v5964, %v6239
        %v6241 = vsub.f32 %v6207, %v6240
        %v6242 = vsub.f32 %v6211, %v6240
        %v6243 = vsub.f32 %v6215, %v6240
        %v6244 = vsub.f32 %v6219, %v6240
        %v6245 = vsub.f32 %v6223, %v6240
        %v6246 = vsub.f32 %v6227, %v6240
        %v6247 = vsub.f32 %v6231, %v6240
        %v6248 = vsub.f32 %v6235, %v6240
        %v6249 = vand.u32 2147483647, %v6241
        %v6250 = vand.u32 2147483647, %v6242
        %v6251 = vand.u32 2147483647, %v6243
        %v6252 = vand.u32 2147483647, %v6244
        %v6253 = vand.u32 2147483647, %v6245
        %v6254 = vand.u32 2147483647, %v6246
        %v6255 = vand.u32 2147483647, %v6247
        %v6256 = vand.u32 2147483647, %v6248
        %v6257 = vadd.f32 %v6197, %v6249
        %v6258 = vadd.f32 %v6198, %v6250
        %v6259 = vadd.f32 %v6199, %v6251
        %v6260 = vadd.f32 %v6200, %v6252
        %v6261 = vadd.f32 %v6201, %v6253
        %v6262 = vadd.f32 %v6202, %v6254
        %v6263 = vadd.f32 %v6203, %v6255
        %v6264 = vadd.f32 %v6204, %v6256
        %6265 = vset.pattern.permute.xlu0 101
        %6266 = vperm.xlu0 %6265, %v176
        %v6267 = vpop.permute.xlu0 %6266
        %6269 = vset.pattern.permute.xlu0 101
        %6270 = vperm.xlu0 %6269, %v177
        %v6271 = vpop.permute.xlu0 %6270
        %6273 = vset.pattern.permute.xlu0 101
        %6274 = vperm.xlu0 %6273, %v178
        %v6275 = vpop.permute.xlu0 %6274
        %6277 = vset.pattern.permute.xlu0 101
        %6278 = vperm.xlu0 %6277, %v179
        %v6279 = vpop.permute.xlu0 %6278
        %6281 = vset.pattern.permute.xlu0 101
        %6282 = vperm.xlu0 %6281, %v180
        %v6283 = vpop.permute.xlu0 %6282
        %6285 = vset.pattern.permute.xlu0 101
        %6286 = vperm.xlu0 %6285, %v181
        %v6287 = vpop.permute.xlu0 %6286
        %6289 = vset.pattern.permute.xlu0 101
        %6290 = vperm.xlu0 %6289, %v182
        %v6291 = vpop.permute.xlu0 %6290
        %6293 = vset.pattern.permute.xlu0 101
        %6294 = vperm.xlu0 %6293, %v183
        %v6295 = vpop.permute.xlu0 %6294
        %v6297 = vlaneseq
        %v6298 = vshrl.u32 %v6297, 7
        %v6299 = vsub.s32 5, %v6298
        %v6300 = vrot.slane %v5964, %v6299
        %v6301 = vsub.f32 %v6267, %v6300
        %v6302 = vsub.f32 %v6271, %v6300
        %v6303 = vsub.f32 %v6275, %v6300
        %v6304 = vsub.f32 %v6279, %v6300
        %v6305 = vsub.f32 %v6283, %v6300
        %v6306 = vsub.f32 %v6287, %v6300
        %v6307 = vsub.f32 %v6291, %v6300
        %v6308 = vsub.f32 %v6295, %v6300
        %v6309 = vand.u32 2147483647, %v6301
        %v6310 = vand.u32 2147483647, %v6302
        %v6311 = vand.u32 2147483647, %v6303
        %v6312 = vand.u32 2147483647, %v6304
        %v6313 = vand.u32 2147483647, %v6305
        %v6314 = vand.u32 2147483647, %v6306
        %v6315 = vand.u32 2147483647, %v6307
        %v6316 = vand.u32 2147483647, %v6308
        %v6317 = vadd.f32 %v6257, %v6309
        %v6318 = vadd.f32 %v6258, %v6310
        %v6319 = vadd.f32 %v6259, %v6311
        %v6320 = vadd.f32 %v6260, %v6312
        %v6321 = vadd.f32 %v6261, %v6313
        %v6322 = vadd.f32 %v6262, %v6314
        %v6323 = vadd.f32 %v6263, %v6315
        %v6324 = vadd.f32 %v6264, %v6316
        %6325 = vset.pattern.permute.xlu0 102
        %6326 = vperm.xlu0 %6325, %v176
        %v6327 = vpop.permute.xlu0 %6326
        %6329 = vset.pattern.permute.xlu0 102
        %6330 = vperm.xlu0 %6329, %v177
        %v6331 = vpop.permute.xlu0 %6330
        %6333 = vset.pattern.permute.xlu0 102
        %6334 = vperm.xlu0 %6333, %v178
        %v6335 = vpop.permute.xlu0 %6334
        %6337 = vset.pattern.permute.xlu0 102
        %6338 = vperm.xlu0 %6337, %v179
        %v6339 = vpop.permute.xlu0 %6338
        %6341 = vset.pattern.permute.xlu0 102
        %6342 = vperm.xlu0 %6341, %v180
        %v6343 = vpop.permute.xlu0 %6342
        %6345 = vset.pattern.permute.xlu0 102
        %6346 = vperm.xlu0 %6345, %v181
        %v6347 = vpop.permute.xlu0 %6346
        %6349 = vset.pattern.permute.xlu0 102
        %6350 = vperm.xlu0 %6349, %v182
        %v6351 = vpop.permute.xlu0 %6350
        %6353 = vset.pattern.permute.xlu0 102
        %6354 = vperm.xlu0 %6353, %v183
        %v6355 = vpop.permute.xlu0 %6354
        %v6357 = vlaneseq
        %v6358 = vshrl.u32 %v6357, 7
        %v6359 = vsub.s32 6, %v6358
        %v6360 = vrot.slane %v5964, %v6359
        %v6361 = vsub.f32 %v6327, %v6360
        %v6362 = vsub.f32 %v6331, %v6360
        %v6363 = vsub.f32 %v6335, %v6360
        %v6364 = vsub.f32 %v6339, %v6360
        %v6365 = vsub.f32 %v6343, %v6360
        %v6366 = vsub.f32 %v6347, %v6360
        %v6367 = vsub.f32 %v6351, %v6360
        %v6368 = vsub.f32 %v6355, %v6360
        %v6369 = vand.u32 2147483647, %v6361
        %v6370 = vand.u32 2147483647, %v6362
        %v6371 = vand.u32 2147483647, %v6363
        %v6372 = vand.u32 2147483647, %v6364
        %v6373 = vand.u32 2147483647, %v6365
        %v6374 = vand.u32 2147483647, %v6366
        %v6375 = vand.u32 2147483647, %v6367
        %v6376 = vand.u32 2147483647, %v6368
        %v6377 = vadd.f32 %v6317, %v6369
        %v6378 = vadd.f32 %v6318, %v6370
        %v6379 = vadd.f32 %v6319, %v6371
        %v6380 = vadd.f32 %v6320, %v6372
        %v6381 = vadd.f32 %v6321, %v6373
        %v6382 = vadd.f32 %v6322, %v6374
        %v6383 = vadd.f32 %v6323, %v6375
        %v6384 = vadd.f32 %v6324, %v6376
        %6385 = vset.pattern.permute.xlu0 103
        %6386 = vperm.xlu0 %6385, %v176
        %v6387 = vpop.permute.xlu0 %6386
        %6389 = vset.pattern.permute.xlu0 103
        %6390 = vperm.xlu0 %6389, %v177
        %v6391 = vpop.permute.xlu0 %6390
        %6393 = vset.pattern.permute.xlu0 103
        %6394 = vperm.xlu0 %6393, %v178
        %v6395 = vpop.permute.xlu0 %6394
        %6397 = vset.pattern.permute.xlu0 103
        %6398 = vperm.xlu0 %6397, %v179
        %v6399 = vpop.permute.xlu0 %6398
        %6401 = vset.pattern.permute.xlu0 103
        %6402 = vperm.xlu0 %6401, %v180
        %v6403 = vpop.permute.xlu0 %6402
        %6405 = vset.pattern.permute.xlu0 103
        %6406 = vperm.xlu0 %6405, %v181
        %v6407 = vpop.permute.xlu0 %6406
        %6409 = vset.pattern.permute.xlu0 103
        %6410 = vperm.xlu0 %6409, %v182
        %v6411 = vpop.permute.xlu0 %6410
        %6413 = vset.pattern.permute.xlu0 103
        %6414 = vperm.xlu0 %6413, %v183
        %v6415 = vpop.permute.xlu0 %6414
        %v6417 = vlaneseq
        %v6418 = vshrl.u32 %v6417, 7
        %v6419 = vsub.s32 7, %v6418
        %v6420 = vrot.slane %v5964, %v6419
        %v6421 = vsub.f32 %v6387, %v6420
        %v6422 = vsub.f32 %v6391, %v6420
        %v6423 = vsub.f32 %v6395, %v6420
        %v6424 = vsub.f32 %v6399, %v6420
        %v6425 = vsub.f32 %v6403, %v6420
        %v6426 = vsub.f32 %v6407, %v6420
        %v6427 = vsub.f32 %v6411, %v6420
        %v6428 = vsub.f32 %v6415, %v6420
        %v6429 = vand.u32 2147483647, %v6421
        %v6430 = vand.u32 2147483647, %v6422
        %v6431 = vand.u32 2147483647, %v6423
        %v6432 = vand.u32 2147483647, %v6424
        %v6433 = vand.u32 2147483647, %v6425
        %v6434 = vand.u32 2147483647, %v6426
        %v6435 = vand.u32 2147483647, %v6427
        %v6436 = vand.u32 2147483647, %v6428
        %v6437 = vadd.f32 %v6377, %v6429
        %v6438 = vadd.f32 %v6378, %v6430
        %v6439 = vadd.f32 %v6379, %v6431
        %v6440 = vadd.f32 %v6380, %v6432
        %v6441 = vadd.f32 %v6381, %v6433
        %v6442 = vadd.f32 %v6382, %v6434
        %v6443 = vadd.f32 %v6383, %v6435
        %v6444 = vadd.f32 %v6384, %v6436
        %v6445 = vld [vmem:[%s174 + $0x68] sm:$0xff]
        %6446 = vset.pattern.permute.xlu0 104
        %6447 = vperm.xlu0 %6446, %v176
        %v6448 = vpop.permute.xlu0 %6447
        %6450 = vset.pattern.permute.xlu0 104
        %6451 = vperm.xlu0 %6450, %v177
        %v6452 = vpop.permute.xlu0 %6451
        %6454 = vset.pattern.permute.xlu0 104
        %6455 = vperm.xlu0 %6454, %v178
        %v6456 = vpop.permute.xlu0 %6455
        %6458 = vset.pattern.permute.xlu0 104
        %6459 = vperm.xlu0 %6458, %v179
        %v6460 = vpop.permute.xlu0 %6459
        %6462 = vset.pattern.permute.xlu0 104
        %6463 = vperm.xlu0 %6462, %v180
        %v6464 = vpop.permute.xlu0 %6463
        %6466 = vset.pattern.permute.xlu0 104
        %6467 = vperm.xlu0 %6466, %v181
        %v6468 = vpop.permute.xlu0 %6467
        %6470 = vset.pattern.permute.xlu0 104
        %6471 = vperm.xlu0 %6470, %v182
        %v6472 = vpop.permute.xlu0 %6471
        %6474 = vset.pattern.permute.xlu0 104
        %6475 = vperm.xlu0 %6474, %v183
        %v6476 = vpop.permute.xlu0 %6475
        %v6478 = vlaneseq
        %v6479 = vshrl.u32 %v6478, 7
        %v6480 = vsub.s32 0, %v6479
        %v6481 = vrot.slane %v6445, %v6480
        %v6482 = vsub.f32 %v6448, %v6481
        %v6483 = vsub.f32 %v6452, %v6481
        %v6484 = vsub.f32 %v6456, %v6481
        %v6485 = vsub.f32 %v6460, %v6481
        %v6486 = vsub.f32 %v6464, %v6481
        %v6487 = vsub.f32 %v6468, %v6481
        %v6488 = vsub.f32 %v6472, %v6481
        %v6489 = vsub.f32 %v6476, %v6481
        %v6490 = vand.u32 2147483647, %v6482
        %v6491 = vand.u32 2147483647, %v6483
        %v6492 = vand.u32 2147483647, %v6484
        %v6493 = vand.u32 2147483647, %v6485
        %v6494 = vand.u32 2147483647, %v6486
        %v6495 = vand.u32 2147483647, %v6487
        %v6496 = vand.u32 2147483647, %v6488
        %v6497 = vand.u32 2147483647, %v6489
        %v6498 = vadd.f32 %v6437, %v6490
        %v6499 = vadd.f32 %v6438, %v6491
        %v6500 = vadd.f32 %v6439, %v6492
        %v6501 = vadd.f32 %v6440, %v6493
        %v6502 = vadd.f32 %v6441, %v6494
        %v6503 = vadd.f32 %v6442, %v6495
        %v6504 = vadd.f32 %v6443, %v6496
        %v6505 = vadd.f32 %v6444, %v6497
        %6506 = vset.pattern.permute.xlu0 105
        %6507 = vperm.xlu0 %6506, %v176
        %v6508 = vpop.permute.xlu0 %6507
        %6510 = vset.pattern.permute.xlu0 105
        %6511 = vperm.xlu0 %6510, %v177
        %v6512 = vpop.permute.xlu0 %6511
        %6514 = vset.pattern.permute.xlu0 105
        %6515 = vperm.xlu0 %6514, %v178
        %v6516 = vpop.permute.xlu0 %6515
        %6518 = vset.pattern.permute.xlu0 105
        %6519 = vperm.xlu0 %6518, %v179
        %v6520 = vpop.permute.xlu0 %6519
        %6522 = vset.pattern.permute.xlu0 105
        %6523 = vperm.xlu0 %6522, %v180
        %v6524 = vpop.permute.xlu0 %6523
        %6526 = vset.pattern.permute.xlu0 105
        %6527 = vperm.xlu0 %6526, %v181
        %v6528 = vpop.permute.xlu0 %6527
        %6530 = vset.pattern.permute.xlu0 105
        %6531 = vperm.xlu0 %6530, %v182
        %v6532 = vpop.permute.xlu0 %6531
        %6534 = vset.pattern.permute.xlu0 105
        %6535 = vperm.xlu0 %6534, %v183
        %v6536 = vpop.permute.xlu0 %6535
        %v6538 = vlaneseq
        %v6539 = vshrl.u32 %v6538, 7
        %v6540 = vsub.s32 1, %v6539
        %v6541 = vrot.slane %v6445, %v6540
        %v6542 = vsub.f32 %v6508, %v6541
        %v6543 = vsub.f32 %v6512, %v6541
        %v6544 = vsub.f32 %v6516, %v6541
        %v6545 = vsub.f32 %v6520, %v6541
        %v6546 = vsub.f32 %v6524, %v6541
        %v6547 = vsub.f32 %v6528, %v6541
        %v6548 = vsub.f32 %v6532, %v6541
        %v6549 = vsub.f32 %v6536, %v6541
        %v6550 = vand.u32 2147483647, %v6542
        %v6551 = vand.u32 2147483647, %v6543
        %v6552 = vand.u32 2147483647, %v6544
        %v6553 = vand.u32 2147483647, %v6545
        %v6554 = vand.u32 2147483647, %v6546
        %v6555 = vand.u32 2147483647, %v6547
        %v6556 = vand.u32 2147483647, %v6548
        %v6557 = vand.u32 2147483647, %v6549
        %v6558 = vadd.f32 %v6498, %v6550
        %v6559 = vadd.f32 %v6499, %v6551
        %v6560 = vadd.f32 %v6500, %v6552
        %v6561 = vadd.f32 %v6501, %v6553
        %v6562 = vadd.f32 %v6502, %v6554
        %v6563 = vadd.f32 %v6503, %v6555
        %v6564 = vadd.f32 %v6504, %v6556
        %v6565 = vadd.f32 %v6505, %v6557
        %6566 = vset.pattern.permute.xlu0 106
        %6567 = vperm.xlu0 %6566, %v176
        %v6568 = vpop.permute.xlu0 %6567
        %6570 = vset.pattern.permute.xlu0 106
        %6571 = vperm.xlu0 %6570, %v177
        %v6572 = vpop.permute.xlu0 %6571
        %6574 = vset.pattern.permute.xlu0 106
        %6575 = vperm.xlu0 %6574, %v178
        %v6576 = vpop.permute.xlu0 %6575
        %6578 = vset.pattern.permute.xlu0 106
        %6579 = vperm.xlu0 %6578, %v179
        %v6580 = vpop.permute.xlu0 %6579
        %6582 = vset.pattern.permute.xlu0 106
        %6583 = vperm.xlu0 %6582, %v180
        %v6584 = vpop.permute.xlu0 %6583
        %6586 = vset.pattern.permute.xlu0 106
        %6587 = vperm.xlu0 %6586, %v181
        %v6588 = vpop.permute.xlu0 %6587
        %6590 = vset.pattern.permute.xlu0 106
        %6591 = vperm.xlu0 %6590, %v182
        %v6592 = vpop.permute.xlu0 %6591
        %6594 = vset.pattern.permute.xlu0 106
        %6595 = vperm.xlu0 %6594, %v183
        %v6596 = vpop.permute.xlu0 %6595
        %v6598 = vlaneseq
        %v6599 = vshrl.u32 %v6598, 7
        %v6600 = vsub.s32 2, %v6599
        %v6601 = vrot.slane %v6445, %v6600
        %v6602 = vsub.f32 %v6568, %v6601
        %v6603 = vsub.f32 %v6572, %v6601
        %v6604 = vsub.f32 %v6576, %v6601
        %v6605 = vsub.f32 %v6580, %v6601
        %v6606 = vsub.f32 %v6584, %v6601
        %v6607 = vsub.f32 %v6588, %v6601
        %v6608 = vsub.f32 %v6592, %v6601
        %v6609 = vsub.f32 %v6596, %v6601
        %v6610 = vand.u32 2147483647, %v6602
        %v6611 = vand.u32 2147483647, %v6603
        %v6612 = vand.u32 2147483647, %v6604
        %v6613 = vand.u32 2147483647, %v6605
        %v6614 = vand.u32 2147483647, %v6606
        %v6615 = vand.u32 2147483647, %v6607
        %v6616 = vand.u32 2147483647, %v6608
        %v6617 = vand.u32 2147483647, %v6609
        %v6618 = vadd.f32 %v6558, %v6610
        %v6619 = vadd.f32 %v6559, %v6611
        %v6620 = vadd.f32 %v6560, %v6612
        %v6621 = vadd.f32 %v6561, %v6613
        %v6622 = vadd.f32 %v6562, %v6614
        %v6623 = vadd.f32 %v6563, %v6615
        %v6624 = vadd.f32 %v6564, %v6616
        %v6625 = vadd.f32 %v6565, %v6617
        %6626 = vset.pattern.permute.xlu0 107
        %6627 = vperm.xlu0 %6626, %v176
        %v6628 = vpop.permute.xlu0 %6627
        %6630 = vset.pattern.permute.xlu0 107
        %6631 = vperm.xlu0 %6630, %v177
        %v6632 = vpop.permute.xlu0 %6631
        %6634 = vset.pattern.permute.xlu0 107
        %6635 = vperm.xlu0 %6634, %v178
        %v6636 = vpop.permute.xlu0 %6635
        %6638 = vset.pattern.permute.xlu0 107
        %6639 = vperm.xlu0 %6638, %v179
        %v6640 = vpop.permute.xlu0 %6639
        %6642 = vset.pattern.permute.xlu0 107
        %6643 = vperm.xlu0 %6642, %v180
        %v6644 = vpop.permute.xlu0 %6643
        %6646 = vset.pattern.permute.xlu0 107
        %6647 = vperm.xlu0 %6646, %v181
        %v6648 = vpop.permute.xlu0 %6647
        %6650 = vset.pattern.permute.xlu0 107
        %6651 = vperm.xlu0 %6650, %v182
        %v6652 = vpop.permute.xlu0 %6651
        %6654 = vset.pattern.permute.xlu0 107
        %6655 = vperm.xlu0 %6654, %v183
        %v6656 = vpop.permute.xlu0 %6655
        %v6658 = vlaneseq
        %v6659 = vshrl.u32 %v6658, 7
        %v6660 = vsub.s32 3, %v6659
        %v6661 = vrot.slane %v6445, %v6660
        %v6662 = vsub.f32 %v6628, %v6661
        %v6663 = vsub.f32 %v6632, %v6661
        %v6664 = vsub.f32 %v6636, %v6661
        %v6665 = vsub.f32 %v6640, %v6661
        %v6666 = vsub.f32 %v6644, %v6661
        %v6667 = vsub.f32 %v6648, %v6661
        %v6668 = vsub.f32 %v6652, %v6661
        %v6669 = vsub.f32 %v6656, %v6661
        %v6670 = vand.u32 2147483647, %v6662
        %v6671 = vand.u32 2147483647, %v6663
        %v6672 = vand.u32 2147483647, %v6664
        %v6673 = vand.u32 2147483647, %v6665
        %v6674 = vand.u32 2147483647, %v6666
        %v6675 = vand.u32 2147483647, %v6667
        %v6676 = vand.u32 2147483647, %v6668
        %v6677 = vand.u32 2147483647, %v6669
        %v6678 = vadd.f32 %v6618, %v6670
        %v6679 = vadd.f32 %v6619, %v6671
        %v6680 = vadd.f32 %v6620, %v6672
        %v6681 = vadd.f32 %v6621, %v6673
        %v6682 = vadd.f32 %v6622, %v6674
        %v6683 = vadd.f32 %v6623, %v6675
        %v6684 = vadd.f32 %v6624, %v6676
        %v6685 = vadd.f32 %v6625, %v6677
        %6686 = vset.pattern.permute.xlu0 108
        %6687 = vperm.xlu0 %6686, %v176
        %v6688 = vpop.permute.xlu0 %6687
        %6690 = vset.pattern.permute.xlu0 108
        %6691 = vperm.xlu0 %6690, %v177
        %v6692 = vpop.permute.xlu0 %6691
        %6694 = vset.pattern.permute.xlu0 108
        %6695 = vperm.xlu0 %6694, %v178
        %v6696 = vpop.permute.xlu0 %6695
        %6698 = vset.pattern.permute.xlu0 108
        %6699 = vperm.xlu0 %6698, %v179
        %v6700 = vpop.permute.xlu0 %6699
        %6702 = vset.pattern.permute.xlu0 108
        %6703 = vperm.xlu0 %6702, %v180
        %v6704 = vpop.permute.xlu0 %6703
        %6706 = vset.pattern.permute.xlu0 108
        %6707 = vperm.xlu0 %6706, %v181
        %v6708 = vpop.permute.xlu0 %6707
        %6710 = vset.pattern.permute.xlu0 108
        %6711 = vperm.xlu0 %6710, %v182
        %v6712 = vpop.permute.xlu0 %6711
        %6714 = vset.pattern.permute.xlu0 108
        %6715 = vperm.xlu0 %6714, %v183
        %v6716 = vpop.permute.xlu0 %6715
        %v6718 = vlaneseq
        %v6719 = vshrl.u32 %v6718, 7
        %v6720 = vsub.s32 4, %v6719
        %v6721 = vrot.slane %v6445, %v6720
        %v6722 = vsub.f32 %v6688, %v6721
        %v6723 = vsub.f32 %v6692, %v6721
        %v6724 = vsub.f32 %v6696, %v6721
        %v6725 = vsub.f32 %v6700, %v6721
        %v6726 = vsub.f32 %v6704, %v6721
        %v6727 = vsub.f32 %v6708, %v6721
        %v6728 = vsub.f32 %v6712, %v6721
        %v6729 = vsub.f32 %v6716, %v6721
        %v6730 = vand.u32 2147483647, %v6722
        %v6731 = vand.u32 2147483647, %v6723
        %v6732 = vand.u32 2147483647, %v6724
        %v6733 = vand.u32 2147483647, %v6725
        %v6734 = vand.u32 2147483647, %v6726
        %v6735 = vand.u32 2147483647, %v6727
        %v6736 = vand.u32 2147483647, %v6728
        %v6737 = vand.u32 2147483647, %v6729
        %v6738 = vadd.f32 %v6678, %v6730
        %v6739 = vadd.f32 %v6679, %v6731
        %v6740 = vadd.f32 %v6680, %v6732
        %v6741 = vadd.f32 %v6681, %v6733
        %v6742 = vadd.f32 %v6682, %v6734
        %v6743 = vadd.f32 %v6683, %v6735
        %v6744 = vadd.f32 %v6684, %v6736
        %v6745 = vadd.f32 %v6685, %v6737
        %6746 = vset.pattern.permute.xlu0 109
        %6747 = vperm.xlu0 %6746, %v176
        %v6748 = vpop.permute.xlu0 %6747
        %6750 = vset.pattern.permute.xlu0 109
        %6751 = vperm.xlu0 %6750, %v177
        %v6752 = vpop.permute.xlu0 %6751
        %6754 = vset.pattern.permute.xlu0 109
        %6755 = vperm.xlu0 %6754, %v178
        %v6756 = vpop.permute.xlu0 %6755
        %6758 = vset.pattern.permute.xlu0 109
        %6759 = vperm.xlu0 %6758, %v179
        %v6760 = vpop.permute.xlu0 %6759
        %6762 = vset.pattern.permute.xlu0 109
        %6763 = vperm.xlu0 %6762, %v180
        %v6764 = vpop.permute.xlu0 %6763
        %6766 = vset.pattern.permute.xlu0 109
        %6767 = vperm.xlu0 %6766, %v181
        %v6768 = vpop.permute.xlu0 %6767
        %6770 = vset.pattern.permute.xlu0 109
        %6771 = vperm.xlu0 %6770, %v182
        %v6772 = vpop.permute.xlu0 %6771
        %6774 = vset.pattern.permute.xlu0 109
        %6775 = vperm.xlu0 %6774, %v183
        %v6776 = vpop.permute.xlu0 %6775
        %v6778 = vlaneseq
        %v6779 = vshrl.u32 %v6778, 7
        %v6780 = vsub.s32 5, %v6779
        %v6781 = vrot.slane %v6445, %v6780
        %v6782 = vsub.f32 %v6748, %v6781
        %v6783 = vsub.f32 %v6752, %v6781
        %v6784 = vsub.f32 %v6756, %v6781
        %v6785 = vsub.f32 %v6760, %v6781
        %v6786 = vsub.f32 %v6764, %v6781
        %v6787 = vsub.f32 %v6768, %v6781
        %v6788 = vsub.f32 %v6772, %v6781
        %v6789 = vsub.f32 %v6776, %v6781
        %v6790 = vand.u32 2147483647, %v6782
        %v6791 = vand.u32 2147483647, %v6783
        %v6792 = vand.u32 2147483647, %v6784
        %v6793 = vand.u32 2147483647, %v6785
        %v6794 = vand.u32 2147483647, %v6786
        %v6795 = vand.u32 2147483647, %v6787
        %v6796 = vand.u32 2147483647, %v6788
        %v6797 = vand.u32 2147483647, %v6789
        %v6798 = vadd.f32 %v6738, %v6790
        %v6799 = vadd.f32 %v6739, %v6791
        %v6800 = vadd.f32 %v6740, %v6792
        %v6801 = vadd.f32 %v6741, %v6793
        %v6802 = vadd.f32 %v6742, %v6794
        %v6803 = vadd.f32 %v6743, %v6795
        %v6804 = vadd.f32 %v6744, %v6796
        %v6805 = vadd.f32 %v6745, %v6797
        %6806 = vset.pattern.permute.xlu0 110
        %6807 = vperm.xlu0 %6806, %v176
        %v6808 = vpop.permute.xlu0 %6807
        %6810 = vset.pattern.permute.xlu0 110
        %6811 = vperm.xlu0 %6810, %v177
        %v6812 = vpop.permute.xlu0 %6811
        %6814 = vset.pattern.permute.xlu0 110
        %6815 = vperm.xlu0 %6814, %v178
        %v6816 = vpop.permute.xlu0 %6815
        %6818 = vset.pattern.permute.xlu0 110
        %6819 = vperm.xlu0 %6818, %v179
        %v6820 = vpop.permute.xlu0 %6819
        %6822 = vset.pattern.permute.xlu0 110
        %6823 = vperm.xlu0 %6822, %v180
        %v6824 = vpop.permute.xlu0 %6823
        %6826 = vset.pattern.permute.xlu0 110
        %6827 = vperm.xlu0 %6826, %v181
        %v6828 = vpop.permute.xlu0 %6827
        %6830 = vset.pattern.permute.xlu0 110
        %6831 = vperm.xlu0 %6830, %v182
        %v6832 = vpop.permute.xlu0 %6831
        %6834 = vset.pattern.permute.xlu0 110
        %6835 = vperm.xlu0 %6834, %v183
        %v6836 = vpop.permute.xlu0 %6835
        %v6838 = vlaneseq
        %v6839 = vshrl.u32 %v6838, 7
        %v6840 = vsub.s32 6, %v6839
        %v6841 = vrot.slane %v6445, %v6840
        %v6842 = vsub.f32 %v6808, %v6841
        %v6843 = vsub.f32 %v6812, %v6841
        %v6844 = vsub.f32 %v6816, %v6841
        %v6845 = vsub.f32 %v6820, %v6841
        %v6846 = vsub.f32 %v6824, %v6841
        %v6847 = vsub.f32 %v6828, %v6841
        %v6848 = vsub.f32 %v6832, %v6841
        %v6849 = vsub.f32 %v6836, %v6841
        %v6850 = vand.u32 2147483647, %v6842
        %v6851 = vand.u32 2147483647, %v6843
        %v6852 = vand.u32 2147483647, %v6844
        %v6853 = vand.u32 2147483647, %v6845
        %v6854 = vand.u32 2147483647, %v6846
        %v6855 = vand.u32 2147483647, %v6847
        %v6856 = vand.u32 2147483647, %v6848
        %v6857 = vand.u32 2147483647, %v6849
        %v6858 = vadd.f32 %v6798, %v6850
        %v6859 = vadd.f32 %v6799, %v6851
        %v6860 = vadd.f32 %v6800, %v6852
        %v6861 = vadd.f32 %v6801, %v6853
        %v6862 = vadd.f32 %v6802, %v6854
        %v6863 = vadd.f32 %v6803, %v6855
        %v6864 = vadd.f32 %v6804, %v6856
        %v6865 = vadd.f32 %v6805, %v6857
        %6866 = vset.pattern.permute.xlu0 111
        %6867 = vperm.xlu0 %6866, %v176
        %v6868 = vpop.permute.xlu0 %6867
        %6870 = vset.pattern.permute.xlu0 111
        %6871 = vperm.xlu0 %6870, %v177
        %v6872 = vpop.permute.xlu0 %6871
        %6874 = vset.pattern.permute.xlu0 111
        %6875 = vperm.xlu0 %6874, %v178
        %v6876 = vpop.permute.xlu0 %6875
        %6878 = vset.pattern.permute.xlu0 111
        %6879 = vperm.xlu0 %6878, %v179
        %v6880 = vpop.permute.xlu0 %6879
        %6882 = vset.pattern.permute.xlu0 111
        %6883 = vperm.xlu0 %6882, %v180
        %v6884 = vpop.permute.xlu0 %6883
        %6886 = vset.pattern.permute.xlu0 111
        %6887 = vperm.xlu0 %6886, %v181
        %v6888 = vpop.permute.xlu0 %6887
        %6890 = vset.pattern.permute.xlu0 111
        %6891 = vperm.xlu0 %6890, %v182
        %v6892 = vpop.permute.xlu0 %6891
        %6894 = vset.pattern.permute.xlu0 111
        %6895 = vperm.xlu0 %6894, %v183
        %v6896 = vpop.permute.xlu0 %6895
        %v6898 = vlaneseq
        %v6899 = vshrl.u32 %v6898, 7
        %v6900 = vsub.s32 7, %v6899
        %v6901 = vrot.slane %v6445, %v6900
        %v6902 = vsub.f32 %v6868, %v6901
        %v6903 = vsub.f32 %v6872, %v6901
        %v6904 = vsub.f32 %v6876, %v6901
        %v6905 = vsub.f32 %v6880, %v6901
        %v6906 = vsub.f32 %v6884, %v6901
        %v6907 = vsub.f32 %v6888, %v6901
        %v6908 = vsub.f32 %v6892, %v6901
        %v6909 = vsub.f32 %v6896, %v6901
        %v6910 = vand.u32 2147483647, %v6902
        %v6911 = vand.u32 2147483647, %v6903
        %v6912 = vand.u32 2147483647, %v6904
        %v6913 = vand.u32 2147483647, %v6905
        %v6914 = vand.u32 2147483647, %v6906
        %v6915 = vand.u32 2147483647, %v6907
        %v6916 = vand.u32 2147483647, %v6908
        %v6917 = vand.u32 2147483647, %v6909
        %v6918 = vadd.f32 %v6858, %v6910
        %v6919 = vadd.f32 %v6859, %v6911
        %v6920 = vadd.f32 %v6860, %v6912
        %v6921 = vadd.f32 %v6861, %v6913
        %v6922 = vadd.f32 %v6862, %v6914
        %v6923 = vadd.f32 %v6863, %v6915
        %v6924 = vadd.f32 %v6864, %v6916
        %v6925 = vadd.f32 %v6865, %v6917
        %v6926 = vld [vmem:[%s174 + $0x70] sm:$0xff]
        %6927 = vset.pattern.permute.xlu0 112
        %6928 = vperm.xlu0 %6927, %v176
        %v6929 = vpop.permute.xlu0 %6928
        %6931 = vset.pattern.permute.xlu0 112
        %6932 = vperm.xlu0 %6931, %v177
        %v6933 = vpop.permute.xlu0 %6932
        %6935 = vset.pattern.permute.xlu0 112
        %6936 = vperm.xlu0 %6935, %v178
        %v6937 = vpop.permute.xlu0 %6936
        %6939 = vset.pattern.permute.xlu0 112
        %6940 = vperm.xlu0 %6939, %v179
        %v6941 = vpop.permute.xlu0 %6940
        %6943 = vset.pattern.permute.xlu0 112
        %6944 = vperm.xlu0 %6943, %v180
        %v6945 = vpop.permute.xlu0 %6944
        %6947 = vset.pattern.permute.xlu0 112
        %6948 = vperm.xlu0 %6947, %v181
        %v6949 = vpop.permute.xlu0 %6948
        %6951 = vset.pattern.permute.xlu0 112
        %6952 = vperm.xlu0 %6951, %v182
        %v6953 = vpop.permute.xlu0 %6952
        %6955 = vset.pattern.permute.xlu0 112
        %6956 = vperm.xlu0 %6955, %v183
        %v6957 = vpop.permute.xlu0 %6956
        %v6959 = vlaneseq
        %v6960 = vshrl.u32 %v6959, 7
        %v6961 = vsub.s32 0, %v6960
        %v6962 = vrot.slane %v6926, %v6961
        %v6963 = vsub.f32 %v6929, %v6962
        %v6964 = vsub.f32 %v6933, %v6962
        %v6965 = vsub.f32 %v6937, %v6962
        %v6966 = vsub.f32 %v6941, %v6962
        %v6967 = vsub.f32 %v6945, %v6962
        %v6968 = vsub.f32 %v6949, %v6962
        %v6969 = vsub.f32 %v6953, %v6962
        %v6970 = vsub.f32 %v6957, %v6962
        %v6971 = vand.u32 2147483647, %v6963
        %v6972 = vand.u32 2147483647, %v6964
        %v6973 = vand.u32 2147483647, %v6965
        %v6974 = vand.u32 2147483647, %v6966
        %v6975 = vand.u32 2147483647, %v6967
        %v6976 = vand.u32 2147483647, %v6968
        %v6977 = vand.u32 2147483647, %v6969
        %v6978 = vand.u32 2147483647, %v6970
        %v6979 = vadd.f32 %v6918, %v6971
        %v6980 = vadd.f32 %v6919, %v6972
        %v6981 = vadd.f32 %v6920, %v6973
        %v6982 = vadd.f32 %v6921, %v6974
        %v6983 = vadd.f32 %v6922, %v6975
        %v6984 = vadd.f32 %v6923, %v6976
        %v6985 = vadd.f32 %v6924, %v6977
        %v6986 = vadd.f32 %v6925, %v6978
        %6987 = vset.pattern.permute.xlu0 113
        %6988 = vperm.xlu0 %6987, %v176
        %v6989 = vpop.permute.xlu0 %6988
        %6991 = vset.pattern.permute.xlu0 113
        %6992 = vperm.xlu0 %6991, %v177
        %v6993 = vpop.permute.xlu0 %6992
        %6995 = vset.pattern.permute.xlu0 113
        %6996 = vperm.xlu0 %6995, %v178
        %v6997 = vpop.permute.xlu0 %6996
        %6999 = vset.pattern.permute.xlu0 113
        %7000 = vperm.xlu0 %6999, %v179
        %v7001 = vpop.permute.xlu0 %7000
        %7003 = vset.pattern.permute.xlu0 113
        %7004 = vperm.xlu0 %7003, %v180
        %v7005 = vpop.permute.xlu0 %7004
        %7007 = vset.pattern.permute.xlu0 113
        %7008 = vperm.xlu0 %7007, %v181
        %v7009 = vpop.permute.xlu0 %7008
        %7011 = vset.pattern.permute.xlu0 113
        %7012 = vperm.xlu0 %7011, %v182
        %v7013 = vpop.permute.xlu0 %7012
        %7015 = vset.pattern.permute.xlu0 113
        %7016 = vperm.xlu0 %7015, %v183
        %v7017 = vpop.permute.xlu0 %7016
        %v7019 = vlaneseq
        %v7020 = vshrl.u32 %v7019, 7
        %v7021 = vsub.s32 1, %v7020
        %v7022 = vrot.slane %v6926, %v7021
        %v7023 = vsub.f32 %v6989, %v7022
        %v7024 = vsub.f32 %v6993, %v7022
        %v7025 = vsub.f32 %v6997, %v7022
        %v7026 = vsub.f32 %v7001, %v7022
        %v7027 = vsub.f32 %v7005, %v7022
        %v7028 = vsub.f32 %v7009, %v7022
        %v7029 = vsub.f32 %v7013, %v7022
        %v7030 = vsub.f32 %v7017, %v7022
        %v7031 = vand.u32 2147483647, %v7023
        %v7032 = vand.u32 2147483647, %v7024
        %v7033 = vand.u32 2147483647, %v7025
        %v7034 = vand.u32 2147483647, %v7026
        %v7035 = vand.u32 2147483647, %v7027
        %v7036 = vand.u32 2147483647, %v7028
        %v7037 = vand.u32 2147483647, %v7029
        %v7038 = vand.u32 2147483647, %v7030
        %v7039 = vadd.f32 %v6979, %v7031
        %v7040 = vadd.f32 %v6980, %v7032
        %v7041 = vadd.f32 %v6981, %v7033
        %v7042 = vadd.f32 %v6982, %v7034
        %v7043 = vadd.f32 %v6983, %v7035
        %v7044 = vadd.f32 %v6984, %v7036
        %v7045 = vadd.f32 %v6985, %v7037
        %v7046 = vadd.f32 %v6986, %v7038
        %7047 = vset.pattern.permute.xlu0 114
        %7048 = vperm.xlu0 %7047, %v176
        %v7049 = vpop.permute.xlu0 %7048
        %7051 = vset.pattern.permute.xlu0 114
        %7052 = vperm.xlu0 %7051, %v177
        %v7053 = vpop.permute.xlu0 %7052
        %7055 = vset.pattern.permute.xlu0 114
        %7056 = vperm.xlu0 %7055, %v178
        %v7057 = vpop.permute.xlu0 %7056
        %7059 = vset.pattern.permute.xlu0 114
        %7060 = vperm.xlu0 %7059, %v179
        %v7061 = vpop.permute.xlu0 %7060
        %7063 = vset.pattern.permute.xlu0 114
        %7064 = vperm.xlu0 %7063, %v180
        %v7065 = vpop.permute.xlu0 %7064
        %7067 = vset.pattern.permute.xlu0 114
        %7068 = vperm.xlu0 %7067, %v181
        %v7069 = vpop.permute.xlu0 %7068
        %7071 = vset.pattern.permute.xlu0 114
        %7072 = vperm.xlu0 %7071, %v182
        %v7073 = vpop.permute.xlu0 %7072
        %7075 = vset.pattern.permute.xlu0 114
        %7076 = vperm.xlu0 %7075, %v183
        %v7077 = vpop.permute.xlu0 %7076
        %v7079 = vlaneseq
        %v7080 = vshrl.u32 %v7079, 7
        %v7081 = vsub.s32 2, %v7080
        %v7082 = vrot.slane %v6926, %v7081
        %v7083 = vsub.f32 %v7049, %v7082
        %v7084 = vsub.f32 %v7053, %v7082
        %v7085 = vsub.f32 %v7057, %v7082
        %v7086 = vsub.f32 %v7061, %v7082
        %v7087 = vsub.f32 %v7065, %v7082
        %v7088 = vsub.f32 %v7069, %v7082
        %v7089 = vsub.f32 %v7073, %v7082
        %v7090 = vsub.f32 %v7077, %v7082
        %v7091 = vand.u32 2147483647, %v7083
        %v7092 = vand.u32 2147483647, %v7084
        %v7093 = vand.u32 2147483647, %v7085
        %v7094 = vand.u32 2147483647, %v7086
        %v7095 = vand.u32 2147483647, %v7087
        %v7096 = vand.u32 2147483647, %v7088
        %v7097 = vand.u32 2147483647, %v7089
        %v7098 = vand.u32 2147483647, %v7090
        %v7099 = vadd.f32 %v7039, %v7091
        %v7100 = vadd.f32 %v7040, %v7092
        %v7101 = vadd.f32 %v7041, %v7093
        %v7102 = vadd.f32 %v7042, %v7094
        %v7103 = vadd.f32 %v7043, %v7095
        %v7104 = vadd.f32 %v7044, %v7096
        %v7105 = vadd.f32 %v7045, %v7097
        %v7106 = vadd.f32 %v7046, %v7098
        %7107 = vset.pattern.permute.xlu0 115
        %7108 = vperm.xlu0 %7107, %v176
        %v7109 = vpop.permute.xlu0 %7108
        %7111 = vset.pattern.permute.xlu0 115
        %7112 = vperm.xlu0 %7111, %v177
        %v7113 = vpop.permute.xlu0 %7112
        %7115 = vset.pattern.permute.xlu0 115
        %7116 = vperm.xlu0 %7115, %v178
        %v7117 = vpop.permute.xlu0 %7116
        %7119 = vset.pattern.permute.xlu0 115
        %7120 = vperm.xlu0 %7119, %v179
        %v7121 = vpop.permute.xlu0 %7120
        %7123 = vset.pattern.permute.xlu0 115
        %7124 = vperm.xlu0 %7123, %v180
        %v7125 = vpop.permute.xlu0 %7124
        %7127 = vset.pattern.permute.xlu0 115
        %7128 = vperm.xlu0 %7127, %v181
        %v7129 = vpop.permute.xlu0 %7128
        %7131 = vset.pattern.permute.xlu0 115
        %7132 = vperm.xlu0 %7131, %v182
        %v7133 = vpop.permute.xlu0 %7132
        %7135 = vset.pattern.permute.xlu0 115
        %7136 = vperm.xlu0 %7135, %v183
        %v7137 = vpop.permute.xlu0 %7136
        %v7139 = vlaneseq
        %v7140 = vshrl.u32 %v7139, 7
        %v7141 = vsub.s32 3, %v7140
        %v7142 = vrot.slane %v6926, %v7141
        %v7143 = vsub.f32 %v7109, %v7142
        %v7144 = vsub.f32 %v7113, %v7142
        %v7145 = vsub.f32 %v7117, %v7142
        %v7146 = vsub.f32 %v7121, %v7142
        %v7147 = vsub.f32 %v7125, %v7142
        %v7148 = vsub.f32 %v7129, %v7142
        %v7149 = vsub.f32 %v7133, %v7142
        %v7150 = vsub.f32 %v7137, %v7142
        %v7151 = vand.u32 2147483647, %v7143
        %v7152 = vand.u32 2147483647, %v7144
        %v7153 = vand.u32 2147483647, %v7145
        %v7154 = vand.u32 2147483647, %v7146
        %v7155 = vand.u32 2147483647, %v7147
        %v7156 = vand.u32 2147483647, %v7148
        %v7157 = vand.u32 2147483647, %v7149
        %v7158 = vand.u32 2147483647, %v7150
        %v7159 = vadd.f32 %v7099, %v7151
        %v7160 = vadd.f32 %v7100, %v7152
        %v7161 = vadd.f32 %v7101, %v7153
        %v7162 = vadd.f32 %v7102, %v7154
        %v7163 = vadd.f32 %v7103, %v7155
        %v7164 = vadd.f32 %v7104, %v7156
        %v7165 = vadd.f32 %v7105, %v7157
        %v7166 = vadd.f32 %v7106, %v7158
        %7167 = vset.pattern.permute.xlu0 116
        %7168 = vperm.xlu0 %7167, %v176
        %v7169 = vpop.permute.xlu0 %7168
        %7171 = vset.pattern.permute.xlu0 116
        %7172 = vperm.xlu0 %7171, %v177
        %v7173 = vpop.permute.xlu0 %7172
        %7175 = vset.pattern.permute.xlu0 116
        %7176 = vperm.xlu0 %7175, %v178
        %v7177 = vpop.permute.xlu0 %7176
        %7179 = vset.pattern.permute.xlu0 116
        %7180 = vperm.xlu0 %7179, %v179
        %v7181 = vpop.permute.xlu0 %7180
        %7183 = vset.pattern.permute.xlu0 116
        %7184 = vperm.xlu0 %7183, %v180
        %v7185 = vpop.permute.xlu0 %7184
        %7187 = vset.pattern.permute.xlu0 116
        %7188 = vperm.xlu0 %7187, %v181
        %v7189 = vpop.permute.xlu0 %7188
        %7191 = vset.pattern.permute.xlu0 116
        %7192 = vperm.xlu0 %7191, %v182
        %v7193 = vpop.permute.xlu0 %7192
        %7195 = vset.pattern.permute.xlu0 116
        %7196 = vperm.xlu0 %7195, %v183
        %v7197 = vpop.permute.xlu0 %7196
        %v7199 = vlaneseq
        %v7200 = vshrl.u32 %v7199, 7
        %v7201 = vsub.s32 4, %v7200
        %v7202 = vrot.slane %v6926, %v7201
        %v7203 = vsub.f32 %v7169, %v7202
        %v7204 = vsub.f32 %v7173, %v7202
        %v7205 = vsub.f32 %v7177, %v7202
        %v7206 = vsub.f32 %v7181, %v7202
        %v7207 = vsub.f32 %v7185, %v7202
        %v7208 = vsub.f32 %v7189, %v7202
        %v7209 = vsub.f32 %v7193, %v7202
        %v7210 = vsub.f32 %v7197, %v7202
        %v7211 = vand.u32 2147483647, %v7203
        %v7212 = vand.u32 2147483647, %v7204
        %v7213 = vand.u32 2147483647, %v7205
        %v7214 = vand.u32 2147483647, %v7206
        %v7215 = vand.u32 2147483647, %v7207
        %v7216 = vand.u32 2147483647, %v7208
        %v7217 = vand.u32 2147483647, %v7209
        %v7218 = vand.u32 2147483647, %v7210
        %v7219 = vadd.f32 %v7159, %v7211
        %v7220 = vadd.f32 %v7160, %v7212
        %v7221 = vadd.f32 %v7161, %v7213
        %v7222 = vadd.f32 %v7162, %v7214
        %v7223 = vadd.f32 %v7163, %v7215
        %v7224 = vadd.f32 %v7164, %v7216
        %v7225 = vadd.f32 %v7165, %v7217
        %v7226 = vadd.f32 %v7166, %v7218
        %7227 = vset.pattern.permute.xlu0 117
        %7228 = vperm.xlu0 %7227, %v176
        %v7229 = vpop.permute.xlu0 %7228
        %7231 = vset.pattern.permute.xlu0 117
        %7232 = vperm.xlu0 %7231, %v177
        %v7233 = vpop.permute.xlu0 %7232
        %7235 = vset.pattern.permute.xlu0 117
        %7236 = vperm.xlu0 %7235, %v178
        %v7237 = vpop.permute.xlu0 %7236
        %7239 = vset.pattern.permute.xlu0 117
        %7240 = vperm.xlu0 %7239, %v179
        %v7241 = vpop.permute.xlu0 %7240
        %7243 = vset.pattern.permute.xlu0 117
        %7244 = vperm.xlu0 %7243, %v180
        %v7245 = vpop.permute.xlu0 %7244
        %7247 = vset.pattern.permute.xlu0 117
        %7248 = vperm.xlu0 %7247, %v181
        %v7249 = vpop.permute.xlu0 %7248
        %7251 = vset.pattern.permute.xlu0 117
        %7252 = vperm.xlu0 %7251, %v182
        %v7253 = vpop.permute.xlu0 %7252
        %7255 = vset.pattern.permute.xlu0 117
        %7256 = vperm.xlu0 %7255, %v183
        %v7257 = vpop.permute.xlu0 %7256
        %v7259 = vlaneseq
        %v7260 = vshrl.u32 %v7259, 7
        %v7261 = vsub.s32 5, %v7260
        %v7262 = vrot.slane %v6926, %v7261
        %v7263 = vsub.f32 %v7229, %v7262
        %v7264 = vsub.f32 %v7233, %v7262
        %v7265 = vsub.f32 %v7237, %v7262
        %v7266 = vsub.f32 %v7241, %v7262
        %v7267 = vsub.f32 %v7245, %v7262
        %v7268 = vsub.f32 %v7249, %v7262
        %v7269 = vsub.f32 %v7253, %v7262
        %v7270 = vsub.f32 %v7257, %v7262
        %v7271 = vand.u32 2147483647, %v7263
        %v7272 = vand.u32 2147483647, %v7264
        %v7273 = vand.u32 2147483647, %v7265
        %v7274 = vand.u32 2147483647, %v7266
        %v7275 = vand.u32 2147483647, %v7267
        %v7276 = vand.u32 2147483647, %v7268
        %v7277 = vand.u32 2147483647, %v7269
        %v7278 = vand.u32 2147483647, %v7270
        %v7279 = vadd.f32 %v7219, %v7271
        %v7280 = vadd.f32 %v7220, %v7272
        %v7281 = vadd.f32 %v7221, %v7273
        %v7282 = vadd.f32 %v7222, %v7274
        %v7283 = vadd.f32 %v7223, %v7275
        %v7284 = vadd.f32 %v7224, %v7276
        %v7285 = vadd.f32 %v7225, %v7277
        %v7286 = vadd.f32 %v7226, %v7278
        %7287 = vset.pattern.permute.xlu0 118
        %7288 = vperm.xlu0 %7287, %v176
        %v7289 = vpop.permute.xlu0 %7288
        %7291 = vset.pattern.permute.xlu0 118
        %7292 = vperm.xlu0 %7291, %v177
        %v7293 = vpop.permute.xlu0 %7292
        %7295 = vset.pattern.permute.xlu0 118
        %7296 = vperm.xlu0 %7295, %v178
        %v7297 = vpop.permute.xlu0 %7296
        %7299 = vset.pattern.permute.xlu0 118
        %7300 = vperm.xlu0 %7299, %v179
        %v7301 = vpop.permute.xlu0 %7300
        %7303 = vset.pattern.permute.xlu0 118
        %7304 = vperm.xlu0 %7303, %v180
        %v7305 = vpop.permute.xlu0 %7304
        %7307 = vset.pattern.permute.xlu0 118
        %7308 = vperm.xlu0 %7307, %v181
        %v7309 = vpop.permute.xlu0 %7308
        %7311 = vset.pattern.permute.xlu0 118
        %7312 = vperm.xlu0 %7311, %v182
        %v7313 = vpop.permute.xlu0 %7312
        %7315 = vset.pattern.permute.xlu0 118
        %7316 = vperm.xlu0 %7315, %v183
        %v7317 = vpop.permute.xlu0 %7316
        %v7319 = vlaneseq
        %v7320 = vshrl.u32 %v7319, 7
        %v7321 = vsub.s32 6, %v7320
        %v7322 = vrot.slane %v6926, %v7321
        %v7323 = vsub.f32 %v7289, %v7322
        %v7324 = vsub.f32 %v7293, %v7322
        %v7325 = vsub.f32 %v7297, %v7322
        %v7326 = vsub.f32 %v7301, %v7322
        %v7327 = vsub.f32 %v7305, %v7322
        %v7328 = vsub.f32 %v7309, %v7322
        %v7329 = vsub.f32 %v7313, %v7322
        %v7330 = vsub.f32 %v7317, %v7322
        %v7331 = vand.u32 2147483647, %v7323
        %v7332 = vand.u32 2147483647, %v7324
        %v7333 = vand.u32 2147483647, %v7325
        %v7334 = vand.u32 2147483647, %v7326
        %v7335 = vand.u32 2147483647, %v7327
        %v7336 = vand.u32 2147483647, %v7328
        %v7337 = vand.u32 2147483647, %v7329
        %v7338 = vand.u32 2147483647, %v7330
        %v7339 = vadd.f32 %v7279, %v7331
        %v7340 = vadd.f32 %v7280, %v7332
        %v7341 = vadd.f32 %v7281, %v7333
        %v7342 = vadd.f32 %v7282, %v7334
        %v7343 = vadd.f32 %v7283, %v7335
        %v7344 = vadd.f32 %v7284, %v7336
        %v7345 = vadd.f32 %v7285, %v7337
        %v7346 = vadd.f32 %v7286, %v7338
        %7347 = vset.pattern.permute.xlu0 119
        %7348 = vperm.xlu0 %7347, %v176
        %v7349 = vpop.permute.xlu0 %7348
        %7351 = vset.pattern.permute.xlu0 119
        %7352 = vperm.xlu0 %7351, %v177
        %v7353 = vpop.permute.xlu0 %7352
        %7355 = vset.pattern.permute.xlu0 119
        %7356 = vperm.xlu0 %7355, %v178
        %v7357 = vpop.permute.xlu0 %7356
        %7359 = vset.pattern.permute.xlu0 119
        %7360 = vperm.xlu0 %7359, %v179
        %v7361 = vpop.permute.xlu0 %7360
        %7363 = vset.pattern.permute.xlu0 119
        %7364 = vperm.xlu0 %7363, %v180
        %v7365 = vpop.permute.xlu0 %7364
        %7367 = vset.pattern.permute.xlu0 119
        %7368 = vperm.xlu0 %7367, %v181
        %v7369 = vpop.permute.xlu0 %7368
        %7371 = vset.pattern.permute.xlu0 119
        %7372 = vperm.xlu0 %7371, %v182
        %v7373 = vpop.permute.xlu0 %7372
        %7375 = vset.pattern.permute.xlu0 119
        %7376 = vperm.xlu0 %7375, %v183
        %v7377 = vpop.permute.xlu0 %7376
        %v7379 = vlaneseq
        %v7380 = vshrl.u32 %v7379, 7
        %v7381 = vsub.s32 7, %v7380
        %v7382 = vrot.slane %v6926, %v7381
        %v7383 = vsub.f32 %v7349, %v7382
        %v7384 = vsub.f32 %v7353, %v7382
        %v7385 = vsub.f32 %v7357, %v7382
        %v7386 = vsub.f32 %v7361, %v7382
        %v7387 = vsub.f32 %v7365, %v7382
        %v7388 = vsub.f32 %v7369, %v7382
        %v7389 = vsub.f32 %v7373, %v7382
        %v7390 = vsub.f32 %v7377, %v7382
        %v7391 = vand.u32 2147483647, %v7383
        %v7392 = vand.u32 2147483647, %v7384
        %v7393 = vand.u32 2147483647, %v7385
        %v7394 = vand.u32 2147483647, %v7386
        %v7395 = vand.u32 2147483647, %v7387
        %v7396 = vand.u32 2147483647, %v7388
        %v7397 = vand.u32 2147483647, %v7389
        %v7398 = vand.u32 2147483647, %v7390
        %v7399 = vadd.f32 %v7339, %v7391
        %v7400 = vadd.f32 %v7340, %v7392
        %v7401 = vadd.f32 %v7341, %v7393
        %v7402 = vadd.f32 %v7342, %v7394
        %v7403 = vadd.f32 %v7343, %v7395
        %v7404 = vadd.f32 %v7344, %v7396
        %v7405 = vadd.f32 %v7345, %v7397
        %v7406 = vadd.f32 %v7346, %v7398
        %v7407 = vld [vmem:[%s174 + $0x78] sm:$0xff]
        %7408 = vset.pattern.permute.xlu0 120
        %7409 = vperm.xlu0 %7408, %v176
        %v7410 = vpop.permute.xlu0 %7409
        %7412 = vset.pattern.permute.xlu0 120
        %7413 = vperm.xlu0 %7412, %v177
        %v7414 = vpop.permute.xlu0 %7413
        %7416 = vset.pattern.permute.xlu0 120
        %7417 = vperm.xlu0 %7416, %v178
        %v7418 = vpop.permute.xlu0 %7417
        %7420 = vset.pattern.permute.xlu0 120
        %7421 = vperm.xlu0 %7420, %v179
        %v7422 = vpop.permute.xlu0 %7421
        %7424 = vset.pattern.permute.xlu0 120
        %7425 = vperm.xlu0 %7424, %v180
        %v7426 = vpop.permute.xlu0 %7425
        %7428 = vset.pattern.permute.xlu0 120
        %7429 = vperm.xlu0 %7428, %v181
        %v7430 = vpop.permute.xlu0 %7429
        %7432 = vset.pattern.permute.xlu0 120
        %7433 = vperm.xlu0 %7432, %v182
        %v7434 = vpop.permute.xlu0 %7433
        %7436 = vset.pattern.permute.xlu0 120
        %7437 = vperm.xlu0 %7436, %v183
        %v7438 = vpop.permute.xlu0 %7437
        %v7440 = vlaneseq
        %v7441 = vshrl.u32 %v7440, 7
        %v7442 = vsub.s32 0, %v7441
        %v7443 = vrot.slane %v7407, %v7442
        %v7444 = vsub.f32 %v7410, %v7443
        %v7445 = vsub.f32 %v7414, %v7443
        %v7446 = vsub.f32 %v7418, %v7443
        %v7447 = vsub.f32 %v7422, %v7443
        %v7448 = vsub.f32 %v7426, %v7443
        %v7449 = vsub.f32 %v7430, %v7443
        %v7450 = vsub.f32 %v7434, %v7443
        %v7451 = vsub.f32 %v7438, %v7443
        %v7452 = vand.u32 2147483647, %v7444
        %v7453 = vand.u32 2147483647, %v7445
        %v7454 = vand.u32 2147483647, %v7446
        %v7455 = vand.u32 2147483647, %v7447
        %v7456 = vand.u32 2147483647, %v7448
        %v7457 = vand.u32 2147483647, %v7449
        %v7458 = vand.u32 2147483647, %v7450
        %v7459 = vand.u32 2147483647, %v7451
        %v7460 = vadd.f32 %v7399, %v7452
        %v7461 = vadd.f32 %v7400, %v7453
        %v7462 = vadd.f32 %v7401, %v7454
        %v7463 = vadd.f32 %v7402, %v7455
        %v7464 = vadd.f32 %v7403, %v7456
        %v7465 = vadd.f32 %v7404, %v7457
        %v7466 = vadd.f32 %v7405, %v7458
        %v7467 = vadd.f32 %v7406, %v7459
        %7468 = vset.pattern.permute.xlu0 121
        %7469 = vperm.xlu0 %7468, %v176
        %v7470 = vpop.permute.xlu0 %7469
        %7472 = vset.pattern.permute.xlu0 121
        %7473 = vperm.xlu0 %7472, %v177
        %v7474 = vpop.permute.xlu0 %7473
        %7476 = vset.pattern.permute.xlu0 121
        %7477 = vperm.xlu0 %7476, %v178
        %v7478 = vpop.permute.xlu0 %7477
        %7480 = vset.pattern.permute.xlu0 121
        %7481 = vperm.xlu0 %7480, %v179
        %v7482 = vpop.permute.xlu0 %7481
        %7484 = vset.pattern.permute.xlu0 121
        %7485 = vperm.xlu0 %7484, %v180
        %v7486 = vpop.permute.xlu0 %7485
        %7488 = vset.pattern.permute.xlu0 121
        %7489 = vperm.xlu0 %7488, %v181
        %v7490 = vpop.permute.xlu0 %7489
        %7492 = vset.pattern.permute.xlu0 121
        %7493 = vperm.xlu0 %7492, %v182
        %v7494 = vpop.permute.xlu0 %7493
        %7496 = vset.pattern.permute.xlu0 121
        %7497 = vperm.xlu0 %7496, %v183
        %v7498 = vpop.permute.xlu0 %7497
        %v7500 = vlaneseq
        %v7501 = vshrl.u32 %v7500, 7
        %v7502 = vsub.s32 1, %v7501
        %v7503 = vrot.slane %v7407, %v7502
        %v7504 = vsub.f32 %v7470, %v7503
        %v7505 = vsub.f32 %v7474, %v7503
        %v7506 = vsub.f32 %v7478, %v7503
        %v7507 = vsub.f32 %v7482, %v7503
        %v7508 = vsub.f32 %v7486, %v7503
        %v7509 = vsub.f32 %v7490, %v7503
        %v7510 = vsub.f32 %v7494, %v7503
        %v7511 = vsub.f32 %v7498, %v7503
        %v7512 = vand.u32 2147483647, %v7504
        %v7513 = vand.u32 2147483647, %v7505
        %v7514 = vand.u32 2147483647, %v7506
        %v7515 = vand.u32 2147483647, %v7507
        %v7516 = vand.u32 2147483647, %v7508
        %v7517 = vand.u32 2147483647, %v7509
        %v7518 = vand.u32 2147483647, %v7510
        %v7519 = vand.u32 2147483647, %v7511
        %v7520 = vadd.f32 %v7460, %v7512
        %v7521 = vadd.f32 %v7461, %v7513
        %v7522 = vadd.f32 %v7462, %v7514
        %v7523 = vadd.f32 %v7463, %v7515
        %v7524 = vadd.f32 %v7464, %v7516
        %v7525 = vadd.f32 %v7465, %v7517
        %v7526 = vadd.f32 %v7466, %v7518
        %v7527 = vadd.f32 %v7467, %v7519
        %7528 = vset.pattern.permute.xlu0 122
        %7529 = vperm.xlu0 %7528, %v176
        %v7530 = vpop.permute.xlu0 %7529
        %7532 = vset.pattern.permute.xlu0 122
        %7533 = vperm.xlu0 %7532, %v177
        %v7534 = vpop.permute.xlu0 %7533
        %7536 = vset.pattern.permute.xlu0 122
        %7537 = vperm.xlu0 %7536, %v178
        %v7538 = vpop.permute.xlu0 %7537
        %7540 = vset.pattern.permute.xlu0 122
        %7541 = vperm.xlu0 %7540, %v179
        %v7542 = vpop.permute.xlu0 %7541
        %7544 = vset.pattern.permute.xlu0 122
        %7545 = vperm.xlu0 %7544, %v180
        %v7546 = vpop.permute.xlu0 %7545
        %7548 = vset.pattern.permute.xlu0 122
        %7549 = vperm.xlu0 %7548, %v181
        %v7550 = vpop.permute.xlu0 %7549
        %7552 = vset.pattern.permute.xlu0 122
        %7553 = vperm.xlu0 %7552, %v182
        %v7554 = vpop.permute.xlu0 %7553
        %7556 = vset.pattern.permute.xlu0 122
        %7557 = vperm.xlu0 %7556, %v183
        %v7558 = vpop.permute.xlu0 %7557
        %v7560 = vlaneseq
        %v7561 = vshrl.u32 %v7560, 7
        %v7562 = vsub.s32 2, %v7561
        %v7563 = vrot.slane %v7407, %v7562
        %v7564 = vsub.f32 %v7530, %v7563
        %v7565 = vsub.f32 %v7534, %v7563
        %v7566 = vsub.f32 %v7538, %v7563
        %v7567 = vsub.f32 %v7542, %v7563
        %v7568 = vsub.f32 %v7546, %v7563
        %v7569 = vsub.f32 %v7550, %v7563
        %v7570 = vsub.f32 %v7554, %v7563
        %v7571 = vsub.f32 %v7558, %v7563
        %v7572 = vand.u32 2147483647, %v7564
        %v7573 = vand.u32 2147483647, %v7565
        %v7574 = vand.u32 2147483647, %v7566
        %v7575 = vand.u32 2147483647, %v7567
        %v7576 = vand.u32 2147483647, %v7568
        %v7577 = vand.u32 2147483647, %v7569
        %v7578 = vand.u32 2147483647, %v7570
        %v7579 = vand.u32 2147483647, %v7571
        %v7580 = vadd.f32 %v7520, %v7572
        %v7581 = vadd.f32 %v7521, %v7573
        %v7582 = vadd.f32 %v7522, %v7574
        %v7583 = vadd.f32 %v7523, %v7575
        %v7584 = vadd.f32 %v7524, %v7576
        %v7585 = vadd.f32 %v7525, %v7577
        %v7586 = vadd.f32 %v7526, %v7578
        %v7587 = vadd.f32 %v7527, %v7579
        %7588 = vset.pattern.permute.xlu0 123
        %7589 = vperm.xlu0 %7588, %v176
        %v7590 = vpop.permute.xlu0 %7589
        %7592 = vset.pattern.permute.xlu0 123
        %7593 = vperm.xlu0 %7592, %v177
        %v7594 = vpop.permute.xlu0 %7593
        %7596 = vset.pattern.permute.xlu0 123
        %7597 = vperm.xlu0 %7596, %v178
        %v7598 = vpop.permute.xlu0 %7597
        %7600 = vset.pattern.permute.xlu0 123
        %7601 = vperm.xlu0 %7600, %v179
        %v7602 = vpop.permute.xlu0 %7601
        %7604 = vset.pattern.permute.xlu0 123
        %7605 = vperm.xlu0 %7604, %v180
        %v7606 = vpop.permute.xlu0 %7605
        %7608 = vset.pattern.permute.xlu0 123
        %7609 = vperm.xlu0 %7608, %v181
        %v7610 = vpop.permute.xlu0 %7609
        %7612 = vset.pattern.permute.xlu0 123
        %7613 = vperm.xlu0 %7612, %v182
        %v7614 = vpop.permute.xlu0 %7613
        %7616 = vset.pattern.permute.xlu0 123
        %7617 = vperm.xlu0 %7616, %v183
        %v7618 = vpop.permute.xlu0 %7617
        %v7620 = vlaneseq
        %v7621 = vshrl.u32 %v7620, 7
        %v7622 = vsub.s32 3, %v7621
        %v7623 = vrot.slane %v7407, %v7622
        %v7624 = vsub.f32 %v7590, %v7623
        %v7625 = vsub.f32 %v7594, %v7623
        %v7626 = vsub.f32 %v7598, %v7623
        %v7627 = vsub.f32 %v7602, %v7623
        %v7628 = vsub.f32 %v7606, %v7623
        %v7629 = vsub.f32 %v7610, %v7623
        %v7630 = vsub.f32 %v7614, %v7623
        %v7631 = vsub.f32 %v7618, %v7623
        %v7632 = vand.u32 2147483647, %v7624
        %v7633 = vand.u32 2147483647, %v7625
        %v7634 = vand.u32 2147483647, %v7626
        %v7635 = vand.u32 2147483647, %v7627
        %v7636 = vand.u32 2147483647, %v7628
        %v7637 = vand.u32 2147483647, %v7629
        %v7638 = vand.u32 2147483647, %v7630
        %v7639 = vand.u32 2147483647, %v7631
        %v7640 = vadd.f32 %v7580, %v7632
        %v7641 = vadd.f32 %v7581, %v7633
        %v7642 = vadd.f32 %v7582, %v7634
        %v7643 = vadd.f32 %v7583, %v7635
        %v7644 = vadd.f32 %v7584, %v7636
        %v7645 = vadd.f32 %v7585, %v7637
        %v7646 = vadd.f32 %v7586, %v7638
        %v7647 = vadd.f32 %v7587, %v7639
        %7648 = vset.pattern.permute.xlu0 124
        %7649 = vperm.xlu0 %7648, %v176
        %v7650 = vpop.permute.xlu0 %7649
        %7652 = vset.pattern.permute.xlu0 124
        %7653 = vperm.xlu0 %7652, %v177
        %v7654 = vpop.permute.xlu0 %7653
        %7656 = vset.pattern.permute.xlu0 124
        %7657 = vperm.xlu0 %7656, %v178
        %v7658 = vpop.permute.xlu0 %7657
        %7660 = vset.pattern.permute.xlu0 124
        %7661 = vperm.xlu0 %7660, %v179
        %v7662 = vpop.permute.xlu0 %7661
        %7664 = vset.pattern.permute.xlu0 124
        %7665 = vperm.xlu0 %7664, %v180
        %v7666 = vpop.permute.xlu0 %7665
        %7668 = vset.pattern.permute.xlu0 124
        %7669 = vperm.xlu0 %7668, %v181
        %v7670 = vpop.permute.xlu0 %7669
        %7672 = vset.pattern.permute.xlu0 124
        %7673 = vperm.xlu0 %7672, %v182
        %v7674 = vpop.permute.xlu0 %7673
        %7676 = vset.pattern.permute.xlu0 124
        %7677 = vperm.xlu0 %7676, %v183
        %v7678 = vpop.permute.xlu0 %7677
        %v7680 = vlaneseq
        %v7681 = vshrl.u32 %v7680, 7
        %v7682 = vsub.s32 4, %v7681
        %v7683 = vrot.slane %v7407, %v7682
        %v7684 = vsub.f32 %v7650, %v7683
        %v7685 = vsub.f32 %v7654, %v7683
        %v7686 = vsub.f32 %v7658, %v7683
        %v7687 = vsub.f32 %v7662, %v7683
        %v7688 = vsub.f32 %v7666, %v7683
        %v7689 = vsub.f32 %v7670, %v7683
        %v7690 = vsub.f32 %v7674, %v7683
        %v7691 = vsub.f32 %v7678, %v7683
        %v7692 = vand.u32 2147483647, %v7684
        %v7693 = vand.u32 2147483647, %v7685
        %v7694 = vand.u32 2147483647, %v7686
        %v7695 = vand.u32 2147483647, %v7687
        %v7696 = vand.u32 2147483647, %v7688
        %v7697 = vand.u32 2147483647, %v7689
        %v7698 = vand.u32 2147483647, %v7690
        %v7699 = vand.u32 2147483647, %v7691
        %v7700 = vadd.f32 %v7640, %v7692
        %v7701 = vadd.f32 %v7641, %v7693
        %v7702 = vadd.f32 %v7642, %v7694
        %v7703 = vadd.f32 %v7643, %v7695
        %v7704 = vadd.f32 %v7644, %v7696
        %v7705 = vadd.f32 %v7645, %v7697
        %v7706 = vadd.f32 %v7646, %v7698
        %v7707 = vadd.f32 %v7647, %v7699
        %7708 = vset.pattern.permute.xlu0 125
        %7709 = vperm.xlu0 %7708, %v176
        %v7710 = vpop.permute.xlu0 %7709
        %7712 = vset.pattern.permute.xlu0 125
        %7713 = vperm.xlu0 %7712, %v177
        %v7714 = vpop.permute.xlu0 %7713
        %7716 = vset.pattern.permute.xlu0 125
        %7717 = vperm.xlu0 %7716, %v178
        %v7718 = vpop.permute.xlu0 %7717
        %7720 = vset.pattern.permute.xlu0 125
        %7721 = vperm.xlu0 %7720, %v179
        %v7722 = vpop.permute.xlu0 %7721
        %7724 = vset.pattern.permute.xlu0 125
        %7725 = vperm.xlu0 %7724, %v180
        %v7726 = vpop.permute.xlu0 %7725
        %7728 = vset.pattern.permute.xlu0 125
        %7729 = vperm.xlu0 %7728, %v181
        %v7730 = vpop.permute.xlu0 %7729
        %7732 = vset.pattern.permute.xlu0 125
        %7733 = vperm.xlu0 %7732, %v182
        %v7734 = vpop.permute.xlu0 %7733
        %7736 = vset.pattern.permute.xlu0 125
        %7737 = vperm.xlu0 %7736, %v183
        %v7738 = vpop.permute.xlu0 %7737
        %v7740 = vlaneseq
        %v7741 = vshrl.u32 %v7740, 7
        %v7742 = vsub.s32 5, %v7741
        %v7743 = vrot.slane %v7407, %v7742
        %v7744 = vsub.f32 %v7710, %v7743
        %v7745 = vsub.f32 %v7714, %v7743
        %v7746 = vsub.f32 %v7718, %v7743
        %v7747 = vsub.f32 %v7722, %v7743
        %v7748 = vsub.f32 %v7726, %v7743
        %v7749 = vsub.f32 %v7730, %v7743
        %v7750 = vsub.f32 %v7734, %v7743
        %v7751 = vsub.f32 %v7738, %v7743
        %v7752 = vand.u32 2147483647, %v7744
        %v7753 = vand.u32 2147483647, %v7745
        %v7754 = vand.u32 2147483647, %v7746
        %v7755 = vand.u32 2147483647, %v7747
        %v7756 = vand.u32 2147483647, %v7748
        %v7757 = vand.u32 2147483647, %v7749
        %v7758 = vand.u32 2147483647, %v7750
        %v7759 = vand.u32 2147483647, %v7751
        %v7760 = vadd.f32 %v7700, %v7752
        %v7761 = vadd.f32 %v7701, %v7753
        %v7762 = vadd.f32 %v7702, %v7754
        %v7763 = vadd.f32 %v7703, %v7755
        %v7764 = vadd.f32 %v7704, %v7756
        %v7765 = vadd.f32 %v7705, %v7757
        %v7766 = vadd.f32 %v7706, %v7758
        %v7767 = vadd.f32 %v7707, %v7759
        %7768 = vset.pattern.permute.xlu0 126
        %7769 = vperm.xlu0 %7768, %v176
        %v7770 = vpop.permute.xlu0 %7769
        %7772 = vset.pattern.permute.xlu0 126
        %7773 = vperm.xlu0 %7772, %v177
        %v7774 = vpop.permute.xlu0 %7773
        %7776 = vset.pattern.permute.xlu0 126
        %7777 = vperm.xlu0 %7776, %v178
        %v7778 = vpop.permute.xlu0 %7777
        %7780 = vset.pattern.permute.xlu0 126
        %7781 = vperm.xlu0 %7780, %v179
        %v7782 = vpop.permute.xlu0 %7781
        %7784 = vset.pattern.permute.xlu0 126
        %7785 = vperm.xlu0 %7784, %v180
        %v7786 = vpop.permute.xlu0 %7785
        %7788 = vset.pattern.permute.xlu0 126
        %7789 = vperm.xlu0 %7788, %v181
        %v7790 = vpop.permute.xlu0 %7789
        %7792 = vset.pattern.permute.xlu0 126
        %7793 = vperm.xlu0 %7792, %v182
        %v7794 = vpop.permute.xlu0 %7793
        %7796 = vset.pattern.permute.xlu0 126
        %7797 = vperm.xlu0 %7796, %v183
        %v7798 = vpop.permute.xlu0 %7797
        %v7800 = vlaneseq
        %v7801 = vshrl.u32 %v7800, 7
        %v7802 = vsub.s32 6, %v7801
        %v7803 = vrot.slane %v7407, %v7802
        %v7804 = vsub.f32 %v7770, %v7803
        %v7805 = vsub.f32 %v7774, %v7803
        %v7806 = vsub.f32 %v7778, %v7803
        %v7807 = vsub.f32 %v7782, %v7803
        %v7808 = vsub.f32 %v7786, %v7803
        %v7809 = vsub.f32 %v7790, %v7803
        %v7810 = vsub.f32 %v7794, %v7803
        %v7811 = vsub.f32 %v7798, %v7803
        %v7812 = vand.u32 2147483647, %v7804
        %v7813 = vand.u32 2147483647, %v7805
        %v7814 = vand.u32 2147483647, %v7806
        %v7815 = vand.u32 2147483647, %v7807
        %v7816 = vand.u32 2147483647, %v7808
        %v7817 = vand.u32 2147483647, %v7809
        %v7818 = vand.u32 2147483647, %v7810
        %v7819 = vand.u32 2147483647, %v7811
        %v7820 = vadd.f32 %v7760, %v7812
        %v7821 = vadd.f32 %v7761, %v7813
        %v7822 = vadd.f32 %v7762, %v7814
        %v7823 = vadd.f32 %v7763, %v7815
        %v7824 = vadd.f32 %v7764, %v7816
        %v7825 = vadd.f32 %v7765, %v7817
        %v7826 = vadd.f32 %v7766, %v7818
        %v7827 = vadd.f32 %v7767, %v7819
        %7828 = vset.pattern.permute.xlu0 127
        %7829 = vperm.xlu0 %7828, %v176
        %v7830 = vpop.permute.xlu0 %7829
        %7832 = vset.pattern.permute.xlu0 127
        %7833 = vperm.xlu0 %7832, %v177
        %v7834 = vpop.permute.xlu0 %7833
        %7836 = vset.pattern.permute.xlu0 127
        %7837 = vperm.xlu0 %7836, %v178
        %v7838 = vpop.permute.xlu0 %7837
        %7840 = vset.pattern.permute.xlu0 127
        %7841 = vperm.xlu0 %7840, %v179
        %v7842 = vpop.permute.xlu0 %7841
        %7844 = vset.pattern.permute.xlu0 127
        %7845 = vperm.xlu0 %7844, %v180
        %v7846 = vpop.permute.xlu0 %7845
        %7848 = vset.pattern.permute.xlu0 127
        %7849 = vperm.xlu0 %7848, %v181
        %v7850 = vpop.permute.xlu0 %7849
        %7852 = vset.pattern.permute.xlu0 127
        %7853 = vperm.xlu0 %7852, %v182
        %v7854 = vpop.permute.xlu0 %7853
        %7856 = vset.pattern.permute.xlu0 127
        %7857 = vperm.xlu0 %7856, %v183
        %v7858 = vpop.permute.xlu0 %7857
        %v7860 = vlaneseq
        %v7861 = vshrl.u32 %v7860, 7
        %v7862 = vsub.s32 7, %v7861
        %v7863 = vrot.slane %v7407, %v7862
        %v7864 = vsub.f32 %v7830, %v7863
        %v7865 = vsub.f32 %v7834, %v7863
        %v7866 = vsub.f32 %v7838, %v7863
        %v7867 = vsub.f32 %v7842, %v7863
        %v7868 = vsub.f32 %v7846, %v7863
        %v7869 = vsub.f32 %v7850, %v7863
        %v7870 = vsub.f32 %v7854, %v7863
        %v7871 = vsub.f32 %v7858, %v7863
        %v7872 = vand.u32 2147483647, %v7864
        %v7873 = vand.u32 2147483647, %v7865
        %v7874 = vand.u32 2147483647, %v7866
        %v7875 = vand.u32 2147483647, %v7867
        %v7876 = vand.u32 2147483647, %v7868
        %v7877 = vand.u32 2147483647, %v7869
        %v7878 = vand.u32 2147483647, %v7870
        %v7879 = vand.u32 2147483647, %v7871
        %v7880 = vadd.f32 %v7820, %v7872
        %v7881 = vadd.f32 %v7821, %v7873
        %v7882 = vadd.f32 %v7822, %v7874
        %v7883 = vadd.f32 %v7823, %v7875
        %v7884 = vadd.f32 %v7824, %v7876
        %v7885 = vadd.f32 %v7825, %v7877
        %v7886 = vadd.f32 %v7826, %v7878
        %v7887 = vadd.f32 %v7827, %v7879
        %v7888 = vsub.f32 0.0, %v7880
        %v7889 = vsub.f32 0.0, %v7881
        %v7890 = vsub.f32 0.0, %v7882
        %v7891 = vsub.f32 0.0, %v7883
        %v7892 = vsub.f32 0.0, %v7884
        %v7893 = vsub.f32 0.0, %v7885
        %v7894 = vsub.f32 0.0, %v7886
        %v7895 = vsub.f32 0.0, %v7887
        %7896 = vst [vmem:[%s164] sm:$0xff] %v7888
        %7897 = vst [vmem:[%s164 + $0x8] sm:$0xff] %v7889
        %7898 = vst [vmem:[%s164 + $0x10] sm:$0xff] %v7890
        %7899 = vst [vmem:[%s164 + $0x18] sm:$0xff] %v7891
        %7900 = vst [vmem:[%s164 + $0x20] sm:$0xff] %v7892
        %7901 = vst [vmem:[%s164 + $0x28] sm:$0xff] %v7893
        %7902 = vst [vmem:[%s164 + $0x30] sm:$0xff] %v7894
        %7903 = vst [vmem:[%s164 + $0x38] sm:$0xff] %v7895
        %s7904 = sand.u32 %s90, 1
        %s7905 = scalar_lea.sflag [#allocation3], %s7904
        %s7906 = sand.u32 %s90, 1
        %s7907 = smul.addr %s7906, 64
        %s7908 = scalar_lea.vmem [#allocation2], %s7907
        // Predicated region
        $region29: #{adder_conv3x3.1} parent=27 // pred_check
          %p7909 = pneg %p100
        $region30: #{adder_conv3x3.1} parent=27 // pred_check_branch
          %7911 = sbr.rel (%p7909) target = $region32
        $region31: #{adder_conv3x3.1} parent=27 // pred_region
          %s7912 = smul.u32 8, %s21
          %s7914 = ssub.s32 1024, 1024
          %7915 = vsyncadd %s7905, %s7914
          %s7916 = sadd.s32 %s20, %s7912
          %s7917 = smul.addr %s7916, 128
          %s7918 = scalar_lea.hbm %s2, %s7917
          %s7919 = sshll.u32 %s7908, 4
          %s7920 = int_to_ptr.vmem [resolvable:$true] %s7919
          %7925 = dma.vmem_to_hbm [thread:$0]  %s7920, 1024, %s7918, %s7905, 128, 128, 8
        $region32: #{adder_conv3x3.1} parent=27 // pred_fallthru
          _
      $region28: #{adder_conv3x3.1} parent=5 // pred_fallthru
        _
      %p7926 = scmp.le.s32.totalorder 2, %s11
      // Predicated region
      $region33: #{adder_conv3x3.1} parent=5 // pred_check
        %p7927 = pneg %p7926
      $region34: #{adder_conv3x3.1} parent=5 // pred_check_branch
        %7929 = sbr.rel (%p7927) target = $region36
      $region35: #{adder_conv3x3.1} parent=5 // pred_region
        %s7930 = ssub.s32 %s11, 2
        // Predicated region
        $region37: #{adder_conv3x3.1} parent=35 // pred_check
          %p7931 = pneg %p106
        $region38: #{adder_conv3x3.1} parent=35 // pred_check_branch
          %7933 = sbr.rel (%p7931) target = $region40
        $region39: #{adder_conv3x3.1} parent=35 // pred_region
          %s7934 = sand.u32 %s91, 1
          %s7935 = scalar_lea.sflag [#allocation3], %s7934
          %s7936 = sand.u32 %s91, 1
          %s7937 = smul.addr %s7936, 64
          %s7938 = scalar_lea.vmem [#allocation2], %s7937
          %7939 = dma.done %s7935, 1024
        $region40: #{adder_conv3x3.1} parent=35 // pred_fallthru
          _
      $region36: #{adder_conv3x3.1} parent=5 // pred_fallthru
        _
    $region6: #{adder_conv3x3.1} parent=1 // loop_footer
      %s15 = sadd.s32 1, %s11
    $region7: #{adder_conv3x3.1} parent=1 // loop_footer_branch
      %10 = sbr.rel target = $region3
    $region8: #{adder_conv3x3.1} parent=1 // loop_exit
      _
    %7940 = vsyncpa [#allocation3], 1
    %s7941 = scalar_lea.sflag [#allocation3], 1
    %7942 = vsyncpa %s7941, 1

</llo_original>
